<compile_context>
chip_gen: v5e
topology: v5e:2x2
jax: 0.10.0
libtpu: 0.0.40
codegen_flags: <defaults>
</compile_context>

<pallas_src>
import functools
import math

import numpy as np
import jax
import jax.numpy as jnp
from jax import lax
from jax.experimental import pallas as pl
from jax.experimental.pallas import tpu as pltpu  # noqa: F401  (TPU backend)

RES_GROUPS = 8     # GroupNorm groups inside the assumed residual block
ATTN_GROUPS = 32   # matches nn.GroupNorm(32, C) in Attention
EPS = 1e-5


# ----------------------------------------------------------------------------
# small helpers (trace-time constants, cached per shape)
# ----------------------------------------------------------------------------

def _fs(shape):
    """Full-array BlockSpec for a grid=(1,) pallas_call."""
    nd = len(shape)
    return pl.BlockSpec(shape, lambda *_: (0,) * nd)


@functools.lru_cache(maxsize=None)
def _group_proj_np(c, groups):
    cpg = c // groups
    return np.kron(np.eye(groups, dtype=np.float32),
                   np.ones((cpg, cpg), dtype=np.float32))


@functools.lru_cache(maxsize=None)
def _shift_mats_np(h, w):
    """(9, HW, HW) matrices: x_flat @ S_k == spatially shifted (zero padded) x."""
    hw = h * w
    s = np.zeros((9, hw, hw), np.float32)
    for ky in range(3):
        for kx in range(3):
            k = ky * 3 + kx
            for yy in range(h):
                for xx in range(w):
                    ys, xs = yy + ky - 1, xx + kx - 1
                    if 0 <= ys < h and 0 <= xs < w:
                        s[k, ys * w + xs, yy * w + xx] = 1.0
    return s


def _interp_matrix(out_size, in_size):
    # Matches F.interpolate(mode="bilinear", align_corners=False).
    m = np.zeros((out_size, in_size), dtype=np.float32)
    scale = in_size / out_size
    for o in range(out_size):
        src = max((o + 0.5) * scale - 0.5, 0.0)
        i0 = min(int(np.floor(src)), in_size - 1)
        i1 = min(i0 + 1, in_size - 1)
        w1 = src - i0
        m[o, i0] += 1.0 - w1
        m[o, i1] += w1
    return m


@functools.lru_cache(maxsize=None)
def _bilinear_map_np(h, w, oh, ow):
    ry = _interp_matrix(oh, h)                     # (OH, H)
    rx = _interp_matrix(ow, w)                     # (OW, W)
    return np.ascontiguousarray(np.kron(ry, rx).T.astype(np.float32))  # (HW, OH*OW)


# ----------------------------------------------------------------------------
# in-kernel helpers (operate on traced VMEM values)
# ----------------------------------------------------------------------------

def _silu(x):
    return x * (1.0 / (1.0 + jnp.exp(-x)))


def _gn(x, proj, gamma, beta, inv_n, eps):
    """GroupNorm on a (C, N) tile. proj is the (C, C) block-diag group mask."""
    gsum = jnp.dot(proj, x, preferred_element_type=jnp.float32)
    mu = jnp.sum(gsum, axis=-1, keepdims=True) * inv_n
    d = x - mu
    gsq = jnp.dot(proj, d * d, preferred_element_type=jnp.float32)
    var = jnp.sum(gsq, axis=-1, keepdims=True) * inv_n
    inv_std = lax.rsqrt(var + eps)
    return d * inv_std * gamma + beta


def _conv3x3(h, w_stacked, s_ref, cout):
    """3x3 same-conv on a (Cin, HW) tile via 9 shifted matmuls, all in VMEM.

    w_stacked: (9*Cout, Cin); rows [k*Cout:(k+1)*Cout] are W[:, :, ky, kx].
    s_ref:     (9, HW, HW) shift/zero-pad matrices.
    """
    wh = jnp.dot(w_stacked, h, preferred_element_type=jnp.float32)   # (9*Cout, HW)
    out = None
    for k in range(9):
        part = jnp.dot(wh[k * cout:(k + 1) * cout, :], s_ref[k],
                       preferred_element_type=jnp.float32)
        out = part if out is None else out + part
    return out


# ----------------------------------------------------------------------------
# fused Pallas kernels
# ----------------------------------------------------------------------------

def _res_block_kernel(x_ref, t_ref, g1_ref, b1_ref, p1_ref,
                      w1_ref, c1b_ref, wt_ref, bt_ref,
                      g2_ref, b2_ref, p2_ref, w2_ref, c2b_ref,
                      ws_ref, bs_ref, s_ref, o_ref,
                      *, batch, inv_n1, inv_n2, eps):
    # TODO(synk): the reference's `block` class is undefined; a standard
    # GN -> SiLU -> Conv3x3 time-conditioned residual block is assumed
    # (ad_group_norm=False path), same as the previously accepted version.
    cout = c1b_ref.shape[0]
    # Fused time path for the whole batch: (Cout, B) = W_t @ SiLU(t) + b_t.
    temb_all = jnp.dot(wt_ref[...], _silu(t_ref[...]),
                       preferred_element_type=jnp.float32) + bt_ref[...]
    # Hoist parameter loads out of the (unrolled) batch loop.
    g1, b1, p1 = g1_ref[...], b1_ref[...], p1_ref[...]
    g2, b2, p2 = g2_ref[...], b2_ref[...], p2_ref[...]
    w1, c1b = w1_ref[...], c1b_ref[...]
    w2, c2b = w2_ref[...], c2b_ref[...]
    ws, bs = ws_ref[...], bs_ref[...]
    for b in range(batch):                                   # B unrolled
        xb = x_ref[b]                                        # (Cin, HW)
        h = _silu(_gn(xb, p1, g1, b1, inv_n1, eps))
        y1 = _conv3x3(h, w1, s_ref, cout) + c1b
        y1 = y1 + temb_all[:, b:b + 1]                       # per-batch channel bias
        h2 = _silu(_gn(y1, p2, g2, b2, inv_n2, eps))
        y2 = _conv3x3(h2, w2, s_ref, cout) + c2b
        skip = jnp.dot(ws, xb, preferred_element_type=jnp.float32) + bs
        o_ref[b] = y2 + skip


def _attn_qkv_kernel(x_ref, g_ref, b_ref, proj_ref, wqkv_ref, bqkv_ref, o_ref,
                     *, batch, inv_n, eps):
    # Fused GroupNorm + concatenated q/k/v projection: out (B, 3C, HW).
    g, b_, proj = g_ref[...], b_ref[...], proj_ref[...]
    wqkv, bqkv = wqkv_ref[...], bqkv_ref[...]
    for b in range(batch):
        xn = _gn(x_ref[b], proj, g, b_, inv_n, eps)
        o_ref[b] = jnp.dot(wqkv, xn, preferred_element_type=jnp.float32) + bqkv


def _attn_out_kernel(q_ref, k_ref, vt_ref, xq_ref, wo_t_ref, bo_ref, o_ref,
                     *, batch, scale):
    # Fused softmax attention + output projection + residual add.
    # q, k: (B, C, HW) quirky views; vt, xq: (B, HW, C). Output: (B, HW, C) rows.
    wo_t, bo = wo_t_ref[...], bo_ref[...]
    for b in range(batch):
        s = scale * lax.dot_general(q_ref[b], k_ref[b],
                                    (((1,), (1,)), ((), ())),
                                    preferred_element_type=jnp.float32)    # (C, C)
        s = s - jnp.max(s, axis=-1, keepdims=True)
        e = jnp.exp(s)
        w = e / jnp.sum(e, axis=-1, keepdims=True)
        att_rows = lax.dot_general(vt_ref[b], w, (((1,), (1,)), ((), ())),
                                   preferred_element_type=jnp.float32)     # (HW, C)
        o_rows = jnp.dot(att_rows, wo_t,
                         preferred_element_type=jnp.float32) + bo
        o_ref[b] = o_rows + xq_ref[b]


def _bilinear_kernel(x_ref, m_ref, o_ref):
    # Bilinear resize of ALL B*C images at once via a single precomputed
    # kron(Ry, Rx)^T map -> lane-dense (B*C, OH*OW) output in one matmul.
    o_ref[...] = jnp.dot(x_ref[...], m_ref[...],
                         preferred_element_type=jnp.float32)


# ----------------------------------------------------------------------------
# module forward passes (wrappers)
# ----------------------------------------------------------------------------

def res_block_fwd(p, x_flat, t_col, shift):
    B, cin, hw = x_flat.shape
    cout = p["conv1"]["b"].shape[0]
    tdim = t_col.shape[0]
    proj1 = jnp.asarray(_group_proj_np(cin, RES_GROUPS))
    proj2 = jnp.asarray(_group_proj_np(cout, RES_GROUPS))
    kernel = functools.partial(
        _res_block_kernel, batch=B,
        inv_n1=1.0 / ((cin // RES_GROUPS) * hw),
        inv_n2=1.0 / ((cout // RES_GROUPS) * hw), eps=EPS)
    return pl.pallas_call(
        kernel,
        out_shape=jax.ShapeDtypeStruct((B, cout, hw), jnp.float32),
        grid=(1,),
        in_specs=[_fs((B, cin, hw)), _fs((tdim, B)),
                  _fs((cin, 1)), _fs((cin, 1)), _fs((cin, cin)),
                  _fs((9 * cout, cin)), _fs((cout, 1)),
                  _fs((cout, tdim)), _fs((cout, 1)),
                  _fs((cout, 1)), _fs((cout, 1)), _fs((cout, cout)),
                  _fs((9 * cout, cout)), _fs((cout, 1)),
                  _fs((cout, cin)), _fs((cout, 1)),
                  _fs((9, hw, hw))],
        out_specs=_fs((B, cout, hw)),
    )(x_flat, t_col,
      p["gn1"]["g"], p["gn1"]["b"], proj1,
      p["conv1"]["w"], p["conv1"]["b"],
      p["time"]["w"], p["time"]["b"],
      p["gn2"]["g"], p["gn2"]["b"], proj2,
      p["conv2"]["w"], p["conv2"]["b"],
      p["skip"]["w"], p["skip"]["b"], shift)


def attention_fwd(p, x_flat):
    B, C, hw = x_flat.shape
    proj = jnp.asarray(_group_proj_np(C, ATTN_GROUPS))

    qkv_kernel = functools.partial(
        _attn_qkv_kernel, batch=B, inv_n=1.0 / ((C // ATTN_GROUPS) * hw), eps=EPS)
    qkv_t = pl.pallas_call(
        qkv_kernel,
        out_shape=jax.ShapeDtypeStruct((B, 3 * C, hw), jnp.float32),
        grid=(1,),
        in_specs=[_fs((B, C, hw)), _fs((C, 1)), _fs((C, 1)), _fs((C, C)),
                  _fs((3 * C, C)), _fs((3 * C, 1))],
        out_specs=_fs((B, 3 * C, hw)),
    )(x_flat, p["gn"]["g"], p["gn"]["b"], proj, p["wqkv"], p["bqkv"])

    # Reproduce the reference's quirky `.view(qkv_size)`: a raw row-major
    # reshape of the (B*HW, C) linear outputs (NOT a transpose).
    qkv_rows = jnp.transpose(qkv_t, (0, 2, 1))            # (B, HW, 3C) row layout
    q = qkv_rows[:, :, 0:C].reshape(B, C, hw)
    k = qkv_rows[:, :, C:2 * C].reshape(B, C, hw)
    v = qkv_rows[:, :, 2 * C:3 * C].reshape(B, C, hw)
    vT = jnp.transpose(v, (0, 2, 1))                      # (B, HW, C)
    xq = x_flat.reshape(B, hw, C)                         # quirky-inverse rows of x

    out_kernel = functools.partial(_attn_out_kernel, batch=B,
                                   scale=1.0 / math.sqrt(C))
    out_rows = pl.pallas_call(
        out_kernel,
        out_shape=jax.ShapeDtypeStruct((B, hw, C), jnp.float32),
        grid=(1,),
        in_specs=[_fs((B, C, hw)), _fs((B, C, hw)), _fs((B, hw, C)),
                  _fs((B, hw, C)), _fs((C, C)), _fs((1, C))],
        out_specs=_fs((B, hw, C)),
    )(q, k, vT, xq, p["wo_t"], p["bo"])
    return out_rows.reshape(B, C, hw)                     # quirky view + residual done


def bilinear_resize_flat(x_flat, h, w, oh, ow):
    B, C, hw = x_flat.shape
    m = jnp.asarray(_bilinear_map_np(h, w, oh, ow))       # (HW, OH*OW)
    x2 = x_flat.reshape(B * C, hw)
    y = pl.pallas_call(
        _bilinear_kernel,
        out_shape=jax.ShapeDtypeStruct((B * C, oh * ow), jnp.float32),
        grid=(1,),
        in_specs=[_fs((B * C, hw)), _fs((hw, oh * ow))],
        out_specs=_fs((B * C, oh * ow)),
    )(x2, m)
    return y.reshape(B, C, oh, ow)


def upsample_block_fwd(params, inputs, skips, timestep, img_size,
                       use_attention=True, use_upsampling=False):
    B, _, H, W = inputs.shape
    hw = H * W
    shift = jnp.asarray(_shift_mats_np(H, W))
    t_col = jnp.transpose(timestep)                       # (Tdim, B)

    x = inputs.reshape(B, -1, hw)
    x = jnp.concatenate([x, skips[0].reshape(B, -1, hw)], axis=1)
    x = res_block_fwd(params["res1"], x, t_col, shift)
    if use_attention:
        x = attention_fwd(params["attn1"], x)
    x = jnp.concatenate([x, skips[1].reshape(B, -1, hw)], axis=1)
    x = res_block_fwd(params["res2"], x, t_col, shift)
    if use_attention:
        x = attention_fwd(params["attn2"], x)
    x = jnp.concatenate([x, skips[2].reshape(B, -1, hw)], axis=1)
    x = res_block_fwd(params["res3"], x, t_col, shift)
    if use_attention:
        x = attention_fwd(params["attn3"], x)
    # TODO(synk): upsampling=False here, so the ConvTranspose2d branch is not exercised.
    cf = x.shape[1]
    scale_factor = img_size / W
    out_h = int(math.floor(H * scale_factor))
    out_w = int(math.floor(W * scale_factor))
    feature_map = bilinear_resize_flat(x, H, W, out_h, out_w)
    return x.reshape(B, cf, H, W), feature_map


# ----------------------------------------------------------------------------
# deterministic parameter init (kernel-ready layouts, no runtime re-layout)
# ----------------------------------------------------------------------------

def _init_gn(key, c):
    kg, kb = jax.random.split(key)
    return {"g": 1.0 + 0.1 * jax.random.normal(kg, (c, 1), jnp.float32),
            "b": 0.1 * jax.random.normal(kb, (c, 1), jnp.float32)}


def _init_conv3(key, cout, cin, scale=0.1):
    kw, kb = jax.random.split(key)
    # Stored pre-stacked: rows [k*cout:(k+1)*cout] = W[:, :, ky, kx], k = ky*3+kx.
    return {"w": scale * jax.random.normal(kw, (9 * cout, cin), jnp.float32),
            "b": scale * jax.random.normal(kb, (cout, 1), jnp.float32)}


def _init_linear_col(key, n_out, n_in, scale=0.1):
    kw, kb = jax.random.split(key)
    return {"w": scale * jax.random.normal(kw, (n_out, n_in), jnp.float32),
            "b": scale * jax.random.normal(kb, (n_out, 1), jnp.float32)}


def init_res_block(key, dim_in, dim_out, time_dim):
    keys = jax.random.split(key, 6)
    return {"gn1": _init_gn(keys[0], dim_in),
            "conv1": _init_conv3(keys[1], dim_out, dim_in),
            "time": _init_linear_col(keys[2], dim_out, time_dim),
            "gn2": _init_gn(keys[3], dim_out),
            "conv2": _init_conv3(keys[4], dim_out, dim_out),
            "skip": _init_linear_col(keys[5], dim_out, dim_in)}


def init_attention(key, c, scale=0.1):
    keys = jax.random.split(key, 5)
    return {"gn": _init_gn(keys[0], c),
            "wqkv": scale * jax.random.normal(keys[1], (3 * c, c), jnp.float32),
            "bqkv": scale * jax.random.normal(keys[2], (3 * c, 1), jnp.float32),
            "wo_t": scale * jax.random.normal(keys[3], (c, c), jnp.float32),
            "bo": scale * jax.random.normal(keys[4], (1, c), jnp.float32)}


def init_upsample_block(key, dim_in, dim_out, time_dim):
    keys = jax.random.split(key, 6)
    return {"res1": init_res_block(keys[0], dim_in + dim_in, dim_in, time_dim),
            "res2": init_res_block(keys[1], dim_in + dim_in, dim_in, time_dim),
            "res3": init_res_block(keys[2], dim_in + dim_out, dim_out, time_dim),
            "attn1": init_attention(keys[3], dim_in),
            "attn2": init_attention(keys[4], dim_in),
            "attn3": init_attention(keys[5], dim_out)}


# ----------------------------------------------------------------------------

if __name__ == "__main__":
    B, DIM_IN, DIM_OUT, H, W = 2, 32, 32, 8, 8
    TIME_DIM, IMG_SIZE = 32, 16

    root = jax.random.PRNGKey(0)
    k_par, k_in, k_s0, k_s1, k_s2, k_t = jax.random.split(root, 6)
    params = init_upsample_block(k_par, DIM_IN, DIM_OUT, TIME_DIM)

    inputs = jax.random.normal(k_in, (B, DIM_IN, H, W), jnp.float32)
    skips = [jax.random.normal(k_s0, (B, DIM_IN, H, W), jnp.float32),
             jax.random.normal(k_s1, (B, DIM_IN, H, W), jnp.float32),
             jax.random.normal(k_s2, (B, DIM_OUT, H, W), jnp.float32)]
    timestep = jax.random.normal(k_t, (B, TIME_DIM), jnp.float32)

    fwd = jax.jit(functools.partial(upsample_block_fwd, img_size=IMG_SIZE))
    x_out, feat = fwd(params, inputs, skips, timestep)
    jax.block_until_ready((x_out, feat))

    assert x_out.shape == (B, DIM_OUT, H, W)
    assert feat.shape == (B, DIM_OUT, IMG_SIZE, IMG_SIZE)
    assert bool(jnp.isfinite(x_out).all()) and bool(jnp.isfinite(feat).all())
    print("KERNEL_OK")
</pallas_src>

<mosaic_0001>
module attributes {stable_mosaic.version = 11 : i64} {
  func.func @_res_block_kernel(%arg0: i32, %arg1: memref<2x64x64xf32, #tpu.memory_space<vmem>>, %arg2: memref<32x2xf32, #tpu.memory_space<vmem>>, %arg3: memref<64x1xf32, #tpu.memory_space<vmem>>, %arg4: memref<64x1xf32, #tpu.memory_space<vmem>>, %arg5: memref<64x64xf32, #tpu.memory_space<vmem>>, %arg6: memref<288x64xf32, #tpu.memory_space<vmem>>, %arg7: memref<32x1xf32, #tpu.memory_space<vmem>>, %arg8: memref<32x32xf32, #tpu.memory_space<vmem>>, %arg9: memref<32x1xf32, #tpu.memory_space<vmem>>, %arg10: memref<32x1xf32, #tpu.memory_space<vmem>>, %arg11: memref<32x1xf32, #tpu.memory_space<vmem>>, %arg12: memref<32x32xf32, #tpu.memory_space<vmem>>, %arg13: memref<288x32xf32, #tpu.memory_space<vmem>>, %arg14: memref<32x1xf32, #tpu.memory_space<vmem>>, %arg15: memref<32x64xf32, #tpu.memory_space<vmem>>, %arg16: memref<32x1xf32, #tpu.memory_space<vmem>>, %arg17: memref<9x64x64xf32, #tpu.memory_space<vmem>>, %arg18: memref<2x32x64xf32, #tpu.memory_space<vmem>>) attributes {dimension_semantics = [#tpu.dimension_semantics<arbitrary>], iteration_bounds = array<i64: 1>, scalar_prefetch = 0 : i64, scratch_operands = 0 : i64, tpu.core_type = #tpu.core_type<tc>, window_params = [{pipeline_mode = #tpu.pipeline_mode<synchronous>, transform_indices = @transform_0, window_bounds = array<i64: 2, 64, 64>}, {pipeline_mode = #tpu.pipeline_mode<synchronous>, transform_indices = @transform_1, window_bounds = array<i64: 32, 2>}, {pipeline_mode = #tpu.pipeline_mode<synchronous>, transform_indices = @transform_2, window_bounds = array<i64: 64, 1>}, {pipeline_mode = #tpu.pipeline_mode<synchronous>, transform_indices = @transform_3, window_bounds = array<i64: 64, 1>}, {pipeline_mode = #tpu.pipeline_mode<synchronous>, transform_indices = @transform_4, window_bounds = array<i64: 64, 64>}, {pipeline_mode = #tpu.pipeline_mode<synchronous>, transform_indices = @transform_5, window_bounds = array<i64: 288, 64>}, {pipeline_mode = #tpu.pipeline_mode<synchronous>, transform_indices = @transform_6, window_bounds = array<i64: 32, 1>}, {pipeline_mode = #tpu.pipeline_mode<synchronous>, transform_indices = @transform_7, window_bounds = array<i64: 32, 32>}, {pipeline_mode = #tpu.pipeline_mode<synchronous>, transform_indices = @transform_8, window_bounds = array<i64: 32, 1>}, {pipeline_mode = #tpu.pipeline_mode<synchronous>, transform_indices = @transform_9, window_bounds = array<i64: 32, 1>}, {pipeline_mode = #tpu.pipeline_mode<synchronous>, transform_indices = @transform_10, window_bounds = array<i64: 32, 1>}, {pipeline_mode = #tpu.pipeline_mode<synchronous>, transform_indices = @transform_11, window_bounds = array<i64: 32, 32>}, {pipeline_mode = #tpu.pipeline_mode<synchronous>, transform_indices = @transform_12, window_bounds = array<i64: 288, 32>}, {pipeline_mode = #tpu.pipeline_mode<synchronous>, transform_indices = @transform_13, window_bounds = array<i64: 32, 1>}, {pipeline_mode = #tpu.pipeline_mode<synchronous>, transform_indices = @transform_14, window_bounds = array<i64: 32, 64>}, {pipeline_mode = #tpu.pipeline_mode<synchronous>, transform_indices = @transform_15, window_bounds = array<i64: 32, 1>}, {pipeline_mode = #tpu.pipeline_mode<synchronous>, transform_indices = @transform_16, window_bounds = array<i64: 9, 64, 64>}, {pipeline_mode = #tpu.pipeline_mode<synchronous>, transform_indices = @transform_17, window_bounds = array<i64: 2, 32, 64>}]} {
    %c0 = arith.constant 0 : index
    %c0_0 = arith.constant 0 : index
    %0 = vector.load %arg8[%c0, %c0_0] : memref<32x32xf32, #tpu.memory_space<vmem>>, vector<32x32xf32>
    %c0_1 = arith.constant 0 : index
    %c0_2 = arith.constant 0 : index
    %1 = vector.load %arg2[%c0_1, %c0_2] : memref<32x2xf32, #tpu.memory_space<vmem>>, vector<32x2xf32>
    %cst = arith.constant 0.000000e+00 : f32
    %2 = vector.broadcast %cst : f32 to vector<32x2xf32>
    %3 = arith.subf %2, %1 : vector<32x2xf32>
    %4 = math.exp %3 : vector<32x2xf32>
    %cst_3 = arith.constant 1.000000e+00 : f32
    %5 = vector.broadcast %cst_3 : f32 to vector<32x2xf32>
    %6 = arith.addf %5, %4 : vector<32x2xf32>
    %cst_4 = arith.constant 1.000000e+00 : f32
    %7 = vector.broadcast %cst_4 : f32 to vector<32x2xf32>
    %8 = arith.divf %7, %6 : vector<32x2xf32>
    %9 = arith.mulf %1, %8 : vector<32x2xf32>
    %cst_5 = arith.constant dense<0.000000e+00> : vector<32x2xf32>
    %10 = tpu.matmul %0, %9, %cst_5 {dimension_numbers = #tpu.dot_dimension_numbers<[1], [0], [0], [1], [0, 0, 1, 1], [], []>} : vector<32x32xf32>, vector<32x2xf32>, vector<32x2xf32> -> vector<32x2xf32>
    %c0_6 = arith.constant 0 : index
    %c0_7 = arith.constant 0 : index
    %11 = vector.load %arg9[%c0_6, %c0_7] : memref<32x1xf32, #tpu.memory_space<vmem>>, vector<32x1xf32>
    %12 = vector.broadcast %11 : vector<32x1xf32> to vector<32x2xf32>
    %13 = arith.addf %10, %12 : vector<32x2xf32>
    %c0_8 = arith.constant 0 : index
    %c0_9 = arith.constant 0 : index
    %14 = vector.load %arg3[%c0_8, %c0_9] : memref<64x1xf32, #tpu.memory_space<vmem>>, vector<64x1xf32>
    %c0_10 = arith.constant 0 : index
    %c0_11 = arith.constant 0 : index
    %15 = vector.load %arg4[%c0_10, %c0_11] : memref<64x1xf32, #tpu.memory_space<vmem>>, vector<64x1xf32>
    %c0_12 = arith.constant 0 : index
    %c0_13 = arith.constant 0 : index
    %16 = vector.load %arg5[%c0_12, %c0_13] : memref<64x64xf32, #tpu.memory_space<vmem>>, vector<64x64xf32>
    %c0_14 = arith.constant 0 : index
    %c0_15 = arith.constant 0 : index
    %17 = vector.load %arg10[%c0_14, %c0_15] : memref<32x1xf32, #tpu.memory_space<vmem>>, vector<32x1xf32>
    %c0_16 = arith.constant 0 : index
    %c0_17 = arith.constant 0 : index
    %18 = vector.load %arg11[%c0_16, %c0_17] : memref<32x1xf32, #tpu.memory_space<vmem>>, vector<32x1xf32>
    %c0_18 = arith.constant 0 : index
    %c0_19 = arith.constant 0 : index
    %19 = vector.load %arg12[%c0_18, %c0_19] : memref<32x32xf32, #tpu.memory_space<vmem>>, vector<32x32xf32>
    %c0_20 = arith.constant 0 : index
    %c0_21 = arith.constant 0 : index
    %20 = vector.load %arg6[%c0_20, %c0_21] : memref<288x64xf32, #tpu.memory_space<vmem>>, vector<288x64xf32>
    %c0_22 = arith.constant 0 : index
    %c0_23 = arith.constant 0 : index
    %21 = vector.load %arg7[%c0_22, %c0_23] : memref<32x1xf32, #tpu.memory_space<vmem>>, vector<32x1xf32>
    %c0_24 = arith.constant 0 : index
    %c0_25 = arith.constant 0 : index
    %22 = vector.load %arg13[%c0_24, %c0_25] : memref<288x32xf32, #tpu.memory_space<vmem>>, vector<288x32xf32>
    %c0_26 = arith.constant 0 : index
    %c0_27 = arith.constant 0 : index
    %23 = vector.load %arg14[%c0_26, %c0_27] : memref<32x1xf32, #tpu.memory_space<vmem>>, vector<32x1xf32>
    %c0_28 = arith.constant 0 : index
    %c0_29 = arith.constant 0 : index
    %24 = vector.load %arg15[%c0_28, %c0_29] : memref<32x64xf32, #tpu.memory_space<vmem>>, vector<32x64xf32>
    %c0_30 = arith.constant 0 : index
    %c0_31 = arith.constant 0 : index
    %25 = vector.load %arg16[%c0_30, %c0_31] : memref<32x1xf32, #tpu.memory_space<vmem>>, vector<32x1xf32>
    %c0_32 = arith.constant 0 : index
    %c0_33 = arith.constant 0 : index
    %c0_34 = arith.constant 0 : index
    %26 = vector.load %arg1[%c0_32, %c0_33, %c0_34] : memref<2x64x64xf32, #tpu.memory_space<vmem>>, vector<1x64x64xf32>
    %27 = vector.shape_cast %26 : vector<1x64x64xf32> to vector<64x64xf32>
    %cst_35 = arith.constant dense<0.000000e+00> : vector<64x64xf32>
    %28 = tpu.matmul %16, %27, %cst_35 {dimension_numbers = #tpu.dot_dimension_numbers<[1], [0], [0], [1], [0, 0, 1, 1], [], []>} : vector<64x64xf32>, vector<64x64xf32>, vector<64x64xf32> -> vector<64x64xf32>
    %cst_36 = arith.constant dense<0.000000e+00> : vector<64xf32>
    %29 = vector.multi_reduction <add>, %28, %cst_36 [1] : vector<64x64xf32> to vector<64xf32>
    %30 = vector.shape_cast %29 : vector<64xf32> to vector<64x1xf32>
    %cst_37 = arith.constant 0.001953125 : f32
    %31 = vector.broadcast %cst_37 : f32 to vector<64x1xf32>
    %32 = arith.mulf %30, %31 : vector<64x1xf32>
    %33 = vector.broadcast %32 : vector<64x1xf32> to vector<64x64xf32>
    %34 = arith.subf %27, %33 : vector<64x64xf32>
    %35 = arith.mulf %34, %34 : vector<64x64xf32>
    %cst_38 = arith.constant dense<0.000000e+00> : vector<64x64xf32>
    %36 = tpu.matmul %16, %35, %cst_38 {dimension_numbers = #tpu.dot_dimension_numbers<[1], [0], [0], [1], [0, 0, 1, 1], [], []>} : vector<64x64xf32>, vector<64x64xf32>, vector<64x64xf32> -> vector<64x64xf32>
    %cst_39 = arith.constant dense<0.000000e+00> : vector<64xf32>
    %37 = vector.multi_reduction <add>, %36, %cst_39 [1] : vector<64x64xf32> to vector<64xf32>
    %38 = vector.shape_cast %37 : vector<64xf32> to vector<64x1xf32>
    %cst_40 = arith.constant 0.001953125 : f32
    %39 = vector.broadcast %cst_40 : f32 to vector<64x1xf32>
    %40 = arith.mulf %38, %39 : vector<64x1xf32>
    %cst_41 = arith.constant 9.99999974E-6 : f32
    %41 = vector.broadcast %cst_41 : f32 to vector<64x1xf32>
    %42 = arith.addf %40, %41 : vector<64x1xf32>
    %43 = math.rsqrt %42 : vector<64x1xf32>
    %44 = vector.broadcast %43 : vector<64x1xf32> to vector<64x64xf32>
    %45 = arith.mulf %34, %44 : vector<64x64xf32>
    %46 = vector.broadcast %14 : vector<64x1xf32> to vector<64x64xf32>
    %47 = arith.mulf %45, %46 : vector<64x64xf32>
    %48 = vector.broadcast %15 : vector<64x1xf32> to vector<64x64xf32>
    %49 = arith.addf %47, %48 : vector<64x64xf32>
    %cst_42 = arith.constant 0.000000e+00 : f32
    %50 = vector.broadcast %cst_42 : f32 to vector<64x64xf32>
    %51 = arith.subf %50, %49 : vector<64x64xf32>
    %52 = math.exp %51 : vector<64x64xf32>
    %cst_43 = arith.constant 1.000000e+00 : f32
    %53 = vector.broadcast %cst_43 : f32 to vector<64x64xf32>
    %54 = arith.addf %53, %52 : vector<64x64xf32>
    %cst_44 = arith.constant 1.000000e+00 : f32
    %55 = vector.broadcast %cst_44 : f32 to vector<64x64xf32>
    %56 = arith.divf %55, %54 : vector<64x64xf32>
    %57 = arith.mulf %49, %56 : vector<64x64xf32>
    %cst_45 = arith.constant dense<0.000000e+00> : vector<288x64xf32>
    %58 = tpu.matmul %20, %57, %cst_45 {dimension_numbers = #tpu.dot_dimension_numbers<[1], [0], [0], [1], [0, 0, 1, 1], [], []>} : vector<288x64xf32>, vector<64x64xf32>, vector<288x64xf32> -> vector<288x64xf32>
    %59 = vector.extract_strided_slice %58 {offsets = [0, 0], sizes = [32, 64], strides = [1, 1]} : vector<288x64xf32> to vector<32x64xf32>
    %c0_46 = arith.constant 0 : index
    %c0_47 = arith.constant 0 : index
    %c0_48 = arith.constant 0 : index
    %60 = vector.load %arg17[%c0_46, %c0_47, %c0_48] : memref<9x64x64xf32, #tpu.memory_space<vmem>>, vector<1x64x64xf32>
    %61 = vector.shape_cast %60 : vector<1x64x64xf32> to vector<64x64xf32>
    %cst_49 = arith.constant dense<0.000000e+00> : vector<32x64xf32>
    %62 = tpu.matmul %59, %61, %cst_49 {dimension_numbers = #tpu.dot_dimension_numbers<[1], [0], [0], [1], [0, 0, 1, 1], [], []>} : vector<32x64xf32>, vector<64x64xf32>, vector<32x64xf32> -> vector<32x64xf32>
    %63 = vector.extract_strided_slice %58 {offsets = [32, 0], sizes = [32, 64], strides = [1, 1]} : vector<288x64xf32> to vector<32x64xf32>
    %c1 = arith.constant 1 : index
    %c0_50 = arith.constant 0 : index
    %c0_51 = arith.constant 0 : index
    %64 = vector.load %arg17[%c1, %c0_50, %c0_51] : memref<9x64x64xf32, #tpu.memory_space<vmem>>, vector<1x64x64xf32>
    %65 = vector.shape_cast %64 : vector<1x64x64xf32> to vector<64x64xf32>
    %cst_52 = arith.constant dense<0.000000e+00> : vector<32x64xf32>
    %66 = tpu.matmul %63, %65, %cst_52 {dimension_numbers = #tpu.dot_dimension_numbers<[1], [0], [0], [1], [0, 0, 1, 1], [], []>} : vector<32x64xf32>, vector<64x64xf32>, vector<32x64xf32> -> vector<32x64xf32>
    %67 = arith.addf %62, %66 : vector<32x64xf32>
    %68 = vector.extract_strided_slice %58 {offsets = [64, 0], sizes = [32, 64], strides = [1, 1]} : vector<288x64xf32> to vector<32x64xf32>
    %c2 = arith.constant 2 : index
    %c0_53 = arith.constant 0 : index
    %c0_54 = arith.constant 0 : index
    %69 = vector.load %arg17[%c2, %c0_53, %c0_54] : memref<9x64x64xf32, #tpu.memory_space<vmem>>, vector<1x64x64xf32>
    %70 = vector.shape_cast %69 : vector<1x64x64xf32> to vector<64x64xf32>
    %cst_55 = arith.constant dense<0.000000e+00> : vector<32x64xf32>
    %71 = tpu.matmul %68, %70, %cst_55 {dimension_numbers = #tpu.dot_dimension_numbers<[1], [0], [0], [1], [0, 0, 1, 1], [], []>} : vector<32x64xf32>, vector<64x64xf32>, vector<32x64xf32> -> vector<32x64xf32>
    %72 = arith.addf %67, %71 : vector<32x64xf32>
    %73 = vector.extract_strided_slice %58 {offsets = [96, 0], sizes = [32, 64], strides = [1, 1]} : vector<288x64xf32> to vector<32x64xf32>
    %c3 = arith.constant 3 : index
    %c0_56 = arith.constant 0 : index
    %c0_57 = arith.constant 0 : index
    %74 = vector.load %arg17[%c3, %c0_56, %c0_57] : memref<9x64x64xf32, #tpu.memory_space<vmem>>, vector<1x64x64xf32>
    %75 = vector.shape_cast %74 : vector<1x64x64xf32> to vector<64x64xf32>
    %cst_58 = arith.constant dense<0.000000e+00> : vector<32x64xf32>
    %76 = tpu.matmul %73, %75, %cst_58 {dimension_numbers = #tpu.dot_dimension_numbers<[1], [0], [0], [1], [0, 0, 1, 1], [], []>} : vector<32x64xf32>, vector<64x64xf32>, vector<32x64xf32> -> vector<32x64xf32>
    %77 = arith.addf %72, %76 : vector<32x64xf32>
    %78 = vector.extract_strided_slice %58 {offsets = [128, 0], sizes = [32, 64], strides = [1, 1]} : vector<288x64xf32> to vector<32x64xf32>
    %c4 = arith.constant 4 : index
    %c0_59 = arith.constant 0 : index
    %c0_60 = arith.constant 0 : index
    %79 = vector.load %arg17[%c4, %c0_59, %c0_60] : memref<9x64x64xf32, #tpu.memory_space<vmem>>, vector<1x64x64xf32>
    %80 = vector.shape_cast %79 : vector<1x64x64xf32> to vector<64x64xf32>
    %cst_61 = arith.constant dense<0.000000e+00> : vector<32x64xf32>
    %81 = tpu.matmul %78, %80, %cst_61 {dimension_numbers = #tpu.dot_dimension_numbers<[1], [0], [0], [1], [0, 0, 1, 1], [], []>} : vector<32x64xf32>, vector<64x64xf32>, vector<32x64xf32> -> vector<32x64xf32>
    %82 = arith.addf %77, %81 : vector<32x64xf32>
    %83 = vector.extract_strided_slice %58 {offsets = [160, 0], sizes = [32, 64], strides = [1, 1]} : vector<288x64xf32> to vector<32x64xf32>
    %c5 = arith.constant 5 : index
    %c0_62 = arith.constant 0 : index
    %c0_63 = arith.constant 0 : index
    %84 = vector.load %arg17[%c5, %c0_62, %c0_63] : memref<9x64x64xf32, #tpu.memory_space<vmem>>, vector<1x64x64xf32>
    %85 = vector.shape_cast %84 : vector<1x64x64xf32> to vector<64x64xf32>
    %cst_64 = arith.constant dense<0.000000e+00> : vector<32x64xf32>
    %86 = tpu.matmul %83, %85, %cst_64 {dimension_numbers = #tpu.dot_dimension_numbers<[1], [0], [0], [1], [0, 0, 1, 1], [], []>} : vector<32x64xf32>, vector<64x64xf32>, vector<32x64xf32> -> vector<32x64xf32>
    %87 = arith.addf %82, %86 : vector<32x64xf32>
    %88 = vector.extract_strided_slice %58 {offsets = [192, 0], sizes = [32, 64], strides = [1, 1]} : vector<288x64xf32> to vector<32x64xf32>
    %c6 = arith.constant 6 : index
    %c0_65 = arith.constant 0 : index
    %c0_66 = arith.constant 0 : index
    %89 = vector.load %arg17[%c6, %c0_65, %c0_66] : memref<9x64x64xf32, #tpu.memory_space<vmem>>, vector<1x64x64xf32>
    %90 = vector.shape_cast %89 : vector<1x64x64xf32> to vector<64x64xf32>
    %cst_67 = arith.constant dense<0.000000e+00> : vector<32x64xf32>
    %91 = tpu.matmul %88, %90, %cst_67 {dimension_numbers = #tpu.dot_dimension_numbers<[1], [0], [0], [1], [0, 0, 1, 1], [], []>} : vector<32x64xf32>, vector<64x64xf32>, vector<32x64xf32> -> vector<32x64xf32>
    %92 = arith.addf %87, %91 : vector<32x64xf32>
    %93 = vector.extract_strided_slice %58 {offsets = [224, 0], sizes = [32, 64], strides = [1, 1]} : vector<288x64xf32> to vector<32x64xf32>
    %c7 = arith.constant 7 : index
    %c0_68 = arith.constant 0 : index
    %c0_69 = arith.constant 0 : index
    %94 = vector.load %arg17[%c7, %c0_68, %c0_69] : memref<9x64x64xf32, #tpu.memory_space<vmem>>, vector<1x64x64xf32>
    %95 = vector.shape_cast %94 : vector<1x64x64xf32> to vector<64x64xf32>
    %cst_70 = arith.constant dense<0.000000e+00> : vector<32x64xf32>
    %96 = tpu.matmul %93, %95, %cst_70 {dimension_numbers = #tpu.dot_dimension_numbers<[1], [0], [0], [1], [0, 0, 1, 1], [], []>} : vector<32x64xf32>, vector<64x64xf32>, vector<32x64xf32> -> vector<32x64xf32>
    %97 = arith.addf %92, %96 : vector<32x64xf32>
    %98 = vector.extract_strided_slice %58 {offsets = [256, 0], sizes = [32, 64], strides = [1, 1]} : vector<288x64xf32> to vector<32x64xf32>
    %c8 = arith.constant 8 : index
    %c0_71 = arith.constant 0 : index
    %c0_72 = arith.constant 0 : index
    %99 = vector.load %arg17[%c8, %c0_71, %c0_72] : memref<9x64x64xf32, #tpu.memory_space<vmem>>, vector<1x64x64xf32>
    %100 = vector.shape_cast %99 : vector<1x64x64xf32> to vector<64x64xf32>
    %cst_73 = arith.constant dense<0.000000e+00> : vector<32x64xf32>
    %101 = tpu.matmul %98, %100, %cst_73 {dimension_numbers = #tpu.dot_dimension_numbers<[1], [0], [0], [1], [0, 0, 1, 1], [], []>} : vector<32x64xf32>, vector<64x64xf32>, vector<32x64xf32> -> vector<32x64xf32>
    %102 = arith.addf %97, %101 : vector<32x64xf32>
    %103 = vector.broadcast %21 : vector<32x1xf32> to vector<32x64xf32>
    %104 = arith.addf %102, %103 : vector<32x64xf32>
    %105 = vector.extract_strided_slice %13 {offsets = [0, 0], sizes = [32, 1], strides = [1, 1]} : vector<32x2xf32> to vector<32x1xf32>
    %106 = vector.broadcast %105 : vector<32x1xf32> to vector<32x64xf32>
    %107 = arith.addf %104, %106 : vector<32x64xf32>
    %cst_74 = arith.constant dense<0.000000e+00> : vector<32x64xf32>
    %108 = tpu.matmul %19, %107, %cst_74 {dimension_numbers = #tpu.dot_dimension_numbers<[1], [0], [0], [1], [0, 0, 1, 1], [], []>} : vector<32x32xf32>, vector<32x64xf32>, vector<32x64xf32> -> vector<32x64xf32>
    %cst_75 = arith.constant dense<0.000000e+00> : vector<32xf32>
    %109 = vector.multi_reduction <add>, %108, %cst_75 [1] : vector<32x64xf32> to vector<32xf32>
    %110 = vector.shape_cast %109 : vector<32xf32> to vector<32x1xf32>
    %cst_76 = arith.constant 3.906250e-03 : f32
    %111 = vector.broadcast %cst_76 : f32 to vector<32x1xf32>
    %112 = arith.mulf %110, %111 : vector<32x1xf32>
    %113 = vector.broadcast %112 : vector<32x1xf32> to vector<32x64xf32>
    %114 = arith.subf %107, %113 : vector<32x64xf32>
    %115 = arith.mulf %114, %114 : vector<32x64xf32>
    %cst_77 = arith.constant dense<0.000000e+00> : vector<32x64xf32>
    %116 = tpu.matmul %19, %115, %cst_77 {dimension_numbers = #tpu.dot_dimension_numbers<[1], [0], [0], [1], [0, 0, 1, 1], [], []>} : vector<32x32xf32>, vector<32x64xf32>, vector<32x64xf32> -> vector<32x64xf32>
    %cst_78 = arith.constant dense<0.000000e+00> : vector<32xf32>
    %117 = vector.multi_reduction <add>, %116, %cst_78 [1] : vector<32x64xf32> to vector<32xf32>
    %118 = vector.shape_cast %117 : vector<32xf32> to vector<32x1xf32>
    %cst_79 = arith.constant 3.906250e-03 : f32
    %119 = vector.broadcast %cst_79 : f32 to vector<32x1xf32>
    %120 = arith.mulf %118, %119 : vector<32x1xf32>
    %cst_80 = arith.constant 9.99999974E-6 : f32
    %121 = vector.broadcast %cst_80 : f32 to vector<32x1xf32>
    %122 = arith.addf %120, %121 : vector<32x1xf32>
    %123 = math.rsqrt %122 : vector<32x1xf32>
    %124 = vector.broadcast %123 : vector<32x1xf32> to vector<32x64xf32>
    %125 = arith.mulf %114, %124 : vector<32x64xf32>
    %126 = vector.broadcast %17 : vector<32x1xf32> to vector<32x64xf32>
    %127 = arith.mulf %125, %126 : vector<32x64xf32>
    %128 = vector.broadcast %18 : vector<32x1xf32> to vector<32x64xf32>
    %129 = arith.addf %127, %128 : vector<32x64xf32>
    %cst_81 = arith.constant 0.000000e+00 : f32
    %130 = vector.broadcast %cst_81 : f32 to vector<32x64xf32>
    %131 = arith.subf %130, %129 : vector<32x64xf32>
    %132 = math.exp %131 : vector<32x64xf32>
    %cst_82 = arith.constant 1.000000e+00 : f32
    %133 = vector.broadcast %cst_82 : f32 to vector<32x64xf32>
    %134 = arith.addf %133, %132 : vector<32x64xf32>
    %cst_83 = arith.constant 1.000000e+00 : f32
    %135 = vector.broadcast %cst_83 : f32 to vector<32x64xf32>
    %136 = arith.divf %135, %134 : vector<32x64xf32>
    %137 = arith.mulf %129, %136 : vector<32x64xf32>
    %cst_84 = arith.constant dense<0.000000e+00> : vector<288x64xf32>
    %138 = tpu.matmul %22, %137, %cst_84 {dimension_numbers = #tpu.dot_dimension_numbers<[1], [0], [0], [1], [0, 0, 1, 1], [], []>} : vector<288x32xf32>, vector<32x64xf32>, vector<288x64xf32> -> vector<288x64xf32>
    %139 = vector.extract_strided_slice %138 {offsets = [0, 0], sizes = [32, 64], strides = [1, 1]} : vector<288x64xf32> to vector<32x64xf32>
    %c0_85 = arith.constant 0 : index
    %c0_86 = arith.constant 0 : index
    %c0_87 = arith.constant 0 : index
    %140 = vector.load %arg17[%c0_85, %c0_86, %c0_87] : memref<9x64x64xf32, #tpu.memory_space<vmem>>, vector<1x64x64xf32>
    %141 = vector.shape_cast %140 : vector<1x64x64xf32> to vector<64x64xf32>
    %cst_88 = arith.constant dense<0.000000e+00> : vector<32x64xf32>
    %142 = tpu.matmul %139, %141, %cst_88 {dimension_numbers = #tpu.dot_dimension_numbers<[1], [0], [0], [1], [0, 0, 1, 1], [], []>} : vector<32x64xf32>, vector<64x64xf32>, vector<32x64xf32> -> vector<32x64xf32>
    %143 = vector.extract_strided_slice %138 {offsets = [32, 0], sizes = [32, 64], strides = [1, 1]} : vector<288x64xf32> to vector<32x64xf32>
    %c1_89 = arith.constant 1 : index
    %c0_90 = arith.constant 0 : index
    %c0_91 = arith.constant 0 : index
    %144 = vector.load %arg17[%c1_89, %c0_90, %c0_91] : memref<9x64x64xf32, #tpu.memory_space<vmem>>, vector<1x64x64xf32>
    %145 = vector.shape_cast %144 : vector<1x64x64xf32> to vector<64x64xf32>
    %cst_92 = arith.constant dense<0.000000e+00> : vector<32x64xf32>
    %146 = tpu.matmul %143, %145, %cst_92 {dimension_numbers = #tpu.dot_dimension_numbers<[1], [0], [0], [1], [0, 0, 1, 1], [], []>} : vector<32x64xf32>, vector<64x64xf32>, vector<32x64xf32> -> vector<32x64xf32>
    %147 = arith.addf %142, %146 : vector<32x64xf32>
    %148 = vector.extract_strided_slice %138 {offsets = [64, 0], sizes = [32, 64], strides = [1, 1]} : vector<288x64xf32> to vector<32x64xf32>
    %c2_93 = arith.constant 2 : index
    %c0_94 = arith.constant 0 : index
    %c0_95 = arith.constant 0 : index
    %149 = vector.load %arg17[%c2_93, %c0_94, %c0_95] : memref<9x64x64xf32, #tpu.memory_space<vmem>>, vector<1x64x64xf32>
    %150 = vector.shape_cast %149 : vector<1x64x64xf32> to vector<64x64xf32>
    %cst_96 = arith.constant dense<0.000000e+00> : vector<32x64xf32>
    %151 = tpu.matmul %148, %150, %cst_96 {dimension_numbers = #tpu.dot_dimension_numbers<[1], [0], [0], [1], [0, 0, 1, 1], [], []>} : vector<32x64xf32>, vector<64x64xf32>, vector<32x64xf32> -> vector<32x64xf32>
    %152 = arith.addf %147, %151 : vector<32x64xf32>
    %153 = vector.extract_strided_slice %138 {offsets = [96, 0], sizes = [32, 64], strides = [1, 1]} : vector<288x64xf32> to vector<32x64xf32>
    %c3_97 = arith.constant 3 : index
    %c0_98 = arith.constant 0 : index
    %c0_99 = arith.constant 0 : index
    %154 = vector.load %arg17[%c3_97, %c0_98, %c0_99] : memref<9x64x64xf32, #tpu.memory_space<vmem>>, vector<1x64x64xf32>
    %155 = vector.shape_cast %154 : vector<1x64x64xf32> to vector<64x64xf32>
    %cst_100 = arith.constant dense<0.000000e+00> : vector<32x64xf32>
    %156 = tpu.matmul %153, %155, %cst_100 {dimension_numbers = #tpu.dot_dimension_numbers<[1], [0], [0], [1], [0, 0, 1, 1], [], []>} : vector<32x64xf32>, vector<64x64xf32>, vector<32x64xf32> -> vector<32x64xf32>
    %157 = arith.addf %152, %156 : vector<32x64xf32>
    %158 = vector.extract_strided_slice %138 {offsets = [128, 0], sizes = [32, 64], strides = [1, 1]} : vector<288x64xf32> to vector<32x64xf32>
    %c4_101 = arith.constant 4 : index
    %c0_102 = arith.constant 0 : index
    %c0_103 = arith.constant 0 : index
    %159 = vector.load %arg17[%c4_101, %c0_102, %c0_103] : memref<9x64x64xf32, #tpu.memory_space<vmem>>, vector<1x64x64xf32>
    %160 = vector.shape_cast %159 : vector<1x64x64xf32> to vector<64x64xf32>
    %cst_104 = arith.constant dense<0.000000e+00> : vector<32x64xf32>
    %161 = tpu.matmul %158, %160, %cst_104 {dimension_numbers = #tpu.dot_dimension_numbers<[1], [0], [0], [1], [0, 0, 1, 1], [], []>} : vector<32x64xf32>, vector<64x64xf32>, vector<32x64xf32> -> vector<32x64xf32>
    %162 = arith.addf %157, %161 : vector<32x64xf32>
    %163 = vector.extract_strided_slice %138 {offsets = [160, 0], sizes = [32, 64], strides = [1, 1]} : vector<288x64xf32> to vector<32x64xf32>
    %c5_105 = arith.constant 5 : index
    %c0_106 = arith.constant 0 : index
    %c0_107 = arith.constant 0 : index
    %164 = vector.load %arg17[%c5_105, %c0_106, %c0_107] : memref<9x64x64xf32, #tpu.memory_space<vmem>>, vector<1x64x64xf32>
    %165 = vector.shape_cast %164 : vector<1x64x64xf32> to vector<64x64xf32>
    %cst_108 = arith.constant dense<0.000000e+00> : vector<32x64xf32>
    %166 = tpu.matmul %163, %165, %cst_108 {dimension_numbers = #tpu.dot_dimension_numbers<[1], [0], [0], [1], [0, 0, 1, 1], [], []>} : vector<32x64xf32>, vector<64x64xf32>, vector<32x64xf32> -> vector<32x64xf32>
    %167 = arith.addf %162, %166 : vector<32x64xf32>
    %168 = vector.extract_strided_slice %138 {offsets = [192, 0], sizes = [32, 64], strides = [1, 1]} : vector<288x64xf32> to vector<32x64xf32>
    %c6_109 = arith.constant 6 : index
    %c0_110 = arith.constant 0 : index
    %c0_111 = arith.constant 0 : index
    %169 = vector.load %arg17[%c6_109, %c0_110, %c0_111] : memref<9x64x64xf32, #tpu.memory_space<vmem>>, vector<1x64x64xf32>
    %170 = vector.shape_cast %169 : vector<1x64x64xf32> to vector<64x64xf32>
    %cst_112 = arith.constant dense<0.000000e+00> : vector<32x64xf32>
    %171 = tpu.matmul %168, %170, %cst_112 {dimension_numbers = #tpu.dot_dimension_numbers<[1], [0], [0], [1], [0, 0, 1, 1], [], []>} : vector<32x64xf32>, vector<64x64xf32>, vector<32x64xf32> -> vector<32x64xf32>
    %172 = arith.addf %167, %171 : vector<32x64xf32>
    %173 = vector.extract_strided_slice %138 {offsets = [224, 0], sizes = [32, 64], strides = [1, 1]} : vector<288x64xf32> to vector<32x64xf32>
    %c7_113 = arith.constant 7 : index
    %c0_114 = arith.constant 0 : index
    %c0_115 = arith.constant 0 : index
    %174 = vector.load %arg17[%c7_113, %c0_114, %c0_115] : memref<9x64x64xf32, #tpu.memory_space<vmem>>, vector<1x64x64xf32>
    %175 = vector.shape_cast %174 : vector<1x64x64xf32> to vector<64x64xf32>
    %cst_116 = arith.constant dense<0.000000e+00> : vector<32x64xf32>
    %176 = tpu.matmul %173, %175, %cst_116 {dimension_numbers = #tpu.dot_dimension_numbers<[1], [0], [0], [1], [0, 0, 1, 1], [], []>} : vector<32x64xf32>, vector<64x64xf32>, vector<32x64xf32> -> vector<32x64xf32>
    %177 = arith.addf %172, %176 : vector<32x64xf32>
    %178 = vector.extract_strided_slice %138 {offsets = [256, 0], sizes = [32, 64], strides = [1, 1]} : vector<288x64xf32> to vector<32x64xf32>
    %c8_117 = arith.constant 8 : index
    %c0_118 = arith.constant 0 : index
    %c0_119 = arith.constant 0 : index
    %179 = vector.load %arg17[%c8_117, %c0_118, %c0_119] : memref<9x64x64xf32, #tpu.memory_space<vmem>>, vector<1x64x64xf32>
    %180 = vector.shape_cast %179 : vector<1x64x64xf32> to vector<64x64xf32>
    %cst_120 = arith.constant dense<0.000000e+00> : vector<32x64xf32>
    %181 = tpu.matmul %178, %180, %cst_120 {dimension_numbers = #tpu.dot_dimension_numbers<[1], [0], [0], [1], [0, 0, 1, 1], [], []>} : vector<32x64xf32>, vector<64x64xf32>, vector<32x64xf32> -> vector<32x64xf32>
    %182 = arith.addf %177, %181 : vector<32x64xf32>
    %183 = vector.broadcast %23 : vector<32x1xf32> to vector<32x64xf32>
    %184 = arith.addf %182, %183 : vector<32x64xf32>
    %cst_121 = arith.constant dense<0.000000e+00> : vector<32x64xf32>
    %185 = tpu.matmul %24, %27, %cst_121 {dimension_numbers = #tpu.dot_dimension_numbers<[1], [0], [0], [1], [0, 0, 1, 1], [], []>} : vector<32x64xf32>, vector<64x64xf32>, vector<32x64xf32> -> vector<32x64xf32>
    %186 = vector.broadcast %25 : vector<32x1xf32> to vector<32x64xf32>
    %187 = arith.addf %185, %186 : vector<32x64xf32>
    %188 = arith.addf %184, %187 : vector<32x64xf32>
    %c0_122 = arith.constant 0 : index
    %c0_123 = arith.constant 0 : index
    %c0_124 = arith.constant 0 : index
    %189 = vector.load %arg18[%c0_122, %c0_123, %c0_124] : memref<2x32x64xf32, #tpu.memory_space<vmem>>, vector<1x32x64xf32>
    %190 = vector.shape_cast %189 : vector<1x32x64xf32> to vector<32x64xf32>
    %191 = vector.shape_cast %188 : vector<32x64xf32> to vector<1x32x64xf32>
    tpu.vector_store %arg18[%c0_122, %c0_123, %c0_124], %191 {strides = array<i32>} : memref<2x32x64xf32, #tpu.memory_space<vmem>>, vector<1x32x64xf32>,
    %c1_125 = arith.constant 1 : index
    %c0_126 = arith.constant 0 : index
    %c0_127 = arith.constant 0 : index
    %192 = vector.load %arg1[%c1_125, %c0_126, %c0_127] : memref<2x64x64xf32, #tpu.memory_space<vmem>>, vector<1x64x64xf32>
    %193 = vector.shape_cast %192 : vector<1x64x64xf32> to vector<64x64xf32>
    %cst_128 = arith.constant dense<0.000000e+00> : vector<64x64xf32>
    %194 = tpu.matmul %16, %193, %cst_128 {dimension_numbers = #tpu.dot_dimension_numbers<[1], [0], [0], [1], [0, 0, 1, 1], [], []>} : vector<64x64xf32>, vector<64x64xf32>, vector<64x64xf32> -> vector<64x64xf32>
    %cst_129 = arith.constant dense<0.000000e+00> : vector<64xf32>
    %195 = vector.multi_reduction <add>, %194, %cst_129 [1] : vector<64x64xf32> to vector<64xf32>
    %196 = vector.shape_cast %195 : vector<64xf32> to vector<64x1xf32>
    %cst_130 = arith.constant 0.001953125 : f32
    %197 = vector.broadcast %cst_130 : f32 to vector<64x1xf32>
    %198 = arith.mulf %196, %197 : vector<64x1xf32>
    %199 = vector.broadcast %198 : vector<64x1xf32> to vector<64x64xf32>
    %200 = arith.subf %193, %199 : vector<64x64xf32>
    %201 = arith.mulf %200, %200 : vector<64x64xf32>
    %cst_131 = arith.constant dense<0.000000e+00> : vector<64x64xf32>
    %202 = tpu.matmul %16, %201, %cst_131 {dimension_numbers = #tpu.dot_dimension_numbers<[1], [0], [0], [1], [0, 0, 1, 1], [], []>} : vector<64x64xf32>, vector<64x64xf32>, vector<64x64xf32> -> vector<64x64xf32>
    %cst_132 = arith.constant dense<0.000000e+00> : vector<64xf32>
    %203 = vector.multi_reduction <add>, %202, %cst_132 [1] : vector<64x64xf32> to vector<64xf32>
    %204 = vector.shape_cast %203 : vector<64xf32> to vector<64x1xf32>
    %cst_133 = arith.constant 0.001953125 : f32
    %205 = vector.broadcast %cst_133 : f32 to vector<64x1xf32>
    %206 = arith.mulf %204, %205 : vector<64x1xf32>
    %cst_134 = arith.constant 9.99999974E-6 : f32
    %207 = vector.broadcast %cst_134 : f32 to vector<64x1xf32>
    %208 = arith.addf %206, %207 : vector<64x1xf32>
    %209 = math.rsqrt %208 : vector<64x1xf32>
    %210 = vector.broadcast %209 : vector<64x1xf32> to vector<64x64xf32>
    %211 = arith.mulf %200, %210 : vector<64x64xf32>
    %212 = vector.broadcast %14 : vector<64x1xf32> to vector<64x64xf32>
    %213 = arith.mulf %211, %212 : vector<64x64xf32>
    %214 = vector.broadcast %15 : vector<64x1xf32> to vector<64x64xf32>
    %215 = arith.addf %213, %214 : vector<64x64xf32>
    %cst_135 = arith.constant 0.000000e+00 : f32
    %216 = vector.broadcast %cst_135 : f32 to vector<64x64xf32>
    %217 = arith.subf %216, %215 : vector<64x64xf32>
    %218 = math.exp %217 : vector<64x64xf32>
    %cst_136 = arith.constant 1.000000e+00 : f32
    %219 = vector.broadcast %cst_136 : f32 to vector<64x64xf32>
    %220 = arith.addf %219, %218 : vector<64x64xf32>
    %cst_137 = arith.constant 1.000000e+00 : f32
    %221 = vector.broadcast %cst_137 : f32 to vector<64x64xf32>
    %222 = arith.divf %221, %220 : vector<64x64xf32>
    %223 = arith.mulf %215, %222 : vector<64x64xf32>
    %cst_138 = arith.constant dense<0.000000e+00> : vector<288x64xf32>
    %224 = tpu.matmul %20, %223, %cst_138 {dimension_numbers = #tpu.dot_dimension_numbers<[1], [0], [0], [1], [0, 0, 1, 1], [], []>} : vector<288x64xf32>, vector<64x64xf32>, vector<288x64xf32> -> vector<288x64xf32>
    %225 = vector.extract_strided_slice %224 {offsets = [0, 0], sizes = [32, 64], strides = [1, 1]} : vector<288x64xf32> to vector<32x64xf32>
    %c0_139 = arith.constant 0 : index
    %c0_140 = arith.constant 0 : index
    %c0_141 = arith.constant 0 : index
    %226 = vector.load %arg17[%c0_139, %c0_140, %c0_141] : memref<9x64x64xf32, #tpu.memory_space<vmem>>, vector<1x64x64xf32>
    %227 = vector.shape_cast %226 : vector<1x64x64xf32> to vector<64x64xf32>
    %cst_142 = arith.constant dense<0.000000e+00> : vector<32x64xf32>
    %228 = tpu.matmul %225, %227, %cst_142 {dimension_numbers = #tpu.dot_dimension_numbers<[1], [0], [0], [1], [0, 0, 1, 1], [], []>} : vector<32x64xf32>, vector<64x64xf32>, vector<32x64xf32> -> vector<32x64xf32>
    %229 = vector.extract_strided_slice %224 {offsets = [32, 0], sizes = [32, 64], strides = [1, 1]} : vector<288x64xf32> to vector<32x64xf32>
    %c1_143 = arith.constant 1 : index
    %c0_144 = arith.constant 0 : index
    %c0_145 = arith.constant 0 : index
    %230 = vector.load %arg17[%c1_143, %c0_144, %c0_145] : memref<9x64x64xf32, #tpu.memory_space<vmem>>, vector<1x64x64xf32>
    %231 = vector.shape_cast %230 : vector<1x64x64xf32> to vector<64x64xf32>
    %cst_146 = arith.constant dense<0.000000e+00> : vector<32x64xf32>
    %232 = tpu.matmul %229, %231, %cst_146 {dimension_numbers = #tpu.dot_dimension_numbers<[1], [0], [0], [1], [0, 0, 1, 1], [], []>} : vector<32x64xf32>, vector<64x64xf32>, vector<32x64xf32> -> vector<32x64xf32>
    %233 = arith.addf %228, %232 : vector<32x64xf32>
    %234 = vector.extract_strided_slice %224 {offsets = [64, 0], sizes = [32, 64], strides = [1, 1]} : vector<288x64xf32> to vector<32x64xf32>
    %c2_147 = arith.constant 2 : index
    %c0_148 = arith.constant 0 : index
    %c0_149 = arith.constant 0 : index
    %235 = vector.load %arg17[%c2_147, %c0_148, %c0_149] : memref<9x64x64xf32, #tpu.memory_space<vmem>>, vector<1x64x64xf32>
    %236 = vector.shape_cast %235 : vector<1x64x64xf32> to vector<64x64xf32>
    %cst_150 = arith.constant dense<0.000000e+00> : vector<32x64xf32>
    %237 = tpu.matmul %234, %236, %cst_150 {dimension_numbers = #tpu.dot_dimension_numbers<[1], [0], [0], [1], [0, 0, 1, 1], [], []>} : vector<32x64xf32>, vector<64x64xf32>, vector<32x64xf32> -> vector<32x64xf32>
    %238 = arith.addf %233, %237 : vector<32x64xf32>
    %239 = vector.extract_strided_slice %224 {offsets = [96, 0], sizes = [32, 64], strides = [1, 1]} : vector<288x64xf32> to vector<32x64xf32>
    %c3_151 = arith.constant 3 : index
    %c0_152 = arith.constant 0 : index
    %c0_153 = arith.constant 0 : index
    %240 = vector.load %arg17[%c3_151, %c0_152, %c0_153] : memref<9x64x64xf32, #tpu.memory_space<vmem>>, vector<1x64x64xf32>
    %241 = vector.shape_cast %240 : vector<1x64x64xf32> to vector<64x64xf32>
    %cst_154 = arith.constant dense<0.000000e+00> : vector<32x64xf32>
    %242 = tpu.matmul %239, %241, %cst_154 {dimension_numbers = #tpu.dot_dimension_numbers<[1], [0], [0], [1], [0, 0, 1, 1], [], []>} : vector<32x64xf32>, vector<64x64xf32>, vector<32x64xf32> -> vector<32x64xf32>
    %243 = arith.addf %238, %242 : vector<32x64xf32>
    %244 = vector.extract_strided_slice %224 {offsets = [128, 0], sizes = [32, 64], strides = [1, 1]} : vector<288x64xf32> to vector<32x64xf32>
    %c4_155 = arith.constant 4 : index
    %c0_156 = arith.constant 0 : index
    %c0_157 = arith.constant 0 : index
    %245 = vector.load %arg17[%c4_155, %c0_156, %c0_157] : memref<9x64x64xf32, #tpu.memory_space<vmem>>, vector<1x64x64xf32>
    %246 = vector.shape_cast %245 : vector<1x64x64xf32> to vector<64x64xf32>
    %cst_158 = arith.constant dense<0.000000e+00> : vector<32x64xf32>
    %247 = tpu.matmul %244, %246, %cst_158 {dimension_numbers = #tpu.dot_dimension_numbers<[1], [0], [0], [1], [0, 0, 1, 1], [], []>} : vector<32x64xf32>, vector<64x64xf32>, vector<32x64xf32> -> vector<32x64xf32>
    %248 = arith.addf %243, %247 : vector<32x64xf32>
    %249 = vector.extract_strided_slice %224 {offsets = [160, 0], sizes = [32, 64], strides = [1, 1]} : vector<288x64xf32> to vector<32x64xf32>
    %c5_159 = arith.constant 5 : index
    %c0_160 = arith.constant 0 : index
    %c0_161 = arith.constant 0 : index
    %250 = vector.load %arg17[%c5_159, %c0_160, %c0_161] : memref<9x64x64xf32, #tpu.memory_space<vmem>>, vector<1x64x64xf32>
    %251 = vector.shape_cast %250 : vector<1x64x64xf32> to vector<64x64xf32>
    %cst_162 = arith.constant dense<0.000000e+00> : vector<32x64xf32>
    %252 = tpu.matmul %249, %251, %cst_162 {dimension_numbers = #tpu.dot_dimension_numbers<[1], [0], [0], [1], [0, 0, 1, 1], [], []>} : vector<32x64xf32>, vector<64x64xf32>, vector<32x64xf32> -> vector<32x64xf32>
    %253 = arith.addf %248, %252 : vector<32x64xf32>
    %254 = vector.extract_strided_slice %224 {offsets = [192, 0], sizes = [32, 64], strides = [1, 1]} : vector<288x64xf32> to vector<32x64xf32>
    %c6_163 = arith.constant 6 : index
    %c0_164 = arith.constant 0 : index
    %c0_165 = arith.constant 0 : index
    %255 = vector.load %arg17[%c6_163, %c0_164, %c0_165] : memref<9x64x64xf32, #tpu.memory_space<vmem>>, vector<1x64x64xf32>
    %256 = vector.shape_cast %255 : vector<1x64x64xf32> to vector<64x64xf32>
    %cst_166 = arith.constant dense<0.000000e+00> : vector<32x64xf32>
    %257 = tpu.matmul %254, %256, %cst_166 {dimension_numbers = #tpu.dot_dimension_numbers<[1], [0], [0], [1], [0, 0, 1, 1], [], []>} : vector<32x64xf32>, vector<64x64xf32>, vector<32x64xf32> -> vector<32x64xf32>
    %258 = arith.addf %253, %257 : vector<32x64xf32>
    %259 = vector.extract_strided_slice %224 {offsets = [224, 0], sizes = [32, 64], strides = [1, 1]} : vector<288x64xf32> to vector<32x64xf32>
    %c7_167 = arith.constant 7 : index
    %c0_168 = arith.constant 0 : index
    %c0_169 = arith.constant 0 : index
    %260 = vector.load %arg17[%c7_167, %c0_168, %c0_169] : memref<9x64x64xf32, #tpu.memory_space<vmem>>, vector<1x64x64xf32>
    %261 = vector.shape_cast %260 : vector<1x64x64xf32> to vector<64x64xf32>
    %cst_170 = arith.constant dense<0.000000e+00> : vector<32x64xf32>
    %262 = tpu.matmul %259, %261, %cst_170 {dimension_numbers = #tpu.dot_dimension_numbers<[1], [0], [0], [1], [0, 0, 1, 1], [], []>} : vector<32x64xf32>, vector<64x64xf32>, vector<32x64xf32> -> vector<32x64xf32>
    %263 = arith.addf %258, %262 : vector<32x64xf32>
    %264 = vector.extract_strided_slice %224 {offsets = [256, 0], sizes = [32, 64], strides = [1, 1]} : vector<288x64xf32> to vector<32x64xf32>
    %c8_171 = arith.constant 8 : index
    %c0_172 = arith.constant 0 : index
    %c0_173 = arith.constant 0 : index
    %265 = vector.load %arg17[%c8_171, %c0_172, %c0_173] : memref<9x64x64xf32, #tpu.memory_space<vmem>>, vector<1x64x64xf32>
    %266 = vector.shape_cast %265 : vector<1x64x64xf32> to vector<64x64xf32>
    %cst_174 = arith.constant dense<0.000000e+00> : vector<32x64xf32>
    %267 = tpu.matmul %264, %266, %cst_174 {dimension_numbers = #tpu.dot_dimension_numbers<[1], [0], [0], [1], [0, 0, 1, 1], [], []>} : vector<32x64xf32>, vector<64x64xf32>, vector<32x64xf32> -> vector<32x64xf32>
    %268 = arith.addf %263, %267 : vector<32x64xf32>
    %269 = vector.broadcast %21 : vector<32x1xf32> to vector<32x64xf32>
    %270 = arith.addf %268, %269 : vector<32x64xf32>
    %271 = vector.extract_strided_slice %13 {offsets = [0, 1], sizes = [32, 1], strides = [1, 1]} : vector<32x2xf32> to vector<32x1xf32>
    %272 = vector.broadcast %271 : vector<32x1xf32> to vector<32x64xf32>
    %273 = arith.addf %270, %272 : vector<32x64xf32>
    %cst_175 = arith.constant dense<0.000000e+00> : vector<32x64xf32>
    %274 = tpu.matmul %19, %273, %cst_175 {dimension_numbers = #tpu.dot_dimension_numbers<[1], [0], [0], [1], [0, 0, 1, 1], [], []>} : vector<32x32xf32>, vector<32x64xf32>, vector<32x64xf32> -> vector<32x64xf32>
    %cst_176 = arith.constant dense<0.000000e+00> : vector<32xf32>
    %275 = vector.multi_reduction <add>, %274, %cst_176 [1] : vector<32x64xf32> to vector<32xf32>
    %276 = vector.shape_cast %275 : vector<32xf32> to vector<32x1xf32>
    %cst_177 = arith.constant 3.906250e-03 : f32
    %277 = vector.broadcast %cst_177 : f32 to vector<32x1xf32>
    %278 = arith.mulf %276, %277 : vector<32x1xf32>
    %279 = vector.broadcast %278 : vector<32x1xf32> to vector<32x64xf32>
    %280 = arith.subf %273, %279 : vector<32x64xf32>
    %281 = arith.mulf %280, %280 : vector<32x64xf32>
    %cst_178 = arith.constant dense<0.000000e+00> : vector<32x64xf32>
    %282 = tpu.matmul %19, %281, %cst_178 {dimension_numbers = #tpu.dot_dimension_numbers<[1], [0], [0], [1], [0, 0, 1, 1], [], []>} : vector<32x32xf32>, vector<32x64xf32>, vector<32x64xf32> -> vector<32x64xf32>
    %cst_179 = arith.constant dense<0.000000e+00> : vector<32xf32>
    %283 = vector.multi_reduction <add>, %282, %cst_179 [1] : vector<32x64xf32> to vector<32xf32>
    %284 = vector.shape_cast %283 : vector<32xf32> to vector<32x1xf32>
    %cst_180 = arith.constant 3.906250e-03 : f32
    %285 = vector.broadcast %cst_180 : f32 to vector<32x1xf32>
    %286 = arith.mulf %284, %285 : vector<32x1xf32>
    %cst_181 = arith.constant 9.99999974E-6 : f32
    %287 = vector.broadcast %cst_181 : f32 to vector<32x1xf32>
    %288 = arith.addf %286, %287 : vector<32x1xf32>
    %289 = math.rsqrt %288 : vector<32x1xf32>
    %290 = vector.broadcast %289 : vector<32x1xf32> to vector<32x64xf32>
    %291 = arith.mulf %280, %290 : vector<32x64xf32>
    %292 = vector.broadcast %17 : vector<32x1xf32> to vector<32x64xf32>
    %293 = arith.mulf %291, %292 : vector<32x64xf32>
    %294 = vector.broadcast %18 : vector<32x1xf32> to vector<32x64xf32>
    %295 = arith.addf %293, %294 : vector<32x64xf32>
    %cst_182 = arith.constant 0.000000e+00 : f32
    %296 = vector.broadcast %cst_182 : f32 to vector<32x64xf32>
    %297 = arith.subf %296, %295 : vector<32x64xf32>
    %298 = math.exp %297 : vector<32x64xf32>
    %cst_183 = arith.constant 1.000000e+00 : f32
    %299 = vector.broadcast %cst_183 : f32 to vector<32x64xf32>
    %300 = arith.addf %299, %298 : vector<32x64xf32>
    %cst_184 = arith.constant 1.000000e+00 : f32
    %301 = vector.broadcast %cst_184 : f32 to vector<32x64xf32>
    %302 = arith.divf %301, %300 : vector<32x64xf32>
    %303 = arith.mulf %295, %302 : vector<32x64xf32>
    %cst_185 = arith.constant dense<0.000000e+00> : vector<288x64xf32>
    %304 = tpu.matmul %22, %303, %cst_185 {dimension_numbers = #tpu.dot_dimension_numbers<[1], [0], [0], [1], [0, 0, 1, 1], [], []>} : vector<288x32xf32>, vector<32x64xf32>, vector<288x64xf32> -> vector<288x64xf32>
    %305 = vector.extract_strided_slice %304 {offsets = [0, 0], sizes = [32, 64], strides = [1, 1]} : vector<288x64xf32> to vector<32x64xf32>
    %c0_186 = arith.constant 0 : index
    %c0_187 = arith.constant 0 : index
    %c0_188 = arith.constant 0 : index
    %306 = vector.load %arg17[%c0_186, %c0_187, %c0_188] : memref<9x64x64xf32, #tpu.memory_space<vmem>>, vector<1x64x64xf32>
    %307 = vector.shape_cast %306 : vector<1x64x64xf32> to vector<64x64xf32>
    %cst_189 = arith.constant dense<0.000000e+00> : vector<32x64xf32>
    %308 = tpu.matmul %305, %307, %cst_189 {dimension_numbers = #tpu.dot_dimension_numbers<[1], [0], [0], [1], [0, 0, 1, 1], [], []>} : vector<32x64xf32>, vector<64x64xf32>, vector<32x64xf32> -> vector<32x64xf32>
    %309 = vector.extract_strided_slice %304 {offsets = [32, 0], sizes = [32, 64], strides = [1, 1]} : vector<288x64xf32> to vector<32x64xf32>
    %c1_190 = arith.constant 1 : index
    %c0_191 = arith.constant 0 : index
    %c0_192 = arith.constant 0 : index
    %310 = vector.load %arg17[%c1_190, %c0_191, %c0_192] : memref<9x64x64xf32, #tpu.memory_space<vmem>>, vector<1x64x64xf32>
    %311 = vector.shape_cast %310 : vector<1x64x64xf32> to vector<64x64xf32>
    %cst_193 = arith.constant dense<0.000000e+00> : vector<32x64xf32>
    %312 = tpu.matmul %309, %311, %cst_193 {dimension_numbers = #tpu.dot_dimension_numbers<[1], [0], [0], [1], [0, 0, 1, 1], [], []>} : vector<32x64xf32>, vector<64x64xf32>, vector<32x64xf32> -> vector<32x64xf32>
    %313 = arith.addf %308, %312 : vector<32x64xf32>
    %314 = vector.extract_strided_slice %304 {offsets = [64, 0], sizes = [32, 64], strides = [1, 1]} : vector<288x64xf32> to vector<32x64xf32>
    %c2_194 = arith.constant 2 : index
    %c0_195 = arith.constant 0 : index
    %c0_196 = arith.constant 0 : index
    %315 = vector.load %arg17[%c2_194, %c0_195, %c0_196] : memref<9x64x64xf32, #tpu.memory_space<vmem>>, vector<1x64x64xf32>
    %316 = vector.shape_cast %315 : vector<1x64x64xf32> to vector<64x64xf32>
    %cst_197 = arith.constant dense<0.000000e+00> : vector<32x64xf32>
    %317 = tpu.matmul %314, %316, %cst_197 {dimension_numbers = #tpu.dot_dimension_numbers<[1], [0], [0], [1], [0, 0, 1, 1], [], []>} : vector<32x64xf32>, vector<64x64xf32>, vector<32x64xf32> -> vector<32x64xf32>
    %318 = arith.addf %313, %317 : vector<32x64xf32>
    %319 = vector.extract_strided_slice %304 {offsets = [96, 0], sizes = [32, 64], strides = [1, 1]} : vector<288x64xf32> to vector<32x64xf32>
    %c3_198 = arith.constant 3 : index
    %c0_199 = arith.constant 0 : index
    %c0_200 = arith.constant 0 : index
    %320 = vector.load %arg17[%c3_198, %c0_199, %c0_200] : memref<9x64x64xf32, #tpu.memory_space<vmem>>, vector<1x64x64xf32>
    %321 = vector.shape_cast %320 : vector<1x64x64xf32> to vector<64x64xf32>
    %cst_201 = arith.constant dense<0.000000e+00> : vector<32x64xf32>
    %322 = tpu.matmul %319, %321, %cst_201 {dimension_numbers = #tpu.dot_dimension_numbers<[1], [0], [0], [1], [0, 0, 1, 1], [], []>} : vector<32x64xf32>, vector<64x64xf32>, vector<32x64xf32> -> vector<32x64xf32>
    %323 = arith.addf %318, %322 : vector<32x64xf32>
    %324 = vector.extract_strided_slice %304 {offsets = [128, 0], sizes = [32, 64], strides = [1, 1]} : vector<288x64xf32> to vector<32x64xf32>
    %c4_202 = arith.constant 4 : index
    %c0_203 = arith.constant 0 : index
    %c0_204 = arith.constant 0 : index
    %325 = vector.load %arg17[%c4_202, %c0_203, %c0_204] : memref<9x64x64xf32, #tpu.memory_space<vmem>>, vector<1x64x64xf32>
    %326 = vector.shape_cast %325 : vector<1x64x64xf32> to vector<64x64xf32>
    %cst_205 = arith.constant dense<0.000000e+00> : vector<32x64xf32>
    %327 = tpu.matmul %324, %326, %cst_205 {dimension_numbers = #tpu.dot_dimension_numbers<[1], [0], [0], [1], [0, 0, 1, 1], [], []>} : vector<32x64xf32>, vector<64x64xf32>, vector<32x64xf32> -> vector<32x64xf32>
    %328 = arith.addf %323, %327 : vector<32x64xf32>
    %329 = vector.extract_strided_slice %304 {offsets = [160, 0], sizes = [32, 64], strides = [1, 1]} : vector<288x64xf32> to vector<32x64xf32>
    %c5_206 = arith.constant 5 : index
    %c0_207 = arith.constant 0 : index
    %c0_208 = arith.constant 0 : index
    %330 = vector.load %arg17[%c5_206, %c0_207, %c0_208] : memref<9x64x64xf32, #tpu.memory_space<vmem>>, vector<1x64x64xf32>
    %331 = vector.shape_cast %330 : vector<1x64x64xf32> to vector<64x64xf32>
    %cst_209 = arith.constant dense<0.000000e+00> : vector<32x64xf32>
    %332 = tpu.matmul %329, %331, %cst_209 {dimension_numbers = #tpu.dot_dimension_numbers<[1], [0], [0], [1], [0, 0, 1, 1], [], []>} : vector<32x64xf32>, vector<64x64xf32>, vector<32x64xf32> -> vector<32x64xf32>
    %333 = arith.addf %328, %332 : vector<32x64xf32>
    %334 = vector.extract_strided_slice %304 {offsets = [192, 0], sizes = [32, 64], strides = [1, 1]} : vector<288x64xf32> to vector<32x64xf32>
    %c6_210 = arith.constant 6 : index
    %c0_211 = arith.constant 0 : index
    %c0_212 = arith.constant 0 : index
    %335 = vector.load %arg17[%c6_210, %c0_211, %c0_212] : memref<9x64x64xf32, #tpu.memory_space<vmem>>, vector<1x64x64xf32>
    %336 = vector.shape_cast %335 : vector<1x64x64xf32> to vector<64x64xf32>
    %cst_213 = arith.constant dense<0.000000e+00> : vector<32x64xf32>
    %337 = tpu.matmul %334, %336, %cst_213 {dimension_numbers = #tpu.dot_dimension_numbers<[1], [0], [0], [1], [0, 0, 1, 1], [], []>} : vector<32x64xf32>, vector<64x64xf32>, vector<32x64xf32> -> vector<32x64xf32>
    %338 = arith.addf %333, %337 : vector<32x64xf32>
    %339 = vector.extract_strided_slice %304 {offsets = [224, 0], sizes = [32, 64], strides = [1, 1]} : vector<288x64xf32> to vector<32x64xf32>
    %c7_214 = arith.constant 7 : index
    %c0_215 = arith.constant 0 : index
    %c0_216 = arith.constant 0 : index
    %340 = vector.load %arg17[%c7_214, %c0_215, %c0_216] : memref<9x64x64xf32, #tpu.memory_space<vmem>>, vector<1x64x64xf32>
    %341 = vector.shape_cast %340 : vector<1x64x64xf32> to vector<64x64xf32>
    %cst_217 = arith.constant dense<0.000000e+00> : vector<32x64xf32>
    %342 = tpu.matmul %339, %341, %cst_217 {dimension_numbers = #tpu.dot_dimension_numbers<[1], [0], [0], [1], [0, 0, 1, 1], [], []>} : vector<32x64xf32>, vector<64x64xf32>, vector<32x64xf32> -> vector<32x64xf32>
    %343 = arith.addf %338, %342 : vector<32x64xf32>
    %344 = vector.extract_strided_slice %304 {offsets = [256, 0], sizes = [32, 64], strides = [1, 1]} : vector<288x64xf32> to vector<32x64xf32>
    %c8_218 = arith.constant 8 : index
    %c0_219 = arith.constant 0 : index
    %c0_220 = arith.constant 0 : index
    %345 = vector.load %arg17[%c8_218, %c0_219, %c0_220] : memref<9x64x64xf32, #tpu.memory_space<vmem>>, vector<1x64x64xf32>
    %346 = vector.shape_cast %345 : vector<1x64x64xf32> to vector<64x64xf32>
    %cst_221 = arith.constant dense<0.000000e+00> : vector<32x64xf32>
    %347 = tpu.matmul %344, %346, %cst_221 {dimension_numbers = #tpu.dot_dimension_numbers<[1], [0], [0], [1], [0, 0, 1, 1], [], []>} : vector<32x64xf32>, vector<64x64xf32>, vector<32x64xf32> -> vector<32x64xf32>
    %348 = arith.addf %343, %347 : vector<32x64xf32>
    %349 = vector.broadcast %23 : vector<32x1xf32> to vector<32x64xf32>
    %350 = arith.addf %348, %349 : vector<32x64xf32>
    %cst_222 = arith.constant dense<0.000000e+00> : vector<32x64xf32>
    %351 = tpu.matmul %24, %193, %cst_222 {dimension_numbers = #tpu.dot_dimension_numbers<[1], [0], [0], [1], [0, 0, 1, 1], [], []>} : vector<32x64xf32>, vector<64x64xf32>, vector<32x64xf32> -> vector<32x64xf32>
    %352 = vector.broadcast %25 : vector<32x1xf32> to vector<32x64xf32>
    %353 = arith.addf %351, %352 : vector<32x64xf32>
    %354 = arith.addf %350, %353 : vector<32x64xf32>
    %c1_223 = arith.constant 1 : index
    %c0_224 = arith.constant 0 : index
    %c0_225 = arith.constant 0 : index
    %355 = vector.load %arg18[%c1_223, %c0_224, %c0_225] : memref<2x32x64xf32, #tpu.memory_space<vmem>>, vector<1x32x64xf32>
    %356 = vector.shape_cast %355 : vector<1x32x64xf32> to vector<32x64xf32>
    %357 = vector.shape_cast %354 : vector<32x64xf32> to vector<1x32x64xf32>
    tpu.vector_store %arg18[%c1_223, %c0_224, %c0_225], %357 {strides = array<i32>} : memref<2x32x64xf32, #tpu.memory_space<vmem>>, vector<1x32x64xf32>,
    return
  }
  func.func @transform_0(%arg0: i32) -> (i32, i32, i32) {
    %c0_i32 = arith.constant 0 : i32
    %c0_i32_0 = arith.constant 0 : i32
    %c0_i32_1 = arith.constant 0 : i32
    %c0_i32_2 = arith.constant 0 : i32
    return %c0_i32, %c0_i32_0, %c0_i32_1 : i32, i32, i32
  }
  func.func @transform_1(%arg0: i32) -> (i32, i32) {
    %c0_i32 = arith.constant 0 : i32
    %c0_i32_0 = arith.constant 0 : i32
    %c0_i32_1 = arith.constant 0 : i32
    return %c0_i32, %c0_i32_0 : i32, i32
  }
  func.func @transform_2(%arg0: i32) -> (i32, i32) {
    %c0_i32 = arith.constant 0 : i32
    %c0_i32_0 = arith.constant 0 : i32
    %c0_i32_1 = arith.constant 0 : i32
    return %c0_i32, %c0_i32_0 : i32, i32
  }
  func.func @transform_3(%arg0: i32) -> (i32, i32) {
    %c0_i32 = arith.constant 0 : i32
    %c0_i32_0 = arith.constant 0 : i32
    %c0_i32_1 = arith.constant 0 : i32
    return %c0_i32, %c0_i32_0 : i32, i32
  }
  func.func @transform_4(%arg0: i32) -> (i32, i32) {
    %c0_i32 = arith.constant 0 : i32
    %c0_i32_0 = arith.constant 0 : i32
    %c0_i32_1 = arith.constant 0 : i32
    return %c0_i32, %c0_i32_0 : i32, i32
  }
  func.func @transform_5(%arg0: i32) -> (i32, i32) {
    %c0_i32 = arith.constant 0 : i32
    %c0_i32_0 = arith.constant 0 : i32
    %c0_i32_1 = arith.constant 0 : i32
    return %c0_i32, %c0_i32_0 : i32, i32
  }
  func.func @transform_6(%arg0: i32) -> (i32, i32) {
    %c0_i32 = arith.constant 0 : i32
    %c0_i32_0 = arith.constant 0 : i32
    %c0_i32_1 = arith.constant 0 : i32
    return %c0_i32, %c0_i32_0 : i32, i32
  }
  func.func @transform_7(%arg0: i32) -> (i32, i32) {
    %c0_i32 = arith.constant 0 : i32
    %c0_i32_0 = arith.constant 0 : i32
    %c0_i32_1 = arith.constant 0 : i32
    return %c0_i32, %c0_i32_0 : i32, i32
  }
  func.func @transform_8(%arg0: i32) -> (i32, i32) {
    %c0_i32 = arith.constant 0 : i32
    %c0_i32_0 = arith.constant 0 : i32
    %c0_i32_1 = arith.constant 0 : i32
    return %c0_i32, %c0_i32_0 : i32, i32
  }
  func.func @transform_9(%arg0: i32) -> (i32, i32) {
    %c0_i32 = arith.constant 0 : i32
    %c0_i32_0 = arith.constant 0 : i32
    %c0_i32_1 = arith.constant 0 : i32
    return %c0_i32, %c0_i32_0 : i32, i32
  }
  func.func @transform_10(%arg0: i32) -> (i32, i32) {
    %c0_i32 = arith.constant 0 : i32
    %c0_i32_0 = arith.constant 0 : i32
    %c0_i32_1 = arith.constant 0 : i32
    return %c0_i32, %c0_i32_0 : i32, i32
  }
  func.func @transform_11(%arg0: i32) -> (i32, i32) {
    %c0_i32 = arith.constant 0 : i32
    %c0_i32_0 = arith.constant 0 : i32
    %c0_i32_1 = arith.constant 0 : i32
    return %c0_i32, %c0_i32_0 : i32, i32
  }
  func.func @transform_12(%arg0: i32) -> (i32, i32) {
    %c0_i32 = arith.constant 0 : i32
    %c0_i32_0 = arith.constant 0 : i32
    %c0_i32_1 = arith.constant 0 : i32
    return %c0_i32, %c0_i32_0 : i32, i32
  }
  func.func @transform_13(%arg0: i32) -> (i32, i32) {
    %c0_i32 = arith.constant 0 : i32
    %c0_i32_0 = arith.constant 0 : i32
    %c0_i32_1 = arith.constant 0 : i32
    return %c0_i32, %c0_i32_0 : i32, i32
  }
  func.func @transform_14(%arg0: i32) -> (i32, i32) {
    %c0_i32 = arith.constant 0 : i32
    %c0_i32_0 = arith.constant 0 : i32
    %c0_i32_1 = arith.constant 0 : i32
    return %c0_i32, %c0_i32_0 : i32, i32
  }
  func.func @transform_15(%arg0: i32) -> (i32, i32) {
    %c0_i32 = arith.constant 0 : i32
    %c0_i32_0 = arith.constant 0 : i32
    %c0_i32_1 = arith.constant 0 : i32
    return %c0_i32, %c0_i32_0 : i32, i32
  }
  func.func @transform_16(%arg0: i32) -> (i32, i32, i32) {
    %c0_i32 = arith.constant 0 : i32
    %c0_i32_0 = arith.constant 0 : i32
    %c0_i32_1 = arith.constant 0 : i32
    %c0_i32_2 = arith.constant 0 : i32
    return %c0_i32, %c0_i32_0, %c0_i32_1 : i32, i32, i32
  }
  func.func @transform_17(%arg0: i32) -> (i32, i32, i32) {
    %c0_i32 = arith.constant 0 : i32
    %c0_i32_0 = arith.constant 0 : i32
    %c0_i32_1 = arith.constant 0 : i32
    %c0_i32_2 = arith.constant 0 : i32
    return %c0_i32, %c0_i32_0, %c0_i32_1 : i32, i32, i32
  }
}

module attributes {stable_mosaic.version = 11 : i64} {
  func.func @_attn_qkv_kernel(%arg0: i32, %arg1: memref<2x32x64xf32, #tpu.memory_space<vmem>>, %arg2: memref<32x1xf32, #tpu.memory_space<vmem>>, %arg3: memref<32x1xf32, #tpu.memory_space<vmem>>, %arg4: memref<32x32xf32, #tpu.memory_space<vmem>>, %arg5: memref<96x32xf32, #tpu.memory_space<vmem>>, %arg6: memref<96x1xf32, #tpu.memory_space<vmem>>, %arg7: memref<2x96x64xf32, #tpu.memory_space<vmem>>) attributes {dimension_semantics = [#tpu.dimension_semantics<arbitrary>], iteration_bounds = array<i64: 1>, scalar_prefetch = 0 : i64, scratch_operands = 0 : i64, tpu.core_type = #tpu.core_type<tc>, window_params = [{pipeline_mode = #tpu.pipeline_mode<synchronous>, transform_indices = @transform_0, window_bounds = array<i64: 2, 32, 64>}, {pipeline_mode = #tpu.pipeline_mode<synchronous>, transform_indices = @transform_1, window_bounds = array<i64: 32, 1>}, {pipeline_mode = #tpu.pipeline_mode<synchronous>, transform_indices = @transform_2, window_bounds = array<i64: 32, 1>}, {pipeline_mode = #tpu.pipeline_mode<synchronous>, transform_indices = @transform_3, window_bounds = array<i64: 32, 32>}, {pipeline_mode = #tpu.pipeline_mode<synchronous>, transform_indices = @transform_4, window_bounds = array<i64: 96, 32>}, {pipeline_mode = #tpu.pipeline_mode<synchronous>, transform_indices = @transform_5, window_bounds = array<i64: 96, 1>}, {pipeline_mode = #tpu.pipeline_mode<synchronous>, transform_indices = @transform_6, window_bounds = array<i64: 2, 96, 64>}]} {
    %c0 = arith.constant 0 : index
    %c0_0 = arith.constant 0 : index
    %0 = vector.load %arg2[%c0, %c0_0] : memref<32x1xf32, #tpu.memory_space<vmem>>, vector<32x1xf32>
    %c0_1 = arith.constant 0 : index
    %c0_2 = arith.constant 0 : index
    %1 = vector.load %arg3[%c0_1, %c0_2] : memref<32x1xf32, #tpu.memory_space<vmem>>, vector<32x1xf32>
    %c0_3 = arith.constant 0 : index
    %c0_4 = arith.constant 0 : index
    %2 = vector.load %arg4[%c0_3, %c0_4] : memref<32x32xf32, #tpu.memory_space<vmem>>, vector<32x32xf32>
    %c0_5 = arith.constant 0 : index
    %c0_6 = arith.constant 0 : index
    %3 = vector.load %arg5[%c0_5, %c0_6] : memref<96x32xf32, #tpu.memory_space<vmem>>, vector<96x32xf32>
    %c0_7 = arith.constant 0 : index
    %c0_8 = arith.constant 0 : index
    %4 = vector.load %arg6[%c0_7, %c0_8] : memref<96x1xf32, #tpu.memory_space<vmem>>, vector<96x1xf32>
    %c0_9 = arith.constant 0 : index
    %c0_10 = arith.constant 0 : index
    %c0_11 = arith.constant 0 : index
    %5 = vector.load %arg1[%c0_9, %c0_10, %c0_11] : memref<2x32x64xf32, #tpu.memory_space<vmem>>, vector<1x32x64xf32>
    %6 = vector.shape_cast %5 : vector<1x32x64xf32> to vector<32x64xf32>
    %cst = arith.constant dense<0.000000e+00> : vector<32x64xf32>
    %7 = tpu.matmul %2, %6, %cst {dimension_numbers = #tpu.dot_dimension_numbers<[1], [0], [0], [1], [0, 0, 1, 1], [], []>} : vector<32x32xf32>, vector<32x64xf32>, vector<32x64xf32> -> vector<32x64xf32>
    %cst_12 = arith.constant dense<0.000000e+00> : vector<32xf32>
    %8 = vector.multi_reduction <add>, %7, %cst_12 [1] : vector<32x64xf32> to vector<32xf32>
    %9 = vector.shape_cast %8 : vector<32xf32> to vector<32x1xf32>
    %cst_13 = arith.constant 1.562500e-02 : f32
    %10 = vector.broadcast %cst_13 : f32 to vector<32x1xf32>
    %11 = arith.mulf %9, %10 : vector<32x1xf32>
    %12 = vector.broadcast %11 : vector<32x1xf32> to vector<32x64xf32>
    %13 = arith.subf %6, %12 : vector<32x64xf32>
    %14 = arith.mulf %13, %13 : vector<32x64xf32>
    %cst_14 = arith.constant dense<0.000000e+00> : vector<32x64xf32>
    %15 = tpu.matmul %2, %14, %cst_14 {dimension_numbers = #tpu.dot_dimension_numbers<[1], [0], [0], [1], [0, 0, 1, 1], [], []>} : vector<32x32xf32>, vector<32x64xf32>, vector<32x64xf32> -> vector<32x64xf32>
    %cst_15 = arith.constant dense<0.000000e+00> : vector<32xf32>
    %16 = vector.multi_reduction <add>, %15, %cst_15 [1] : vector<32x64xf32> to vector<32xf32>
    %17 = vector.shape_cast %16 : vector<32xf32> to vector<32x1xf32>
    %cst_16 = arith.constant 1.562500e-02 : f32
    %18 = vector.broadcast %cst_16 : f32 to vector<32x1xf32>
    %19 = arith.mulf %17, %18 : vector<32x1xf32>
    %cst_17 = arith.constant 9.99999974E-6 : f32
    %20 = vector.broadcast %cst_17 : f32 to vector<32x1xf32>
    %21 = arith.addf %19, %20 : vector<32x1xf32>
    %22 = math.rsqrt %21 : vector<32x1xf32>
    %23 = vector.broadcast %22 : vector<32x1xf32> to vector<32x64xf32>
    %24 = arith.mulf %13, %23 : vector<32x64xf32>
    %25 = vector.broadcast %0 : vector<32x1xf32> to vector<32x64xf32>
    %26 = arith.mulf %24, %25 : vector<32x64xf32>
    %27 = vector.broadcast %1 : vector<32x1xf32> to vector<32x64xf32>
    %28 = arith.addf %26, %27 : vector<32x64xf32>
    %cst_18 = arith.constant dense<0.000000e+00> : vector<96x64xf32>
    %29 = tpu.matmul %3, %28, %cst_18 {dimension_numbers = #tpu.dot_dimension_numbers<[1], [0], [0], [1], [0, 0, 1, 1], [], []>} : vector<96x32xf32>, vector<32x64xf32>, vector<96x64xf32> -> vector<96x64xf32>
    %30 = vector.broadcast %4 : vector<96x1xf32> to vector<96x64xf32>
    %31 = arith.addf %29, %30 : vector<96x64xf32>
    %c0_19 = arith.constant 0 : index
    %c0_20 = arith.constant 0 : index
    %c0_21 = arith.constant 0 : index
    %32 = vector.load %arg7[%c0_19, %c0_20, %c0_21] : memref<2x96x64xf32, #tpu.memory_space<vmem>>, vector<1x96x64xf32>
    %33 = vector.shape_cast %32 : vector<1x96x64xf32> to vector<96x64xf32>
    %34 = vector.shape_cast %31 : vector<96x64xf32> to vector<1x96x64xf32>
    tpu.vector_store %arg7[%c0_19, %c0_20, %c0_21], %34 {strides = array<i32>} : memref<2x96x64xf32, #tpu.memory_space<vmem>>, vector<1x96x64xf32>,
    %c1 = arith.constant 1 : index
    %c0_22 = arith.constant 0 : index
    %c0_23 = arith.constant 0 : index
    %35 = vector.load %arg1[%c1, %c0_22, %c0_23] : memref<2x32x64xf32, #tpu.memory_space<vmem>>, vector<1x32x64xf32>
    %36 = vector.shape_cast %35 : vector<1x32x64xf32> to vector<32x64xf32>
    %cst_24 = arith.constant dense<0.000000e+00> : vector<32x64xf32>
    %37 = tpu.matmul %2, %36, %cst_24 {dimension_numbers = #tpu.dot_dimension_numbers<[1], [0], [0], [1], [0, 0, 1, 1], [], []>} : vector<32x32xf32>, vector<32x64xf32>, vector<32x64xf32> -> vector<32x64xf32>
    %cst_25 = arith.constant dense<0.000000e+00> : vector<32xf32>
    %38 = vector.multi_reduction <add>, %37, %cst_25 [1] : vector<32x64xf32> to vector<32xf32>
    %39 = vector.shape_cast %38 : vector<32xf32> to vector<32x1xf32>
    %cst_26 = arith.constant 1.562500e-02 : f32
    %40 = vector.broadcast %cst_26 : f32 to vector<32x1xf32>
    %41 = arith.mulf %39, %40 : vector<32x1xf32>
    %42 = vector.broadcast %41 : vector<32x1xf32> to vector<32x64xf32>
    %43 = arith.subf %36, %42 : vector<32x64xf32>
    %44 = arith.mulf %43, %43 : vector<32x64xf32>
    %cst_27 = arith.constant dense<0.000000e+00> : vector<32x64xf32>
    %45 = tpu.matmul %2, %44, %cst_27 {dimension_numbers = #tpu.dot_dimension_numbers<[1], [0], [0], [1], [0, 0, 1, 1], [], []>} : vector<32x32xf32>, vector<32x64xf32>, vector<32x64xf32> -> vector<32x64xf32>
    %cst_28 = arith.constant dense<0.000000e+00> : vector<32xf32>
    %46 = vector.multi_reduction <add>, %45, %cst_28 [1] : vector<32x64xf32> to vector<32xf32>
    %47 = vector.shape_cast %46 : vector<32xf32> to vector<32x1xf32>
    %cst_29 = arith.constant 1.562500e-02 : f32
    %48 = vector.broadcast %cst_29 : f32 to vector<32x1xf32>
    %49 = arith.mulf %47, %48 : vector<32x1xf32>
    %cst_30 = arith.constant 9.99999974E-6 : f32
    %50 = vector.broadcast %cst_30 : f32 to vector<32x1xf32>
    %51 = arith.addf %49, %50 : vector<32x1xf32>
    %52 = math.rsqrt %51 : vector<32x1xf32>
    %53 = vector.broadcast %52 : vector<32x1xf32> to vector<32x64xf32>
    %54 = arith.mulf %43, %53 : vector<32x64xf32>
    %55 = vector.broadcast %0 : vector<32x1xf32> to vector<32x64xf32>
    %56 = arith.mulf %54, %55 : vector<32x64xf32>
    %57 = vector.broadcast %1 : vector<32x1xf32> to vector<32x64xf32>
    %58 = arith.addf %56, %57 : vector<32x64xf32>
    %cst_31 = arith.constant dense<0.000000e+00> : vector<96x64xf32>
    %59 = tpu.matmul %3, %58, %cst_31 {dimension_numbers = #tpu.dot_dimension_numbers<[1], [0], [0], [1], [0, 0, 1, 1], [], []>} : vector<96x32xf32>, vector<32x64xf32>, vector<96x64xf32> -> vector<96x64xf32>
    %60 = vector.broadcast %4 : vector<96x1xf32> to vector<96x64xf32>
    %61 = arith.addf %59, %60 : vector<96x64xf32>
    %c1_32 = arith.constant 1 : index
    %c0_33 = arith.constant 0 : index
    %c0_34 = arith.constant 0 : index
    %62 = vector.load %arg7[%c1_32, %c0_33, %c0_34] : memref<2x96x64xf32, #tpu.memory_space<vmem>>, vector<1x96x64xf32>
    %63 = vector.shape_cast %62 : vector<1x96x64xf32> to vector<96x64xf32>
    %64 = vector.shape_cast %61 : vector<96x64xf32> to vector<1x96x64xf32>
    tpu.vector_store %arg7[%c1_32, %c0_33, %c0_34], %64 {strides = array<i32>} : memref<2x96x64xf32, #tpu.memory_space<vmem>>, vector<1x96x64xf32>,
    return
  }
  func.func @transform_0(%arg0: i32) -> (i32, i32, i32) {
    %c0_i32 = arith.constant 0 : i32
    %c0_i32_0 = arith.constant 0 : i32
    %c0_i32_1 = arith.constant 0 : i32
    %c0_i32_2 = arith.constant 0 : i32
    return %c0_i32, %c0_i32_0, %c0_i32_1 : i32, i32, i32
  }
  func.func @transform_1(%arg0: i32) -> (i32, i32) {
    %c0_i32 = arith.constant 0 : i32
    %c0_i32_0 = arith.constant 0 : i32
    %c0_i32_1 = arith.constant 0 : i32
    return %c0_i32, %c0_i32_0 : i32, i32
  }
  func.func @transform_2(%arg0: i32) -> (i32, i32) {
    %c0_i32 = arith.constant 0 : i32
    %c0_i32_0 = arith.constant 0 : i32
    %c0_i32_1 = arith.constant 0 : i32
    return %c0_i32, %c0_i32_0 : i32, i32
  }
  func.func @transform_3(%arg0: i32) -> (i32, i32) {
    %c0_i32 = arith.constant 0 : i32
    %c0_i32_0 = arith.constant 0 : i32
    %c0_i32_1 = arith.constant 0 : i32
    return %c0_i32, %c0_i32_0 : i32, i32
  }
  func.func @transform_4(%arg0: i32) -> (i32, i32) {
    %c0_i32 = arith.constant 0 : i32
    %c0_i32_0 = arith.constant 0 : i32
    %c0_i32_1 = arith.constant 0 : i32
    return %c0_i32, %c0_i32_0 : i32, i32
  }
  func.func @transform_5(%arg0: i32) -> (i32, i32) {
    %c0_i32 = arith.constant 0 : i32
    %c0_i32_0 = arith.constant 0 : i32
    %c0_i32_1 = arith.constant 0 : i32
    return %c0_i32, %c0_i32_0 : i32, i32
  }
  func.func @transform_6(%arg0: i32) -> (i32, i32, i32) {
    %c0_i32 = arith.constant 0 : i32
    %c0_i32_0 = arith.constant 0 : i32
    %c0_i32_1 = arith.constant 0 : i32
    %c0_i32_2 = arith.constant 0 : i32
    return %c0_i32, %c0_i32_0, %c0_i32_1 : i32, i32, i32
  }
}

module attributes {stable_mosaic.version = 11 : i64} {
  func.func @_attn_out_kernel(%arg0: i32, %arg1: memref<2x32x64xf32, #tpu.memory_space<vmem>>, %arg2: memref<2x32x64xf32, #tpu.memory_space<vmem>>, %arg3: memref<2x64x32xf32, #tpu.memory_space<vmem>>, %arg4: memref<2x64x32xf32, #tpu.memory_space<vmem>>, %arg5: memref<32x32xf32, #tpu.memory_space<vmem>>, %arg6: memref<1x32xf32, #tpu.memory_space<vmem>>, %arg7: memref<2x64x32xf32, #tpu.memory_space<vmem>>) attributes {dimension_semantics = [#tpu.dimension_semantics<arbitrary>], iteration_bounds = array<i64: 1>, scalar_prefetch = 0 : i64, scratch_operands = 0 : i64, tpu.core_type = #tpu.core_type<tc>, window_params = [{pipeline_mode = #tpu.pipeline_mode<synchronous>, transform_indices = @transform_0, window_bounds = array<i64: 2, 32, 64>}, {pipeline_mode = #tpu.pipeline_mode<synchronous>, transform_indices = @transform_1, window_bounds = array<i64: 2, 32, 64>}, {pipeline_mode = #tpu.pipeline_mode<synchronous>, transform_indices = @transform_2, window_bounds = array<i64: 2, 64, 32>}, {pipeline_mode = #tpu.pipeline_mode<synchronous>, transform_indices = @transform_3, window_bounds = array<i64: 2, 64, 32>}, {pipeline_mode = #tpu.pipeline_mode<synchronous>, transform_indices = @transform_4, window_bounds = array<i64: 32, 32>}, {pipeline_mode = #tpu.pipeline_mode<synchronous>, transform_indices = @transform_5, window_bounds = array<i64: 1, 32>}, {pipeline_mode = #tpu.pipeline_mode<synchronous>, transform_indices = @transform_6, window_bounds = array<i64: 2, 64, 32>}]} {
    %c0 = arith.constant 0 : index
    %c0_0 = arith.constant 0 : index
    %0 = vector.load %arg5[%c0, %c0_0] : memref<32x32xf32, #tpu.memory_space<vmem>>, vector<32x32xf32>
    %c0_1 = arith.constant 0 : index
    %c0_2 = arith.constant 0 : index
    %1 = vector.load %arg6[%c0_1, %c0_2] : memref<1x32xf32, #tpu.memory_space<vmem>>, vector<1x32xf32>
    %c0_3 = arith.constant 0 : index
    %c0_4 = arith.constant 0 : index
    %c0_5 = arith.constant 0 : index
    %2 = vector.load %arg1[%c0_3, %c0_4, %c0_5] : memref<2x32x64xf32, #tpu.memory_space<vmem>>, vector<1x32x64xf32>
    %3 = vector.shape_cast %2 : vector<1x32x64xf32> to vector<32x64xf32>
    %c0_6 = arith.constant 0 : index
    %c0_7 = arith.constant 0 : index
    %c0_8 = arith.constant 0 : index
    %4 = vector.load %arg2[%c0_6, %c0_7, %c0_8] : memref<2x32x64xf32, #tpu.memory_space<vmem>>, vector<1x32x64xf32>
    %5 = vector.shape_cast %4 : vector<1x32x64xf32> to vector<32x64xf32>
    %cst = arith.constant dense<0.000000e+00> : vector<32x32xf32>
    %6 = tpu.matmul %3, %5, %cst {dimension_numbers = #tpu.dot_dimension_numbers<[1], [1], [0], [0], [0, 0, 1, 0], [], []>} : vector<32x64xf32>, vector<32x64xf32>, vector<32x32xf32> -> vector<32x32xf32>
    %cst_9 = arith.constant 0.176776692 : f32
    %7 = vector.broadcast %cst_9 : f32 to vector<32x32xf32>
    %8 = arith.mulf %7, %6 : vector<32x32xf32>
    %cst_10 = arith.constant dense<0xFF800000> : vector<32xf32>
    %9 = vector.multi_reduction <maximumf>, %8, %cst_10 [1] : vector<32x32xf32> to vector<32xf32>
    %10 = vector.shape_cast %9 : vector<32xf32> to vector<32x1xf32>
    %11 = vector.broadcast %10 : vector<32x1xf32> to vector<32x32xf32>
    %12 = arith.subf %8, %11 : vector<32x32xf32>
    %13 = math.exp %12 : vector<32x32xf32>
    %cst_11 = arith.constant dense<0.000000e+00> : vector<32xf32>
    %14 = vector.multi_reduction <add>, %13, %cst_11 [1] : vector<32x32xf32> to vector<32xf32>
    %15 = vector.shape_cast %14 : vector<32xf32> to vector<32x1xf32>
    %16 = vector.broadcast %15 : vector<32x1xf32> to vector<32x32xf32>
    %17 = arith.divf %13, %16 : vector<32x32xf32>
    %c0_12 = arith.constant 0 : index
    %c0_13 = arith.constant 0 : index
    %c0_14 = arith.constant 0 : index
    %18 = vector.load %arg3[%c0_12, %c0_13, %c0_14] : memref<2x64x32xf32, #tpu.memory_space<vmem>>, vector<1x64x32xf32>
    %19 = vector.shape_cast %18 : vector<1x64x32xf32> to vector<64x32xf32>
    %cst_15 = arith.constant dense<0.000000e+00> : vector<64x32xf32>
    %20 = tpu.matmul %19, %17, %cst_15 {dimension_numbers = #tpu.dot_dimension_numbers<[1], [1], [0], [0], [0, 0, 1, 0], [], []>} : vector<64x32xf32>, vector<32x32xf32>, vector<64x32xf32> -> vector<64x32xf32>
    %cst_16 = arith.constant dense<0.000000e+00> : vector<64x32xf32>
    %21 = tpu.matmul %20, %0, %cst_16 {dimension_numbers = #tpu.dot_dimension_numbers<[1], [0], [0], [1], [0, 0, 1, 1], [], []>} : vector<64x32xf32>, vector<32x32xf32>, vector<64x32xf32> -> vector<64x32xf32>
    %22 = vector.broadcast %1 : vector<1x32xf32> to vector<64x32xf32>
    %23 = arith.addf %21, %22 : vector<64x32xf32>
    %c0_17 = arith.constant 0 : index
    %c0_18 = arith.constant 0 : index
    %c0_19 = arith.constant 0 : index
    %24 = vector.load %arg4[%c0_17, %c0_18, %c0_19] : memref<2x64x32xf32, #tpu.memory_space<vmem>>, vector<1x64x32xf32>
    %25 = vector.shape_cast %24 : vector<1x64x32xf32> to vector<64x32xf32>
    %26 = arith.addf %23, %25 : vector<64x32xf32>
    %c0_20 = arith.constant 0 : index
    %c0_21 = arith.constant 0 : index
    %c0_22 = arith.constant 0 : index
    %27 = vector.load %arg7[%c0_20, %c0_21, %c0_22] : memref<2x64x32xf32, #tpu.memory_space<vmem>>, vector<1x64x32xf32>
    %28 = vector.shape_cast %27 : vector<1x64x32xf32> to vector<64x32xf32>
    %29 = vector.shape_cast %26 : vector<64x32xf32> to vector<1x64x32xf32>
    tpu.vector_store %arg7[%c0_20, %c0_21, %c0_22], %29 {strides = array<i32>} : memref<2x64x32xf32, #tpu.memory_space<vmem>>, vector<1x64x32xf32>,
    %c1 = arith.constant 1 : index
    %c0_23 = arith.constant 0 : index
    %c0_24 = arith.constant 0 : index
    %30 = vector.load %arg1[%c1, %c0_23, %c0_24] : memref<2x32x64xf32, #tpu.memory_space<vmem>>, vector<1x32x64xf32>
    %31 = vector.shape_cast %30 : vector<1x32x64xf32> to vector<32x64xf32>
    %c1_25 = arith.constant 1 : index
    %c0_26 = arith.constant 0 : index
    %c0_27 = arith.constant 0 : index
    %32 = vector.load %arg2[%c1_25, %c0_26, %c0_27] : memref<2x32x64xf32, #tpu.memory_space<vmem>>, vector<1x32x64xf32>
    %33 = vector.shape_cast %32 : vector<1x32x64xf32> to vector<32x64xf32>
    %cst_28 = arith.constant dense<0.000000e+00> : vector<32x32xf32>
    %34 = tpu.matmul %31, %33, %cst_28 {dimension_numbers = #tpu.dot_dimension_numbers<[1], [1], [0], [0], [0, 0, 1, 0], [], []>} : vector<32x64xf32>, vector<32x64xf32>, vector<32x32xf32> -> vector<32x32xf32>
    %cst_29 = arith.constant 0.176776692 : f32
    %35 = vector.broadcast %cst_29 : f32 to vector<32x32xf32>
    %36 = arith.mulf %35, %34 : vector<32x32xf32>
    %cst_30 = arith.constant dense<0xFF800000> : vector<32xf32>
    %37 = vector.multi_reduction <maximumf>, %36, %cst_30 [1] : vector<32x32xf32> to vector<32xf32>
    %38 = vector.shape_cast %37 : vector<32xf32> to vector<32x1xf32>
    %39 = vector.broadcast %38 : vector<32x1xf32> to vector<32x32xf32>
    %40 = arith.subf %36, %39 : vector<32x32xf32>
    %41 = math.exp %40 : vector<32x32xf32>
    %cst_31 = arith.constant dense<0.000000e+00> : vector<32xf32>
    %42 = vector.multi_reduction <add>, %41, %cst_31 [1] : vector<32x32xf32> to vector<32xf32>
    %43 = vector.shape_cast %42 : vector<32xf32> to vector<32x1xf32>
    %44 = vector.broadcast %43 : vector<32x1xf32> to vector<32x32xf32>
    %45 = arith.divf %41, %44 : vector<32x32xf32>
    %c1_32 = arith.constant 1 : index
    %c0_33 = arith.constant 0 : index
    %c0_34 = arith.constant 0 : index
    %46 = vector.load %arg3[%c1_32, %c0_33, %c0_34] : memref<2x64x32xf32, #tpu.memory_space<vmem>>, vector<1x64x32xf32>
    %47 = vector.shape_cast %46 : vector<1x64x32xf32> to vector<64x32xf32>
    %cst_35 = arith.constant dense<0.000000e+00> : vector<64x32xf32>
    %48 = tpu.matmul %47, %45, %cst_35 {dimension_numbers = #tpu.dot_dimension_numbers<[1], [1], [0], [0], [0, 0, 1, 0], [], []>} : vector<64x32xf32>, vector<32x32xf32>, vector<64x32xf32> -> vector<64x32xf32>
    %cst_36 = arith.constant dense<0.000000e+00> : vector<64x32xf32>
    %49 = tpu.matmul %48, %0, %cst_36 {dimension_numbers = #tpu.dot_dimension_numbers<[1], [0], [0], [1], [0, 0, 1, 1], [], []>} : vector<64x32xf32>, vector<32x32xf32>, vector<64x32xf32> -> vector<64x32xf32>
    %50 = vector.broadcast %1 : vector<1x32xf32> to vector<64x32xf32>
    %51 = arith.addf %49, %50 : vector<64x32xf32>
    %c1_37 = arith.constant 1 : index
    %c0_38 = arith.constant 0 : index
    %c0_39 = arith.constant 0 : index
    %52 = vector.load %arg4[%c1_37, %c0_38, %c0_39] : memref<2x64x32xf32, #tpu.memory_space<vmem>>, vector<1x64x32xf32>
    %53 = vector.shape_cast %52 : vector<1x64x32xf32> to vector<64x32xf32>
    %54 = arith.addf %51, %53 : vector<64x32xf32>
    %c1_40 = arith.constant 1 : index
    %c0_41 = arith.constant 0 : index
    %c0_42 = arith.constant 0 : index
    %55 = vector.load %arg7[%c1_40, %c0_41, %c0_42] : memref<2x64x32xf32, #tpu.memory_space<vmem>>, vector<1x64x32xf32>
    %56 = vector.shape_cast %55 : vector<1x64x32xf32> to vector<64x32xf32>
    %57 = vector.shape_cast %54 : vector<64x32xf32> to vector<1x64x32xf32>
    tpu.vector_store %arg7[%c1_40, %c0_41, %c0_42], %57 {strides = array<i32>} : memref<2x64x32xf32, #tpu.memory_space<vmem>>, vector<1x64x32xf32>,
    return
  }
  func.func @transform_0(%arg0: i32) -> (i32, i32, i32) {
    %c0_i32 = arith.constant 0 : i32
    %c0_i32_0 = arith.constant 0 : i32
    %c0_i32_1 = arith.constant 0 : i32
    %c0_i32_2 = arith.constant 0 : i32
    return %c0_i32, %c0_i32_0, %c0_i32_1 : i32, i32, i32
  }
  func.func @transform_1(%arg0: i32) -> (i32, i32, i32) {
    %c0_i32 = arith.constant 0 : i32
    %c0_i32_0 = arith.constant 0 : i32
    %c0_i32_1 = arith.constant 0 : i32
    %c0_i32_2 = arith.constant 0 : i32
    return %c0_i32, %c0_i32_0, %c0_i32_1 : i32, i32, i32
  }
  func.func @transform_2(%arg0: i32) -> (i32, i32, i32) {
    %c0_i32 = arith.constant 0 : i32
    %c0_i32_0 = arith.constant 0 : i32
    %c0_i32_1 = arith.constant 0 : i32
    %c0_i32_2 = arith.constant 0 : i32
    return %c0_i32, %c0_i32_0, %c0_i32_1 : i32, i32, i32
  }
  func.func @transform_3(%arg0: i32) -> (i32, i32, i32) {
    %c0_i32 = arith.constant 0 : i32
    %c0_i32_0 = arith.constant 0 : i32
    %c0_i32_1 = arith.constant 0 : i32
    %c0_i32_2 = arith.constant 0 : i32
    return %c0_i32, %c0_i32_0, %c0_i32_1 : i32, i32, i32
  }
  func.func @transform_4(%arg0: i32) -> (i32, i32) {
    %c0_i32 = arith.constant 0 : i32
    %c0_i32_0 = arith.constant 0 : i32
    %c0_i32_1 = arith.constant 0 : i32
    return %c0_i32, %c0_i32_0 : i32, i32
  }
  func.func @transform_5(%arg0: i32) -> (i32, i32) {
    %c0_i32 = arith.constant 0 : i32
    %c0_i32_0 = arith.constant 0 : i32
    %c0_i32_1 = arith.constant 0 : i32
    return %c0_i32, %c0_i32_0 : i32, i32
  }
  func.func @transform_6(%arg0: i32) -> (i32, i32, i32) {
    %c0_i32 = arith.constant 0 : i32
    %c0_i32_0 = arith.constant 0 : i32
    %c0_i32_1 = arith.constant 0 : i32
    %c0_i32_2 = arith.constant 0 : i32
    return %c0_i32, %c0_i32_0, %c0_i32_1 : i32, i32, i32
  }
}

module attributes {stable_mosaic.version = 11 : i64} {
  func.func @_bilinear_kernel(%arg0: i32, %arg1: memref<64x64xf32, #tpu.memory_space<vmem>>, %arg2: memref<64x256xf32, #tpu.memory_space<vmem>>, %arg3: memref<64x256xf32, #tpu.memory_space<vmem>>) attributes {dimension_semantics = [#tpu.dimension_semantics<arbitrary>], iteration_bounds = array<i64: 1>, scalar_prefetch = 0 : i64, scratch_operands = 0 : i64, tpu.core_type = #tpu.core_type<tc>, window_params = [{pipeline_mode = #tpu.pipeline_mode<synchronous>, transform_indices = @transform_0, window_bounds = array<i64: 64, 64>}, {pipeline_mode = #tpu.pipeline_mode<synchronous>, transform_indices = @transform_1, window_bounds = array<i64: 64, 256>}, {pipeline_mode = #tpu.pipeline_mode<synchronous>, transform_indices = @transform_2, window_bounds = array<i64: 64, 256>}]} {
    %c0 = arith.constant 0 : index
    %c0_0 = arith.constant 0 : index
    %0 = vector.load %arg1[%c0, %c0_0] : memref<64x64xf32, #tpu.memory_space<vmem>>, vector<64x64xf32>
    %c0_1 = arith.constant 0 : index
    %c0_2 = arith.constant 0 : index
    %1 = vector.load %arg2[%c0_1, %c0_2] : memref<64x256xf32, #tpu.memory_space<vmem>>, vector<64x256xf32>
    %cst = arith.constant dense<0.000000e+00> : vector<64x256xf32>
    %2 = tpu.matmul %0, %1, %cst {dimension_numbers = #tpu.dot_dimension_numbers<[1], [0], [0], [1], [0, 0, 1, 1], [], []>} : vector<64x64xf32>, vector<64x256xf32>, vector<64x256xf32> -> vector<64x256xf32>
    %c0_3 = arith.constant 0 : index
    %c0_4 = arith.constant 0 : index
    %3 = vector.load %arg3[%c0_3, %c0_4] : memref<64x256xf32, #tpu.memory_space<vmem>>, vector<64x256xf32>
    tpu.vector_store %arg3[%c0_3, %c0_4], %2 {strides = array<i32>} : memref<64x256xf32, #tpu.memory_space<vmem>>, vector<64x256xf32>,
    return
  }
  func.func @transform_0(%arg0: i32) -> (i32, i32) {
    %c0_i32 = arith.constant 0 : i32
    %c0_i32_0 = arith.constant 0 : i32
    %c0_i32_1 = arith.constant 0 : i32
    return %c0_i32, %c0_i32_0 : i32, i32
  }
  func.func @transform_1(%arg0: i32) -> (i32, i32) {
    %c0_i32 = arith.constant 0 : i32
    %c0_i32_0 = arith.constant 0 : i32
    %c0_i32_1 = arith.constant 0 : i32
    return %c0_i32, %c0_i32_0 : i32, i32
  }
  func.func @transform_2(%arg0: i32) -> (i32, i32) {
    %c0_i32 = arith.constant 0 : i32
    %c0_i32_0 = arith.constant 0 : i32
    %c0_i32_1 = arith.constant 0 : i32
    return %c0_i32, %c0_i32_0 : i32, i32
  }
}

</mosaic_0001>

<llo_original>
// kernel: upsample_block_fwd.12
$region0: #{upsample_block_fwd.12}
  #allocation0 [shape = 'u32[]', space=smem, size = 0x4, offset = 0x4, fixed_abs, tag = 'smem constant byte address 0x4 - core index']
  #allocation1 [shape = 'u32[72,128]{1,0:T(1,128)}', space=vmem, size = 0x9000, scoped, tag = 'internal scratch']
  %s0 = inlined_call_operand.vmem [shape: f32[2,32,64], index: 0, kind: input, shape index: {}]
  %s1 = inlined_call_operand.vmem [shape: f32[2,32,64], index: 1, kind: input, shape index: {}]
  %s2 = inlined_call_operand.vmem [shape: f32[2,64,32], index: 2, kind: input, shape index: {}]
  %s3 = inlined_call_operand.vmem [shape: f32[2,64,32], index: 3, kind: input, shape index: {}]
  %s4 = inlined_call_operand.vmem [shape: f32[32,32], index: 4, kind: input, shape index: {}]
  %s5 = inlined_call_operand.vmem [shape: f32[1,32], index: 5, kind: input, shape index: {}]
  %s6 = inlined_call_operand.vmem [shape: f32[2,64,32], index: 6, kind: output, shape index: {}]
  %s7 = sld [smem:[#allocation0]]
  $region34: #{upsample_block_fwd.12} parent=0
    _
  %s9 = ssub.s32 1, %s7
  %s10 = scalar_select 0, %s9, %s7
  // Predicated region
  $region2: #{upsample_block_fwd.12} parent=0 // pred_check
    _
  $region3: #{upsample_block_fwd.12} parent=0 // pred_check_branch
    %12 = sbr.rel (0) target = $region5
  $region4: #{upsample_block_fwd.12} parent=0 // pred_region
    _
  $region5: #{upsample_block_fwd.12} parent=0 // pred_fallthru
    _
  // Predicated region
  $region6: #{upsample_block_fwd.12} parent=0 // pred_check
    _
  $region7: #{upsample_block_fwd.12} parent=0 // pred_check_branch
    %14 = sbr.rel (0) target = $region9
  $region8: #{upsample_block_fwd.12} parent=0 // pred_region
    _
  $region9: #{upsample_block_fwd.12} parent=0 // pred_fallthru
    _
  // Predicated region
  $region10: #{upsample_block_fwd.12} parent=0 // pred_check
    _
  $region11: #{upsample_block_fwd.12} parent=0 // pred_check_branch
    %16 = sbr.rel (0) target = $region13
  $region12: #{upsample_block_fwd.12} parent=0 // pred_region
    _
  $region13: #{upsample_block_fwd.12} parent=0 // pred_fallthru
    _
  // Predicated region
  $region14: #{upsample_block_fwd.12} parent=0 // pred_check
    _
  $region15: #{upsample_block_fwd.12} parent=0 // pred_check_branch
    %18 = sbr.rel (0) target = $region17
  $region16: #{upsample_block_fwd.12} parent=0 // pred_region
    _
  $region17: #{upsample_block_fwd.12} parent=0 // pred_fallthru
    _
  // Predicated region
  $region18: #{upsample_block_fwd.12} parent=0 // pred_check
    _
  $region19: #{upsample_block_fwd.12} parent=0 // pred_check_branch
    %20 = sbr.rel (0) target = $region21
  $region20: #{upsample_block_fwd.12} parent=0 // pred_region
    _
  $region21: #{upsample_block_fwd.12} parent=0 // pred_fallthru
    _
  // Predicated region
  $region22: #{upsample_block_fwd.12} parent=0 // pred_check
    _
  $region23: #{upsample_block_fwd.12} parent=0 // pred_check_branch
    %22 = sbr.rel (0) target = $region25
  $region24: #{upsample_block_fwd.12} parent=0 // pred_region
    _
  $region25: #{upsample_block_fwd.12} parent=0 // pred_fallthru
    _
  %v23 = vld [vmem:[%s4] sm:$0xff]
  %v24 = vld [vmem:[%s4 + $0x8] sm:$0xff]
  %v25 = vld [vmem:[%s4 + $0x10] sm:$0xff]
  %v26 = vld [vmem:[%s4 + $0x18] sm:$0xff]
  %v27 = vld [vmem:[%s5] sm:$0x1]
  %v28 = vld [vmem:[%s0] sm:$0xff]
  %v29 = vld [vmem:[%s0 + $0x8] sm:$0xff]
  %v30 = vld [vmem:[%s0 + $0x10] sm:$0xff]
  %v31 = vld [vmem:[%s0 + $0x18] sm:$0xff]
  %v32 = vld [vmem:[%s1] sm:$0xff]
  %v33 = vld [vmem:[%s1 + $0x8] sm:$0xff]
  %v34 = vld [vmem:[%s1 + $0x10] sm:$0xff]
  %v35 = vld [vmem:[%s1 + $0x18] sm:$0xff]
  %vm36 = vcmask 523264
  %v38 = vsel %vm36, %v28, 0
  %v41 = vsel %vm36, %v29, 0
  %v44 = vsel %vm36, %v30, 0
  %v47 = vsel %vm36, %v31, 0
  %v50 = vsel %vm36, %v32, 0
  %v53 = vsel %vm36, %v33, 0
  %v56 = vsel %vm36, %v34, 0
  %v59 = vsel %vm36, %v35, 0
  %61 = vmatpush.xpose.msra.mxu0 0.0
  %62 = vmatpush.xpose.msra.mxu0 0.0
  %63 = vmatpush.xpose.msra.mxu0 0.0
  %64 = vmatpush.xpose.msra.mxu0 0.0
  %65 = vmatpush.xpose.msra.mxu0 0.0
  %66 = vmatpush.xpose.msra.mxu0 0.0
  %67 = vmatpush.xpose.msra.mxu0 0.0
  %68 = vmatpush.xpose.msra.mxu0 0.0
  %69 = vmatpush.xpose.msra.mxu0 0.0
  %70 = vmatpush.xpose.msra.mxu0 0.0
  %71 = vmatpush.xpose.msra.mxu0 0.0
  %72 = vmatpush.xpose.msra.mxu0 0.0
  %73 = vmatpush.xpose.msra.mxu0 %v59
  %74 = vmatpush.xpose.msra.mxu0 %v56
  %75 = vmatpush.xpose.msra.mxu0 %v53
  %76 = vmatpush.xpose.msra.mxu0 %v50
  %77 = vmatmul.f32.gmra.mxu0 %v38
  %v78 = vpop.f32.mrf.mxu0
  %v79 = vadd.f32 0.0, %v78
  %80 = vmatmul.f32.gmra.mxu0 %v41
  %v81 = vpop.f32.mrf.mxu0
  %v82 = vadd.f32 0.0, %v81
  %83 = vmatmul.f32.gmra.mxu0 %v44
  %v84 = vpop.f32.mrf.mxu0
  %v85 = vadd.f32 0.0, %v84
  %86 = vmatmul.f32.gmra.mxu0 %v47
  %v87 = vpop.f32.mrf.mxu0
  %v88 = vadd.f32 0.0, %v87
  %89 = vdwg.mxu0
  %v90 = vmul.f32 %v79, 0.17677669
  %v91 = vmul.f32 %v82, 0.17677669
  %v92 = vmul.f32 %v85, 0.17677669
  %v93 = vmul.f32 %v88, 0.17677669
  %vm94 = vcmask 261120
  %v95 = vsel %vm94, %v90, -inf
  %96 = vmax.xlane.f32.xlu0 %v95
  %v97 = vpop.xlane.xlu0 %96
  %v98 = vsel %vm94, %v91, -inf
  %99 = vmax.xlane.f32.xlu0 %v98
  %v100 = vpop.xlane.xlu0 %99
  %v101 = vsel %vm94, %v92, -inf
  %102 = vmax.xlane.f32.xlu0 %v101
  %v103 = vpop.xlane.xlu0 %102
  %v104 = vsel %vm94, %v93, -inf
  %105 = vmax.xlane.f32.xlu0 %v104
  %v106 = vpop.xlane.xlu0 %105
  %v107 = vsub.f32 %v90, %v97
  %v108 = vsub.f32 %v91, %v100
  %v109 = vsub.f32 %v92, %v103
  %v110 = vsub.f32 %v93, %v106
  %v111 = vmul.f32 %v107, 1.442695
  %v112 = vpow.pop %v111
  %v113 = vmul.f32 %v108, 1.442695
  %v114 = vpow.pop %v113
  %v115 = vmul.f32 %v109, 1.442695
  %v116 = vpow.pop %v115
  %v117 = vmul.f32 %v110, 1.442695
  %v118 = vpow.pop %v117
  %v119 = vsel %vm94, %v112, 0.0
  %120 = vadd.xlane.f32.xlu0 %v119
  %v121 = vpop.xlane.xlu0 %120
  %v122 = vsel %vm94, %v114, 0.0
  %123 = vadd.xlane.f32.xlu0 %v122
  %v124 = vpop.xlane.xlu0 %123
  %v125 = vsel %vm94, %v116, 0.0
  %126 = vadd.xlane.f32.xlu0 %v125
  %v127 = vpop.xlane.xlu0 %126
  %v128 = vsel %vm94, %v118, 0.0
  %129 = vadd.xlane.f32.xlu0 %v128
  %v130 = vpop.xlane.xlu0 %129
  %v131 = vrcp.pop %v121
  %v132 = vmul.f32 %v121, %v131
  %v133 = vsub.f32 1.0, %v132
  %v134 = vmul.f32 %v131, %v133
  %v135 = vadd.f32 %v131, %v134
  %vm136 = vweird.f32 %v121
  %vm137 = vweird.f32 %v131
  %vm138 = vmor %vm136, %vm137
  %v139 = vsel %vm138, %v131, %v135
  %v140 = vand.u32 2147483647, %v121
  %vm141 = vcmp.eq.f32.partialorder %v140, 8.507059e+37
  %v142 = vand.u32 %v121, 2147483648
  %v143 = vor.u32 1.1754944e-38, %v142
  %v144 = vsel %vm141, %v143, %v139
  %v145 = vmul.f32 %v112, %v144
  %v146 = vrcp.pop %v124
  %v147 = vmul.f32 %v124, %v146
  %v148 = vsub.f32 1.0, %v147
  %v149 = vmul.f32 %v146, %v148
  %v150 = vadd.f32 %v146, %v149
  %vm151 = vweird.f32 %v124
  %vm152 = vweird.f32 %v146
  %vm153 = vmor %vm151, %vm152
  %v154 = vsel %vm153, %v146, %v150
  %v155 = vand.u32 2147483647, %v124
  %vm156 = vcmp.eq.f32.partialorder %v155, 8.507059e+37
  %v157 = vand.u32 %v124, 2147483648
  %v158 = vor.u32 1.1754944e-38, %v157
  %v159 = vsel %vm156, %v158, %v154
  %v160 = vmul.f32 %v114, %v159
  %v161 = vrcp.pop %v127
  %v162 = vmul.f32 %v127, %v161
  %v163 = vsub.f32 1.0, %v162
  %v164 = vmul.f32 %v161, %v163
  %v165 = vadd.f32 %v161, %v164
  %vm166 = vweird.f32 %v127
  %vm167 = vweird.f32 %v161
  %vm168 = vmor %vm166, %vm167
  %v169 = vsel %vm168, %v161, %v165
  %v170 = vand.u32 2147483647, %v127
  %vm171 = vcmp.eq.f32.partialorder %v170, 8.507059e+37
  %v172 = vand.u32 %v127, 2147483648
  %v173 = vor.u32 1.1754944e-38, %v172
  %v174 = vsel %vm171, %v173, %v169
  %v175 = vmul.f32 %v116, %v174
  %v176 = vrcp.pop %v130
  %v177 = vmul.f32 %v130, %v176
  %v178 = vsub.f32 1.0, %v177
  %v179 = vmul.f32 %v176, %v178
  %v180 = vadd.f32 %v176, %v179
  %vm181 = vweird.f32 %v130
  %vm182 = vweird.f32 %v176
  %vm183 = vmor %vm181, %vm182
  %v184 = vsel %vm183, %v176, %v180
  %v185 = vand.u32 2147483647, %v130
  %vm186 = vcmp.eq.f32.partialorder %v185, 8.507059e+37
  %v187 = vand.u32 %v130, 2147483648
  %v188 = vor.u32 1.1754944e-38, %v187
  %v189 = vsel %vm186, %v188, %v184
  %v190 = vmul.f32 %v118, %v189
  %v191 = vld [vmem:[%s2] sm:$0xff]
  %v192 = vld [vmem:[%s2 + $0x8] sm:$0xff]
  %v193 = vld [vmem:[%s2 + $0x10] sm:$0xff]
  %v194 = vld [vmem:[%s2 + $0x18] sm:$0xff]
  %v195 = vld [vmem:[%s2 + $0x20] sm:$0xff]
  %v196 = vld [vmem:[%s2 + $0x28] sm:$0xff]
  %v197 = vld [vmem:[%s2 + $0x30] sm:$0xff]
  %v198 = vld [vmem:[%s2 + $0x38] sm:$0xff]
  %v200 = vsel %vm94, %v191, 0
  %v203 = vsel %vm94, %v192, 0
  %v206 = vsel %vm94, %v193, 0
  %v209 = vsel %vm94, %v194, 0
  %v212 = vsel %vm94, %v195, 0
  %v215 = vsel %vm94, %v196, 0
  %v218 = vsel %vm94, %v197, 0
  %v221 = vsel %vm94, %v198, 0
  %v224 = vsel %vm94, %v145, 0
  %v227 = vsel %vm94, %v160, 0
  %v230 = vsel %vm94, %v175, 0
  %v233 = vsel %vm94, %v190, 0
  %235 = vmatpush.xpose.msra.mxu0 0.0
  %236 = vmatpush.xpose.msra.mxu0 0.0
  %237 = vmatpush.xpose.msra.mxu0 0.0
  %238 = vmatpush.xpose.msra.mxu0 0.0
  %239 = vmatpush.xpose.msra.mxu0 0.0
  %240 = vmatpush.xpose.msra.mxu0 0.0
  %241 = vmatpush.xpose.msra.mxu0 0.0
  %242 = vmatpush.xpose.msra.mxu0 0.0
  %243 = vmatpush.xpose.msra.mxu0 0.0
  %244 = vmatpush.xpose.msra.mxu0 0.0
  %245 = vmatpush.xpose.msra.mxu0 0.0
  %246 = vmatpush.xpose.msra.mxu0 0.0
  %247 = vmatpush.xpose.msra.mxu0 %v233
  %248 = vmatpush.xpose.msra.mxu0 %v230
  %249 = vmatpush.xpose.msra.mxu0 %v227
  %250 = vmatpush.xpose.msra.mxu0 %v224
  %251 = vmatmul.f32.gmra.mxu0 %v200
  %v252 = vpop.f32.mrf.mxu0
  %v253 = vadd.f32 0.0, %v252
  %254 = vmatmul.f32.gmra.mxu0 %v203
  %v255 = vpop.f32.mrf.mxu0
  %v256 = vadd.f32 0.0, %v255
  %257 = vmatmul.f32.gmra.mxu0 %v206
  %v258 = vpop.f32.mrf.mxu0
  %v259 = vadd.f32 0.0, %v258
  %260 = vmatmul.f32.gmra.mxu0 %v209
  %v261 = vpop.f32.mrf.mxu0
  %v262 = vadd.f32 0.0, %v261
  %263 = vmatmul.f32.gmra.mxu0 %v212
  %v264 = vpop.f32.mrf.mxu0
  %v265 = vadd.f32 0.0, %v264
  %266 = vmatmul.f32.gmra.mxu0 %v215
  %v267 = vpop.f32.mrf.mxu0
  %v268 = vadd.f32 0.0, %v267
  %269 = vmatmul.f32.gmra.mxu0 %v218
  %v270 = vpop.f32.mrf.mxu0
  %v271 = vadd.f32 0.0, %v270
  %272 = vmatmul.f32.gmra.mxu0 %v221
  %v273 = vpop.f32.mrf.mxu0
  %v274 = vadd.f32 0.0, %v273
  %275 = vdwg.mxu0
  %v277 = vperm.slane %v27, 0
  %v280 = vsel %vm94, %v253, 0
  %v283 = vsel %vm94, %v256, 0
  %v286 = vsel %vm94, %v259, 0
  %v289 = vsel %vm94, %v262, 0
  %v292 = vsel %vm94, %v265, 0
  %v295 = vsel %vm94, %v268, 0
  %v298 = vsel %vm94, %v271, 0
  %v301 = vsel %vm94, %v274, 0
  %303 = vmatpush.msra.mxu0 0.0
  %304 = vmatpush.msra.mxu0 0.0
  %305 = vmatpush.msra.mxu0 0.0
  %306 = vmatpush.msra.mxu0 0.0
  %307 = vmatpush.msra.mxu0 0.0
  %308 = vmatpush.msra.mxu0 0.0
  %309 = vmatpush.msra.mxu0 0.0
  %310 = vmatpush.msra.mxu0 0.0
  %311 = vmatpush.msra.mxu0 0.0
  %312 = vmatpush.msra.mxu0 0.0
  %313 = vmatpush.msra.mxu0 0.0
  %314 = vmatpush.msra.mxu0 0.0
  %315 = vmatpush.msra.mxu0 %v26
  %316 = vmatpush.msra.mxu0 %v25
  %317 = vmatpush.msra.mxu0 %v24
  %318 = vmatpush.msra.mxu0 %v23
  %319 = vmatmul.f32.gmra.mxu0 %v280
  %v320 = vpop.f32.mrf.mxu0
  %v321 = vadd.f32 %v277, %v320
  %322 = vmatmul.f32.gmra.mxu0 %v283
  %v323 = vpop.f32.mrf.mxu0
  %v324 = vadd.f32 %v277, %v323
  %325 = vmatmul.f32.gmra.mxu0 %v286
  %v326 = vpop.f32.mrf.mxu0
  %v327 = vadd.f32 %v277, %v326
  %328 = vmatmul.f32.gmra.mxu0 %v289
  %v329 = vpop.f32.mrf.mxu0
  %v330 = vadd.f32 %v277, %v329
  %331 = vmatmul.f32.gmra.mxu0 %v292
  %v332 = vpop.f32.mrf.mxu0
  %v333 = vadd.f32 %v277, %v332
  %334 = vmatmul.f32.gmra.mxu0 %v295
  %v335 = vpop.f32.mrf.mxu0
  %v336 = vadd.f32 %v277, %v335
  %337 = vmatmul.f32.gmra.mxu0 %v298
  %v338 = vpop.f32.mrf.mxu0
  %v339 = vadd.f32 %v277, %v338
  %340 = vmatmul.f32.gmra.mxu0 %v301
  %v341 = vpop.f32.mrf.mxu0
  %v342 = vadd.f32 %v277, %v341
  %343 = vdwg.mxu0
  %v344 = vld [vmem:[%s3] sm:$0xff]
  %v345 = vld [vmem:[%s3 + $0x8] sm:$0xff]
  %v346 = vld [vmem:[%s3 + $0x10] sm:$0xff]
  %v347 = vld [vmem:[%s3 + $0x18] sm:$0xff]
  %v348 = vld [vmem:[%s3 + $0x20] sm:$0xff]
  %v349 = vld [vmem:[%s3 + $0x28] sm:$0xff]
  %v350 = vld [vmem:[%s3 + $0x30] sm:$0xff]
  %v351 = vld [vmem:[%s3 + $0x38] sm:$0xff]
  %v352 = vadd.f32 %v321, %v344
  %v353 = vadd.f32 %v324, %v345
  %v354 = vadd.f32 %v327, %v346
  %v355 = vadd.f32 %v330, %v347
  %v356 = vadd.f32 %v333, %v348
  %v357 = vadd.f32 %v336, %v349
  %v358 = vadd.f32 %v339, %v350
  %v359 = vadd.f32 %v342, %v351
  %360 = vst.msk [vmem:[%s6] sm:$0xff] %vm94, %v352
  %361 = vst.msk [vmem:[%s6 + $0x8] sm:$0xff] %vm94, %v353
  %362 = vst.msk [vmem:[%s6 + $0x10] sm:$0xff] %vm94, %v354
  %363 = vst.msk [vmem:[%s6 + $0x18] sm:$0xff] %vm94, %v355
  %364 = vst.msk [vmem:[%s6 + $0x20] sm:$0xff] %vm94, %v356
  %365 = vst.msk [vmem:[%s6 + $0x28] sm:$0xff] %vm94, %v357
  %366 = vst.msk [vmem:[%s6 + $0x30] sm:$0xff] %vm94, %v358
  %367 = vst.msk [vmem:[%s6 + $0x38] sm:$0xff] %vm94, %v359
  %s368 = scalar_lea.vmem %s0, 32
  %v369 = vld [vmem:[%s368] sm:$0xff]
  %v370 = vld [vmem:[%s368 + $0x8] sm:$0xff]
  %v371 = vld [vmem:[%s368 + $0x10] sm:$0xff]
  %v372 = vld [vmem:[%s368 + $0x18] sm:$0xff]
  %s373 = scalar_lea.vmem %s1, 32
  %v374 = vld [vmem:[%s373] sm:$0xff]
  %v375 = vld [vmem:[%s373 + $0x8] sm:$0xff]
  %v376 = vld [vmem:[%s373 + $0x10] sm:$0xff]
  %v377 = vld [vmem:[%s373 + $0x18] sm:$0xff]
  %v379 = vsel %vm36, %v369, 0
  %v382 = vsel %vm36, %v370, 0
  %v385 = vsel %vm36, %v371, 0
  %v388 = vsel %vm36, %v372, 0
  %v391 = vsel %vm36, %v374, 0
  %v394 = vsel %vm36, %v375, 0
  %v397 = vsel %vm36, %v376, 0
  %v400 = vsel %vm36, %v377, 0
  %402 = vmatpush.xpose.msra.mxu0 0.0
  %403 = vmatpush.xpose.msra.mxu0 0.0
  %404 = vmatpush.xpose.msra.mxu0 0.0
  %405 = vmatpush.xpose.msra.mxu0 0.0
  %406 = vmatpush.xpose.msra.mxu0 0.0
  %407 = vmatpush.xpose.msra.mxu0 0.0
  %408 = vmatpush.xpose.msra.mxu0 0.0
  %409 = vmatpush.xpose.msra.mxu0 0.0
  %410 = vmatpush.xpose.msra.mxu0 0.0
  %411 = vmatpush.xpose.msra.mxu0 0.0
  %412 = vmatpush.xpose.msra.mxu0 0.0
  %413 = vmatpush.xpose.msra.mxu0 0.0
  %414 = vmatpush.xpose.msra.mxu0 %v400
  %415 = vmatpush.xpose.msra.mxu0 %v397
  %416 = vmatpush.xpose.msra.mxu0 %v394
  %417 = vmatpush.xpose.msra.mxu0 %v391
  %418 = vmatmul.f32.gmra.mxu0 %v379
  %v419 = vpop.f32.mrf.mxu0
  %v420 = vadd.f32 0.0, %v419
  %421 = vmatmul.f32.gmra.mxu0 %v382
  %v422 = vpop.f32.mrf.mxu0
  %v423 = vadd.f32 0.0, %v422
  %424 = vmatmul.f32.gmra.mxu0 %v385
  %v425 = vpop.f32.mrf.mxu0
  %v426 = vadd.f32 0.0, %v425
  %427 = vmatmul.f32.gmra.mxu0 %v388
  %v428 = vpop.f32.mrf.mxu0
  %v429 = vadd.f32 0.0, %v428
  %430 = vdwg.mxu0
  %v431 = vmul.f32 %v420, 0.17677669
  %v432 = vmul.f32 %v423, 0.17677669
  %v433 = vmul.f32 %v426, 0.17677669
  %v434 = vmul.f32 %v429, 0.17677669
  %v435 = vsel %vm94, %v431, -inf
  %436 = vmax.xlane.f32.xlu0 %v435
  %v437 = vpop.xlane.xlu0 %436
  %v438 = vsel %vm94, %v432, -inf
  %439 = vmax.xlane.f32.xlu0 %v438
  %v440 = vpop.xlane.xlu0 %439
  %v441 = vsel %vm94, %v433, -inf
  %442 = vmax.xlane.f32.xlu0 %v441
  %v443 = vpop.xlane.xlu0 %442
  %v444 = vsel %vm94, %v434, -inf
  %445 = vmax.xlane.f32.xlu0 %v444
  %v446 = vpop.xlane.xlu0 %445
  %v447 = vsub.f32 %v431, %v437
  %v448 = vsub.f32 %v432, %v440
  %v449 = vsub.f32 %v433, %v443
  %v450 = vsub.f32 %v434, %v446
  %v451 = vmul.f32 %v447, 1.442695
  %v452 = vpow.pop %v451
  %v453 = vmul.f32 %v448, 1.442695
  %v454 = vpow.pop %v453
  %v455 = vmul.f32 %v449, 1.442695
  %v456 = vpow.pop %v455
  %v457 = vmul.f32 %v450, 1.442695
  %v458 = vpow.pop %v457
  %v459 = vsel %vm94, %v452, 0.0
  %460 = vadd.xlane.f32.xlu0 %v459
  %v461 = vpop.xlane.xlu0 %460
  %v462 = vsel %vm94, %v454, 0.0
  %463 = vadd.xlane.f32.xlu0 %v462
  %v464 = vpop.xlane.xlu0 %463
  %v465 = vsel %vm94, %v456, 0.0
  %466 = vadd.xlane.f32.xlu0 %v465
  %v467 = vpop.xlane.xlu0 %466
  %v468 = vsel %vm94, %v458, 0.0
  %469 = vadd.xlane.f32.xlu0 %v468
  %v470 = vpop.xlane.xlu0 %469
  %v471 = vrcp.pop %v461
  %v472 = vmul.f32 %v461, %v471
  %v473 = vsub.f32 1.0, %v472
  %v474 = vmul.f32 %v471, %v473
  %v475 = vadd.f32 %v471, %v474
  %vm476 = vweird.f32 %v461
  %vm477 = vweird.f32 %v471
  %vm478 = vmor %vm476, %vm477
  %v479 = vsel %vm478, %v471, %v475
  %v480 = vand.u32 2147483647, %v461
  %vm481 = vcmp.eq.f32.partialorder %v480, 8.507059e+37
  %v482 = vand.u32 %v461, 2147483648
  %v483 = vor.u32 1.1754944e-38, %v482
  %v484 = vsel %vm481, %v483, %v479
  %v485 = vmul.f32 %v452, %v484
  %v486 = vrcp.pop %v464
  %v487 = vmul.f32 %v464, %v486
  %v488 = vsub.f32 1.0, %v487
  %v489 = vmul.f32 %v486, %v488
  %v490 = vadd.f32 %v486, %v489
  %vm491 = vweird.f32 %v464
  %vm492 = vweird.f32 %v486
  %vm493 = vmor %vm491, %vm492
  %v494 = vsel %vm493, %v486, %v490
  %v495 = vand.u32 2147483647, %v464
  %vm496 = vcmp.eq.f32.partialorder %v495, 8.507059e+37
  %v497 = vand.u32 %v464, 2147483648
  %v498 = vor.u32 1.1754944e-38, %v497
  %v499 = vsel %vm496, %v498, %v494
  %v500 = vmul.f32 %v454, %v499
  %v501 = vrcp.pop %v467
  %v502 = vmul.f32 %v467, %v501
  %v503 = vsub.f32 1.0, %v502
  %v504 = vmul.f32 %v501, %v503
  %v505 = vadd.f32 %v501, %v504
  %vm506 = vweird.f32 %v467
  %vm507 = vweird.f32 %v501
  %vm508 = vmor %vm506, %vm507
  %v509 = vsel %vm508, %v501, %v505
  %v510 = vand.u32 2147483647, %v467
  %vm511 = vcmp.eq.f32.partialorder %v510, 8.507059e+37
  %v512 = vand.u32 %v467, 2147483648
  %v513 = vor.u32 1.1754944e-38, %v512
  %v514 = vsel %vm511, %v513, %v509
  %v515 = vmul.f32 %v456, %v514
  %v516 = vrcp.pop %v470
  %v517 = vmul.f32 %v470, %v516
  %v518 = vsub.f32 1.0, %v517
  %v519 = vmul.f32 %v516, %v518
  %v520 = vadd.f32 %v516, %v519
  %vm521 = vweird.f32 %v470
  %vm522 = vweird.f32 %v516
  %vm523 = vmor %vm521, %vm522
  %v524 = vsel %vm523, %v516, %v520
  %v525 = vand.u32 2147483647, %v470
  %vm526 = vcmp.eq.f32.partialorder %v525, 8.507059e+37
  %v527 = vand.u32 %v470, 2147483648
  %v528 = vor.u32 1.1754944e-38, %v527
  %v529 = vsel %vm526, %v528, %v524
  %v530 = vmul.f32 %v458, %v529
  %s531 = scalar_lea.vmem %s2, 64
  %v532 = vld [vmem:[%s531] sm:$0xff]
  %v533 = vld [vmem:[%s531 + $0x8] sm:$0xff]
  %v534 = vld [vmem:[%s531 + $0x10] sm:$0xff]
  %v535 = vld [vmem:[%s531 + $0x18] sm:$0xff]
  %v536 = vld [vmem:[%s531 + $0x20] sm:$0xff]
  %v537 = vld [vmem:[%s531 + $0x28] sm:$0xff]
  %v538 = vld [vmem:[%s531 + $0x30] sm:$0xff]
  %v539 = vld [vmem:[%s531 + $0x38] sm:$0xff]
  %v541 = vsel %vm94, %v532, 0
  %v544 = vsel %vm94, %v533, 0
  %v547 = vsel %vm94, %v534, 0
  %v550 = vsel %vm94, %v535, 0
  %v553 = vsel %vm94, %v536, 0
  %v556 = vsel %vm94, %v537, 0
  %v559 = vsel %vm94, %v538, 0
  %v562 = vsel %vm94, %v539, 0
  %v565 = vsel %vm94, %v485, 0
  %v568 = vsel %vm94, %v500, 0
  %v571 = vsel %vm94, %v515, 0
  %v574 = vsel %vm94, %v530, 0
  %576 = vmatpush.xpose.msra.mxu0 0.0
  %577 = vmatpush.xpose.msra.mxu0 0.0
  %578 = vmatpush.xpose.msra.mxu0 0.0
  %579 = vmatpush.xpose.msra.mxu0 0.0
  %580 = vmatpush.xpose.msra.mxu0 0.0
  %581 = vmatpush.xpose.msra.mxu0 0.0
  %582 = vmatpush.xpose.msra.mxu0 0.0
  %583 = vmatpush.xpose.msra.mxu0 0.0
  %584 = vmatpush.xpose.msra.mxu0 0.0
  %585 = vmatpush.xpose.msra.mxu0 0.0
  %586 = vmatpush.xpose.msra.mxu0 0.0
  %587 = vmatpush.xpose.msra.mxu0 0.0
  %588 = vmatpush.xpose.msra.mxu0 %v574
  %589 = vmatpush.xpose.msra.mxu0 %v571
  %590 = vmatpush.xpose.msra.mxu0 %v568
  %591 = vmatpush.xpose.msra.mxu0 %v565
  %592 = vmatmul.f32.gmra.mxu0 %v541
  %v593 = vpop.f32.mrf.mxu0
  %v594 = vadd.f32 0.0, %v593
  %595 = vmatmul.f32.gmra.mxu0 %v544
  %v596 = vpop.f32.mrf.mxu0
  %v597 = vadd.f32 0.0, %v596
  %598 = vmatmul.f32.gmra.mxu0 %v547
  %v599 = vpop.f32.mrf.mxu0
  %v600 = vadd.f32 0.0, %v599
  %601 = vmatmul.f32.gmra.mxu0 %v550
  %v602 = vpop.f32.mrf.mxu0
  %v603 = vadd.f32 0.0, %v602
  %604 = vmatmul.f32.gmra.mxu0 %v553
  %v605 = vpop.f32.mrf.mxu0
  %v606 = vadd.f32 0.0, %v605
  %607 = vmatmul.f32.gmra.mxu0 %v556
  %v608 = vpop.f32.mrf.mxu0
  %v609 = vadd.f32 0.0, %v608
  %610 = vmatmul.f32.gmra.mxu0 %v559
  %v611 = vpop.f32.mrf.mxu0
  %v612 = vadd.f32 0.0, %v611
  %613 = vmatmul.f32.gmra.mxu0 %v562
  %v614 = vpop.f32.mrf.mxu0
  %v615 = vadd.f32 0.0, %v614
  %616 = vdwg.mxu0
  %v618 = vsel %vm94, %v594, 0
  %v621 = vsel %vm94, %v597, 0
  %v624 = vsel %vm94, %v600, 0
  %v627 = vsel %vm94, %v603, 0
  %v630 = vsel %vm94, %v606, 0
  %v633 = vsel %vm94, %v609, 0
  %v636 = vsel %vm94, %v612, 0
  %v639 = vsel %vm94, %v615, 0
  %641 = vmatpush.msra.mxu0 0.0
  %642 = vmatpush.msra.mxu0 0.0
  %643 = vmatpush.msra.mxu0 0.0
  %644 = vmatpush.msra.mxu0 0.0
  %645 = vmatpush.msra.mxu0 0.0
  %646 = vmatpush.msra.mxu0 0.0
  %647 = vmatpush.msra.mxu0 0.0
  %648 = vmatpush.msra.mxu0 0.0
  %649 = vmatpush.msra.mxu0 0.0
  %650 = vmatpush.msra.mxu0 0.0
  %651 = vmatpush.msra.mxu0 0.0
  %652 = vmatpush.msra.mxu0 0.0
  %653 = vmatpush.msra.mxu0 %v26
  %654 = vmatpush.msra.mxu0 %v25
  %655 = vmatpush.msra.mxu0 %v24
  %656 = vmatpush.msra.mxu0 %v23
  %657 = vmatmul.f32.gmra.mxu0 %v618
  %v658 = vpop.f32.mrf.mxu0
  %v659 = vadd.f32 %v277, %v658
  %660 = vmatmul.f32.gmra.mxu0 %v621
  %v661 = vpop.f32.mrf.mxu0
  %v662 = vadd.f32 %v277, %v661
  %663 = vmatmul.f32.gmra.mxu0 %v624
  %v664 = vpop.f32.mrf.mxu0
  %v665 = vadd.f32 %v277, %v664
  %666 = vmatmul.f32.gmra.mxu0 %v627
  %v667 = vpop.f32.mrf.mxu0
  %v668 = vadd.f32 %v277, %v667
  %669 = vmatmul.f32.gmra.mxu0 %v630
  %v670 = vpop.f32.mrf.mxu0
  %v671 = vadd.f32 %v277, %v670
  %672 = vmatmul.f32.gmra.mxu0 %v633
  %v673 = vpop.f32.mrf.mxu0
  %v674 = vadd.f32 %v277, %v673
  %675 = vmatmul.f32.gmra.mxu0 %v636
  %v676 = vpop.f32.mrf.mxu0
  %v677 = vadd.f32 %v277, %v676
  %678 = vmatmul.f32.gmra.mxu0 %v639
  %v679 = vpop.f32.mrf.mxu0
  %v680 = vadd.f32 %v277, %v679
  %681 = vdwg.mxu0
  %s682 = scalar_lea.vmem %s3, 64
  %v683 = vld [vmem:[%s682] sm:$0xff]
  %v684 = vld [vmem:[%s682 + $0x8] sm:$0xff]
  %v685 = vld [vmem:[%s682 + $0x10] sm:$0xff]
  %v686 = vld [vmem:[%s682 + $0x18] sm:$0xff]
  %v687 = vld [vmem:[%s682 + $0x20] sm:$0xff]
  %v688 = vld [vmem:[%s682 + $0x28] sm:$0xff]
  %v689 = vld [vmem:[%s682 + $0x30] sm:$0xff]
  %v690 = vld [vmem:[%s682 + $0x38] sm:$0xff]
  %v691 = vadd.f32 %v659, %v683
  %v692 = vadd.f32 %v662, %v684
  %v693 = vadd.f32 %v665, %v685
  %v694 = vadd.f32 %v668, %v686
  %v695 = vadd.f32 %v671, %v687
  %v696 = vadd.f32 %v674, %v688
  %v697 = vadd.f32 %v677, %v689
  %v698 = vadd.f32 %v680, %v690
  %s699 = scalar_lea.vmem %s6, 64
  %700 = vst.msk [vmem:[%s699] sm:$0xff] %vm94, %v691
  %701 = vst.msk [vmem:[%s699 + $0x8] sm:$0xff] %vm94, %v692
  %702 = vst.msk [vmem:[%s699 + $0x10] sm:$0xff] %vm94, %v693
  %703 = vst.msk [vmem:[%s699 + $0x18] sm:$0xff] %vm94, %v694
  %704 = vst.msk [vmem:[%s699 + $0x20] sm:$0xff] %vm94, %v695
  %705 = vst.msk [vmem:[%s699 + $0x28] sm:$0xff] %vm94, %v696
  %706 = vst.msk [vmem:[%s699 + $0x30] sm:$0xff] %vm94, %v697
  %707 = vst.msk [vmem:[%s699 + $0x38] sm:$0xff] %vm94, %v698
  // Predicated region
  $region26: #{upsample_block_fwd.12} parent=0 // pred_check
    _
  $region27: #{upsample_block_fwd.12} parent=0 // pred_check_branch
    %709 = sbr.rel (0) target = $region29
  $region28: #{upsample_block_fwd.12} parent=0 // pred_region
    _
  $region29: #{upsample_block_fwd.12} parent=0 // pred_fallthru
    _
  // Predicated region
  $region30: #{upsample_block_fwd.12} parent=0 // pred_check
    _
  $region31: #{upsample_block_fwd.12} parent=0 // pred_check_branch
    %711 = sbr.rel (0) target = $region33
  $region32: #{upsample_block_fwd.12} parent=0 // pred_region
    _
  $region33: #{upsample_block_fwd.12} parent=0 // pred_fallthru
    _

// kernel: upsample_block_fwd.19
$region0: #{upsample_block_fwd.19}
  #allocation0 [shape = 'u32[]', space=smem, size = 0x4, offset = 0x4, fixed_abs, tag = 'smem constant byte address 0x4 - core index']
  #allocation1 [shape = 'u32[72,128]{1,0:T(1,128)}', space=vmem, size = 0x9000, scoped, tag = 'internal scratch']
  %s0 = inlined_call_operand.vmem [shape: f32[64,64], index: 0, kind: input, shape index: {}]
  %s1 = inlined_call_operand.vmem [shape: f32[64,256], index: 1, kind: input, shape index: {}]
  %s2 = inlined_call_operand.vmem [shape: f32[64,256], index: 2, kind: output, shape index: {}]
  %s3 = sld [smem:[#allocation0]]
  $region18: #{upsample_block_fwd.19} parent=0
    _
  %s5 = ssub.s32 1, %s3
  %s6 = scalar_select 0, %s5, %s3
  // Predicated region
  $region2: #{upsample_block_fwd.19} parent=0 // pred_check
    _
  $region3: #{upsample_block_fwd.19} parent=0 // pred_check_branch
    %8 = sbr.rel (0) target = $region5
  $region4: #{upsample_block_fwd.19} parent=0 // pred_region
    _
  $region5: #{upsample_block_fwd.19} parent=0 // pred_fallthru
    _
  // Predicated region
  $region6: #{upsample_block_fwd.19} parent=0 // pred_check
    _
  $region7: #{upsample_block_fwd.19} parent=0 // pred_check_branch
    %10 = sbr.rel (0) target = $region9
  $region8: #{upsample_block_fwd.19} parent=0 // pred_region
    _
  $region9: #{upsample_block_fwd.19} parent=0 // pred_fallthru
    _
  %v11 = vld [vmem:[%s0] sm:$0xff]
  %v12 = vld [vmem:[%s0 + $0x8] sm:$0xff]
  %v13 = vld [vmem:[%s0 + $0x10] sm:$0xff]
  %v14 = vld [vmem:[%s0 + $0x18] sm:$0xff]
  %v15 = vld [vmem:[%s0 + $0x20] sm:$0xff]
  %v16 = vld [vmem:[%s0 + $0x28] sm:$0xff]
  %v17 = vld [vmem:[%s0 + $0x30] sm:$0xff]
  %v18 = vld [vmem:[%s0 + $0x38] sm:$0xff]
  %v19 = vld [vmem:[%s1] sm:$0xff]
  %v20 = vld [vmem:[%s1 + $0x8] sm:$0xff]
  %v21 = vld [vmem:[%s1 + $0x10] sm:$0xff]
  %v22 = vld [vmem:[%s1 + $0x18] sm:$0xff]
  %v23 = vld [vmem:[%s1 + $0x20] sm:$0xff]
  %v24 = vld [vmem:[%s1 + $0x28] sm:$0xff]
  %v25 = vld [vmem:[%s1 + $0x30] sm:$0xff]
  %v26 = vld [vmem:[%s1 + $0x38] sm:$0xff]
  %v27 = vld [vmem:[%s1 + $0x40] sm:$0xff]
  %v28 = vld [vmem:[%s1 + $0x48] sm:$0xff]
  %v29 = vld [vmem:[%s1 + $0x50] sm:$0xff]
  %v30 = vld [vmem:[%s1 + $0x58] sm:$0xff]
  %v31 = vld [vmem:[%s1 + $0x60] sm:$0xff]
  %v32 = vld [vmem:[%s1 + $0x68] sm:$0xff]
  %v33 = vld [vmem:[%s1 + $0x70] sm:$0xff]
  %v34 = vld [vmem:[%s1 + $0x78] sm:$0xff]
  %vm35 = vcmask 523264
  %v37 = vsel %vm35, %v11, 0
  %v40 = vsel %vm35, %v12, 0
  %v43 = vsel %vm35, %v13, 0
  %v46 = vsel %vm35, %v14, 0
  %v49 = vsel %vm35, %v15, 0
  %v52 = vsel %vm35, %v16, 0
  %v55 = vsel %vm35, %v17, 0
  %v58 = vsel %vm35, %v18, 0
  %60 = vmatpush.msra.mxu0 0.0
  %61 = vmatpush.msra.mxu0 0.0
  %62 = vmatpush.msra.mxu0 0.0
  %63 = vmatpush.msra.mxu0 0.0
  %64 = vmatpush.msra.mxu0 0.0
  %65 = vmatpush.msra.mxu0 0.0
  %66 = vmatpush.msra.mxu0 0.0
  %67 = vmatpush.msra.mxu0 0.0
  %68 = vmatpush.msra.mxu0 %v33
  %69 = vmatpush.msra.mxu0 %v31
  %70 = vmatpush.msra.mxu0 %v29
  %71 = vmatpush.msra.mxu0 %v27
  %72 = vmatpush.msra.mxu0 %v25
  %73 = vmatpush.msra.mxu0 %v23
  %74 = vmatpush.msra.mxu0 %v21
  %75 = vmatpush.msra.mxu0 %v19
  %76 = vmatmul.f32.gmra.mxu0 %v37
  %v77 = vpop.f32.mrf.mxu0
  %v78 = vadd.f32 0.0, %v77
  %79 = vmatmul.f32.gmra.mxu0 %v40
  %v80 = vpop.f32.mrf.mxu0
  %v81 = vadd.f32 0.0, %v80
  %82 = vmatmul.f32.gmra.mxu0 %v43
  %v83 = vpop.f32.mrf.mxu0
  %v84 = vadd.f32 0.0, %v83
  %85 = vmatmul.f32.gmra.mxu0 %v46
  %v86 = vpop.f32.mrf.mxu0
  %v87 = vadd.f32 0.0, %v86
  %88 = vmatmul.f32.gmra.mxu0 %v49
  %v89 = vpop.f32.mrf.mxu0
  %v90 = vadd.f32 0.0, %v89
  %91 = vmatmul.f32.gmra.mxu0 %v52
  %v92 = vpop.f32.mrf.mxu0
  %v93 = vadd.f32 0.0, %v92
  %94 = vmatmul.f32.gmra.mxu0 %v55
  %v95 = vpop.f32.mrf.mxu0
  %v96 = vadd.f32 0.0, %v95
  %97 = vmatmul.f32.gmra.mxu0 %v58
  %v98 = vpop.f32.mrf.mxu0
  %v99 = vadd.f32 0.0, %v98
  %100 = vdwg.mxu0
  %101 = vmatpush.msra.mxu0 0.0
  %102 = vmatpush.msra.mxu0 0.0
  %103 = vmatpush.msra.mxu0 0.0
  %104 = vmatpush.msra.mxu0 0.0
  %105 = vmatpush.msra.mxu0 0.0
  %106 = vmatpush.msra.mxu0 0.0
  %107 = vmatpush.msra.mxu0 0.0
  %108 = vmatpush.msra.mxu0 0.0
  %109 = vmatpush.msra.mxu0 %v34
  %110 = vmatpush.msra.mxu0 %v32
  %111 = vmatpush.msra.mxu0 %v30
  %112 = vmatpush.msra.mxu0 %v28
  %113 = vmatpush.msra.mxu0 %v26
  %114 = vmatpush.msra.mxu0 %v24
  %115 = vmatpush.msra.mxu0 %v22
  %116 = vmatpush.msra.mxu0 %v20
  %117 = vmatmul.f32.gmra.mxu0 %v37
  %v118 = vpop.f32.mrf.mxu0
  %v119 = vadd.f32 0.0, %v118
  %120 = vmatmul.f32.gmra.mxu0 %v40
  %v121 = vpop.f32.mrf.mxu0
  %v122 = vadd.f32 0.0, %v121
  %123 = vmatmul.f32.gmra.mxu0 %v43
  %v124 = vpop.f32.mrf.mxu0
  %v125 = vadd.f32 0.0, %v124
  %126 = vmatmul.f32.gmra.mxu0 %v46
  %v127 = vpop.f32.mrf.mxu0
  %v128 = vadd.f32 0.0, %v127
  %129 = vmatmul.f32.gmra.mxu0 %v49
  %v130 = vpop.f32.mrf.mxu0
  %v131 = vadd.f32 0.0, %v130
  %132 = vmatmul.f32.gmra.mxu0 %v52
  %v133 = vpop.f32.mrf.mxu0
  %v134 = vadd.f32 0.0, %v133
  %135 = vmatmul.f32.gmra.mxu0 %v55
  %v136 = vpop.f32.mrf.mxu0
  %v137 = vadd.f32 0.0, %v136
  %138 = vmatmul.f32.gmra.mxu0 %v58
  %v139 = vpop.f32.mrf.mxu0
  %v140 = vadd.f32 0.0, %v139
  %141 = vdwg.mxu0
  %142 = vst [vmem:[%s2] sm:$0xff] %v78
  %143 = vst [vmem:[%s2 + $0x8] sm:$0xff] %v119
  %144 = vst [vmem:[%s2 + $0x10] sm:$0xff] %v81
  %145 = vst [vmem:[%s2 + $0x18] sm:$0xff] %v122
  %146 = vst [vmem:[%s2 + $0x20] sm:$0xff] %v84
  %147 = vst [vmem:[%s2 + $0x28] sm:$0xff] %v125
  %148 = vst [vmem:[%s2 + $0x30] sm:$0xff] %v87
  %149 = vst [vmem:[%s2 + $0x38] sm:$0xff] %v128
  %150 = vst [vmem:[%s2 + $0x40] sm:$0xff] %v90
  %151 = vst [vmem:[%s2 + $0x48] sm:$0xff] %v131
  %152 = vst [vmem:[%s2 + $0x50] sm:$0xff] %v93
  %153 = vst [vmem:[%s2 + $0x58] sm:$0xff] %v134
  %154 = vst [vmem:[%s2 + $0x60] sm:$0xff] %v96
  %155 = vst [vmem:[%s2 + $0x68] sm:$0xff] %v137
  %156 = vst [vmem:[%s2 + $0x70] sm:$0xff] %v99
  %157 = vst [vmem:[%s2 + $0x78] sm:$0xff] %v140
  // Predicated region
  $region10: #{upsample_block_fwd.19} parent=0 // pred_check
    _
  $region11: #{upsample_block_fwd.19} parent=0 // pred_check_branch
    %159 = sbr.rel (0) target = $region13
  $region12: #{upsample_block_fwd.19} parent=0 // pred_region
    _
  $region13: #{upsample_block_fwd.19} parent=0 // pred_fallthru
    _
  // Predicated region
  $region14: #{upsample_block_fwd.19} parent=0 // pred_check
    _
  $region15: #{upsample_block_fwd.19} parent=0 // pred_check_branch
    %161 = sbr.rel (0) target = $region17
  $region16: #{upsample_block_fwd.19} parent=0 // pred_region
    _
  $region17: #{upsample_block_fwd.19} parent=0 // pred_fallthru
    _

// kernel: upsample_block_fwd.11
$region0: #{upsample_block_fwd.11}
  #allocation0 [shape = 'u32[]', space=smem, size = 0x4, offset = 0x4, fixed_abs, tag = 'smem constant byte address 0x4 - core index']
  #allocation1 [shape = 'u32[72,128]{1,0:T(1,128)}', space=vmem, size = 0x9000, scoped, tag = 'internal scratch']
  %s0 = inlined_call_operand.vmem [shape: f32[2,32,64], index: 0, kind: input, shape index: {}]
  %s1 = inlined_call_operand.vmem [shape: f32[32,1], index: 1, kind: input, shape index: {}]
  %s2 = inlined_call_operand.vmem [shape: f32[32,1], index: 2, kind: input, shape index: {}]
  %s3 = inlined_call_operand.vmem [shape: f32[32,32], index: 3, kind: input, shape index: {}]
  %s4 = inlined_call_operand.vmem [shape: f32[96,32], index: 4, kind: input, shape index: {}]
  %s5 = inlined_call_operand.vmem [shape: f32[96,1], index: 5, kind: input, shape index: {}]
  %s6 = inlined_call_operand.vmem [shape: f32[2,96,64], index: 6, kind: output, shape index: {}]
  %s7 = sld [smem:[#allocation0]]
  $region34: #{upsample_block_fwd.11} parent=0
    _
  %s9 = ssub.s32 1, %s7
  %s10 = scalar_select 0, %s9, %s7
  // Predicated region
  $region2: #{upsample_block_fwd.11} parent=0 // pred_check
    _
  $region3: #{upsample_block_fwd.11} parent=0 // pred_check_branch
    %12 = sbr.rel (0) target = $region5
  $region4: #{upsample_block_fwd.11} parent=0 // pred_region
    _
  $region5: #{upsample_block_fwd.11} parent=0 // pred_fallthru
    _
  // Predicated region
  $region6: #{upsample_block_fwd.11} parent=0 // pred_check
    _
  $region7: #{upsample_block_fwd.11} parent=0 // pred_check_branch
    %14 = sbr.rel (0) target = $region9
  $region8: #{upsample_block_fwd.11} parent=0 // pred_region
    _
  $region9: #{upsample_block_fwd.11} parent=0 // pred_fallthru
    _
  // Predicated region
  $region10: #{upsample_block_fwd.11} parent=0 // pred_check
    _
  $region11: #{upsample_block_fwd.11} parent=0 // pred_check_branch
    %16 = sbr.rel (0) target = $region13
  $region12: #{upsample_block_fwd.11} parent=0 // pred_region
    _
  $region13: #{upsample_block_fwd.11} parent=0 // pred_fallthru
    _
  // Predicated region
  $region14: #{upsample_block_fwd.11} parent=0 // pred_check
    _
  $region15: #{upsample_block_fwd.11} parent=0 // pred_check_branch
    %18 = sbr.rel (0) target = $region17
  $region16: #{upsample_block_fwd.11} parent=0 // pred_region
    _
  $region17: #{upsample_block_fwd.11} parent=0 // pred_fallthru
    _
  // Predicated region
  $region18: #{upsample_block_fwd.11} parent=0 // pred_check
    _
  $region19: #{upsample_block_fwd.11} parent=0 // pred_check_branch
    %20 = sbr.rel (0) target = $region21
  $region20: #{upsample_block_fwd.11} parent=0 // pred_region
    _
  $region21: #{upsample_block_fwd.11} parent=0 // pred_fallthru
    _
  // Predicated region
  $region22: #{upsample_block_fwd.11} parent=0 // pred_check
    _
  $region23: #{upsample_block_fwd.11} parent=0 // pred_check_branch
    %22 = sbr.rel (0) target = $region25
  $region24: #{upsample_block_fwd.11} parent=0 // pred_region
    _
  $region25: #{upsample_block_fwd.11} parent=0 // pred_fallthru
    _
  %v23 = vld [vmem:[%s1] sm:$0xff]
  %v24 = vld [vmem:[%s1 + $0x8] sm:$0xff]
  %v25 = vld [vmem:[%s1 + $0x10] sm:$0xff]
  %v26 = vld [vmem:[%s1 + $0x18] sm:$0xff]
  %v27 = vld [vmem:[%s2] sm:$0xff]
  %v28 = vld [vmem:[%s2 + $0x8] sm:$0xff]
  %v29 = vld [vmem:[%s2 + $0x10] sm:$0xff]
  %v30 = vld [vmem:[%s2 + $0x18] sm:$0xff]
  %v31 = vld [vmem:[%s3] sm:$0xff]
  %v32 = vld [vmem:[%s3 + $0x8] sm:$0xff]
  %v33 = vld [vmem:[%s3 + $0x10] sm:$0xff]
  %v34 = vld [vmem:[%s3 + $0x18] sm:$0xff]
  %v35 = vld [vmem:[%s4] sm:$0xff]
  %v36 = vld [vmem:[%s4 + $0x8] sm:$0xff]
  %v37 = vld [vmem:[%s4 + $0x10] sm:$0xff]
  %v38 = vld [vmem:[%s4 + $0x18] sm:$0xff]
  %v39 = vld [vmem:[%s4 + $0x20] sm:$0xff]
  %v40 = vld [vmem:[%s4 + $0x28] sm:$0xff]
  %v41 = vld [vmem:[%s4 + $0x30] sm:$0xff]
  %v42 = vld [vmem:[%s4 + $0x38] sm:$0xff]
  %v43 = vld [vmem:[%s4 + $0x40] sm:$0xff]
  %v44 = vld [vmem:[%s4 + $0x48] sm:$0xff]
  %v45 = vld [vmem:[%s4 + $0x50] sm:$0xff]
  %v46 = vld [vmem:[%s4 + $0x58] sm:$0xff]
  %v47 = vld [vmem:[%s5] sm:$0xff]
  %v48 = vld [vmem:[%s5 + $0x8] sm:$0xff]
  %v49 = vld [vmem:[%s5 + $0x10] sm:$0xff]
  %v50 = vld [vmem:[%s5 + $0x18] sm:$0xff]
  %v51 = vld [vmem:[%s5 + $0x20] sm:$0xff]
  %v52 = vld [vmem:[%s5 + $0x28] sm:$0xff]
  %v53 = vld [vmem:[%s5 + $0x30] sm:$0xff]
  %v54 = vld [vmem:[%s5 + $0x38] sm:$0xff]
  %v55 = vld [vmem:[%s5 + $0x40] sm:$0xff]
  %v56 = vld [vmem:[%s5 + $0x48] sm:$0xff]
  %v57 = vld [vmem:[%s5 + $0x50] sm:$0xff]
  %v58 = vld [vmem:[%s5 + $0x58] sm:$0xff]
  %v59 = vld [vmem:[%s0] sm:$0xff]
  %v60 = vld [vmem:[%s0 + $0x8] sm:$0xff]
  %v61 = vld [vmem:[%s0 + $0x10] sm:$0xff]
  %v62 = vld [vmem:[%s0 + $0x18] sm:$0xff]
  %vm63 = vcmask 261120
  %v65 = vsel %vm63, %v31, 0
  %v68 = vsel %vm63, %v32, 0
  %v71 = vsel %vm63, %v33, 0
  %v74 = vsel %vm63, %v34, 0
  %76 = vmatpush.msra.mxu0 0.0
  %77 = vmatpush.msra.mxu0 0.0
  %78 = vmatpush.msra.mxu0 0.0
  %79 = vmatpush.msra.mxu0 0.0
  %80 = vmatpush.msra.mxu0 0.0
  %81 = vmatpush.msra.mxu0 0.0
  %82 = vmatpush.msra.mxu0 0.0
  %83 = vmatpush.msra.mxu0 0.0
  %84 = vmatpush.msra.mxu0 0.0
  %85 = vmatpush.msra.mxu0 0.0
  %86 = vmatpush.msra.mxu0 0.0
  %87 = vmatpush.msra.mxu0 0.0
  %88 = vmatpush.msra.mxu0 %v62
  %89 = vmatpush.msra.mxu0 %v61
  %90 = vmatpush.msra.mxu0 %v60
  %91 = vmatpush.msra.mxu0 %v59
  %92 = vmatmul.f32.gmra.mxu0 %v65
  %v93 = vpop.f32.mrf.mxu0
  %v94 = vadd.f32 0.0, %v93
  %95 = vmatmul.f32.gmra.mxu0 %v68
  %v96 = vpop.f32.mrf.mxu0
  %v97 = vadd.f32 0.0, %v96
  %98 = vmatmul.f32.gmra.mxu0 %v71
  %v99 = vpop.f32.mrf.mxu0
  %v100 = vadd.f32 0.0, %v99
  %101 = vmatmul.f32.gmra.mxu0 %v74
  %v102 = vpop.f32.mrf.mxu0
  %v103 = vadd.f32 0.0, %v102
  %104 = vdwg.mxu0
  %vm105 = vcmask 523264
  %v106 = vsel %vm105, %v94, 0.0
  %107 = vadd.xlane.f32.xlu0 %v106
  %v108 = vpop.xlane.xlu0 %107
  %v109 = vsel %vm105, %v97, 0.0
  %110 = vadd.xlane.f32.xlu0 %v109
  %v111 = vpop.xlane.xlu0 %110
  %v112 = vsel %vm105, %v100, 0.0
  %113 = vadd.xlane.f32.xlu0 %v112
  %v114 = vpop.xlane.xlu0 %113
  %v115 = vsel %vm105, %v103, 0.0
  %116 = vadd.xlane.f32.xlu0 %v115
  %v117 = vpop.xlane.xlu0 %116
  %v118 = vmul.f32 %v108, 0.015625
  %v119 = vmul.f32 %v111, 0.015625
  %v120 = vmul.f32 %v114, 0.015625
  %v121 = vmul.f32 %v117, 0.015625
  %v122 = vsub.f32 %v59, %v118
  %v123 = vsub.f32 %v60, %v119
  %v124 = vsub.f32 %v61, %v120
  %v125 = vsub.f32 %v62, %v121
  %v126 = vmul.f32 %v122, %v122
  %v127 = vmul.f32 %v123, %v123
  %v128 = vmul.f32 %v124, %v124
  %v129 = vmul.f32 %v125, %v125
  %130 = vmatpush.msra.mxu0 0.0
  %131 = vmatpush.msra.mxu0 0.0
  %132 = vmatpush.msra.mxu0 0.0
  %133 = vmatpush.msra.mxu0 0.0
  %134 = vmatpush.msra.mxu0 0.0
  %135 = vmatpush.msra.mxu0 0.0
  %136 = vmatpush.msra.mxu0 0.0
  %137 = vmatpush.msra.mxu0 0.0
  %138 = vmatpush.msra.mxu0 0.0
  %139 = vmatpush.msra.mxu0 0.0
  %140 = vmatpush.msra.mxu0 0.0
  %141 = vmatpush.msra.mxu0 0.0
  %142 = vmatpush.msra.mxu0 %v129
  %143 = vmatpush.msra.mxu0 %v128
  %144 = vmatpush.msra.mxu0 %v127
  %145 = vmatpush.msra.mxu0 %v126
  %146 = vmatmul.f32.gmra.mxu0 %v65
  %v147 = vpop.f32.mrf.mxu0
  %v148 = vadd.f32 0.0, %v147
  %149 = vmatmul.f32.gmra.mxu0 %v68
  %v150 = vpop.f32.mrf.mxu0
  %v151 = vadd.f32 0.0, %v150
  %152 = vmatmul.f32.gmra.mxu0 %v71
  %v153 = vpop.f32.mrf.mxu0
  %v154 = vadd.f32 0.0, %v153
  %155 = vmatmul.f32.gmra.mxu0 %v74
  %v156 = vpop.f32.mrf.mxu0
  %v157 = vadd.f32 0.0, %v156
  %158 = vdwg.mxu0
  %v159 = vsel %vm105, %v148, 0.0
  %160 = vadd.xlane.f32.xlu0 %v159
  %v161 = vpop.xlane.xlu0 %160
  %v162 = vsel %vm105, %v151, 0.0
  %163 = vadd.xlane.f32.xlu0 %v162
  %v164 = vpop.xlane.xlu0 %163
  %v165 = vsel %vm105, %v154, 0.0
  %166 = vadd.xlane.f32.xlu0 %v165
  %v167 = vpop.xlane.xlu0 %166
  %v168 = vsel %vm105, %v157, 0.0
  %169 = vadd.xlane.f32.xlu0 %v168
  %v170 = vpop.xlane.xlu0 %169
  %v171 = vmul.f32 %v161, 0.015625
  %v172 = vmul.f32 %v164, 0.015625
  %v173 = vmul.f32 %v167, 0.015625
  %v174 = vmul.f32 %v170, 0.015625
  %v175 = vadd.f32 %v171, 1e-05
  %v176 = vadd.f32 %v172, 1e-05
  %v177 = vadd.f32 %v173, 1e-05
  %v178 = vadd.f32 %v174, 1e-05
  %v179 = vrsqrt.pop %v175
  %v180 = vmul.f32 %v179, %v175
  %v181 = vmul.f32 %v180, %v179
  %v182 = vmul.f32 0.5, %v181
  %v183 = vsub.f32 1.5, %v182
  %v184 = vmul.f32 %v179, %v183
  %vm185 = vweird.f32 %v175
  %vm186 = vweird.f32 %v179
  %vm187 = vmor %vm185, %vm186
  %v188 = vsel %vm187, %v179, %v184
  %v189 = vrsqrt.pop %v176
  %v190 = vmul.f32 %v189, %v176
  %v191 = vmul.f32 %v190, %v189
  %v192 = vmul.f32 0.5, %v191
  %v193 = vsub.f32 1.5, %v192
  %v194 = vmul.f32 %v189, %v193
  %vm195 = vweird.f32 %v176
  %vm196 = vweird.f32 %v189
  %vm197 = vmor %vm195, %vm196
  %v198 = vsel %vm197, %v189, %v194
  %v199 = vrsqrt.pop %v177
  %v200 = vmul.f32 %v199, %v177
  %v201 = vmul.f32 %v200, %v199
  %v202 = vmul.f32 0.5, %v201
  %v203 = vsub.f32 1.5, %v202
  %v204 = vmul.f32 %v199, %v203
  %vm205 = vweird.f32 %v177
  %vm206 = vweird.f32 %v199
  %vm207 = vmor %vm205, %vm206
  %v208 = vsel %vm207, %v199, %v204
  %v209 = vrsqrt.pop %v178
  %v210 = vmul.f32 %v209, %v178
  %v211 = vmul.f32 %v210, %v209
  %v212 = vmul.f32 0.5, %v211
  %v213 = vsub.f32 1.5, %v212
  %v214 = vmul.f32 %v209, %v213
  %vm215 = vweird.f32 %v178
  %vm216 = vweird.f32 %v209
  %vm217 = vmor %vm215, %vm216
  %v218 = vsel %vm217, %v209, %v214
  %v219 = vmul.f32 %v122, %v188
  %v220 = vmul.f32 %v123, %v198
  %v221 = vmul.f32 %v124, %v208
  %v222 = vmul.f32 %v125, %v218
  %224 = vset.pattern.permute.xlu0 0
  %225 = vperm.xlu0 %224, %v23
  %v226 = vpop.permute.xlu0 %225
  %229 = vset.pattern.permute.xlu0 0
  %230 = vperm.xlu0 %229, %v24
  %v231 = vpop.permute.xlu0 %230
  %234 = vset.pattern.permute.xlu0 0
  %235 = vperm.xlu0 %234, %v25
  %v236 = vpop.permute.xlu0 %235
  %239 = vset.pattern.permute.xlu0 0
  %240 = vperm.xlu0 %239, %v26
  %v241 = vpop.permute.xlu0 %240
  %v243 = vmul.f32 %v219, %v226
  %v244 = vmul.f32 %v220, %v231
  %v245 = vmul.f32 %v221, %v236
  %v246 = vmul.f32 %v222, %v241
  %248 = vset.pattern.permute.xlu0 0
  %249 = vperm.xlu0 %248, %v27
  %v250 = vpop.permute.xlu0 %249
  %253 = vset.pattern.permute.xlu0 0
  %254 = vperm.xlu0 %253, %v28
  %v255 = vpop.permute.xlu0 %254
  %258 = vset.pattern.permute.xlu0 0
  %259 = vperm.xlu0 %258, %v29
  %v260 = vpop.permute.xlu0 %259
  %263 = vset.pattern.permute.xlu0 0
  %264 = vperm.xlu0 %263, %v30
  %v265 = vpop.permute.xlu0 %264
  %v267 = vadd.f32 %v243, %v250
  %v268 = vadd.f32 %v244, %v255
  %v269 = vadd.f32 %v245, %v260
  %v270 = vadd.f32 %v246, %v265
  %272 = vset.pattern.permute.xlu0 0
  %273 = vperm.xlu0 %272, %v47
  %v274 = vpop.permute.xlu0 %273
  %277 = vset.pattern.permute.xlu0 0
  %278 = vperm.xlu0 %277, %v48
  %v279 = vpop.permute.xlu0 %278
  %282 = vset.pattern.permute.xlu0 0
  %283 = vperm.xlu0 %282, %v49
  %v284 = vpop.permute.xlu0 %283
  %287 = vset.pattern.permute.xlu0 0
  %288 = vperm.xlu0 %287, %v50
  %v289 = vpop.permute.xlu0 %288
  %292 = vset.pattern.permute.xlu0 0
  %293 = vperm.xlu0 %292, %v51
  %v294 = vpop.permute.xlu0 %293
  %297 = vset.pattern.permute.xlu0 0
  %298 = vperm.xlu0 %297, %v52
  %v299 = vpop.permute.xlu0 %298
  %302 = vset.pattern.permute.xlu0 0
  %303 = vperm.xlu0 %302, %v53
  %v304 = vpop.permute.xlu0 %303
  %307 = vset.pattern.permute.xlu0 0
  %308 = vperm.xlu0 %307, %v54
  %v309 = vpop.permute.xlu0 %308
  %312 = vset.pattern.permute.xlu0 0
  %313 = vperm.xlu0 %312, %v55
  %v314 = vpop.permute.xlu0 %313
  %317 = vset.pattern.permute.xlu0 0
  %318 = vperm.xlu0 %317, %v56
  %v319 = vpop.permute.xlu0 %318
  %322 = vset.pattern.permute.xlu0 0
  %323 = vperm.xlu0 %322, %v57
  %v324 = vpop.permute.xlu0 %323
  %327 = vset.pattern.permute.xlu0 0
  %328 = vperm.xlu0 %327, %v58
  %v329 = vpop.permute.xlu0 %328
  %v332 = vsel %vm63, %v35, 0
  %v335 = vsel %vm63, %v36, 0
  %v338 = vsel %vm63, %v37, 0
  %v341 = vsel %vm63, %v38, 0
  %v344 = vsel %vm63, %v39, 0
  %v347 = vsel %vm63, %v40, 0
  %v350 = vsel %vm63, %v41, 0
  %v353 = vsel %vm63, %v42, 0
  %v356 = vsel %vm63, %v43, 0
  %v359 = vsel %vm63, %v44, 0
  %v362 = vsel %vm63, %v45, 0
  %v365 = vsel %vm63, %v46, 0
  %367 = vmatpush.msra.mxu0 0.0
  %368 = vmatpush.msra.mxu0 0.0
  %369 = vmatpush.msra.mxu0 0.0
  %370 = vmatpush.msra.mxu0 0.0
  %371 = vmatpush.msra.mxu0 0.0
  %372 = vmatpush.msra.mxu0 0.0
  %373 = vmatpush.msra.mxu0 0.0
  %374 = vmatpush.msra.mxu0 0.0
  %375 = vmatpush.msra.mxu0 0.0
  %376 = vmatpush.msra.mxu0 0.0
  %377 = vmatpush.msra.mxu0 0.0
  %378 = vmatpush.msra.mxu0 0.0
  %379 = vmatpush.msra.mxu0 %v270
  %380 = vmatpush.msra.mxu0 %v269
  %381 = vmatpush.msra.mxu0 %v268
  %382 = vmatpush.msra.mxu0 %v267
  %383 = vmatmul.f32.gmra.mxu0 %v332
  %v384 = vpop.f32.mrf.mxu0
  %v385 = vadd.f32 %v274, %v384
  %386 = vmatmul.f32.gmra.mxu0 %v335
  %v387 = vpop.f32.mrf.mxu0
  %v388 = vadd.f32 %v279, %v387
  %389 = vmatmul.f32.gmra.mxu0 %v338
  %v390 = vpop.f32.mrf.mxu0
  %v391 = vadd.f32 %v284, %v390
  %392 = vmatmul.f32.gmra.mxu0 %v341
  %v393 = vpop.f32.mrf.mxu0
  %v394 = vadd.f32 %v289, %v393
  %395 = vmatmul.f32.gmra.mxu0 %v344
  %v396 = vpop.f32.mrf.mxu0
  %v397 = vadd.f32 %v294, %v396
  %398 = vmatmul.f32.gmra.mxu0 %v347
  %v399 = vpop.f32.mrf.mxu0
  %v400 = vadd.f32 %v299, %v399
  %401 = vmatmul.f32.gmra.mxu0 %v350
  %v402 = vpop.f32.mrf.mxu0
  %v403 = vadd.f32 %v304, %v402
  %404 = vmatmul.f32.gmra.mxu0 %v353
  %v405 = vpop.f32.mrf.mxu0
  %v406 = vadd.f32 %v309, %v405
  %407 = vmatmul.f32.gmra.mxu0 %v356
  %v408 = vpop.f32.mrf.mxu0
  %v409 = vadd.f32 %v314, %v408
  %410 = vmatmul.f32.gmra.mxu0 %v359
  %v411 = vpop.f32.mrf.mxu0
  %v412 = vadd.f32 %v319, %v411
  %413 = vmatmul.f32.gmra.mxu0 %v362
  %v414 = vpop.f32.mrf.mxu0
  %v415 = vadd.f32 %v324, %v414
  %416 = vmatmul.f32.gmra.mxu0 %v365
  %v417 = vpop.f32.mrf.mxu0
  %v418 = vadd.f32 %v329, %v417
  %419 = vdwg.mxu0
  %420 = vst.msk [vmem:[%s6] sm:$0xff] %vm105, %v385
  %421 = vst.msk [vmem:[%s6 + $0x8] sm:$0xff] %vm105, %v388
  %422 = vst.msk [vmem:[%s6 + $0x10] sm:$0xff] %vm105, %v391
  %423 = vst.msk [vmem:[%s6 + $0x18] sm:$0xff] %vm105, %v394
  %424 = vst.msk [vmem:[%s6 + $0x20] sm:$0xff] %vm105, %v397
  %425 = vst.msk [vmem:[%s6 + $0x28] sm:$0xff] %vm105, %v400
  %426 = vst.msk [vmem:[%s6 + $0x30] sm:$0xff] %vm105, %v403
  %427 = vst.msk [vmem:[%s6 + $0x38] sm:$0xff] %vm105, %v406
  %428 = vst.msk [vmem:[%s6 + $0x40] sm:$0xff] %vm105, %v409
  %429 = vst.msk [vmem:[%s6 + $0x48] sm:$0xff] %vm105, %v412
  %430 = vst.msk [vmem:[%s6 + $0x50] sm:$0xff] %vm105, %v415
  %431 = vst.msk [vmem:[%s6 + $0x58] sm:$0xff] %vm105, %v418
  %s432 = scalar_lea.vmem %s0, 32
  %v433 = vld [vmem:[%s432] sm:$0xff]
  %v434 = vld [vmem:[%s432 + $0x8] sm:$0xff]
  %v435 = vld [vmem:[%s432 + $0x10] sm:$0xff]
  %v436 = vld [vmem:[%s432 + $0x18] sm:$0xff]
  %437 = vmatpush.msra.mxu0 0.0
  %438 = vmatpush.msra.mxu0 0.0
  %439 = vmatpush.msra.mxu0 0.0
  %440 = vmatpush.msra.mxu0 0.0
  %441 = vmatpush.msra.mxu0 0.0
  %442 = vmatpush.msra.mxu0 0.0
  %443 = vmatpush.msra.mxu0 0.0
  %444 = vmatpush.msra.mxu0 0.0
  %445 = vmatpush.msra.mxu0 0.0
  %446 = vmatpush.msra.mxu0 0.0
  %447 = vmatpush.msra.mxu0 0.0
  %448 = vmatpush.msra.mxu0 0.0
  %449 = vmatpush.msra.mxu0 %v436
  %450 = vmatpush.msra.mxu0 %v435
  %451 = vmatpush.msra.mxu0 %v434
  %452 = vmatpush.msra.mxu0 %v433
  %453 = vmatmul.f32.gmra.mxu0 %v65
  %v454 = vpop.f32.mrf.mxu0
  %v455 = vadd.f32 0.0, %v454
  %456 = vmatmul.f32.gmra.mxu0 %v68
  %v457 = vpop.f32.mrf.mxu0
  %v458 = vadd.f32 0.0, %v457
  %459 = vmatmul.f32.gmra.mxu0 %v71
  %v460 = vpop.f32.mrf.mxu0
  %v461 = vadd.f32 0.0, %v460
  %462 = vmatmul.f32.gmra.mxu0 %v74
  %v463 = vpop.f32.mrf.mxu0
  %v464 = vadd.f32 0.0, %v463
  %465 = vdwg.mxu0
  %v466 = vsel %vm105, %v455, 0.0
  %467 = vadd.xlane.f32.xlu0 %v466
  %v468 = vpop.xlane.xlu0 %467
  %v469 = vsel %vm105, %v458, 0.0
  %470 = vadd.xlane.f32.xlu0 %v469
  %v471 = vpop.xlane.xlu0 %470
  %v472 = vsel %vm105, %v461, 0.0
  %473 = vadd.xlane.f32.xlu0 %v472
  %v474 = vpop.xlane.xlu0 %473
  %v475 = vsel %vm105, %v464, 0.0
  %476 = vadd.xlane.f32.xlu0 %v475
  %v477 = vpop.xlane.xlu0 %476
  %v478 = vmul.f32 %v468, 0.015625
  %v479 = vmul.f32 %v471, 0.015625
  %v480 = vmul.f32 %v474, 0.015625
  %v481 = vmul.f32 %v477, 0.015625
  %v482 = vsub.f32 %v433, %v478
  %v483 = vsub.f32 %v434, %v479
  %v484 = vsub.f32 %v435, %v480
  %v485 = vsub.f32 %v436, %v481
  %v486 = vmul.f32 %v482, %v482
  %v487 = vmul.f32 %v483, %v483
  %v488 = vmul.f32 %v484, %v484
  %v489 = vmul.f32 %v485, %v485
  %490 = vmatpush.msra.mxu0 0.0
  %491 = vmatpush.msra.mxu0 0.0
  %492 = vmatpush.msra.mxu0 0.0
  %493 = vmatpush.msra.mxu0 0.0
  %494 = vmatpush.msra.mxu0 0.0
  %495 = vmatpush.msra.mxu0 0.0
  %496 = vmatpush.msra.mxu0 0.0
  %497 = vmatpush.msra.mxu0 0.0
  %498 = vmatpush.msra.mxu0 0.0
  %499 = vmatpush.msra.mxu0 0.0
  %500 = vmatpush.msra.mxu0 0.0
  %501 = vmatpush.msra.mxu0 0.0
  %502 = vmatpush.msra.mxu0 %v489
  %503 = vmatpush.msra.mxu0 %v488
  %504 = vmatpush.msra.mxu0 %v487
  %505 = vmatpush.msra.mxu0 %v486
  %506 = vmatmul.f32.gmra.mxu0 %v65
  %v507 = vpop.f32.mrf.mxu0
  %v508 = vadd.f32 0.0, %v507
  %509 = vmatmul.f32.gmra.mxu0 %v68
  %v510 = vpop.f32.mrf.mxu0
  %v511 = vadd.f32 0.0, %v510
  %512 = vmatmul.f32.gmra.mxu0 %v71
  %v513 = vpop.f32.mrf.mxu0
  %v514 = vadd.f32 0.0, %v513
  %515 = vmatmul.f32.gmra.mxu0 %v74
  %v516 = vpop.f32.mrf.mxu0
  %v517 = vadd.f32 0.0, %v516
  %518 = vdwg.mxu0
  %v519 = vsel %vm105, %v508, 0.0
  %520 = vadd.xlane.f32.xlu0 %v519
  %v521 = vpop.xlane.xlu0 %520
  %v522 = vsel %vm105, %v511, 0.0
  %523 = vadd.xlane.f32.xlu0 %v522
  %v524 = vpop.xlane.xlu0 %523
  %v525 = vsel %vm105, %v514, 0.0
  %526 = vadd.xlane.f32.xlu0 %v525
  %v527 = vpop.xlane.xlu0 %526
  %v528 = vsel %vm105, %v517, 0.0
  %529 = vadd.xlane.f32.xlu0 %v528
  %v530 = vpop.xlane.xlu0 %529
  %v531 = vmul.f32 %v521, 0.015625
  %v532 = vmul.f32 %v524, 0.015625
  %v533 = vmul.f32 %v527, 0.015625
  %v534 = vmul.f32 %v530, 0.015625
  %v535 = vadd.f32 %v531, 1e-05
  %v536 = vadd.f32 %v532, 1e-05
  %v537 = vadd.f32 %v533, 1e-05
  %v538 = vadd.f32 %v534, 1e-05
  %v539 = vrsqrt.pop %v535
  %v540 = vmul.f32 %v539, %v535
  %v541 = vmul.f32 %v540, %v539
  %v542 = vmul.f32 0.5, %v541
  %v543 = vsub.f32 1.5, %v542
  %v544 = vmul.f32 %v539, %v543
  %vm545 = vweird.f32 %v535
  %vm546 = vweird.f32 %v539
  %vm547 = vmor %vm545, %vm546
  %v548 = vsel %vm547, %v539, %v544
  %v549 = vrsqrt.pop %v536
  %v550 = vmul.f32 %v549, %v536
  %v551 = vmul.f32 %v550, %v549
  %v552 = vmul.f32 0.5, %v551
  %v553 = vsub.f32 1.5, %v552
  %v554 = vmul.f32 %v549, %v553
  %vm555 = vweird.f32 %v536
  %vm556 = vweird.f32 %v549
  %vm557 = vmor %vm555, %vm556
  %v558 = vsel %vm557, %v549, %v554
  %v559 = vrsqrt.pop %v537
  %v560 = vmul.f32 %v559, %v537
  %v561 = vmul.f32 %v560, %v559
  %v562 = vmul.f32 0.5, %v561
  %v563 = vsub.f32 1.5, %v562
  %v564 = vmul.f32 %v559, %v563
  %vm565 = vweird.f32 %v537
  %vm566 = vweird.f32 %v559
  %vm567 = vmor %vm565, %vm566
  %v568 = vsel %vm567, %v559, %v564
  %v569 = vrsqrt.pop %v538
  %v570 = vmul.f32 %v569, %v538
  %v571 = vmul.f32 %v570, %v569
  %v572 = vmul.f32 0.5, %v571
  %v573 = vsub.f32 1.5, %v572
  %v574 = vmul.f32 %v569, %v573
  %vm575 = vweird.f32 %v538
  %vm576 = vweird.f32 %v569
  %vm577 = vmor %vm575, %vm576
  %v578 = vsel %vm577, %v569, %v574
  %v579 = vmul.f32 %v482, %v548
  %v580 = vmul.f32 %v483, %v558
  %v581 = vmul.f32 %v484, %v568
  %v582 = vmul.f32 %v485, %v578
  %v583 = vmul.f32 %v579, %v226
  %v584 = vmul.f32 %v580, %v231
  %v585 = vmul.f32 %v581, %v236
  %v586 = vmul.f32 %v582, %v241
  %v587 = vadd.f32 %v583, %v250
  %v588 = vadd.f32 %v584, %v255
  %v589 = vadd.f32 %v585, %v260
  %v590 = vadd.f32 %v586, %v265
  %591 = vmatpush.msra.mxu0 0.0
  %592 = vmatpush.msra.mxu0 0.0
  %593 = vmatpush.msra.mxu0 0.0
  %594 = vmatpush.msra.mxu0 0.0
  %595 = vmatpush.msra.mxu0 0.0
  %596 = vmatpush.msra.mxu0 0.0
  %597 = vmatpush.msra.mxu0 0.0
  %598 = vmatpush.msra.mxu0 0.0
  %599 = vmatpush.msra.mxu0 0.0
  %600 = vmatpush.msra.mxu0 0.0
  %601 = vmatpush.msra.mxu0 0.0
  %602 = vmatpush.msra.mxu0 0.0
  %603 = vmatpush.msra.mxu0 %v590
  %604 = vmatpush.msra.mxu0 %v589
  %605 = vmatpush.msra.mxu0 %v588
  %606 = vmatpush.msra.mxu0 %v587
  %607 = vmatmul.f32.gmra.mxu0 %v332
  %v608 = vpop.f32.mrf.mxu0
  %v609 = vadd.f32 %v274, %v608
  %610 = vmatmul.f32.gmra.mxu0 %v335
  %v611 = vpop.f32.mrf.mxu0
  %v612 = vadd.f32 %v279, %v611
  %613 = vmatmul.f32.gmra.mxu0 %v338
  %v614 = vpop.f32.mrf.mxu0
  %v615 = vadd.f32 %v284, %v614
  %616 = vmatmul.f32.gmra.mxu0 %v341
  %v617 = vpop.f32.mrf.mxu0
  %v618 = vadd.f32 %v289, %v617
  %619 = vmatmul.f32.gmra.mxu0 %v344
  %v620 = vpop.f32.mrf.mxu0
  %v621 = vadd.f32 %v294, %v620
  %622 = vmatmul.f32.gmra.mxu0 %v347
  %v623 = vpop.f32.mrf.mxu0
  %v624 = vadd.f32 %v299, %v623
  %625 = vmatmul.f32.gmra.mxu0 %v350
  %v626 = vpop.f32.mrf.mxu0
  %v627 = vadd.f32 %v304, %v626
  %628 = vmatmul.f32.gmra.mxu0 %v353
  %v629 = vpop.f32.mrf.mxu0
  %v630 = vadd.f32 %v309, %v629
  %631 = vmatmul.f32.gmra.mxu0 %v356
  %v632 = vpop.f32.mrf.mxu0
  %v633 = vadd.f32 %v314, %v632
  %634 = vmatmul.f32.gmra.mxu0 %v359
  %v635 = vpop.f32.mrf.mxu0
  %v636 = vadd.f32 %v319, %v635
  %637 = vmatmul.f32.gmra.mxu0 %v362
  %v638 = vpop.f32.mrf.mxu0
  %v639 = vadd.f32 %v324, %v638
  %640 = vmatmul.f32.gmra.mxu0 %v365
  %v641 = vpop.f32.mrf.mxu0
  %v642 = vadd.f32 %v329, %v641
  %643 = vdwg.mxu0
  %s644 = scalar_lea.vmem %s6, 96
  %645 = vst.msk [vmem:[%s644] sm:$0xff] %vm105, %v609
  %646 = vst.msk [vmem:[%s644 + $0x8] sm:$0xff] %vm105, %v612
  %647 = vst.msk [vmem:[%s644 + $0x10] sm:$0xff] %vm105, %v615
  %648 = vst.msk [vmem:[%s644 + $0x18] sm:$0xff] %vm105, %v618
  %649 = vst.msk [vmem:[%s644 + $0x20] sm:$0xff] %vm105, %v621
  %650 = vst.msk [vmem:[%s644 + $0x28] sm:$0xff] %vm105, %v624
  %651 = vst.msk [vmem:[%s644 + $0x30] sm:$0xff] %vm105, %v627
  %652 = vst.msk [vmem:[%s644 + $0x38] sm:$0xff] %vm105, %v630
  %653 = vst.msk [vmem:[%s644 + $0x40] sm:$0xff] %vm105, %v633
  %654 = vst.msk [vmem:[%s644 + $0x48] sm:$0xff] %vm105, %v636
  %655 = vst.msk [vmem:[%s644 + $0x50] sm:$0xff] %vm105, %v639
  %656 = vst.msk [vmem:[%s644 + $0x58] sm:$0xff] %vm105, %v642
  // Predicated region
  $region26: #{upsample_block_fwd.11} parent=0 // pred_check
    _
  $region27: #{upsample_block_fwd.11} parent=0 // pred_check_branch
    %658 = sbr.rel (0) target = $region29
  $region28: #{upsample_block_fwd.11} parent=0 // pred_region
    _
  $region29: #{upsample_block_fwd.11} parent=0 // pred_fallthru
    _
  // Predicated region
  $region30: #{upsample_block_fwd.11} parent=0 // pred_check
    _
  $region31: #{upsample_block_fwd.11} parent=0 // pred_check_branch
    %660 = sbr.rel (0) target = $region33
  $region32: #{upsample_block_fwd.11} parent=0 // pred_region
    _
  $region33: #{upsample_block_fwd.11} parent=0 // pred_fallthru
    _

// kernel: upsample_block_fwd.10
$region0: #{upsample_block_fwd.10}
  #allocation0 [shape = 'u32[]', space=smem, size = 0x4, offset = 0x4, fixed_abs, tag = 'smem constant byte address 0x4 - core index']
  #allocation1 [shape = 'u32[72,128]{1,0:T(1,128)}', space=vmem, size = 0x9000, scoped, tag = 'internal scratch']
  %s0 = inlined_call_operand.vmem [shape: f32[2,64,64], index: 0, kind: input, shape index: {}]
  %s1 = inlined_call_operand.vmem [shape: f32[32,2], index: 1, kind: input, shape index: {}]
  %s2 = inlined_call_operand.vmem [shape: f32[64,1], index: 2, kind: input, shape index: {}]
  %s3 = inlined_call_operand.vmem [shape: f32[64,1], index: 3, kind: input, shape index: {}]
  %s4 = inlined_call_operand.vmem [shape: f32[64,64], index: 4, kind: input, shape index: {}]
  %s5 = inlined_call_operand.vmem [shape: f32[288,64], index: 5, kind: input, shape index: {}]
  %s6 = inlined_call_operand.vmem [shape: f32[32,1], index: 6, kind: input, shape index: {}]
  %s7 = inlined_call_operand.vmem [shape: f32[32,32], index: 7, kind: input, shape index: {}]
  %s8 = inlined_call_operand.vmem [shape: f32[32,1], index: 8, kind: input, shape index: {}]
  %s9 = inlined_call_operand.vmem [shape: f32[32,1], index: 9, kind: input, shape index: {}]
  %s10 = inlined_call_operand.vmem [shape: f32[32,1], index: 10, kind: input, shape index: {}]
  %s11 = inlined_call_operand.vmem [shape: f32[32,32], index: 11, kind: input, shape index: {}]
  %s12 = inlined_call_operand.vmem [shape: f32[288,32], index: 12, kind: input, shape index: {}]
  %s13 = inlined_call_operand.vmem [shape: f32[32,1], index: 13, kind: input, shape index: {}]
  %s14 = inlined_call_operand.vmem [shape: f32[32,64], index: 14, kind: input, shape index: {}]
  %s15 = inlined_call_operand.vmem [shape: f32[32,1], index: 15, kind: input, shape index: {}]
  %s16 = inlined_call_operand.vmem [shape: f32[9,64,64], index: 16, kind: input, shape index: {}]
  %s17 = inlined_call_operand.vmem [shape: f32[2,32,64], index: 17, kind: output, shape index: {}]
  %s18 = sld [smem:[#allocation0]]
  $region78: #{upsample_block_fwd.10} parent=0
    _
  %s20 = ssub.s32 1, %s18
  %s21 = scalar_select 0, %s20, %s18
  // Predicated region
  $region2: #{upsample_block_fwd.10} parent=0 // pred_check
    _
  $region3: #{upsample_block_fwd.10} parent=0 // pred_check_branch
    %23 = sbr.rel (0) target = $region5
  $region4: #{upsample_block_fwd.10} parent=0 // pred_region
    _
  $region5: #{upsample_block_fwd.10} parent=0 // pred_fallthru
    _
  // Predicated region
  $region6: #{upsample_block_fwd.10} parent=0 // pred_check
    _
  $region7: #{upsample_block_fwd.10} parent=0 // pred_check_branch
    %25 = sbr.rel (0) target = $region9
  $region8: #{upsample_block_fwd.10} parent=0 // pred_region
    _
  $region9: #{upsample_block_fwd.10} parent=0 // pred_fallthru
    _
  // Predicated region
  $region10: #{upsample_block_fwd.10} parent=0 // pred_check
    _
  $region11: #{upsample_block_fwd.10} parent=0 // pred_check_branch
    %27 = sbr.rel (0) target = $region13
  $region12: #{upsample_block_fwd.10} parent=0 // pred_region
    _
  $region13: #{upsample_block_fwd.10} parent=0 // pred_fallthru
    _
  // Predicated region
  $region14: #{upsample_block_fwd.10} parent=0 // pred_check
    _
  $region15: #{upsample_block_fwd.10} parent=0 // pred_check_branch
    %29 = sbr.rel (0) target = $region17
  $region16: #{upsample_block_fwd.10} parent=0 // pred_region
    _
  $region17: #{upsample_block_fwd.10} parent=0 // pred_fallthru
    _
  // Predicated region
  $region18: #{upsample_block_fwd.10} parent=0 // pred_check
    _
  $region19: #{upsample_block_fwd.10} parent=0 // pred_check_branch
    %31 = sbr.rel (0) target = $region21
  $region20: #{upsample_block_fwd.10} parent=0 // pred_region
    _
  $region21: #{upsample_block_fwd.10} parent=0 // pred_fallthru
    _
  // Predicated region
  $region22: #{upsample_block_fwd.10} parent=0 // pred_check
    _
  $region23: #{upsample_block_fwd.10} parent=0 // pred_check_branch
    %33 = sbr.rel (0) target = $region25
  $region24: #{upsample_block_fwd.10} parent=0 // pred_region
    _
  $region25: #{upsample_block_fwd.10} parent=0 // pred_fallthru
    _
  // Predicated region
  $region26: #{upsample_block_fwd.10} parent=0 // pred_check
    _
  $region27: #{upsample_block_fwd.10} parent=0 // pred_check_branch
    %35 = sbr.rel (0) target = $region29
  $region28: #{upsample_block_fwd.10} parent=0 // pred_region
    _
  $region29: #{upsample_block_fwd.10} parent=0 // pred_fallthru
    _
  // Predicated region
  $region30: #{upsample_block_fwd.10} parent=0 // pred_check
    _
  $region31: #{upsample_block_fwd.10} parent=0 // pred_check_branch
    %37 = sbr.rel (0) target = $region33
  $region32: #{upsample_block_fwd.10} parent=0 // pred_region
    _
  $region33: #{upsample_block_fwd.10} parent=0 // pred_fallthru
    _
  // Predicated region
  $region34: #{upsample_block_fwd.10} parent=0 // pred_check
    _
  $region35: #{upsample_block_fwd.10} parent=0 // pred_check_branch
    %39 = sbr.rel (0) target = $region37
  $region36: #{upsample_block_fwd.10} parent=0 // pred_region
    _
  $region37: #{upsample_block_fwd.10} parent=0 // pred_fallthru
    _
  // Predicated region
  $region38: #{upsample_block_fwd.10} parent=0 // pred_check
    _
  $region39: #{upsample_block_fwd.10} parent=0 // pred_check_branch
    %41 = sbr.rel (0) target = $region41
  $region40: #{upsample_block_fwd.10} parent=0 // pred_region
    _
  $region41: #{upsample_block_fwd.10} parent=0 // pred_fallthru
    _
  // Predicated region
  $region42: #{upsample_block_fwd.10} parent=0 // pred_check
    _
  $region43: #{upsample_block_fwd.10} parent=0 // pred_check_branch
    %43 = sbr.rel (0) target = $region45
  $region44: #{upsample_block_fwd.10} parent=0 // pred_region
    _
  $region45: #{upsample_block_fwd.10} parent=0 // pred_fallthru
    _
  // Predicated region
  $region46: #{upsample_block_fwd.10} parent=0 // pred_check
    _
  $region47: #{upsample_block_fwd.10} parent=0 // pred_check_branch
    %45 = sbr.rel (0) target = $region49
  $region48: #{upsample_block_fwd.10} parent=0 // pred_region
    _
  $region49: #{upsample_block_fwd.10} parent=0 // pred_fallthru
    _
  // Predicated region
  $region50: #{upsample_block_fwd.10} parent=0 // pred_check
    _
  $region51: #{upsample_block_fwd.10} parent=0 // pred_check_branch
    %47 = sbr.rel (0) target = $region53
  $region52: #{upsample_block_fwd.10} parent=0 // pred_region
    _
  $region53: #{upsample_block_fwd.10} parent=0 // pred_fallthru
    _
  // Predicated region
  $region54: #{upsample_block_fwd.10} parent=0 // pred_check
    _
  $region55: #{upsample_block_fwd.10} parent=0 // pred_check_branch
    %49 = sbr.rel (0) target = $region57
  $region56: #{upsample_block_fwd.10} parent=0 // pred_region
    _
  $region57: #{upsample_block_fwd.10} parent=0 // pred_fallthru
    _
  // Predicated region
  $region58: #{upsample_block_fwd.10} parent=0 // pred_check
    _
  $region59: #{upsample_block_fwd.10} parent=0 // pred_check_branch
    %51 = sbr.rel (0) target = $region61
  $region60: #{upsample_block_fwd.10} parent=0 // pred_region
    _
  $region61: #{upsample_block_fwd.10} parent=0 // pred_fallthru
    _
  // Predicated region
  $region62: #{upsample_block_fwd.10} parent=0 // pred_check
    _
  $region63: #{upsample_block_fwd.10} parent=0 // pred_check_branch
    %53 = sbr.rel (0) target = $region65
  $region64: #{upsample_block_fwd.10} parent=0 // pred_region
    _
  $region65: #{upsample_block_fwd.10} parent=0 // pred_fallthru
    _
  // Predicated region
  $region66: #{upsample_block_fwd.10} parent=0 // pred_check
    _
  $region67: #{upsample_block_fwd.10} parent=0 // pred_check_branch
    %55 = sbr.rel (0) target = $region69
  $region68: #{upsample_block_fwd.10} parent=0 // pred_region
    _
  $region69: #{upsample_block_fwd.10} parent=0 // pred_fallthru
    _
  %v56 = vld [vmem:[%s7] sm:$0xff]
  %v57 = vld [vmem:[%s7 + $0x8] sm:$0xff]
  %v58 = vld [vmem:[%s7 + $0x10] sm:$0xff]
  %v59 = vld [vmem:[%s7 + $0x18] sm:$0xff]
  %v60 = vld [vmem:[%s1] sm:$0xff]
  %v61 = vld [vmem:[%s1 + $0x8] sm:$0xff]
  %v62 = vld [vmem:[%s1 + $0x10] sm:$0xff]
  %v63 = vld [vmem:[%s1 + $0x18] sm:$0xff]
  %v64 = vsub.f32 0.0, %v60
  %v65 = vsub.f32 0.0, %v61
  %v66 = vsub.f32 0.0, %v62
  %v67 = vsub.f32 0.0, %v63
  %v68 = vmul.f32 %v64, 1.442695
  %v69 = vpow.pop %v68
  %v70 = vmul.f32 %v65, 1.442695
  %v71 = vpow.pop %v70
  %v72 = vmul.f32 %v66, 1.442695
  %v73 = vpow.pop %v72
  %v74 = vmul.f32 %v67, 1.442695
  %v75 = vpow.pop %v74
  %v76 = vadd.f32 %v69, 1.0
  %v77 = vadd.f32 %v71, 1.0
  %v78 = vadd.f32 %v73, 1.0
  %v79 = vadd.f32 %v75, 1.0
  %v80 = vrcp.pop %v76
  %v81 = vmul.f32 %v76, %v80
  %v82 = vsub.f32 1.0, %v81
  %v83 = vmul.f32 %v80, %v82
  %v84 = vadd.f32 %v80, %v83
  %vm85 = vweird.f32 %v76
  %vm86 = vweird.f32 %v80
  %vm87 = vmor %vm85, %vm86
  %v88 = vsel %vm87, %v80, %v84
  %v89 = vand.u32 2147483647, %v76
  %vm90 = vcmp.eq.f32.partialorder %v89, 8.507059e+37
  %v91 = vand.u32 %v76, 2147483648
  %v92 = vor.u32 1.1754944e-38, %v91
  %v93 = vsel %vm90, %v92, %v88
  %v94 = vmul.f32 1.0, %v93
  %v95 = vrcp.pop %v77
  %v96 = vmul.f32 %v77, %v95
  %v97 = vsub.f32 1.0, %v96
  %v98 = vmul.f32 %v95, %v97
  %v99 = vadd.f32 %v95, %v98
  %vm100 = vweird.f32 %v77
  %vm101 = vweird.f32 %v95
  %vm102 = vmor %vm100, %vm101
  %v103 = vsel %vm102, %v95, %v99
  %v104 = vand.u32 2147483647, %v77
  %vm105 = vcmp.eq.f32.partialorder %v104, 8.507059e+37
  %v106 = vand.u32 %v77, 2147483648
  %v107 = vor.u32 1.1754944e-38, %v106
  %v108 = vsel %vm105, %v107, %v103
  %v109 = vmul.f32 1.0, %v108
  %v110 = vrcp.pop %v78
  %v111 = vmul.f32 %v78, %v110
  %v112 = vsub.f32 1.0, %v111
  %v113 = vmul.f32 %v110, %v112
  %v114 = vadd.f32 %v110, %v113
  %vm115 = vweird.f32 %v78
  %vm116 = vweird.f32 %v110
  %vm117 = vmor %vm115, %vm116
  %v118 = vsel %vm117, %v110, %v114
  %v119 = vand.u32 2147483647, %v78
  %vm120 = vcmp.eq.f32.partialorder %v119, 8.507059e+37
  %v121 = vand.u32 %v78, 2147483648
  %v122 = vor.u32 1.1754944e-38, %v121
  %v123 = vsel %vm120, %v122, %v118
  %v124 = vmul.f32 1.0, %v123
  %v125 = vrcp.pop %v79
  %v126 = vmul.f32 %v79, %v125
  %v127 = vsub.f32 1.0, %v126
  %v128 = vmul.f32 %v125, %v127
  %v129 = vadd.f32 %v125, %v128
  %vm130 = vweird.f32 %v79
  %vm131 = vweird.f32 %v125
  %vm132 = vmor %vm130, %vm131
  %v133 = vsel %vm132, %v125, %v129
  %v134 = vand.u32 2147483647, %v79
  %vm135 = vcmp.eq.f32.partialorder %v134, 8.507059e+37
  %v136 = vand.u32 %v79, 2147483648
  %v137 = vor.u32 1.1754944e-38, %v136
  %v138 = vsel %vm135, %v137, %v133
  %v139 = vmul.f32 1.0, %v138
  %v140 = vmul.f32 %v60, %v94
  %v141 = vmul.f32 %v61, %v109
  %v142 = vmul.f32 %v62, %v124
  %v143 = vmul.f32 %v63, %v139
  %v144 = vld [vmem:[%s8] sm:$0xff]
  %v145 = vld [vmem:[%s8 + $0x8] sm:$0xff]
  %v146 = vld [vmem:[%s8 + $0x10] sm:$0xff]
  %v147 = vld [vmem:[%s8 + $0x18] sm:$0xff]
  %149 = vset.pattern.permute.xlu0 0
  %150 = vperm.xlu0 %149, %v144
  %v151 = vpop.permute.xlu0 %150
  %154 = vset.pattern.permute.xlu0 0
  %155 = vperm.xlu0 %154, %v145
  %v156 = vpop.permute.xlu0 %155
  %159 = vset.pattern.permute.xlu0 0
  %160 = vperm.xlu0 %159, %v146
  %v161 = vpop.permute.xlu0 %160
  %164 = vset.pattern.permute.xlu0 0
  %165 = vperm.xlu0 %164, %v147
  %v166 = vpop.permute.xlu0 %165
  %vm168 = vcmask 261120
  %v170 = vsel %vm168, %v56, 0
  %v173 = vsel %vm168, %v57, 0
  %v176 = vsel %vm168, %v58, 0
  %v179 = vsel %vm168, %v59, 0
  %181 = vmatpush.msra.mxu0 0.0
  %182 = vmatpush.msra.mxu0 0.0
  %183 = vmatpush.msra.mxu0 0.0
  %184 = vmatpush.msra.mxu0 0.0
  %185 = vmatpush.msra.mxu0 0.0
  %186 = vmatpush.msra.mxu0 0.0
  %187 = vmatpush.msra.mxu0 0.0
  %188 = vmatpush.msra.mxu0 0.0
  %189 = vmatpush.msra.mxu0 0.0
  %190 = vmatpush.msra.mxu0 0.0
  %191 = vmatpush.msra.mxu0 0.0
  %192 = vmatpush.msra.mxu0 0.0
  %193 = vmatpush.msra.mxu0 %v143
  %194 = vmatpush.msra.mxu0 %v142
  %195 = vmatpush.msra.mxu0 %v141
  %196 = vmatpush.msra.mxu0 %v140
  %197 = vmatmul.f32.gmra.mxu0 %v170
  %v198 = vpop.f32.mrf.mxu0
  %v199 = vadd.f32 %v151, %v198
  %200 = vmatmul.f32.gmra.mxu0 %v173
  %v201 = vpop.f32.mrf.mxu0
  %v202 = vadd.f32 %v156, %v201
  %203 = vmatmul.f32.gmra.mxu0 %v176
  %v204 = vpop.f32.mrf.mxu0
  %v205 = vadd.f32 %v161, %v204
  %206 = vmatmul.f32.gmra.mxu0 %v179
  %v207 = vpop.f32.mrf.mxu0
  %v208 = vadd.f32 %v166, %v207
  %209 = vdwg.mxu0
  %v210 = vld [vmem:[%s2] sm:$0xff]
  %v211 = vld [vmem:[%s2 + $0x8] sm:$0xff]
  %v212 = vld [vmem:[%s2 + $0x10] sm:$0xff]
  %v213 = vld [vmem:[%s2 + $0x18] sm:$0xff]
  %v214 = vld [vmem:[%s2 + $0x20] sm:$0xff]
  %v215 = vld [vmem:[%s2 + $0x28] sm:$0xff]
  %v216 = vld [vmem:[%s2 + $0x30] sm:$0xff]
  %v217 = vld [vmem:[%s2 + $0x38] sm:$0xff]
  %v218 = vld [vmem:[%s3] sm:$0xff]
  %v219 = vld [vmem:[%s3 + $0x8] sm:$0xff]
  %v220 = vld [vmem:[%s3 + $0x10] sm:$0xff]
  %v221 = vld [vmem:[%s3 + $0x18] sm:$0xff]
  %v222 = vld [vmem:[%s3 + $0x20] sm:$0xff]
  %v223 = vld [vmem:[%s3 + $0x28] sm:$0xff]
  %v224 = vld [vmem:[%s3 + $0x30] sm:$0xff]
  %v225 = vld [vmem:[%s3 + $0x38] sm:$0xff]
  %v226 = vld [vmem:[%s4] sm:$0xff]
  %v227 = vld [vmem:[%s4 + $0x8] sm:$0xff]
  %v228 = vld [vmem:[%s4 + $0x10] sm:$0xff]
  %v229 = vld [vmem:[%s4 + $0x18] sm:$0xff]
  %v230 = vld [vmem:[%s4 + $0x20] sm:$0xff]
  %v231 = vld [vmem:[%s4 + $0x28] sm:$0xff]
  %v232 = vld [vmem:[%s4 + $0x30] sm:$0xff]
  %v233 = vld [vmem:[%s4 + $0x38] sm:$0xff]
  %v234 = vld [vmem:[%s9] sm:$0xff]
  %v235 = vld [vmem:[%s9 + $0x8] sm:$0xff]
  %v236 = vld [vmem:[%s9 + $0x10] sm:$0xff]
  %v237 = vld [vmem:[%s9 + $0x18] sm:$0xff]
  %v238 = vld [vmem:[%s10] sm:$0xff]
  %v239 = vld [vmem:[%s10 + $0x8] sm:$0xff]
  %v240 = vld [vmem:[%s10 + $0x10] sm:$0xff]
  %v241 = vld [vmem:[%s10 + $0x18] sm:$0xff]
  %v242 = vld [vmem:[%s11] sm:$0xff]
  %v243 = vld [vmem:[%s11 + $0x8] sm:$0xff]
  %v244 = vld [vmem:[%s11 + $0x10] sm:$0xff]
  %v245 = vld [vmem:[%s11 + $0x18] sm:$0xff]
  %v246 = vld [vmem:[%s5] sm:$0xff]
  %v247 = vld [vmem:[%s5 + $0x8] sm:$0xff]
  %v248 = vld [vmem:[%s5 + $0x10] sm:$0xff]
  %v249 = vld [vmem:[%s5 + $0x18] sm:$0xff]
  %v250 = vld [vmem:[%s5 + $0x20] sm:$0xff]
  %v251 = vld [vmem:[%s5 + $0x28] sm:$0xff]
  %v252 = vld [vmem:[%s5 + $0x30] sm:$0xff]
  %v253 = vld [vmem:[%s5 + $0x38] sm:$0xff]
  %v254 = vld [vmem:[%s5 + $0x40] sm:$0xff]
  %v255 = vld [vmem:[%s5 + $0x48] sm:$0xff]
  %v256 = vld [vmem:[%s5 + $0x50] sm:$0xff]
  %v257 = vld [vmem:[%s5 + $0x58] sm:$0xff]
  %v258 = vld [vmem:[%s5 + $0x60] sm:$0xff]
  %v259 = vld [vmem:[%s5 + $0x68] sm:$0xff]
  %v260 = vld [vmem:[%s5 + $0x70] sm:$0xff]
  %v261 = vld [vmem:[%s5 + $0x78] sm:$0xff]
  %v262 = vld [vmem:[%s5 + $0x80] sm:$0xff]
  %v263 = vld [vmem:[%s5 + $0x88] sm:$0xff]
  %v264 = vld [vmem:[%s5 + $0x90] sm:$0xff]
  %v265 = vld [vmem:[%s5 + $0x98] sm:$0xff]
  %v266 = vld [vmem:[%s5 + $0xa0] sm:$0xff]
  %v267 = vld [vmem:[%s5 + $0xa8] sm:$0xff]
  %v268 = vld [vmem:[%s5 + $0xb0] sm:$0xff]
  %v269 = vld [vmem:[%s5 + $0xb8] sm:$0xff]
  %v270 = vld [vmem:[%s5 + $0xc0] sm:$0xff]
  %v271 = vld [vmem:[%s5 + $0xc8] sm:$0xff]
  %v272 = vld [vmem:[%s5 + $0xd0] sm:$0xff]
  %v273 = vld [vmem:[%s5 + $0xd8] sm:$0xff]
  %v274 = vld [vmem:[%s5 + $0xe0] sm:$0xff]
  %v275 = vld [vmem:[%s5 + $0xe8] sm:$0xff]
  %v276 = vld [vmem:[%s5 + $0xf0] sm:$0xff]
  %v277 = vld [vmem:[%s5 + $0xf8] sm:$0xff]
  %v278 = vld [vmem:[%s5 + $0x100] sm:$0xff]
  %v279 = vld [vmem:[%s5 + $0x108] sm:$0xff]
  %v280 = vld [vmem:[%s5 + $0x110] sm:$0xff]
  %v281 = vld [vmem:[%s5 + $0x118] sm:$0xff]
  %v282 = vld [vmem:[%s6] sm:$0xff]
  %v283 = vld [vmem:[%s6 + $0x8] sm:$0xff]
  %v284 = vld [vmem:[%s6 + $0x10] sm:$0xff]
  %v285 = vld [vmem:[%s6 + $0x18] sm:$0xff]
  %v286 = vld [vmem:[%s12] sm:$0xff]
  %v287 = vld [vmem:[%s12 + $0x8] sm:$0xff]
  %v288 = vld [vmem:[%s12 + $0x10] sm:$0xff]
  %v289 = vld [vmem:[%s12 + $0x18] sm:$0xff]
  %v290 = vld [vmem:[%s12 + $0x20] sm:$0xff]
  %v291 = vld [vmem:[%s12 + $0x28] sm:$0xff]
  %v292 = vld [vmem:[%s12 + $0x30] sm:$0xff]
  %v293 = vld [vmem:[%s12 + $0x38] sm:$0xff]
  %v294 = vld [vmem:[%s12 + $0x40] sm:$0xff]
  %v295 = vld [vmem:[%s12 + $0x48] sm:$0xff]
  %v296 = vld [vmem:[%s12 + $0x50] sm:$0xff]
  %v297 = vld [vmem:[%s12 + $0x58] sm:$0xff]
  %v298 = vld [vmem:[%s12 + $0x60] sm:$0xff]
  %v299 = vld [vmem:[%s12 + $0x68] sm:$0xff]
  %v300 = vld [vmem:[%s12 + $0x70] sm:$0xff]
  %v301 = vld [vmem:[%s12 + $0x78] sm:$0xff]
  %v302 = vld [vmem:[%s12 + $0x80] sm:$0xff]
  %v303 = vld [vmem:[%s12 + $0x88] sm:$0xff]
  %v304 = vld [vmem:[%s12 + $0x90] sm:$0xff]
  %v305 = vld [vmem:[%s12 + $0x98] sm:$0xff]
  %v306 = vld [vmem:[%s12 + $0xa0] sm:$0xff]
  %v307 = vld [vmem:[%s12 + $0xa8] sm:$0xff]
  %v308 = vld [vmem:[%s12 + $0xb0] sm:$0xff]
  %v309 = vld [vmem:[%s12 + $0xb8] sm:$0xff]
  %v310 = vld [vmem:[%s12 + $0xc0] sm:$0xff]
  %v311 = vld [vmem:[%s12 + $0xc8] sm:$0xff]
  %v312 = vld [vmem:[%s12 + $0xd0] sm:$0xff]
  %v313 = vld [vmem:[%s12 + $0xd8] sm:$0xff]
  %v314 = vld [vmem:[%s12 + $0xe0] sm:$0xff]
  %v315 = vld [vmem:[%s12 + $0xe8] sm:$0xff]
  %v316 = vld [vmem:[%s12 + $0xf0] sm:$0xff]
  %v317 = vld [vmem:[%s12 + $0xf8] sm:$0xff]
  %v318 = vld [vmem:[%s12 + $0x100] sm:$0xff]
  %v319 = vld [vmem:[%s12 + $0x108] sm:$0xff]
  %v320 = vld [vmem:[%s12 + $0x110] sm:$0xff]
  %v321 = vld [vmem:[%s12 + $0x118] sm:$0xff]
  %v322 = vld [vmem:[%s13] sm:$0xff]
  %v323 = vld [vmem:[%s13 + $0x8] sm:$0xff]
  %v324 = vld [vmem:[%s13 + $0x10] sm:$0xff]
  %v325 = vld [vmem:[%s13 + $0x18] sm:$0xff]
  %v326 = vld [vmem:[%s14] sm:$0xff]
  %v327 = vld [vmem:[%s14 + $0x8] sm:$0xff]
  %v328 = vld [vmem:[%s14 + $0x10] sm:$0xff]
  %v329 = vld [vmem:[%s14 + $0x18] sm:$0xff]
  %v330 = vld [vmem:[%s15] sm:$0xff]
  %v331 = vld [vmem:[%s15 + $0x8] sm:$0xff]
  %v332 = vld [vmem:[%s15 + $0x10] sm:$0xff]
  %v333 = vld [vmem:[%s15 + $0x18] sm:$0xff]
  %v334 = vld [vmem:[%s0] sm:$0xff]
  %v335 = vld [vmem:[%s0 + $0x8] sm:$0xff]
  %v336 = vld [vmem:[%s0 + $0x10] sm:$0xff]
  %v337 = vld [vmem:[%s0 + $0x18] sm:$0xff]
  %v338 = vld [vmem:[%s0 + $0x20] sm:$0xff]
  %v339 = vld [vmem:[%s0 + $0x28] sm:$0xff]
  %v340 = vld [vmem:[%s0 + $0x30] sm:$0xff]
  %v341 = vld [vmem:[%s0 + $0x38] sm:$0xff]
  %vm342 = vcmask 523264
  %v344 = vsel %vm342, %v226, 0
  %v347 = vsel %vm342, %v227, 0
  %v350 = vsel %vm342, %v228, 0
  %v353 = vsel %vm342, %v229, 0
  %v356 = vsel %vm342, %v230, 0
  %v359 = vsel %vm342, %v231, 0
  %v362 = vsel %vm342, %v232, 0
  %v365 = vsel %vm342, %v233, 0
  %367 = vmatpush.msra.mxu0 0.0
  %368 = vmatpush.msra.mxu0 0.0
  %369 = vmatpush.msra.mxu0 0.0
  %370 = vmatpush.msra.mxu0 0.0
  %371 = vmatpush.msra.mxu0 0.0
  %372 = vmatpush.msra.mxu0 0.0
  %373 = vmatpush.msra.mxu0 0.0
  %374 = vmatpush.msra.mxu0 0.0
  %375 = vmatpush.msra.mxu0 %v341
  %376 = vmatpush.msra.mxu0 %v340
  %377 = vmatpush.msra.mxu0 %v339
  %378 = vmatpush.msra.mxu0 %v338
  %379 = vmatpush.msra.mxu0 %v337
  %380 = vmatpush.msra.mxu0 %v336
  %381 = vmatpush.msra.mxu0 %v335
  %382 = vmatpush.msra.mxu0 %v334
  %383 = vmatmul.f32.gmra.mxu0 %v344
  %v384 = vpop.f32.mrf.mxu0
  %v385 = vadd.f32 0.0, %v384
  %386 = vmatmul.f32.gmra.mxu0 %v347
  %v387 = vpop.f32.mrf.mxu0
  %v388 = vadd.f32 0.0, %v387
  %389 = vmatmul.f32.gmra.mxu0 %v350
  %v390 = vpop.f32.mrf.mxu0
  %v391 = vadd.f32 0.0, %v390
  %392 = vmatmul.f32.gmra.mxu0 %v353
  %v393 = vpop.f32.mrf.mxu0
  %v394 = vadd.f32 0.0, %v393
  %395 = vmatmul.f32.gmra.mxu0 %v356
  %v396 = vpop.f32.mrf.mxu0
  %v397 = vadd.f32 0.0, %v396
  %398 = vmatmul.f32.gmra.mxu0 %v359
  %v399 = vpop.f32.mrf.mxu0
  %v400 = vadd.f32 0.0, %v399
  %401 = vmatmul.f32.gmra.mxu0 %v362
  %v402 = vpop.f32.mrf.mxu0
  %v403 = vadd.f32 0.0, %v402
  %404 = vmatmul.f32.gmra.mxu0 %v365
  %v405 = vpop.f32.mrf.mxu0
  %v406 = vadd.f32 0.0, %v405
  %407 = vdwg.mxu0
  %v408 = vsel %vm342, %v385, 0.0
  %409 = vadd.xlane.f32.xlu0 %v408
  %v410 = vpop.xlane.xlu0 %409
  %v411 = vsel %vm342, %v388, 0.0
  %412 = vadd.xlane.f32.xlu0 %v411
  %v413 = vpop.xlane.xlu0 %412
  %v414 = vsel %vm342, %v391, 0.0
  %415 = vadd.xlane.f32.xlu0 %v414
  %v416 = vpop.xlane.xlu0 %415
  %v417 = vsel %vm342, %v394, 0.0
  %418 = vadd.xlane.f32.xlu0 %v417
  %v419 = vpop.xlane.xlu0 %418
  %v420 = vsel %vm342, %v397, 0.0
  %421 = vadd.xlane.f32.xlu0 %v420
  %v422 = vpop.xlane.xlu0 %421
  %v423 = vsel %vm342, %v400, 0.0
  %424 = vadd.xlane.f32.xlu0 %v423
  %v425 = vpop.xlane.xlu0 %424
  %v426 = vsel %vm342, %v403, 0.0
  %427 = vadd.xlane.f32.xlu0 %v426
  %v428 = vpop.xlane.xlu0 %427
  %v429 = vsel %vm342, %v406, 0.0
  %430 = vadd.xlane.f32.xlu0 %v429
  %v431 = vpop.xlane.xlu0 %430
  %v432 = vmul.f32 %v410, 0.001953125
  %v433 = vmul.f32 %v413, 0.001953125
  %v434 = vmul.f32 %v416, 0.001953125
  %v435 = vmul.f32 %v419, 0.001953125
  %v436 = vmul.f32 %v422, 0.001953125
  %v437 = vmul.f32 %v425, 0.001953125
  %v438 = vmul.f32 %v428, 0.001953125
  %v439 = vmul.f32 %v431, 0.001953125
  %v440 = vsub.f32 %v334, %v432
  %v441 = vsub.f32 %v335, %v433
  %v442 = vsub.f32 %v336, %v434
  %v443 = vsub.f32 %v337, %v435
  %v444 = vsub.f32 %v338, %v436
  %v445 = vsub.f32 %v339, %v437
  %v446 = vsub.f32 %v340, %v438
  %v447 = vsub.f32 %v341, %v439
  %v448 = vmul.f32 %v440, %v440
  %v449 = vmul.f32 %v441, %v441
  %v450 = vmul.f32 %v442, %v442
  %v451 = vmul.f32 %v443, %v443
  %v452 = vmul.f32 %v444, %v444
  %v453 = vmul.f32 %v445, %v445
  %v454 = vmul.f32 %v446, %v446
  %v455 = vmul.f32 %v447, %v447
  %456 = vmatpush.msra.mxu0 0.0
  %457 = vmatpush.msra.mxu0 0.0
  %458 = vmatpush.msra.mxu0 0.0
  %459 = vmatpush.msra.mxu0 0.0
  %460 = vmatpush.msra.mxu0 0.0
  %461 = vmatpush.msra.mxu0 0.0
  %462 = vmatpush.msra.mxu0 0.0
  %463 = vmatpush.msra.mxu0 0.0
  %464 = vmatpush.msra.mxu0 %v455
  %465 = vmatpush.msra.mxu0 %v454
  %466 = vmatpush.msra.mxu0 %v453
  %467 = vmatpush.msra.mxu0 %v452
  %468 = vmatpush.msra.mxu0 %v451
  %469 = vmatpush.msra.mxu0 %v450
  %470 = vmatpush.msra.mxu0 %v449
  %471 = vmatpush.msra.mxu0 %v448
  %472 = vmatmul.f32.gmra.mxu0 %v344
  %v473 = vpop.f32.mrf.mxu0
  %v474 = vadd.f32 0.0, %v473
  %475 = vmatmul.f32.gmra.mxu0 %v347
  %v476 = vpop.f32.mrf.mxu0
  %v477 = vadd.f32 0.0, %v476
  %478 = vmatmul.f32.gmra.mxu0 %v350
  %v479 = vpop.f32.mrf.mxu0
  %v480 = vadd.f32 0.0, %v479
  %481 = vmatmul.f32.gmra.mxu0 %v353
  %v482 = vpop.f32.mrf.mxu0
  %v483 = vadd.f32 0.0, %v482
  %484 = vmatmul.f32.gmra.mxu0 %v356
  %v485 = vpop.f32.mrf.mxu0
  %v486 = vadd.f32 0.0, %v485
  %487 = vmatmul.f32.gmra.mxu0 %v359
  %v488 = vpop.f32.mrf.mxu0
  %v489 = vadd.f32 0.0, %v488
  %490 = vmatmul.f32.gmra.mxu0 %v362
  %v491 = vpop.f32.mrf.mxu0
  %v492 = vadd.f32 0.0, %v491
  %493 = vmatmul.f32.gmra.mxu0 %v365
  %v494 = vpop.f32.mrf.mxu0
  %v495 = vadd.f32 0.0, %v494
  %496 = vdwg.mxu0
  %v497 = vsel %vm342, %v474, 0.0
  %498 = vadd.xlane.f32.xlu0 %v497
  %v499 = vpop.xlane.xlu0 %498
  %v500 = vsel %vm342, %v477, 0.0
  %501 = vadd.xlane.f32.xlu0 %v500
  %v502 = vpop.xlane.xlu0 %501
  %v503 = vsel %vm342, %v480, 0.0
  %504 = vadd.xlane.f32.xlu0 %v503
  %v505 = vpop.xlane.xlu0 %504
  %v506 = vsel %vm342, %v483, 0.0
  %507 = vadd.xlane.f32.xlu0 %v506
  %v508 = vpop.xlane.xlu0 %507
  %v509 = vsel %vm342, %v486, 0.0
  %510 = vadd.xlane.f32.xlu0 %v509
  %v511 = vpop.xlane.xlu0 %510
  %v512 = vsel %vm342, %v489, 0.0
  %513 = vadd.xlane.f32.xlu0 %v512
  %v514 = vpop.xlane.xlu0 %513
  %v515 = vsel %vm342, %v492, 0.0
  %516 = vadd.xlane.f32.xlu0 %v515
  %v517 = vpop.xlane.xlu0 %516
  %v518 = vsel %vm342, %v495, 0.0
  %519 = vadd.xlane.f32.xlu0 %v518
  %v520 = vpop.xlane.xlu0 %519
  %v521 = vmul.f32 %v499, 0.001953125
  %v522 = vmul.f32 %v502, 0.001953125
  %v523 = vmul.f32 %v505, 0.001953125
  %v524 = vmul.f32 %v508, 0.001953125
  %v525 = vmul.f32 %v511, 0.001953125
  %v526 = vmul.f32 %v514, 0.001953125
  %v527 = vmul.f32 %v517, 0.001953125
  %v528 = vmul.f32 %v520, 0.001953125
  %v529 = vadd.f32 %v521, 1e-05
  %v530 = vadd.f32 %v522, 1e-05
  %v531 = vadd.f32 %v523, 1e-05
  %v532 = vadd.f32 %v524, 1e-05
  %v533 = vadd.f32 %v525, 1e-05
  %v534 = vadd.f32 %v526, 1e-05
  %v535 = vadd.f32 %v527, 1e-05
  %v536 = vadd.f32 %v528, 1e-05
  %v537 = vrsqrt.pop %v529
  %v538 = vmul.f32 %v537, %v529
  %v539 = vmul.f32 %v538, %v537
  %v540 = vmul.f32 0.5, %v539
  %v541 = vsub.f32 1.5, %v540
  %v542 = vmul.f32 %v537, %v541
  %vm543 = vweird.f32 %v529
  %vm544 = vweird.f32 %v537
  %vm545 = vmor %vm543, %vm544
  %v546 = vsel %vm545, %v537, %v542
  %v547 = vrsqrt.pop %v530
  %v548 = vmul.f32 %v547, %v530
  %v549 = vmul.f32 %v548, %v547
  %v550 = vmul.f32 0.5, %v549
  %v551 = vsub.f32 1.5, %v550
  %v552 = vmul.f32 %v547, %v551
  %vm553 = vweird.f32 %v530
  %vm554 = vweird.f32 %v547
  %vm555 = vmor %vm553, %vm554
  %v556 = vsel %vm555, %v547, %v552
  %v557 = vrsqrt.pop %v531
  %v558 = vmul.f32 %v557, %v531
  %v559 = vmul.f32 %v558, %v557
  %v560 = vmul.f32 0.5, %v559
  %v561 = vsub.f32 1.5, %v560
  %v562 = vmul.f32 %v557, %v561
  %vm563 = vweird.f32 %v531
  %vm564 = vweird.f32 %v557
  %vm565 = vmor %vm563, %vm564
  %v566 = vsel %vm565, %v557, %v562
  %v567 = vrsqrt.pop %v532
  %v568 = vmul.f32 %v567, %v532
  %v569 = vmul.f32 %v568, %v567
  %v570 = vmul.f32 0.5, %v569
  %v571 = vsub.f32 1.5, %v570
  %v572 = vmul.f32 %v567, %v571
  %vm573 = vweird.f32 %v532
  %vm574 = vweird.f32 %v567
  %vm575 = vmor %vm573, %vm574
  %v576 = vsel %vm575, %v567, %v572
  %v577 = vrsqrt.pop %v533
  %v578 = vmul.f32 %v577, %v533
  %v579 = vmul.f32 %v578, %v577
  %v580 = vmul.f32 0.5, %v579
  %v581 = vsub.f32 1.5, %v580
  %v582 = vmul.f32 %v577, %v581
  %vm583 = vweird.f32 %v533
  %vm584 = vweird.f32 %v577
  %vm585 = vmor %vm583, %vm584
  %v586 = vsel %vm585, %v577, %v582
  %v587 = vrsqrt.pop %v534
  %v588 = vmul.f32 %v587, %v534
  %v589 = vmul.f32 %v588, %v587
  %v590 = vmul.f32 0.5, %v589
  %v591 = vsub.f32 1.5, %v590
  %v592 = vmul.f32 %v587, %v591
  %vm593 = vweird.f32 %v534
  %vm594 = vweird.f32 %v587
  %vm595 = vmor %vm593, %vm594
  %v596 = vsel %vm595, %v587, %v592
  %v597 = vrsqrt.pop %v535
  %v598 = vmul.f32 %v597, %v535
  %v599 = vmul.f32 %v598, %v597
  %v600 = vmul.f32 0.5, %v599
  %v601 = vsub.f32 1.5, %v600
  %v602 = vmul.f32 %v597, %v601
  %vm603 = vweird.f32 %v535
  %vm604 = vweird.f32 %v597
  %vm605 = vmor %vm603, %vm604
  %v606 = vsel %vm605, %v597, %v602
  %v607 = vrsqrt.pop %v536
  %v608 = vmul.f32 %v607, %v536
  %v609 = vmul.f32 %v608, %v607
  %v610 = vmul.f32 0.5, %v609
  %v611 = vsub.f32 1.5, %v610
  %v612 = vmul.f32 %v607, %v611
  %vm613 = vweird.f32 %v536
  %vm614 = vweird.f32 %v607
  %vm615 = vmor %vm613, %vm614
  %v616 = vsel %vm615, %v607, %v612
  %v617 = vmul.f32 %v440, %v546
  %v618 = vmul.f32 %v441, %v556
  %v619 = vmul.f32 %v442, %v566
  %v620 = vmul.f32 %v443, %v576
  %v621 = vmul.f32 %v444, %v586
  %v622 = vmul.f32 %v445, %v596
  %v623 = vmul.f32 %v446, %v606
  %v624 = vmul.f32 %v447, %v616
  %626 = vset.pattern.permute.xlu0 0
  %627 = vperm.xlu0 %626, %v210
  %v628 = vpop.permute.xlu0 %627
  %631 = vset.pattern.permute.xlu0 0
  %632 = vperm.xlu0 %631, %v211
  %v633 = vpop.permute.xlu0 %632
  %636 = vset.pattern.permute.xlu0 0
  %637 = vperm.xlu0 %636, %v212
  %v638 = vpop.permute.xlu0 %637
  %641 = vset.pattern.permute.xlu0 0
  %642 = vperm.xlu0 %641, %v213
  %v643 = vpop.permute.xlu0 %642
  %646 = vset.pattern.permute.xlu0 0
  %647 = vperm.xlu0 %646, %v214
  %v648 = vpop.permute.xlu0 %647
  %651 = vset.pattern.permute.xlu0 0
  %652 = vperm.xlu0 %651, %v215
  %v653 = vpop.permute.xlu0 %652
  %656 = vset.pattern.permute.xlu0 0
  %657 = vperm.xlu0 %656, %v216
  %v658 = vpop.permute.xlu0 %657
  %661 = vset.pattern.permute.xlu0 0
  %662 = vperm.xlu0 %661, %v217
  %v663 = vpop.permute.xlu0 %662
  %v665 = vmul.f32 %v617, %v628
  %v666 = vmul.f32 %v618, %v633
  %v667 = vmul.f32 %v619, %v638
  %v668 = vmul.f32 %v620, %v643
  %v669 = vmul.f32 %v621, %v648
  %v670 = vmul.f32 %v622, %v653
  %v671 = vmul.f32 %v623, %v658
  %v672 = vmul.f32 %v624, %v663
  %674 = vset.pattern.permute.xlu0 0
  %675 = vperm.xlu0 %674, %v218
  %v676 = vpop.permute.xlu0 %675
  %679 = vset.pattern.permute.xlu0 0
  %680 = vperm.xlu0 %679, %v219
  %v681 = vpop.permute.xlu0 %680
  %684 = vset.pattern.permute.xlu0 0
  %685 = vperm.xlu0 %684, %v220
  %v686 = vpop.permute.xlu0 %685
  %689 = vset.pattern.permute.xlu0 0
  %690 = vperm.xlu0 %689, %v221
  %v691 = vpop.permute.xlu0 %690
  %694 = vset.pattern.permute.xlu0 0
  %695 = vperm.xlu0 %694, %v222
  %v696 = vpop.permute.xlu0 %695
  %699 = vset.pattern.permute.xlu0 0
  %700 = vperm.xlu0 %699, %v223
  %v701 = vpop.permute.xlu0 %700
  %704 = vset.pattern.permute.xlu0 0
  %705 = vperm.xlu0 %704, %v224
  %v706 = vpop.permute.xlu0 %705
  %709 = vset.pattern.permute.xlu0 0
  %710 = vperm.xlu0 %709, %v225
  %v711 = vpop.permute.xlu0 %710
  %v713 = vadd.f32 %v665, %v676
  %v714 = vadd.f32 %v666, %v681
  %v715 = vadd.f32 %v667, %v686
  %v716 = vadd.f32 %v668, %v691
  %v717 = vadd.f32 %v669, %v696
  %v718 = vadd.f32 %v670, %v701
  %v719 = vadd.f32 %v671, %v706
  %v720 = vadd.f32 %v672, %v711
  %v721 = vsub.f32 0.0, %v713
  %v722 = vsub.f32 0.0, %v714
  %v723 = vsub.f32 0.0, %v715
  %v724 = vsub.f32 0.0, %v716
  %v725 = vsub.f32 0.0, %v717
  %v726 = vsub.f32 0.0, %v718
  %v727 = vsub.f32 0.0, %v719
  %v728 = vsub.f32 0.0, %v720
  %v729 = vmul.f32 %v721, 1.442695
  %v730 = vpow.pop %v729
  %v731 = vmul.f32 %v722, 1.442695
  %v732 = vpow.pop %v731
  %v733 = vmul.f32 %v723, 1.442695
  %v734 = vpow.pop %v733
  %v735 = vmul.f32 %v724, 1.442695
  %v736 = vpow.pop %v735
  %v737 = vmul.f32 %v725, 1.442695
  %v738 = vpow.pop %v737
  %v739 = vmul.f32 %v726, 1.442695
  %v740 = vpow.pop %v739
  %v741 = vmul.f32 %v727, 1.442695
  %v742 = vpow.pop %v741
  %v743 = vmul.f32 %v728, 1.442695
  %v744 = vpow.pop %v743
  %v745 = vadd.f32 %v730, 1.0
  %v746 = vadd.f32 %v732, 1.0
  %v747 = vadd.f32 %v734, 1.0
  %v748 = vadd.f32 %v736, 1.0
  %v749 = vadd.f32 %v738, 1.0
  %v750 = vadd.f32 %v740, 1.0
  %v751 = vadd.f32 %v742, 1.0
  %v752 = vadd.f32 %v744, 1.0
  %v753 = vrcp.pop %v745
  %v754 = vmul.f32 %v745, %v753
  %v755 = vsub.f32 1.0, %v754
  %v756 = vmul.f32 %v753, %v755
  %v757 = vadd.f32 %v753, %v756
  %vm758 = vweird.f32 %v745
  %vm759 = vweird.f32 %v753
  %vm760 = vmor %vm758, %vm759
  %v761 = vsel %vm760, %v753, %v757
  %v762 = vand.u32 2147483647, %v745
  %vm763 = vcmp.eq.f32.partialorder %v762, 8.507059e+37
  %v764 = vand.u32 %v745, 2147483648
  %v765 = vor.u32 1.1754944e-38, %v764
  %v766 = vsel %vm763, %v765, %v761
  %v767 = vmul.f32 1.0, %v766
  %v768 = vrcp.pop %v746
  %v769 = vmul.f32 %v746, %v768
  %v770 = vsub.f32 1.0, %v769
  %v771 = vmul.f32 %v768, %v770
  %v772 = vadd.f32 %v768, %v771
  %vm773 = vweird.f32 %v746
  %vm774 = vweird.f32 %v768
  %vm775 = vmor %vm773, %vm774
  %v776 = vsel %vm775, %v768, %v772
  %v777 = vand.u32 2147483647, %v746
  %vm778 = vcmp.eq.f32.partialorder %v777, 8.507059e+37
  %v779 = vand.u32 %v746, 2147483648
  %v780 = vor.u32 1.1754944e-38, %v779
  %v781 = vsel %vm778, %v780, %v776
  %v782 = vmul.f32 1.0, %v781
  %v783 = vrcp.pop %v747
  %v784 = vmul.f32 %v747, %v783
  %v785 = vsub.f32 1.0, %v784
  %v786 = vmul.f32 %v783, %v785
  %v787 = vadd.f32 %v783, %v786
  %vm788 = vweird.f32 %v747
  %vm789 = vweird.f32 %v783
  %vm790 = vmor %vm788, %vm789
  %v791 = vsel %vm790, %v783, %v787
  %v792 = vand.u32 2147483647, %v747
  %vm793 = vcmp.eq.f32.partialorder %v792, 8.507059e+37
  %v794 = vand.u32 %v747, 2147483648
  %v795 = vor.u32 1.1754944e-38, %v794
  %v796 = vsel %vm793, %v795, %v791
  %v797 = vmul.f32 1.0, %v796
  %v798 = vrcp.pop %v748
  %v799 = vmul.f32 %v748, %v798
  %v800 = vsub.f32 1.0, %v799
  %v801 = vmul.f32 %v798, %v800
  %v802 = vadd.f32 %v798, %v801
  %vm803 = vweird.f32 %v748
  %vm804 = vweird.f32 %v798
  %vm805 = vmor %vm803, %vm804
  %v806 = vsel %vm805, %v798, %v802
  %v807 = vand.u32 2147483647, %v748
  %vm808 = vcmp.eq.f32.partialorder %v807, 8.507059e+37
  %v809 = vand.u32 %v748, 2147483648
  %v810 = vor.u32 1.1754944e-38, %v809
  %v811 = vsel %vm808, %v810, %v806
  %v812 = vmul.f32 1.0, %v811
  %v813 = vrcp.pop %v749
  %v814 = vmul.f32 %v749, %v813
  %v815 = vsub.f32 1.0, %v814
  %v816 = vmul.f32 %v813, %v815
  %v817 = vadd.f32 %v813, %v816
  %vm818 = vweird.f32 %v749
  %vm819 = vweird.f32 %v813
  %vm820 = vmor %vm818, %vm819
  %v821 = vsel %vm820, %v813, %v817
  %v822 = vand.u32 2147483647, %v749
  %vm823 = vcmp.eq.f32.partialorder %v822, 8.507059e+37
  %v824 = vand.u32 %v749, 2147483648
  %v825 = vor.u32 1.1754944e-38, %v824
  %v826 = vsel %vm823, %v825, %v821
  %v827 = vmul.f32 1.0, %v826
  %v828 = vrcp.pop %v750
  %v829 = vmul.f32 %v750, %v828
  %v830 = vsub.f32 1.0, %v829
  %v831 = vmul.f32 %v828, %v830
  %v832 = vadd.f32 %v828, %v831
  %vm833 = vweird.f32 %v750
  %vm834 = vweird.f32 %v828
  %vm835 = vmor %vm833, %vm834
  %v836 = vsel %vm835, %v828, %v832
  %v837 = vand.u32 2147483647, %v750
  %vm838 = vcmp.eq.f32.partialorder %v837, 8.507059e+37
  %v839 = vand.u32 %v750, 2147483648
  %v840 = vor.u32 1.1754944e-38, %v839
  %v841 = vsel %vm838, %v840, %v836
  %v842 = vmul.f32 1.0, %v841
  %v843 = vrcp.pop %v751
  %v844 = vmul.f32 %v751, %v843
  %v845 = vsub.f32 1.0, %v844
  %v846 = vmul.f32 %v843, %v845
  %v847 = vadd.f32 %v843, %v846
  %vm848 = vweird.f32 %v751
  %vm849 = vweird.f32 %v843
  %vm850 = vmor %vm848, %vm849
  %v851 = vsel %vm850, %v843, %v847
  %v852 = vand.u32 2147483647, %v751
  %vm853 = vcmp.eq.f32.partialorder %v852, 8.507059e+37
  %v854 = vand.u32 %v751, 2147483648
  %v855 = vor.u32 1.1754944e-38, %v854
  %v856 = vsel %vm853, %v855, %v851
  %v857 = vmul.f32 1.0, %v856
  %v858 = vrcp.pop %v752
  %v859 = vmul.f32 %v752, %v858
  %v860 = vsub.f32 1.0, %v859
  %v861 = vmul.f32 %v858, %v860
  %v862 = vadd.f32 %v858, %v861
  %vm863 = vweird.f32 %v752
  %vm864 = vweird.f32 %v858
  %vm865 = vmor %vm863, %vm864
  %v866 = vsel %vm865, %v858, %v862
  %v867 = vand.u32 2147483647, %v752
  %vm868 = vcmp.eq.f32.partialorder %v867, 8.507059e+37
  %v869 = vand.u32 %v752, 2147483648
  %v870 = vor.u32 1.1754944e-38, %v869
  %v871 = vsel %vm868, %v870, %v866
  %v872 = vmul.f32 1.0, %v871
  %v873 = vmul.f32 %v713, %v767
  %v874 = vmul.f32 %v714, %v782
  %v875 = vmul.f32 %v715, %v797
  %v876 = vmul.f32 %v716, %v812
  %v877 = vmul.f32 %v717, %v827
  %v878 = vmul.f32 %v718, %v842
  %v879 = vmul.f32 %v719, %v857
  %v880 = vmul.f32 %v720, %v872
  %v882 = vsel %vm342, %v246, 0
  %v885 = vsel %vm342, %v247, 0
  %v888 = vsel %vm342, %v248, 0
  %v891 = vsel %vm342, %v249, 0
  %v894 = vsel %vm342, %v250, 0
  %v897 = vsel %vm342, %v251, 0
  %v900 = vsel %vm342, %v252, 0
  %v903 = vsel %vm342, %v253, 0
  %v906 = vsel %vm342, %v254, 0
  %v909 = vsel %vm342, %v255, 0
  %v912 = vsel %vm342, %v256, 0
  %v915 = vsel %vm342, %v257, 0
  %v918 = vsel %vm342, %v258, 0
  %v921 = vsel %vm342, %v259, 0
  %v924 = vsel %vm342, %v260, 0
  %v927 = vsel %vm342, %v261, 0
  %v930 = vsel %vm342, %v262, 0
  %v933 = vsel %vm342, %v263, 0
  %v936 = vsel %vm342, %v264, 0
  %v939 = vsel %vm342, %v265, 0
  %v942 = vsel %vm342, %v266, 0
  %v945 = vsel %vm342, %v267, 0
  %v948 = vsel %vm342, %v268, 0
  %v951 = vsel %vm342, %v269, 0
  %v954 = vsel %vm342, %v270, 0
  %v957 = vsel %vm342, %v271, 0
  %v960 = vsel %vm342, %v272, 0
  %v963 = vsel %vm342, %v273, 0
  %v966 = vsel %vm342, %v274, 0
  %v969 = vsel %vm342, %v275, 0
  %v972 = vsel %vm342, %v276, 0
  %v975 = vsel %vm342, %v277, 0
  %v978 = vsel %vm342, %v278, 0
  %v981 = vsel %vm342, %v279, 0
  %v984 = vsel %vm342, %v280, 0
  %v987 = vsel %vm342, %v281, 0
  %989 = vmatpush.msra.mxu0 0.0
  %990 = vmatpush.msra.mxu0 0.0
  %991 = vmatpush.msra.mxu0 0.0
  %992 = vmatpush.msra.mxu0 0.0
  %993 = vmatpush.msra.mxu0 0.0
  %994 = vmatpush.msra.mxu0 0.0
  %995 = vmatpush.msra.mxu0 0.0
  %996 = vmatpush.msra.mxu0 0.0
  %997 = vmatpush.msra.mxu0 %v880
  %998 = vmatpush.msra.mxu0 %v879
  %999 = vmatpush.msra.mxu0 %v878
  %1000 = vmatpush.msra.mxu0 %v877
  %1001 = vmatpush.msra.mxu0 %v876
  %1002 = vmatpush.msra.mxu0 %v875
  %1003 = vmatpush.msra.mxu0 %v874
  %1004 = vmatpush.msra.mxu0 %v873
  %1005 = vmatmul.f32.gmra.mxu0 %v882
  %v1006 = vpop.f32.mrf.mxu0
  %v1007 = vadd.f32 0.0, %v1006
  %1008 = vmatmul.f32.gmra.mxu0 %v885
  %v1009 = vpop.f32.mrf.mxu0
  %v1010 = vadd.f32 0.0, %v1009
  %1011 = vmatmul.f32.gmra.mxu0 %v888
  %v1012 = vpop.f32.mrf.mxu0
  %v1013 = vadd.f32 0.0, %v1012
  %1014 = vmatmul.f32.gmra.mxu0 %v891
  %v1015 = vpop.f32.mrf.mxu0
  %v1016 = vadd.f32 0.0, %v1015
  %1017 = vmatmul.f32.gmra.mxu0 %v894
  %v1018 = vpop.f32.mrf.mxu0
  %v1019 = vadd.f32 0.0, %v1018
  %1020 = vmatmul.f32.gmra.mxu0 %v897
  %v1021 = vpop.f32.mrf.mxu0
  %v1022 = vadd.f32 0.0, %v1021
  %1023 = vmatmul.f32.gmra.mxu0 %v900
  %v1024 = vpop.f32.mrf.mxu0
  %v1025 = vadd.f32 0.0, %v1024
  %1026 = vmatmul.f32.gmra.mxu0 %v903
  %v1027 = vpop.f32.mrf.mxu0
  %v1028 = vadd.f32 0.0, %v1027
  %1029 = vmatmul.f32.gmra.mxu0 %v906
  %v1030 = vpop.f32.mrf.mxu0
  %v1031 = vadd.f32 0.0, %v1030
  %1032 = vmatmul.f32.gmra.mxu0 %v909
  %v1033 = vpop.f32.mrf.mxu0
  %v1034 = vadd.f32 0.0, %v1033
  %1035 = vmatmul.f32.gmra.mxu0 %v912
  %v1036 = vpop.f32.mrf.mxu0
  %v1037 = vadd.f32 0.0, %v1036
  %1038 = vmatmul.f32.gmra.mxu0 %v915
  %v1039 = vpop.f32.mrf.mxu0
  %v1040 = vadd.f32 0.0, %v1039
  %1041 = vmatmul.f32.gmra.mxu0 %v918
  %v1042 = vpop.f32.mrf.mxu0
  %v1043 = vadd.f32 0.0, %v1042
  %1044 = vmatmul.f32.gmra.mxu0 %v921
  %v1045 = vpop.f32.mrf.mxu0
  %v1046 = vadd.f32 0.0, %v1045
  %1047 = vmatmul.f32.gmra.mxu0 %v924
  %v1048 = vpop.f32.mrf.mxu0
  %v1049 = vadd.f32 0.0, %v1048
  %1050 = vmatmul.f32.gmra.mxu0 %v927
  %v1051 = vpop.f32.mrf.mxu0
  %v1052 = vadd.f32 0.0, %v1051
  %1053 = vmatmul.f32.gmra.mxu0 %v930
  %v1054 = vpop.f32.mrf.mxu0
  %v1055 = vadd.f32 0.0, %v1054
  %1056 = vmatmul.f32.gmra.mxu0 %v933
  %v1057 = vpop.f32.mrf.mxu0
  %v1058 = vadd.f32 0.0, %v1057
  %1059 = vmatmul.f32.gmra.mxu0 %v936
  %v1060 = vpop.f32.mrf.mxu0
  %v1061 = vadd.f32 0.0, %v1060
  %1062 = vmatmul.f32.gmra.mxu0 %v939
  %v1063 = vpop.f32.mrf.mxu0
  %v1064 = vadd.f32 0.0, %v1063
  %1065 = vmatmul.f32.gmra.mxu0 %v942
  %v1066 = vpop.f32.mrf.mxu0
  %v1067 = vadd.f32 0.0, %v1066
  %1068 = vmatmul.f32.gmra.mxu0 %v945
  %v1069 = vpop.f32.mrf.mxu0
  %v1070 = vadd.f32 0.0, %v1069
  %1071 = vmatmul.f32.gmra.mxu0 %v948
  %v1072 = vpop.f32.mrf.mxu0
  %v1073 = vadd.f32 0.0, %v1072
  %1074 = vmatmul.f32.gmra.mxu0 %v951
  %v1075 = vpop.f32.mrf.mxu0
  %v1076 = vadd.f32 0.0, %v1075
  %1077 = vmatmul.f32.gmra.mxu0 %v954
  %v1078 = vpop.f32.mrf.mxu0
  %v1079 = vadd.f32 0.0, %v1078
  %1080 = vmatmul.f32.gmra.mxu0 %v957
  %v1081 = vpop.f32.mrf.mxu0
  %v1082 = vadd.f32 0.0, %v1081
  %1083 = vmatmul.f32.gmra.mxu0 %v960
  %v1084 = vpop.f32.mrf.mxu0
  %v1085 = vadd.f32 0.0, %v1084
  %1086 = vmatmul.f32.gmra.mxu0 %v963
  %v1087 = vpop.f32.mrf.mxu0
  %v1088 = vadd.f32 0.0, %v1087
  %1089 = vmatmul.f32.gmra.mxu0 %v966
  %v1090 = vpop.f32.mrf.mxu0
  %v1091 = vadd.f32 0.0, %v1090
  %1092 = vmatmul.f32.gmra.mxu0 %v969
  %v1093 = vpop.f32.mrf.mxu0
  %v1094 = vadd.f32 0.0, %v1093
  %1095 = vmatmul.f32.gmra.mxu0 %v972
  %v1096 = vpop.f32.mrf.mxu0
  %v1097 = vadd.f32 0.0, %v1096
  %1098 = vmatmul.f32.gmra.mxu0 %v975
  %v1099 = vpop.f32.mrf.mxu0
  %v1100 = vadd.f32 0.0, %v1099
  %1101 = vmatmul.f32.gmra.mxu0 %v978
  %v1102 = vpop.f32.mrf.mxu0
  %v1103 = vadd.f32 0.0, %v1102
  %1104 = vmatmul.f32.gmra.mxu0 %v981
  %v1105 = vpop.f32.mrf.mxu0
  %v1106 = vadd.f32 0.0, %v1105
  %1107 = vmatmul.f32.gmra.mxu0 %v984
  %v1108 = vpop.f32.mrf.mxu0
  %v1109 = vadd.f32 0.0, %v1108
  %1110 = vmatmul.f32.gmra.mxu0 %v987
  %v1111 = vpop.f32.mrf.mxu0
  %v1112 = vadd.f32 0.0, %v1111
  %1113 = vdwg.mxu0
  %v1114 = vld [vmem:[%s16] sm:$0xff]
  %v1115 = vld [vmem:[%s16 + $0x8] sm:$0xff]
  %v1116 = vld [vmem:[%s16 + $0x10] sm:$0xff]
  %v1117 = vld [vmem:[%s16 + $0x18] sm:$0xff]
  %v1118 = vld [vmem:[%s16 + $0x20] sm:$0xff]
  %v1119 = vld [vmem:[%s16 + $0x28] sm:$0xff]
  %v1120 = vld [vmem:[%s16 + $0x30] sm:$0xff]
  %v1121 = vld [vmem:[%s16 + $0x38] sm:$0xff]
  %s1122 = scalar_lea.vmem %s16, 64
  %v1123 = vld [vmem:[%s1122] sm:$0xff]
  %v1124 = vld [vmem:[%s1122 + $0x8] sm:$0xff]
  %v1125 = vld [vmem:[%s1122 + $0x10] sm:$0xff]
  %v1126 = vld [vmem:[%s1122 + $0x18] sm:$0xff]
  %v1127 = vld [vmem:[%s1122 + $0x20] sm:$0xff]
  %v1128 = vld [vmem:[%s1122 + $0x28] sm:$0xff]
  %v1129 = vld [vmem:[%s1122 + $0x30] sm:$0xff]
  %v1130 = vld [vmem:[%s1122 + $0x38] sm:$0xff]
  %v1132 = vsel %vm342, %v1019, 0
  %v1135 = vsel %vm342, %v1022, 0
  %v1138 = vsel %vm342, %v1025, 0
  %v1141 = vsel %vm342, %v1028, 0
  %1143 = vmatpush.msra.mxu0 0.0
  %1144 = vmatpush.msra.mxu0 0.0
  %1145 = vmatpush.msra.mxu0 0.0
  %1146 = vmatpush.msra.mxu0 0.0
  %1147 = vmatpush.msra.mxu0 0.0
  %1148 = vmatpush.msra.mxu0 0.0
  %1149 = vmatpush.msra.mxu0 0.0
  %1150 = vmatpush.msra.mxu0 0.0
  %1151 = vmatpush.msra.mxu0 %v1130
  %1152 = vmatpush.msra.mxu0 %v1129
  %1153 = vmatpush.msra.mxu0 %v1128
  %1154 = vmatpush.msra.mxu0 %v1127
  %1155 = vmatpush.msra.mxu0 %v1126
  %1156 = vmatpush.msra.mxu0 %v1125
  %1157 = vmatpush.msra.mxu0 %v1124
  %1158 = vmatpush.msra.mxu0 %v1123
  %1159 = vmatmul.f32.gmra.mxu0 %v1132
  %v1160 = vpop.f32.mrf.mxu0
  %v1161 = vadd.f32 0.0, %v1160
  %1162 = vmatmul.f32.gmra.mxu0 %v1135
  %v1163 = vpop.f32.mrf.mxu0
  %v1164 = vadd.f32 0.0, %v1163
  %1165 = vmatmul.f32.gmra.mxu0 %v1138
  %v1166 = vpop.f32.mrf.mxu0
  %v1167 = vadd.f32 0.0, %v1166
  %1168 = vmatmul.f32.gmra.mxu0 %v1141
  %v1169 = vpop.f32.mrf.mxu0
  %v1170 = vadd.f32 0.0, %v1169
  %1171 = vdwg.mxu0
  %v1173 = vsel %vm342, %v1007, 0
  %v1176 = vsel %vm342, %v1010, 0
  %v1179 = vsel %vm342, %v1013, 0
  %v1182 = vsel %vm342, %v1016, 0
  %1184 = vmatpush.msra.mxu0 0.0
  %1185 = vmatpush.msra.mxu0 0.0
  %1186 = vmatpush.msra.mxu0 0.0
  %1187 = vmatpush.msra.mxu0 0.0
  %1188 = vmatpush.msra.mxu0 0.0
  %1189 = vmatpush.msra.mxu0 0.0
  %1190 = vmatpush.msra.mxu0 0.0
  %1191 = vmatpush.msra.mxu0 0.0
  %1192 = vmatpush.msra.mxu0 %v1121
  %1193 = vmatpush.msra.mxu0 %v1120
  %1194 = vmatpush.msra.mxu0 %v1119
  %1195 = vmatpush.msra.mxu0 %v1118
  %1196 = vmatpush.msra.mxu0 %v1117
  %1197 = vmatpush.msra.mxu0 %v1116
  %1198 = vmatpush.msra.mxu0 %v1115
  %1199 = vmatpush.msra.mxu0 %v1114
  %1200 = vmatmul.f32.gmra.mxu0 %v1173
  %v1201 = vpop.f32.mrf.mxu0
  %v1202 = vadd.f32 %v1161, %v1201
  %1203 = vmatmul.f32.gmra.mxu0 %v1176
  %v1204 = vpop.f32.mrf.mxu0
  %v1205 = vadd.f32 %v1164, %v1204
  %1206 = vmatmul.f32.gmra.mxu0 %v1179
  %v1207 = vpop.f32.mrf.mxu0
  %v1208 = vadd.f32 %v1167, %v1207
  %1209 = vmatmul.f32.gmra.mxu0 %v1182
  %v1210 = vpop.f32.mrf.mxu0
  %v1211 = vadd.f32 %v1170, %v1210
  %1212 = vdwg.mxu0
  %s1213 = scalar_lea.vmem %s16, 128
  %v1214 = vld [vmem:[%s1213] sm:$0xff]
  %v1215 = vld [vmem:[%s1213 + $0x8] sm:$0xff]
  %v1216 = vld [vmem:[%s1213 + $0x10] sm:$0xff]
  %v1217 = vld [vmem:[%s1213 + $0x18] sm:$0xff]
  %v1218 = vld [vmem:[%s1213 + $0x20] sm:$0xff]
  %v1219 = vld [vmem:[%s1213 + $0x28] sm:$0xff]
  %v1220 = vld [vmem:[%s1213 + $0x30] sm:$0xff]
  %v1221 = vld [vmem:[%s1213 + $0x38] sm:$0xff]
  %v1223 = vsel %vm342, %v1031, 0
  %v1226 = vsel %vm342, %v1034, 0
  %v1229 = vsel %vm342, %v1037, 0
  %v1232 = vsel %vm342, %v1040, 0
  %1234 = vmatpush.msra.mxu0 0.0
  %1235 = vmatpush.msra.mxu0 0.0
  %1236 = vmatpush.msra.mxu0 0.0
  %1237 = vmatpush.msra.mxu0 0.0
  %1238 = vmatpush.msra.mxu0 0.0
  %1239 = vmatpush.msra.mxu0 0.0
  %1240 = vmatpush.msra.mxu0 0.0
  %1241 = vmatpush.msra.mxu0 0.0
  %1242 = vmatpush.msra.mxu0 %v1221
  %1243 = vmatpush.msra.mxu0 %v1220
  %1244 = vmatpush.msra.mxu0 %v1219
  %1245 = vmatpush.msra.mxu0 %v1218
  %1246 = vmatpush.msra.mxu0 %v1217
  %1247 = vmatpush.msra.mxu0 %v1216
  %1248 = vmatpush.msra.mxu0 %v1215
  %1249 = vmatpush.msra.mxu0 %v1214
  %1250 = vmatmul.f32.gmra.mxu0 %v1223
  %v1251 = vpop.f32.mrf.mxu0
  %v1252 = vadd.f32 0.0, %v1251
  %1253 = vmatmul.f32.gmra.mxu0 %v1226
  %v1254 = vpop.f32.mrf.mxu0
  %v1255 = vadd.f32 0.0, %v1254
  %1256 = vmatmul.f32.gmra.mxu0 %v1229
  %v1257 = vpop.f32.mrf.mxu0
  %v1258 = vadd.f32 0.0, %v1257
  %1259 = vmatmul.f32.gmra.mxu0 %v1232
  %v1260 = vpop.f32.mrf.mxu0
  %v1261 = vadd.f32 0.0, %v1260
  %1262 = vdwg.mxu0
  %v1263 = vadd.f32 %v1202, %v1252
  %v1264 = vadd.f32 %v1205, %v1255
  %v1265 = vadd.f32 %v1208, %v1258
  %v1266 = vadd.f32 %v1211, %v1261
  %s1267 = scalar_lea.vmem %s16, 192
  %v1268 = vld [vmem:[%s1267] sm:$0xff]
  %v1269 = vld [vmem:[%s1267 + $0x8] sm:$0xff]
  %v1270 = vld [vmem:[%s1267 + $0x10] sm:$0xff]
  %v1271 = vld [vmem:[%s1267 + $0x18] sm:$0xff]
  %v1272 = vld [vmem:[%s1267 + $0x20] sm:$0xff]
  %v1273 = vld [vmem:[%s1267 + $0x28] sm:$0xff]
  %v1274 = vld [vmem:[%s1267 + $0x30] sm:$0xff]
  %v1275 = vld [vmem:[%s1267 + $0x38] sm:$0xff]
  %v1277 = vsel %vm342, %v1043, 0
  %v1280 = vsel %vm342, %v1046, 0
  %v1283 = vsel %vm342, %v1049, 0
  %v1286 = vsel %vm342, %v1052, 0
  %1288 = vmatpush.msra.mxu0 0.0
  %1289 = vmatpush.msra.mxu0 0.0
  %1290 = vmatpush.msra.mxu0 0.0
  %1291 = vmatpush.msra.mxu0 0.0
  %1292 = vmatpush.msra.mxu0 0.0
  %1293 = vmatpush.msra.mxu0 0.0
  %1294 = vmatpush.msra.mxu0 0.0
  %1295 = vmatpush.msra.mxu0 0.0
  %1296 = vmatpush.msra.mxu0 %v1275
  %1297 = vmatpush.msra.mxu0 %v1274
  %1298 = vmatpush.msra.mxu0 %v1273
  %1299 = vmatpush.msra.mxu0 %v1272
  %1300 = vmatpush.msra.mxu0 %v1271
  %1301 = vmatpush.msra.mxu0 %v1270
  %1302 = vmatpush.msra.mxu0 %v1269
  %1303 = vmatpush.msra.mxu0 %v1268
  %1304 = vmatmul.f32.gmra.mxu0 %v1277
  %v1305 = vpop.f32.mrf.mxu0
  %v1306 = vadd.f32 0.0, %v1305
  %1307 = vmatmul.f32.gmra.mxu0 %v1280
  %v1308 = vpop.f32.mrf.mxu0
  %v1309 = vadd.f32 0.0, %v1308
  %1310 = vmatmul.f32.gmra.mxu0 %v1283
  %v1311 = vpop.f32.mrf.mxu0
  %v1312 = vadd.f32 0.0, %v1311
  %1313 = vmatmul.f32.gmra.mxu0 %v1286
  %v1314 = vpop.f32.mrf.mxu0
  %v1315 = vadd.f32 0.0, %v1314
  %1316 = vdwg.mxu0
  %v1317 = vadd.f32 %v1263, %v1306
  %v1318 = vadd.f32 %v1264, %v1309
  %v1319 = vadd.f32 %v1265, %v1312
  %v1320 = vadd.f32 %v1266, %v1315
  %s1321 = scalar_lea.vmem %s16, 256
  %v1322 = vld [vmem:[%s1321] sm:$0xff]
  %v1323 = vld [vmem:[%s1321 + $0x8] sm:$0xff]
  %v1324 = vld [vmem:[%s1321 + $0x10] sm:$0xff]
  %v1325 = vld [vmem:[%s1321 + $0x18] sm:$0xff]
  %v1326 = vld [vmem:[%s1321 + $0x20] sm:$0xff]
  %v1327 = vld [vmem:[%s1321 + $0x28] sm:$0xff]
  %v1328 = vld [vmem:[%s1321 + $0x30] sm:$0xff]
  %v1329 = vld [vmem:[%s1321 + $0x38] sm:$0xff]
  %v1331 = vsel %vm342, %v1055, 0
  %v1334 = vsel %vm342, %v1058, 0
  %v1337 = vsel %vm342, %v1061, 0
  %v1340 = vsel %vm342, %v1064, 0
  %1342 = vmatpush.msra.mxu0 0.0
  %1343 = vmatpush.msra.mxu0 0.0
  %1344 = vmatpush.msra.mxu0 0.0
  %1345 = vmatpush.msra.mxu0 0.0
  %1346 = vmatpush.msra.mxu0 0.0
  %1347 = vmatpush.msra.mxu0 0.0
  %1348 = vmatpush.msra.mxu0 0.0
  %1349 = vmatpush.msra.mxu0 0.0
  %1350 = vmatpush.msra.mxu0 %v1329
  %1351 = vmatpush.msra.mxu0 %v1328
  %1352 = vmatpush.msra.mxu0 %v1327
  %1353 = vmatpush.msra.mxu0 %v1326
  %1354 = vmatpush.msra.mxu0 %v1325
  %1355 = vmatpush.msra.mxu0 %v1324
  %1356 = vmatpush.msra.mxu0 %v1323
  %1357 = vmatpush.msra.mxu0 %v1322
  %1358 = vmatmul.f32.gmra.mxu0 %v1331
  %v1359 = vpop.f32.mrf.mxu0
  %v1360 = vadd.f32 0.0, %v1359
  %1361 = vmatmul.f32.gmra.mxu0 %v1334
  %v1362 = vpop.f32.mrf.mxu0
  %v1363 = vadd.f32 0.0, %v1362
  %1364 = vmatmul.f32.gmra.mxu0 %v1337
  %v1365 = vpop.f32.mrf.mxu0
  %v1366 = vadd.f32 0.0, %v1365
  %1367 = vmatmul.f32.gmra.mxu0 %v1340
  %v1368 = vpop.f32.mrf.mxu0
  %v1369 = vadd.f32 0.0, %v1368
  %1370 = vdwg.mxu0
  %v1371 = vadd.f32 %v1317, %v1360
  %v1372 = vadd.f32 %v1318, %v1363
  %v1373 = vadd.f32 %v1319, %v1366
  %v1374 = vadd.f32 %v1320, %v1369
  %s1375 = scalar_lea.vmem %s16, 320
  %v1376 = vld [vmem:[%s1375] sm:$0xff]
  %v1377 = vld [vmem:[%s1375 + $0x8] sm:$0xff]
  %v1378 = vld [vmem:[%s1375 + $0x10] sm:$0xff]
  %v1379 = vld [vmem:[%s1375 + $0x18] sm:$0xff]
  %v1380 = vld [vmem:[%s1375 + $0x20] sm:$0xff]
  %v1381 = vld [vmem:[%s1375 + $0x28] sm:$0xff]
  %v1382 = vld [vmem:[%s1375 + $0x30] sm:$0xff]
  %v1383 = vld [vmem:[%s1375 + $0x38] sm:$0xff]
  %v1385 = vsel %vm342, %v1067, 0
  %v1388 = vsel %vm342, %v1070, 0
  %v1391 = vsel %vm342, %v1073, 0
  %v1394 = vsel %vm342, %v1076, 0
  %1396 = vmatpush.msra.mxu0 0.0
  %1397 = vmatpush.msra.mxu0 0.0
  %1398 = vmatpush.msra.mxu0 0.0
  %1399 = vmatpush.msra.mxu0 0.0
  %1400 = vmatpush.msra.mxu0 0.0
  %1401 = vmatpush.msra.mxu0 0.0
  %1402 = vmatpush.msra.mxu0 0.0
  %1403 = vmatpush.msra.mxu0 0.0
  %1404 = vmatpush.msra.mxu0 %v1383
  %1405 = vmatpush.msra.mxu0 %v1382
  %1406 = vmatpush.msra.mxu0 %v1381
  %1407 = vmatpush.msra.mxu0 %v1380
  %1408 = vmatpush.msra.mxu0 %v1379
  %1409 = vmatpush.msra.mxu0 %v1378
  %1410 = vmatpush.msra.mxu0 %v1377
  %1411 = vmatpush.msra.mxu0 %v1376
  %1412 = vmatmul.f32.gmra.mxu0 %v1385
  %v1413 = vpop.f32.mrf.mxu0
  %v1414 = vadd.f32 0.0, %v1413
  %1415 = vmatmul.f32.gmra.mxu0 %v1388
  %v1416 = vpop.f32.mrf.mxu0
  %v1417 = vadd.f32 0.0, %v1416
  %1418 = vmatmul.f32.gmra.mxu0 %v1391
  %v1419 = vpop.f32.mrf.mxu0
  %v1420 = vadd.f32 0.0, %v1419
  %1421 = vmatmul.f32.gmra.mxu0 %v1394
  %v1422 = vpop.f32.mrf.mxu0
  %v1423 = vadd.f32 0.0, %v1422
  %1424 = vdwg.mxu0
  %v1425 = vadd.f32 %v1371, %v1414
  %v1426 = vadd.f32 %v1372, %v1417
  %v1427 = vadd.f32 %v1373, %v1420
  %v1428 = vadd.f32 %v1374, %v1423
  %s1429 = scalar_lea.vmem %s16, 384
  %v1430 = vld [vmem:[%s1429] sm:$0xff]
  %v1431 = vld [vmem:[%s1429 + $0x8] sm:$0xff]
  %v1432 = vld [vmem:[%s1429 + $0x10] sm:$0xff]
  %v1433 = vld [vmem:[%s1429 + $0x18] sm:$0xff]
  %v1434 = vld [vmem:[%s1429 + $0x20] sm:$0xff]
  %v1435 = vld [vmem:[%s1429 + $0x28] sm:$0xff]
  %v1436 = vld [vmem:[%s1429 + $0x30] sm:$0xff]
  %v1437 = vld [vmem:[%s1429 + $0x38] sm:$0xff]
  %v1439 = vsel %vm342, %v1079, 0
  %v1442 = vsel %vm342, %v1082, 0
  %v1445 = vsel %vm342, %v1085, 0
  %v1448 = vsel %vm342, %v1088, 0
  %1450 = vmatpush.msra.mxu0 0.0
  %1451 = vmatpush.msra.mxu0 0.0
  %1452 = vmatpush.msra.mxu0 0.0
  %1453 = vmatpush.msra.mxu0 0.0
  %1454 = vmatpush.msra.mxu0 0.0
  %1455 = vmatpush.msra.mxu0 0.0
  %1456 = vmatpush.msra.mxu0 0.0
  %1457 = vmatpush.msra.mxu0 0.0
  %1458 = vmatpush.msra.mxu0 %v1437
  %1459 = vmatpush.msra.mxu0 %v1436
  %1460 = vmatpush.msra.mxu0 %v1435
  %1461 = vmatpush.msra.mxu0 %v1434
  %1462 = vmatpush.msra.mxu0 %v1433
  %1463 = vmatpush.msra.mxu0 %v1432
  %1464 = vmatpush.msra.mxu0 %v1431
  %1465 = vmatpush.msra.mxu0 %v1430
  %1466 = vmatmul.f32.gmra.mxu0 %v1439
  %v1467 = vpop.f32.mrf.mxu0
  %v1468 = vadd.f32 0.0, %v1467
  %1469 = vmatmul.f32.gmra.mxu0 %v1442
  %v1470 = vpop.f32.mrf.mxu0
  %v1471 = vadd.f32 0.0, %v1470
  %1472 = vmatmul.f32.gmra.mxu0 %v1445
  %v1473 = vpop.f32.mrf.mxu0
  %v1474 = vadd.f32 0.0, %v1473
  %1475 = vmatmul.f32.gmra.mxu0 %v1448
  %v1476 = vpop.f32.mrf.mxu0
  %v1477 = vadd.f32 0.0, %v1476
  %1478 = vdwg.mxu0
  %v1479 = vadd.f32 %v1425, %v1468
  %v1480 = vadd.f32 %v1426, %v1471
  %v1481 = vadd.f32 %v1427, %v1474
  %v1482 = vadd.f32 %v1428, %v1477
  %s1483 = scalar_lea.vmem %s16, 448
  %v1484 = vld [vmem:[%s1483] sm:$0xff]
  %v1485 = vld [vmem:[%s1483 + $0x8] sm:$0xff]
  %v1486 = vld [vmem:[%s1483 + $0x10] sm:$0xff]
  %v1487 = vld [vmem:[%s1483 + $0x18] sm:$0xff]
  %v1488 = vld [vmem:[%s1483 + $0x20] sm:$0xff]
  %v1489 = vld [vmem:[%s1483 + $0x28] sm:$0xff]
  %v1490 = vld [vmem:[%s1483 + $0x30] sm:$0xff]
  %v1491 = vld [vmem:[%s1483 + $0x38] sm:$0xff]
  %v1493 = vsel %vm342, %v1091, 0
  %v1496 = vsel %vm342, %v1094, 0
  %v1499 = vsel %vm342, %v1097, 0
  %v1502 = vsel %vm342, %v1100, 0
  %1504 = vmatpush.msra.mxu0 0.0
  %1505 = vmatpush.msra.mxu0 0.0
  %1506 = vmatpush.msra.mxu0 0.0
  %1507 = vmatpush.msra.mxu0 0.0
  %1508 = vmatpush.msra.mxu0 0.0
  %1509 = vmatpush.msra.mxu0 0.0
  %1510 = vmatpush.msra.mxu0 0.0
  %1511 = vmatpush.msra.mxu0 0.0
  %1512 = vmatpush.msra.mxu0 %v1491
  %1513 = vmatpush.msra.mxu0 %v1490
  %1514 = vmatpush.msra.mxu0 %v1489
  %1515 = vmatpush.msra.mxu0 %v1488
  %1516 = vmatpush.msra.mxu0 %v1487
  %1517 = vmatpush.msra.mxu0 %v1486
  %1518 = vmatpush.msra.mxu0 %v1485
  %1519 = vmatpush.msra.mxu0 %v1484
  %1520 = vmatmul.f32.gmra.mxu0 %v1493
  %v1521 = vpop.f32.mrf.mxu0
  %v1522 = vadd.f32 0.0, %v1521
  %1523 = vmatmul.f32.gmra.mxu0 %v1496
  %v1524 = vpop.f32.mrf.mxu0
  %v1525 = vadd.f32 0.0, %v1524
  %1526 = vmatmul.f32.gmra.mxu0 %v1499
  %v1527 = vpop.f32.mrf.mxu0
  %v1528 = vadd.f32 0.0, %v1527
  %1529 = vmatmul.f32.gmra.mxu0 %v1502
  %v1530 = vpop.f32.mrf.mxu0
  %v1531 = vadd.f32 0.0, %v1530
  %1532 = vdwg.mxu0
  %v1533 = vadd.f32 %v1479, %v1522
  %v1534 = vadd.f32 %v1480, %v1525
  %v1535 = vadd.f32 %v1481, %v1528
  %v1536 = vadd.f32 %v1482, %v1531
  %s1537 = scalar_lea.vmem %s16, 512
  %v1538 = vld [vmem:[%s1537] sm:$0xff]
  %v1539 = vld [vmem:[%s1537 + $0x8] sm:$0xff]
  %v1540 = vld [vmem:[%s1537 + $0x10] sm:$0xff]
  %v1541 = vld [vmem:[%s1537 + $0x18] sm:$0xff]
  %v1542 = vld [vmem:[%s1537 + $0x20] sm:$0xff]
  %v1543 = vld [vmem:[%s1537 + $0x28] sm:$0xff]
  %v1544 = vld [vmem:[%s1537 + $0x30] sm:$0xff]
  %v1545 = vld [vmem:[%s1537 + $0x38] sm:$0xff]
  %v1547 = vsel %vm342, %v1103, 0
  %v1550 = vsel %vm342, %v1106, 0
  %v1553 = vsel %vm342, %v1109, 0
  %v1556 = vsel %vm342, %v1112, 0
  %1558 = vmatpush.msra.mxu0 0.0
  %1559 = vmatpush.msra.mxu0 0.0
  %1560 = vmatpush.msra.mxu0 0.0
  %1561 = vmatpush.msra.mxu0 0.0
  %1562 = vmatpush.msra.mxu0 0.0
  %1563 = vmatpush.msra.mxu0 0.0
  %1564 = vmatpush.msra.mxu0 0.0
  %1565 = vmatpush.msra.mxu0 0.0
  %1566 = vmatpush.msra.mxu0 %v1545
  %1567 = vmatpush.msra.mxu0 %v1544
  %1568 = vmatpush.msra.mxu0 %v1543
  %1569 = vmatpush.msra.mxu0 %v1542
  %1570 = vmatpush.msra.mxu0 %v1541
  %1571 = vmatpush.msra.mxu0 %v1540
  %1572 = vmatpush.msra.mxu0 %v1539
  %1573 = vmatpush.msra.mxu0 %v1538
  %1574 = vmatmul.f32.gmra.mxu0 %v1547
  %v1575 = vpop.f32.mrf.mxu0
  %v1576 = vadd.f32 0.0, %v1575
  %1577 = vmatmul.f32.gmra.mxu0 %v1550
  %v1578 = vpop.f32.mrf.mxu0
  %v1579 = vadd.f32 0.0, %v1578
  %1580 = vmatmul.f32.gmra.mxu0 %v1553
  %v1581 = vpop.f32.mrf.mxu0
  %v1582 = vadd.f32 0.0, %v1581
  %1583 = vmatmul.f32.gmra.mxu0 %v1556
  %v1584 = vpop.f32.mrf.mxu0
  %v1585 = vadd.f32 0.0, %v1584
  %1586 = vdwg.mxu0
  %v1587 = vadd.f32 %v1533, %v1576
  %v1588 = vadd.f32 %v1534, %v1579
  %v1589 = vadd.f32 %v1535, %v1582
  %v1590 = vadd.f32 %v1536, %v1585
  %1592 = vset.pattern.permute.xlu0 0
  %1593 = vperm.xlu0 %1592, %v282
  %v1594 = vpop.permute.xlu0 %1593
  %1597 = vset.pattern.permute.xlu0 0
  %1598 = vperm.xlu0 %1597, %v283
  %v1599 = vpop.permute.xlu0 %1598
  %1602 = vset.pattern.permute.xlu0 0
  %1603 = vperm.xlu0 %1602, %v284
  %v1604 = vpop.permute.xlu0 %1603
  %1607 = vset.pattern.permute.xlu0 0
  %1608 = vperm.xlu0 %1607, %v285
  %v1609 = vpop.permute.xlu0 %1608
  %v1611 = vadd.f32 %v1587, %v1594
  %v1612 = vadd.f32 %v1588, %v1599
  %v1613 = vadd.f32 %v1589, %v1604
  %v1614 = vadd.f32 %v1590, %v1609
  %1616 = vset.pattern.permute.xlu0 0
  %1617 = vperm.xlu0 %1616, %v199
  %v1618 = vpop.permute.xlu0 %1617
  %1621 = vset.pattern.permute.xlu0 0
  %1622 = vperm.xlu0 %1621, %v202
  %v1623 = vpop.permute.xlu0 %1622
  %1626 = vset.pattern.permute.xlu0 0
  %1627 = vperm.xlu0 %1626, %v205
  %v1628 = vpop.permute.xlu0 %1627
  %1631 = vset.pattern.permute.xlu0 0
  %1632 = vperm.xlu0 %1631, %v208
  %v1633 = vpop.permute.xlu0 %1632
  %v1635 = vadd.f32 %v1611, %v1618
  %v1636 = vadd.f32 %v1612, %v1623
  %v1637 = vadd.f32 %v1613, %v1628
  %v1638 = vadd.f32 %v1614, %v1633
  %v1640 = vsel %vm168, %v242, 0
  %v1643 = vsel %vm168, %v243, 0
  %v1646 = vsel %vm168, %v244, 0
  %v1649 = vsel %vm168, %v245, 0
  %1651 = vmatpush.msra.mxu0 0.0
  %1652 = vmatpush.msra.mxu0 0.0
  %1653 = vmatpush.msra.mxu0 0.0
  %1654 = vmatpush.msra.mxu0 0.0
  %1655 = vmatpush.msra.mxu0 0.0
  %1656 = vmatpush.msra.mxu0 0.0
  %1657 = vmatpush.msra.mxu0 0.0
  %1658 = vmatpush.msra.mxu0 0.0
  %1659 = vmatpush.msra.mxu0 0.0
  %1660 = vmatpush.msra.mxu0 0.0
  %1661 = vmatpush.msra.mxu0 0.0
  %1662 = vmatpush.msra.mxu0 0.0
  %1663 = vmatpush.msra.mxu0 %v1638
  %1664 = vmatpush.msra.mxu0 %v1637
  %1665 = vmatpush.msra.mxu0 %v1636
  %1666 = vmatpush.msra.mxu0 %v1635
  %1667 = vmatmul.f32.gmra.mxu0 %v1640
  %v1668 = vpop.f32.mrf.mxu0
  %v1669 = vadd.f32 0.0, %v1668
  %1670 = vmatmul.f32.gmra.mxu0 %v1643
  %v1671 = vpop.f32.mrf.mxu0
  %v1672 = vadd.f32 0.0, %v1671
  %1673 = vmatmul.f32.gmra.mxu0 %v1646
  %v1674 = vpop.f32.mrf.mxu0
  %v1675 = vadd.f32 0.0, %v1674
  %1676 = vmatmul.f32.gmra.mxu0 %v1649
  %v1677 = vpop.f32.mrf.mxu0
  %v1678 = vadd.f32 0.0, %v1677
  %1679 = vdwg.mxu0
  %v1680 = vsel %vm342, %v1669, 0.0
  %1681 = vadd.xlane.f32.xlu0 %v1680
  %v1682 = vpop.xlane.xlu0 %1681
  %v1683 = vsel %vm342, %v1672, 0.0
  %1684 = vadd.xlane.f32.xlu0 %v1683
  %v1685 = vpop.xlane.xlu0 %1684
  %v1686 = vsel %vm342, %v1675, 0.0
  %1687 = vadd.xlane.f32.xlu0 %v1686
  %v1688 = vpop.xlane.xlu0 %1687
  %v1689 = vsel %vm342, %v1678, 0.0
  %1690 = vadd.xlane.f32.xlu0 %v1689
  %v1691 = vpop.xlane.xlu0 %1690
  %v1692 = vmul.f32 %v1682, 0.00390625
  %v1693 = vmul.f32 %v1685, 0.00390625
  %v1694 = vmul.f32 %v1688, 0.00390625
  %v1695 = vmul.f32 %v1691, 0.00390625
  %v1696 = vsub.f32 %v1635, %v1692
  %v1697 = vsub.f32 %v1636, %v1693
  %v1698 = vsub.f32 %v1637, %v1694
  %v1699 = vsub.f32 %v1638, %v1695
  %v1700 = vmul.f32 %v1696, %v1696
  %v1701 = vmul.f32 %v1697, %v1697
  %v1702 = vmul.f32 %v1698, %v1698
  %v1703 = vmul.f32 %v1699, %v1699
  %1704 = vmatpush.msra.mxu0 0.0
  %1705 = vmatpush.msra.mxu0 0.0
  %1706 = vmatpush.msra.mxu0 0.0
  %1707 = vmatpush.msra.mxu0 0.0
  %1708 = vmatpush.msra.mxu0 0.0
  %1709 = vmatpush.msra.mxu0 0.0
  %1710 = vmatpush.msra.mxu0 0.0
  %1711 = vmatpush.msra.mxu0 0.0
  %1712 = vmatpush.msra.mxu0 0.0
  %1713 = vmatpush.msra.mxu0 0.0
  %1714 = vmatpush.msra.mxu0 0.0
  %1715 = vmatpush.msra.mxu0 0.0
  %1716 = vmatpush.msra.mxu0 %v1703
  %1717 = vmatpush.msra.mxu0 %v1702
  %1718 = vmatpush.msra.mxu0 %v1701
  %1719 = vmatpush.msra.mxu0 %v1700
  %1720 = vmatmul.f32.gmra.mxu0 %v1640
  %v1721 = vpop.f32.mrf.mxu0
  %v1722 = vadd.f32 0.0, %v1721
  %1723 = vmatmul.f32.gmra.mxu0 %v1643
  %v1724 = vpop.f32.mrf.mxu0
  %v1725 = vadd.f32 0.0, %v1724
  %1726 = vmatmul.f32.gmra.mxu0 %v1646
  %v1727 = vpop.f32.mrf.mxu0
  %v1728 = vadd.f32 0.0, %v1727
  %1729 = vmatmul.f32.gmra.mxu0 %v1649
  %v1730 = vpop.f32.mrf.mxu0
  %v1731 = vadd.f32 0.0, %v1730
  %1732 = vdwg.mxu0
  %v1733 = vsel %vm342, %v1722, 0.0
  %1734 = vadd.xlane.f32.xlu0 %v1733
  %v1735 = vpop.xlane.xlu0 %1734
  %v1736 = vsel %vm342, %v1725, 0.0
  %1737 = vadd.xlane.f32.xlu0 %v1736
  %v1738 = vpop.xlane.xlu0 %1737
  %v1739 = vsel %vm342, %v1728, 0.0
  %1740 = vadd.xlane.f32.xlu0 %v1739
  %v1741 = vpop.xlane.xlu0 %1740
  %v1742 = vsel %vm342, %v1731, 0.0
  %1743 = vadd.xlane.f32.xlu0 %v1742
  %v1744 = vpop.xlane.xlu0 %1743
  %v1745 = vmul.f32 %v1735, 0.00390625
  %v1746 = vmul.f32 %v1738, 0.00390625
  %v1747 = vmul.f32 %v1741, 0.00390625
  %v1748 = vmul.f32 %v1744, 0.00390625
  %v1749 = vadd.f32 %v1745, 1e-05
  %v1750 = vadd.f32 %v1746, 1e-05
  %v1751 = vadd.f32 %v1747, 1e-05
  %v1752 = vadd.f32 %v1748, 1e-05
  %v1753 = vrsqrt.pop %v1749
  %v1754 = vmul.f32 %v1753, %v1749
  %v1755 = vmul.f32 %v1754, %v1753
  %v1756 = vmul.f32 0.5, %v1755
  %v1757 = vsub.f32 1.5, %v1756
  %v1758 = vmul.f32 %v1753, %v1757
  %vm1759 = vweird.f32 %v1749
  %vm1760 = vweird.f32 %v1753
  %vm1761 = vmor %vm1759, %vm1760
  %v1762 = vsel %vm1761, %v1753, %v1758
  %v1763 = vrsqrt.pop %v1750
  %v1764 = vmul.f32 %v1763, %v1750
  %v1765 = vmul.f32 %v1764, %v1763
  %v1766 = vmul.f32 0.5, %v1765
  %v1767 = vsub.f32 1.5, %v1766
  %v1768 = vmul.f32 %v1763, %v1767
  %vm1769 = vweird.f32 %v1750
  %vm1770 = vweird.f32 %v1763
  %vm1771 = vmor %vm1769, %vm1770
  %v1772 = vsel %vm1771, %v1763, %v1768
  %v1773 = vrsqrt.pop %v1751
  %v1774 = vmul.f32 %v1773, %v1751
  %v1775 = vmul.f32 %v1774, %v1773
  %v1776 = vmul.f32 0.5, %v1775
  %v1777 = vsub.f32 1.5, %v1776
  %v1778 = vmul.f32 %v1773, %v1777
  %vm1779 = vweird.f32 %v1751
  %vm1780 = vweird.f32 %v1773
  %vm1781 = vmor %vm1779, %vm1780
  %v1782 = vsel %vm1781, %v1773, %v1778
  %v1783 = vrsqrt.pop %v1752
  %v1784 = vmul.f32 %v1783, %v1752
  %v1785 = vmul.f32 %v1784, %v1783
  %v1786 = vmul.f32 0.5, %v1785
  %v1787 = vsub.f32 1.5, %v1786
  %v1788 = vmul.f32 %v1783, %v1787
  %vm1789 = vweird.f32 %v1752
  %vm1790 = vweird.f32 %v1783
  %vm1791 = vmor %vm1789, %vm1790
  %v1792 = vsel %vm1791, %v1783, %v1788
  %v1793 = vmul.f32 %v1696, %v1762
  %v1794 = vmul.f32 %v1697, %v1772
  %v1795 = vmul.f32 %v1698, %v1782
  %v1796 = vmul.f32 %v1699, %v1792
  %1798 = vset.pattern.permute.xlu0 0
  %1799 = vperm.xlu0 %1798, %v234
  %v1800 = vpop.permute.xlu0 %1799
  %1803 = vset.pattern.permute.xlu0 0
  %1804 = vperm.xlu0 %1803, %v235
  %v1805 = vpop.permute.xlu0 %1804
  %1808 = vset.pattern.permute.xlu0 0
  %1809 = vperm.xlu0 %1808, %v236
  %v1810 = vpop.permute.xlu0 %1809
  %1813 = vset.pattern.permute.xlu0 0
  %1814 = vperm.xlu0 %1813, %v237
  %v1815 = vpop.permute.xlu0 %1814
  %v1817 = vmul.f32 %v1793, %v1800
  %v1818 = vmul.f32 %v1794, %v1805
  %v1819 = vmul.f32 %v1795, %v1810
  %v1820 = vmul.f32 %v1796, %v1815
  %1822 = vset.pattern.permute.xlu0 0
  %1823 = vperm.xlu0 %1822, %v238
  %v1824 = vpop.permute.xlu0 %1823
  %1827 = vset.pattern.permute.xlu0 0
  %1828 = vperm.xlu0 %1827, %v239
  %v1829 = vpop.permute.xlu0 %1828
  %1832 = vset.pattern.permute.xlu0 0
  %1833 = vperm.xlu0 %1832, %v240
  %v1834 = vpop.permute.xlu0 %1833
  %1837 = vset.pattern.permute.xlu0 0
  %1838 = vperm.xlu0 %1837, %v241
  %v1839 = vpop.permute.xlu0 %1838
  %v1841 = vadd.f32 %v1817, %v1824
  %v1842 = vadd.f32 %v1818, %v1829
  %v1843 = vadd.f32 %v1819, %v1834
  %v1844 = vadd.f32 %v1820, %v1839
  %v1845 = vsub.f32 0.0, %v1841
  %v1846 = vsub.f32 0.0, %v1842
  %v1847 = vsub.f32 0.0, %v1843
  %v1848 = vsub.f32 0.0, %v1844
  %v1849 = vmul.f32 %v1845, 1.442695
  %v1850 = vpow.pop %v1849
  %v1851 = vmul.f32 %v1846, 1.442695
  %v1852 = vpow.pop %v1851
  %v1853 = vmul.f32 %v1847, 1.442695
  %v1854 = vpow.pop %v1853
  %v1855 = vmul.f32 %v1848, 1.442695
  %v1856 = vpow.pop %v1855
  %v1857 = vadd.f32 %v1850, 1.0
  %v1858 = vadd.f32 %v1852, 1.0
  %v1859 = vadd.f32 %v1854, 1.0
  %v1860 = vadd.f32 %v1856, 1.0
  %v1861 = vrcp.pop %v1857
  %v1862 = vmul.f32 %v1857, %v1861
  %v1863 = vsub.f32 1.0, %v1862
  %v1864 = vmul.f32 %v1861, %v1863
  %v1865 = vadd.f32 %v1861, %v1864
  %vm1866 = vweird.f32 %v1857
  %vm1867 = vweird.f32 %v1861
  %vm1868 = vmor %vm1866, %vm1867
  %v1869 = vsel %vm1868, %v1861, %v1865
  %v1870 = vand.u32 2147483647, %v1857
  %vm1871 = vcmp.eq.f32.partialorder %v1870, 8.507059e+37
  %v1872 = vand.u32 %v1857, 2147483648
  %v1873 = vor.u32 1.1754944e-38, %v1872
  %v1874 = vsel %vm1871, %v1873, %v1869
  %v1875 = vmul.f32 1.0, %v1874
  %v1876 = vrcp.pop %v1858
  %v1877 = vmul.f32 %v1858, %v1876
  %v1878 = vsub.f32 1.0, %v1877
  %v1879 = vmul.f32 %v1876, %v1878
  %v1880 = vadd.f32 %v1876, %v1879
  %vm1881 = vweird.f32 %v1858
  %vm1882 = vweird.f32 %v1876
  %vm1883 = vmor %vm1881, %vm1882
  %v1884 = vsel %vm1883, %v1876, %v1880
  %v1885 = vand.u32 2147483647, %v1858
  %vm1886 = vcmp.eq.f32.partialorder %v1885, 8.507059e+37
  %v1887 = vand.u32 %v1858, 2147483648
  %v1888 = vor.u32 1.1754944e-38, %v1887
  %v1889 = vsel %vm1886, %v1888, %v1884
  %v1890 = vmul.f32 1.0, %v1889
  %v1891 = vrcp.pop %v1859
  %v1892 = vmul.f32 %v1859, %v1891
  %v1893 = vsub.f32 1.0, %v1892
  %v1894 = vmul.f32 %v1891, %v1893
  %v1895 = vadd.f32 %v1891, %v1894
  %vm1896 = vweird.f32 %v1859
  %vm1897 = vweird.f32 %v1891
  %vm1898 = vmor %vm1896, %vm1897
  %v1899 = vsel %vm1898, %v1891, %v1895
  %v1900 = vand.u32 2147483647, %v1859
  %vm1901 = vcmp.eq.f32.partialorder %v1900, 8.507059e+37
  %v1902 = vand.u32 %v1859, 2147483648
  %v1903 = vor.u32 1.1754944e-38, %v1902
  %v1904 = vsel %vm1901, %v1903, %v1899
  %v1905 = vmul.f32 1.0, %v1904
  %v1906 = vrcp.pop %v1860
  %v1907 = vmul.f32 %v1860, %v1906
  %v1908 = vsub.f32 1.0, %v1907
  %v1909 = vmul.f32 %v1906, %v1908
  %v1910 = vadd.f32 %v1906, %v1909
  %vm1911 = vweird.f32 %v1860
  %vm1912 = vweird.f32 %v1906
  %vm1913 = vmor %vm1911, %vm1912
  %v1914 = vsel %vm1913, %v1906, %v1910
  %v1915 = vand.u32 2147483647, %v1860
  %vm1916 = vcmp.eq.f32.partialorder %v1915, 8.507059e+37
  %v1917 = vand.u32 %v1860, 2147483648
  %v1918 = vor.u32 1.1754944e-38, %v1917
  %v1919 = vsel %vm1916, %v1918, %v1914
  %v1920 = vmul.f32 1.0, %v1919
  %v1921 = vmul.f32 %v1841, %v1875
  %v1922 = vmul.f32 %v1842, %v1890
  %v1923 = vmul.f32 %v1843, %v1905
  %v1924 = vmul.f32 %v1844, %v1920
  %v1926 = vsel %vm168, %v286, 0
  %v1929 = vsel %vm168, %v287, 0
  %v1932 = vsel %vm168, %v288, 0
  %v1935 = vsel %vm168, %v289, 0
  %v1938 = vsel %vm168, %v290, 0
  %v1941 = vsel %vm168, %v291, 0
  %v1944 = vsel %vm168, %v292, 0
  %v1947 = vsel %vm168, %v293, 0
  %v1950 = vsel %vm168, %v294, 0
  %v1953 = vsel %vm168, %v295, 0
  %v1956 = vsel %vm168, %v296, 0
  %v1959 = vsel %vm168, %v297, 0
  %v1962 = vsel %vm168, %v298, 0
  %v1965 = vsel %vm168, %v299, 0
  %v1968 = vsel %vm168, %v300, 0
  %v1971 = vsel %vm168, %v301, 0
  %v1974 = vsel %vm168, %v302, 0
  %v1977 = vsel %vm168, %v303, 0
  %v1980 = vsel %vm168, %v304, 0
  %v1983 = vsel %vm168, %v305, 0
  %v1986 = vsel %vm168, %v306, 0
  %v1989 = vsel %vm168, %v307, 0
  %v1992 = vsel %vm168, %v308, 0
  %v1995 = vsel %vm168, %v309, 0
  %v1998 = vsel %vm168, %v310, 0
  %v2001 = vsel %vm168, %v311, 0
  %v2004 = vsel %vm168, %v312, 0
  %v2007 = vsel %vm168, %v313, 0
  %v2010 = vsel %vm168, %v314, 0
  %v2013 = vsel %vm168, %v315, 0
  %v2016 = vsel %vm168, %v316, 0
  %v2019 = vsel %vm168, %v317, 0
  %v2022 = vsel %vm168, %v318, 0
  %v2025 = vsel %vm168, %v319, 0
  %v2028 = vsel %vm168, %v320, 0
  %v2031 = vsel %vm168, %v321, 0
  %2033 = vmatpush.msra.mxu0 0.0
  %2034 = vmatpush.msra.mxu0 0.0
  %2035 = vmatpush.msra.mxu0 0.0
  %2036 = vmatpush.msra.mxu0 0.0
  %2037 = vmatpush.msra.mxu0 0.0
  %2038 = vmatpush.msra.mxu0 0.0
  %2039 = vmatpush.msra.mxu0 0.0
  %2040 = vmatpush.msra.mxu0 0.0
  %2041 = vmatpush.msra.mxu0 0.0
  %2042 = vmatpush.msra.mxu0 0.0
  %2043 = vmatpush.msra.mxu0 0.0
  %2044 = vmatpush.msra.mxu0 0.0
  %2045 = vmatpush.msra.mxu0 %v1924
  %2046 = vmatpush.msra.mxu0 %v1923
  %2047 = vmatpush.msra.mxu0 %v1922
  %2048 = vmatpush.msra.mxu0 %v1921
  %2049 = vmatmul.f32.gmra.mxu0 %v1926
  %v2050 = vpop.f32.mrf.mxu0
  %v2051 = vadd.f32 0.0, %v2050
  %2052 = vmatmul.f32.gmra.mxu0 %v1929
  %v2053 = vpop.f32.mrf.mxu0
  %v2054 = vadd.f32 0.0, %v2053
  %2055 = vmatmul.f32.gmra.mxu0 %v1932
  %v2056 = vpop.f32.mrf.mxu0
  %v2057 = vadd.f32 0.0, %v2056
  %2058 = vmatmul.f32.gmra.mxu0 %v1935
  %v2059 = vpop.f32.mrf.mxu0
  %v2060 = vadd.f32 0.0, %v2059
  %2061 = vmatmul.f32.gmra.mxu0 %v1938
  %v2062 = vpop.f32.mrf.mxu0
  %v2063 = vadd.f32 0.0, %v2062
  %2064 = vmatmul.f32.gmra.mxu0 %v1941
  %v2065 = vpop.f32.mrf.mxu0
  %v2066 = vadd.f32 0.0, %v2065
  %2067 = vmatmul.f32.gmra.mxu0 %v1944
  %v2068 = vpop.f32.mrf.mxu0
  %v2069 = vadd.f32 0.0, %v2068
  %2070 = vmatmul.f32.gmra.mxu0 %v1947
  %v2071 = vpop.f32.mrf.mxu0
  %v2072 = vadd.f32 0.0, %v2071
  %2073 = vmatmul.f32.gmra.mxu0 %v1950
  %v2074 = vpop.f32.mrf.mxu0
  %v2075 = vadd.f32 0.0, %v2074
  %2076 = vmatmul.f32.gmra.mxu0 %v1953
  %v2077 = vpop.f32.mrf.mxu0
  %v2078 = vadd.f32 0.0, %v2077
  %2079 = vmatmul.f32.gmra.mxu0 %v1956
  %v2080 = vpop.f32.mrf.mxu0
  %v2081 = vadd.f32 0.0, %v2080
  %2082 = vmatmul.f32.gmra.mxu0 %v1959
  %v2083 = vpop.f32.mrf.mxu0
  %v2084 = vadd.f32 0.0, %v2083
  %2085 = vmatmul.f32.gmra.mxu0 %v1962
  %v2086 = vpop.f32.mrf.mxu0
  %v2087 = vadd.f32 0.0, %v2086
  %2088 = vmatmul.f32.gmra.mxu0 %v1965
  %v2089 = vpop.f32.mrf.mxu0
  %v2090 = vadd.f32 0.0, %v2089
  %2091 = vmatmul.f32.gmra.mxu0 %v1968
  %v2092 = vpop.f32.mrf.mxu0
  %v2093 = vadd.f32 0.0, %v2092
  %2094 = vmatmul.f32.gmra.mxu0 %v1971
  %v2095 = vpop.f32.mrf.mxu0
  %v2096 = vadd.f32 0.0, %v2095
  %2097 = vmatmul.f32.gmra.mxu0 %v1974
  %v2098 = vpop.f32.mrf.mxu0
  %v2099 = vadd.f32 0.0, %v2098
  %2100 = vmatmul.f32.gmra.mxu0 %v1977
  %v2101 = vpop.f32.mrf.mxu0
  %v2102 = vadd.f32 0.0, %v2101
  %2103 = vmatmul.f32.gmra.mxu0 %v1980
  %v2104 = vpop.f32.mrf.mxu0
  %v2105 = vadd.f32 0.0, %v2104
  %2106 = vmatmul.f32.gmra.mxu0 %v1983
  %v2107 = vpop.f32.mrf.mxu0
  %v2108 = vadd.f32 0.0, %v2107
  %2109 = vmatmul.f32.gmra.mxu0 %v1986
  %v2110 = vpop.f32.mrf.mxu0
  %v2111 = vadd.f32 0.0, %v2110
  %2112 = vmatmul.f32.gmra.mxu0 %v1989
  %v2113 = vpop.f32.mrf.mxu0
  %v2114 = vadd.f32 0.0, %v2113
  %2115 = vmatmul.f32.gmra.mxu0 %v1992
  %v2116 = vpop.f32.mrf.mxu0
  %v2117 = vadd.f32 0.0, %v2116
  %2118 = vmatmul.f32.gmra.mxu0 %v1995
  %v2119 = vpop.f32.mrf.mxu0
  %v2120 = vadd.f32 0.0, %v2119
  %2121 = vmatmul.f32.gmra.mxu0 %v1998
  %v2122 = vpop.f32.mrf.mxu0
  %v2123 = vadd.f32 0.0, %v2122
  %2124 = vmatmul.f32.gmra.mxu0 %v2001
  %v2125 = vpop.f32.mrf.mxu0
  %v2126 = vadd.f32 0.0, %v2125
  %2127 = vmatmul.f32.gmra.mxu0 %v2004
  %v2128 = vpop.f32.mrf.mxu0
  %v2129 = vadd.f32 0.0, %v2128
  %2130 = vmatmul.f32.gmra.mxu0 %v2007
  %v2131 = vpop.f32.mrf.mxu0
  %v2132 = vadd.f32 0.0, %v2131
  %2133 = vmatmul.f32.gmra.mxu0 %v2010
  %v2134 = vpop.f32.mrf.mxu0
  %v2135 = vadd.f32 0.0, %v2134
  %2136 = vmatmul.f32.gmra.mxu0 %v2013
  %v2137 = vpop.f32.mrf.mxu0
  %v2138 = vadd.f32 0.0, %v2137
  %2139 = vmatmul.f32.gmra.mxu0 %v2016
  %v2140 = vpop.f32.mrf.mxu0
  %v2141 = vadd.f32 0.0, %v2140
  %2142 = vmatmul.f32.gmra.mxu0 %v2019
  %v2143 = vpop.f32.mrf.mxu0
  %v2144 = vadd.f32 0.0, %v2143
  %2145 = vmatmul.f32.gmra.mxu0 %v2022
  %v2146 = vpop.f32.mrf.mxu0
  %v2147 = vadd.f32 0.0, %v2146
  %2148 = vmatmul.f32.gmra.mxu0 %v2025
  %v2149 = vpop.f32.mrf.mxu0
  %v2150 = vadd.f32 0.0, %v2149
  %2151 = vmatmul.f32.gmra.mxu0 %v2028
  %v2152 = vpop.f32.mrf.mxu0
  %v2153 = vadd.f32 0.0, %v2152
  %2154 = vmatmul.f32.gmra.mxu0 %v2031
  %v2155 = vpop.f32.mrf.mxu0
  %v2156 = vadd.f32 0.0, %v2155
  %2157 = vdwg.mxu0
  %v2159 = vsel %vm342, %v2063, 0
  %v2162 = vsel %vm342, %v2066, 0
  %v2165 = vsel %vm342, %v2069, 0
  %v2168 = vsel %vm342, %v2072, 0
  %2170 = vmatpush.msra.mxu0 0.0
  %2171 = vmatpush.msra.mxu0 0.0
  %2172 = vmatpush.msra.mxu0 0.0
  %2173 = vmatpush.msra.mxu0 0.0
  %2174 = vmatpush.msra.mxu0 0.0
  %2175 = vmatpush.msra.mxu0 0.0
  %2176 = vmatpush.msra.mxu0 0.0
  %2177 = vmatpush.msra.mxu0 0.0
  %2178 = vmatpush.msra.mxu0 %v1130
  %2179 = vmatpush.msra.mxu0 %v1129
  %2180 = vmatpush.msra.mxu0 %v1128
  %2181 = vmatpush.msra.mxu0 %v1127
  %2182 = vmatpush.msra.mxu0 %v1126
  %2183 = vmatpush.msra.mxu0 %v1125
  %2184 = vmatpush.msra.mxu0 %v1124
  %2185 = vmatpush.msra.mxu0 %v1123
  %2186 = vmatmul.f32.gmra.mxu0 %v2159
  %v2187 = vpop.f32.mrf.mxu0
  %v2188 = vadd.f32 0.0, %v2187
  %2189 = vmatmul.f32.gmra.mxu0 %v2162
  %v2190 = vpop.f32.mrf.mxu0
  %v2191 = vadd.f32 0.0, %v2190
  %2192 = vmatmul.f32.gmra.mxu0 %v2165
  %v2193 = vpop.f32.mrf.mxu0
  %v2194 = vadd.f32 0.0, %v2193
  %2195 = vmatmul.f32.gmra.mxu0 %v2168
  %v2196 = vpop.f32.mrf.mxu0
  %v2197 = vadd.f32 0.0, %v2196
  %2198 = vdwg.mxu0
  %v2200 = vsel %vm342, %v2051, 0
  %v2203 = vsel %vm342, %v2054, 0
  %v2206 = vsel %vm342, %v2057, 0
  %v2209 = vsel %vm342, %v2060, 0
  %2211 = vmatpush.msra.mxu0 0.0
  %2212 = vmatpush.msra.mxu0 0.0
  %2213 = vmatpush.msra.mxu0 0.0
  %2214 = vmatpush.msra.mxu0 0.0
  %2215 = vmatpush.msra.mxu0 0.0
  %2216 = vmatpush.msra.mxu0 0.0
  %2217 = vmatpush.msra.mxu0 0.0
  %2218 = vmatpush.msra.mxu0 0.0
  %2219 = vmatpush.msra.mxu0 %v1121
  %2220 = vmatpush.msra.mxu0 %v1120
  %2221 = vmatpush.msra.mxu0 %v1119
  %2222 = vmatpush.msra.mxu0 %v1118
  %2223 = vmatpush.msra.mxu0 %v1117
  %2224 = vmatpush.msra.mxu0 %v1116
  %2225 = vmatpush.msra.mxu0 %v1115
  %2226 = vmatpush.msra.mxu0 %v1114
  %2227 = vmatmul.f32.gmra.mxu0 %v2200
  %v2228 = vpop.f32.mrf.mxu0
  %v2229 = vadd.f32 %v2188, %v2228
  %2230 = vmatmul.f32.gmra.mxu0 %v2203
  %v2231 = vpop.f32.mrf.mxu0
  %v2232 = vadd.f32 %v2191, %v2231
  %2233 = vmatmul.f32.gmra.mxu0 %v2206
  %v2234 = vpop.f32.mrf.mxu0
  %v2235 = vadd.f32 %v2194, %v2234
  %2236 = vmatmul.f32.gmra.mxu0 %v2209
  %v2237 = vpop.f32.mrf.mxu0
  %v2238 = vadd.f32 %v2197, %v2237
  %2239 = vdwg.mxu0
  %v2241 = vsel %vm342, %v2075, 0
  %v2244 = vsel %vm342, %v2078, 0
  %v2247 = vsel %vm342, %v2081, 0
  %v2250 = vsel %vm342, %v2084, 0
  %2252 = vmatpush.msra.mxu0 0.0
  %2253 = vmatpush.msra.mxu0 0.0
  %2254 = vmatpush.msra.mxu0 0.0
  %2255 = vmatpush.msra.mxu0 0.0
  %2256 = vmatpush.msra.mxu0 0.0
  %2257 = vmatpush.msra.mxu0 0.0
  %2258 = vmatpush.msra.mxu0 0.0
  %2259 = vmatpush.msra.mxu0 0.0
  %2260 = vmatpush.msra.mxu0 %v1221
  %2261 = vmatpush.msra.mxu0 %v1220
  %2262 = vmatpush.msra.mxu0 %v1219
  %2263 = vmatpush.msra.mxu0 %v1218
  %2264 = vmatpush.msra.mxu0 %v1217
  %2265 = vmatpush.msra.mxu0 %v1216
  %2266 = vmatpush.msra.mxu0 %v1215
  %2267 = vmatpush.msra.mxu0 %v1214
  %2268 = vmatmul.f32.gmra.mxu0 %v2241
  %v2269 = vpop.f32.mrf.mxu0
  %v2270 = vadd.f32 0.0, %v2269
  %2271 = vmatmul.f32.gmra.mxu0 %v2244
  %v2272 = vpop.f32.mrf.mxu0
  %v2273 = vadd.f32 0.0, %v2272
  %2274 = vmatmul.f32.gmra.mxu0 %v2247
  %v2275 = vpop.f32.mrf.mxu0
  %v2276 = vadd.f32 0.0, %v2275
  %2277 = vmatmul.f32.gmra.mxu0 %v2250
  %v2278 = vpop.f32.mrf.mxu0
  %v2279 = vadd.f32 0.0, %v2278
  %2280 = vdwg.mxu0
  %v2281 = vadd.f32 %v2229, %v2270
  %v2282 = vadd.f32 %v2232, %v2273
  %v2283 = vadd.f32 %v2235, %v2276
  %v2284 = vadd.f32 %v2238, %v2279
  %v2286 = vsel %vm342, %v2087, 0
  %v2289 = vsel %vm342, %v2090, 0
  %v2292 = vsel %vm342, %v2093, 0
  %v2295 = vsel %vm342, %v2096, 0
  %2297 = vmatpush.msra.mxu0 0.0
  %2298 = vmatpush.msra.mxu0 0.0
  %2299 = vmatpush.msra.mxu0 0.0
  %2300 = vmatpush.msra.mxu0 0.0
  %2301 = vmatpush.msra.mxu0 0.0
  %2302 = vmatpush.msra.mxu0 0.0
  %2303 = vmatpush.msra.mxu0 0.0
  %2304 = vmatpush.msra.mxu0 0.0
  %2305 = vmatpush.msra.mxu0 %v1275
  %2306 = vmatpush.msra.mxu0 %v1274
  %2307 = vmatpush.msra.mxu0 %v1273
  %2308 = vmatpush.msra.mxu0 %v1272
  %2309 = vmatpush.msra.mxu0 %v1271
  %2310 = vmatpush.msra.mxu0 %v1270
  %2311 = vmatpush.msra.mxu0 %v1269
  %2312 = vmatpush.msra.mxu0 %v1268
  %2313 = vmatmul.f32.gmra.mxu0 %v2286
  %v2314 = vpop.f32.mrf.mxu0
  %v2315 = vadd.f32 0.0, %v2314
  %2316 = vmatmul.f32.gmra.mxu0 %v2289
  %v2317 = vpop.f32.mrf.mxu0
  %v2318 = vadd.f32 0.0, %v2317
  %2319 = vmatmul.f32.gmra.mxu0 %v2292
  %v2320 = vpop.f32.mrf.mxu0
  %v2321 = vadd.f32 0.0, %v2320
  %2322 = vmatmul.f32.gmra.mxu0 %v2295
  %v2323 = vpop.f32.mrf.mxu0
  %v2324 = vadd.f32 0.0, %v2323
  %2325 = vdwg.mxu0
  %v2326 = vadd.f32 %v2281, %v2315
  %v2327 = vadd.f32 %v2282, %v2318
  %v2328 = vadd.f32 %v2283, %v2321
  %v2329 = vadd.f32 %v2284, %v2324
  %v2331 = vsel %vm342, %v2099, 0
  %v2334 = vsel %vm342, %v2102, 0
  %v2337 = vsel %vm342, %v2105, 0
  %v2340 = vsel %vm342, %v2108, 0
  %2342 = vmatpush.msra.mxu0 0.0
  %2343 = vmatpush.msra.mxu0 0.0
  %2344 = vmatpush.msra.mxu0 0.0
  %2345 = vmatpush.msra.mxu0 0.0
  %2346 = vmatpush.msra.mxu0 0.0
  %2347 = vmatpush.msra.mxu0 0.0
  %2348 = vmatpush.msra.mxu0 0.0
  %2349 = vmatpush.msra.mxu0 0.0
  %2350 = vmatpush.msra.mxu0 %v1329
  %2351 = vmatpush.msra.mxu0 %v1328
  %2352 = vmatpush.msra.mxu0 %v1327
  %2353 = vmatpush.msra.mxu0 %v1326
  %2354 = vmatpush.msra.mxu0 %v1325
  %2355 = vmatpush.msra.mxu0 %v1324
  %2356 = vmatpush.msra.mxu0 %v1323
  %2357 = vmatpush.msra.mxu0 %v1322
  %2358 = vmatmul.f32.gmra.mxu0 %v2331
  %v2359 = vpop.f32.mrf.mxu0
  %v2360 = vadd.f32 0.0, %v2359
  %2361 = vmatmul.f32.gmra.mxu0 %v2334
  %v2362 = vpop.f32.mrf.mxu0
  %v2363 = vadd.f32 0.0, %v2362
  %2364 = vmatmul.f32.gmra.mxu0 %v2337
  %v2365 = vpop.f32.mrf.mxu0
  %v2366 = vadd.f32 0.0, %v2365
  %2367 = vmatmul.f32.gmra.mxu0 %v2340
  %v2368 = vpop.f32.mrf.mxu0
  %v2369 = vadd.f32 0.0, %v2368
  %2370 = vdwg.mxu0
  %v2371 = vadd.f32 %v2326, %v2360
  %v2372 = vadd.f32 %v2327, %v2363
  %v2373 = vadd.f32 %v2328, %v2366
  %v2374 = vadd.f32 %v2329, %v2369
  %v2376 = vsel %vm342, %v2111, 0
  %v2379 = vsel %vm342, %v2114, 0
  %v2382 = vsel %vm342, %v2117, 0
  %v2385 = vsel %vm342, %v2120, 0
  %2387 = vmatpush.msra.mxu0 0.0
  %2388 = vmatpush.msra.mxu0 0.0
  %2389 = vmatpush.msra.mxu0 0.0
  %2390 = vmatpush.msra.mxu0 0.0
  %2391 = vmatpush.msra.mxu0 0.0
  %2392 = vmatpush.msra.mxu0 0.0
  %2393 = vmatpush.msra.mxu0 0.0
  %2394 = vmatpush.msra.mxu0 0.0
  %2395 = vmatpush.msra.mxu0 %v1383
  %2396 = vmatpush.msra.mxu0 %v1382
  %2397 = vmatpush.msra.mxu0 %v1381
  %2398 = vmatpush.msra.mxu0 %v1380
  %2399 = vmatpush.msra.mxu0 %v1379
  %2400 = vmatpush.msra.mxu0 %v1378
  %2401 = vmatpush.msra.mxu0 %v1377
  %2402 = vmatpush.msra.mxu0 %v1376
  %2403 = vmatmul.f32.gmra.mxu0 %v2376
  %v2404 = vpop.f32.mrf.mxu0
  %v2405 = vadd.f32 0.0, %v2404
  %2406 = vmatmul.f32.gmra.mxu0 %v2379
  %v2407 = vpop.f32.mrf.mxu0
  %v2408 = vadd.f32 0.0, %v2407
  %2409 = vmatmul.f32.gmra.mxu0 %v2382
  %v2410 = vpop.f32.mrf.mxu0
  %v2411 = vadd.f32 0.0, %v2410
  %2412 = vmatmul.f32.gmra.mxu0 %v2385
  %v2413 = vpop.f32.mrf.mxu0
  %v2414 = vadd.f32 0.0, %v2413
  %2415 = vdwg.mxu0
  %v2416 = vadd.f32 %v2371, %v2405
  %v2417 = vadd.f32 %v2372, %v2408
  %v2418 = vadd.f32 %v2373, %v2411
  %v2419 = vadd.f32 %v2374, %v2414
  %v2421 = vsel %vm342, %v2123, 0
  %v2424 = vsel %vm342, %v2126, 0
  %v2427 = vsel %vm342, %v2129, 0
  %v2430 = vsel %vm342, %v2132, 0
  %2432 = vmatpush.msra.mxu0 0.0
  %2433 = vmatpush.msra.mxu0 0.0
  %2434 = vmatpush.msra.mxu0 0.0
  %2435 = vmatpush.msra.mxu0 0.0
  %2436 = vmatpush.msra.mxu0 0.0
  %2437 = vmatpush.msra.mxu0 0.0
  %2438 = vmatpush.msra.mxu0 0.0
  %2439 = vmatpush.msra.mxu0 0.0
  %2440 = vmatpush.msra.mxu0 %v1437
  %2441 = vmatpush.msra.mxu0 %v1436
  %2442 = vmatpush.msra.mxu0 %v1435
  %2443 = vmatpush.msra.mxu0 %v1434
  %2444 = vmatpush.msra.mxu0 %v1433
  %2445 = vmatpush.msra.mxu0 %v1432
  %2446 = vmatpush.msra.mxu0 %v1431
  %2447 = vmatpush.msra.mxu0 %v1430
  %2448 = vmatmul.f32.gmra.mxu0 %v2421
  %v2449 = vpop.f32.mrf.mxu0
  %v2450 = vadd.f32 0.0, %v2449
  %2451 = vmatmul.f32.gmra.mxu0 %v2424
  %v2452 = vpop.f32.mrf.mxu0
  %v2453 = vadd.f32 0.0, %v2452
  %2454 = vmatmul.f32.gmra.mxu0 %v2427
  %v2455 = vpop.f32.mrf.mxu0
  %v2456 = vadd.f32 0.0, %v2455
  %2457 = vmatmul.f32.gmra.mxu0 %v2430
  %v2458 = vpop.f32.mrf.mxu0
  %v2459 = vadd.f32 0.0, %v2458
  %2460 = vdwg.mxu0
  %v2461 = vadd.f32 %v2416, %v2450
  %v2462 = vadd.f32 %v2417, %v2453
  %v2463 = vadd.f32 %v2418, %v2456
  %v2464 = vadd.f32 %v2419, %v2459
  %v2466 = vsel %vm342, %v2135, 0
  %v2469 = vsel %vm342, %v2138, 0
  %v2472 = vsel %vm342, %v2141, 0
  %v2475 = vsel %vm342, %v2144, 0
  %2477 = vmatpush.msra.mxu0 0.0
  %2478 = vmatpush.msra.mxu0 0.0
  %2479 = vmatpush.msra.mxu0 0.0
  %2480 = vmatpush.msra.mxu0 0.0
  %2481 = vmatpush.msra.mxu0 0.0
  %2482 = vmatpush.msra.mxu0 0.0
  %2483 = vmatpush.msra.mxu0 0.0
  %2484 = vmatpush.msra.mxu0 0.0
  %2485 = vmatpush.msra.mxu0 %v1491
  %2486 = vmatpush.msra.mxu0 %v1490
  %2487 = vmatpush.msra.mxu0 %v1489
  %2488 = vmatpush.msra.mxu0 %v1488
  %2489 = vmatpush.msra.mxu0 %v1487
  %2490 = vmatpush.msra.mxu0 %v1486
  %2491 = vmatpush.msra.mxu0 %v1485
  %2492 = vmatpush.msra.mxu0 %v1484
  %2493 = vmatmul.f32.gmra.mxu0 %v2466
  %v2494 = vpop.f32.mrf.mxu0
  %v2495 = vadd.f32 0.0, %v2494
  %2496 = vmatmul.f32.gmra.mxu0 %v2469
  %v2497 = vpop.f32.mrf.mxu0
  %v2498 = vadd.f32 0.0, %v2497
  %2499 = vmatmul.f32.gmra.mxu0 %v2472
  %v2500 = vpop.f32.mrf.mxu0
  %v2501 = vadd.f32 0.0, %v2500
  %2502 = vmatmul.f32.gmra.mxu0 %v2475
  %v2503 = vpop.f32.mrf.mxu0
  %v2504 = vadd.f32 0.0, %v2503
  %2505 = vdwg.mxu0
  %v2506 = vadd.f32 %v2461, %v2495
  %v2507 = vadd.f32 %v2462, %v2498
  %v2508 = vadd.f32 %v2463, %v2501
  %v2509 = vadd.f32 %v2464, %v2504
  %v2511 = vsel %vm342, %v2147, 0
  %v2514 = vsel %vm342, %v2150, 0
  %v2517 = vsel %vm342, %v2153, 0
  %v2520 = vsel %vm342, %v2156, 0
  %2522 = vmatpush.msra.mxu0 0.0
  %2523 = vmatpush.msra.mxu0 0.0
  %2524 = vmatpush.msra.mxu0 0.0
  %2525 = vmatpush.msra.mxu0 0.0
  %2526 = vmatpush.msra.mxu0 0.0
  %2527 = vmatpush.msra.mxu0 0.0
  %2528 = vmatpush.msra.mxu0 0.0
  %2529 = vmatpush.msra.mxu0 0.0
  %2530 = vmatpush.msra.mxu0 %v1545
  %2531 = vmatpush.msra.mxu0 %v1544
  %2532 = vmatpush.msra.mxu0 %v1543
  %2533 = vmatpush.msra.mxu0 %v1542
  %2534 = vmatpush.msra.mxu0 %v1541
  %2535 = vmatpush.msra.mxu0 %v1540
  %2536 = vmatpush.msra.mxu0 %v1539
  %2537 = vmatpush.msra.mxu0 %v1538
  %2538 = vmatmul.f32.gmra.mxu0 %v2511
  %v2539 = vpop.f32.mrf.mxu0
  %v2540 = vadd.f32 0.0, %v2539
  %2541 = vmatmul.f32.gmra.mxu0 %v2514
  %v2542 = vpop.f32.mrf.mxu0
  %v2543 = vadd.f32 0.0, %v2542
  %2544 = vmatmul.f32.gmra.mxu0 %v2517
  %v2545 = vpop.f32.mrf.mxu0
  %v2546 = vadd.f32 0.0, %v2545
  %2547 = vmatmul.f32.gmra.mxu0 %v2520
  %v2548 = vpop.f32.mrf.mxu0
  %v2549 = vadd.f32 0.0, %v2548
  %2550 = vdwg.mxu0
  %v2551 = vadd.f32 %v2506, %v2540
  %v2552 = vadd.f32 %v2507, %v2543
  %v2553 = vadd.f32 %v2508, %v2546
  %v2554 = vadd.f32 %v2509, %v2549
  %2556 = vset.pattern.permute.xlu0 0
  %2557 = vperm.xlu0 %2556, %v322
  %v2558 = vpop.permute.xlu0 %2557
  %2561 = vset.pattern.permute.xlu0 0
  %2562 = vperm.xlu0 %2561, %v323
  %v2563 = vpop.permute.xlu0 %2562
  %2566 = vset.pattern.permute.xlu0 0
  %2567 = vperm.xlu0 %2566, %v324
  %v2568 = vpop.permute.xlu0 %2567
  %2571 = vset.pattern.permute.xlu0 0
  %2572 = vperm.xlu0 %2571, %v325
  %v2573 = vpop.permute.xlu0 %2572
  %v2575 = vadd.f32 %v2551, %v2558
  %v2576 = vadd.f32 %v2552, %v2563
  %v2577 = vadd.f32 %v2553, %v2568
  %v2578 = vadd.f32 %v2554, %v2573
  %2580 = vset.pattern.permute.xlu0 0
  %2581 = vperm.xlu0 %2580, %v330
  %v2582 = vpop.permute.xlu0 %2581
  %2585 = vset.pattern.permute.xlu0 0
  %2586 = vperm.xlu0 %2585, %v331
  %v2587 = vpop.permute.xlu0 %2586
  %2590 = vset.pattern.permute.xlu0 0
  %2591 = vperm.xlu0 %2590, %v332
  %v2592 = vpop.permute.xlu0 %2591
  %2595 = vset.pattern.permute.xlu0 0
  %2596 = vperm.xlu0 %2595, %v333
  %v2597 = vpop.permute.xlu0 %2596
  %v2600 = vsel %vm342, %v326, 0
  %v2603 = vsel %vm342, %v327, 0
  %v2606 = vsel %vm342, %v328, 0
  %v2609 = vsel %vm342, %v329, 0
  %2611 = vmatpush.msra.mxu0 0.0
  %2612 = vmatpush.msra.mxu0 0.0
  %2613 = vmatpush.msra.mxu0 0.0
  %2614 = vmatpush.msra.mxu0 0.0
  %2615 = vmatpush.msra.mxu0 0.0
  %2616 = vmatpush.msra.mxu0 0.0
  %2617 = vmatpush.msra.mxu0 0.0
  %2618 = vmatpush.msra.mxu0 0.0
  %2619 = vmatpush.msra.mxu0 %v341
  %2620 = vmatpush.msra.mxu0 %v340
  %2621 = vmatpush.msra.mxu0 %v339
  %2622 = vmatpush.msra.mxu0 %v338
  %2623 = vmatpush.msra.mxu0 %v337
  %2624 = vmatpush.msra.mxu0 %v336
  %2625 = vmatpush.msra.mxu0 %v335
  %2626 = vmatpush.msra.mxu0 %v334
  %2627 = vmatmul.f32.gmra.mxu0 %v2600
  %v2628 = vpop.f32.mrf.mxu0
  %v2629 = vadd.f32 %v2582, %v2628
  %2630 = vmatmul.f32.gmra.mxu0 %v2603
  %v2631 = vpop.f32.mrf.mxu0
  %v2632 = vadd.f32 %v2587, %v2631
  %2633 = vmatmul.f32.gmra.mxu0 %v2606
  %v2634 = vpop.f32.mrf.mxu0
  %v2635 = vadd.f32 %v2592, %v2634
  %2636 = vmatmul.f32.gmra.mxu0 %v2609
  %v2637 = vpop.f32.mrf.mxu0
  %v2638 = vadd.f32 %v2597, %v2637
  %2639 = vdwg.mxu0
  %v2640 = vadd.f32 %v2575, %v2629
  %v2641 = vadd.f32 %v2576, %v2632
  %v2642 = vadd.f32 %v2577, %v2635
  %v2643 = vadd.f32 %v2578, %v2638
  %2644 = vst.msk [vmem:[%s17] sm:$0xff] %vm342, %v2640
  %2645 = vst.msk [vmem:[%s17 + $0x8] sm:$0xff] %vm342, %v2641
  %2646 = vst.msk [vmem:[%s17 + $0x10] sm:$0xff] %vm342, %v2642
  %2647 = vst.msk [vmem:[%s17 + $0x18] sm:$0xff] %vm342, %v2643
  %s2648 = scalar_lea.vmem %s0, 64
  %v2649 = vld [vmem:[%s2648] sm:$0xff]
  %v2650 = vld [vmem:[%s2648 + $0x8] sm:$0xff]
  %v2651 = vld [vmem:[%s2648 + $0x10] sm:$0xff]
  %v2652 = vld [vmem:[%s2648 + $0x18] sm:$0xff]
  %v2653 = vld [vmem:[%s2648 + $0x20] sm:$0xff]
  %v2654 = vld [vmem:[%s2648 + $0x28] sm:$0xff]
  %v2655 = vld [vmem:[%s2648 + $0x30] sm:$0xff]
  %v2656 = vld [vmem:[%s2648 + $0x38] sm:$0xff]
  %2657 = vmatpush.msra.mxu0 0.0
  %2658 = vmatpush.msra.mxu0 0.0
  %2659 = vmatpush.msra.mxu0 0.0
  %2660 = vmatpush.msra.mxu0 0.0
  %2661 = vmatpush.msra.mxu0 0.0
  %2662 = vmatpush.msra.mxu0 0.0
  %2663 = vmatpush.msra.mxu0 0.0
  %2664 = vmatpush.msra.mxu0 0.0
  %2665 = vmatpush.msra.mxu0 %v2656
  %2666 = vmatpush.msra.mxu0 %v2655
  %2667 = vmatpush.msra.mxu0 %v2654
  %2668 = vmatpush.msra.mxu0 %v2653
  %2669 = vmatpush.msra.mxu0 %v2652
  %2670 = vmatpush.msra.mxu0 %v2651
  %2671 = vmatpush.msra.mxu0 %v2650
  %2672 = vmatpush.msra.mxu0 %v2649
  %2673 = vmatmul.f32.gmra.mxu0 %v344
  %v2674 = vpop.f32.mrf.mxu0
  %v2675 = vadd.f32 0.0, %v2674
  %2676 = vmatmul.f32.gmra.mxu0 %v347
  %v2677 = vpop.f32.mrf.mxu0
  %v2678 = vadd.f32 0.0, %v2677
  %2679 = vmatmul.f32.gmra.mxu0 %v350
  %v2680 = vpop.f32.mrf.mxu0
  %v2681 = vadd.f32 0.0, %v2680
  %2682 = vmatmul.f32.gmra.mxu0 %v353
  %v2683 = vpop.f32.mrf.mxu0
  %v2684 = vadd.f32 0.0, %v2683
  %2685 = vmatmul.f32.gmra.mxu0 %v356
  %v2686 = vpop.f32.mrf.mxu0
  %v2687 = vadd.f32 0.0, %v2686
  %2688 = vmatmul.f32.gmra.mxu0 %v359
  %v2689 = vpop.f32.mrf.mxu0
  %v2690 = vadd.f32 0.0, %v2689
  %2691 = vmatmul.f32.gmra.mxu0 %v362
  %v2692 = vpop.f32.mrf.mxu0
  %v2693 = vadd.f32 0.0, %v2692
  %2694 = vmatmul.f32.gmra.mxu0 %v365
  %v2695 = vpop.f32.mrf.mxu0
  %v2696 = vadd.f32 0.0, %v2695
  %2697 = vdwg.mxu0
  %v2698 = vsel %vm342, %v2675, 0.0
  %2699 = vadd.xlane.f32.xlu0 %v2698
  %v2700 = vpop.xlane.xlu0 %2699
  %v2701 = vsel %vm342, %v2678, 0.0
  %2702 = vadd.xlane.f32.xlu0 %v2701
  %v2703 = vpop.xlane.xlu0 %2702
  %v2704 = vsel %vm342, %v2681, 0.0
  %2705 = vadd.xlane.f32.xlu0 %v2704
  %v2706 = vpop.xlane.xlu0 %2705
  %v2707 = vsel %vm342, %v2684, 0.0
  %2708 = vadd.xlane.f32.xlu0 %v2707
  %v2709 = vpop.xlane.xlu0 %2708
  %v2710 = vsel %vm342, %v2687, 0.0
  %2711 = vadd.xlane.f32.xlu0 %v2710
  %v2712 = vpop.xlane.xlu0 %2711
  %v2713 = vsel %vm342, %v2690, 0.0
  %2714 = vadd.xlane.f32.xlu0 %v2713
  %v2715 = vpop.xlane.xlu0 %2714
  %v2716 = vsel %vm342, %v2693, 0.0
  %2717 = vadd.xlane.f32.xlu0 %v2716
  %v2718 = vpop.xlane.xlu0 %2717
  %v2719 = vsel %vm342, %v2696, 0.0
  %2720 = vadd.xlane.f32.xlu0 %v2719
  %v2721 = vpop.xlane.xlu0 %2720
  %v2722 = vmul.f32 %v2700, 0.001953125
  %v2723 = vmul.f32 %v2703, 0.001953125
  %v2724 = vmul.f32 %v2706, 0.001953125
  %v2725 = vmul.f32 %v2709, 0.001953125
  %v2726 = vmul.f32 %v2712, 0.001953125
  %v2727 = vmul.f32 %v2715, 0.001953125
  %v2728 = vmul.f32 %v2718, 0.001953125
  %v2729 = vmul.f32 %v2721, 0.001953125
  %v2730 = vsub.f32 %v2649, %v2722
  %v2731 = vsub.f32 %v2650, %v2723
  %v2732 = vsub.f32 %v2651, %v2724
  %v2733 = vsub.f32 %v2652, %v2725
  %v2734 = vsub.f32 %v2653, %v2726
  %v2735 = vsub.f32 %v2654, %v2727
  %v2736 = vsub.f32 %v2655, %v2728
  %v2737 = vsub.f32 %v2656, %v2729
  %v2738 = vmul.f32 %v2730, %v2730
  %v2739 = vmul.f32 %v2731, %v2731
  %v2740 = vmul.f32 %v2732, %v2732
  %v2741 = vmul.f32 %v2733, %v2733
  %v2742 = vmul.f32 %v2734, %v2734
  %v2743 = vmul.f32 %v2735, %v2735
  %v2744 = vmul.f32 %v2736, %v2736
  %v2745 = vmul.f32 %v2737, %v2737
  %2746 = vmatpush.msra.mxu0 0.0
  %2747 = vmatpush.msra.mxu0 0.0
  %2748 = vmatpush.msra.mxu0 0.0
  %2749 = vmatpush.msra.mxu0 0.0
  %2750 = vmatpush.msra.mxu0 0.0
  %2751 = vmatpush.msra.mxu0 0.0
  %2752 = vmatpush.msra.mxu0 0.0
  %2753 = vmatpush.msra.mxu0 0.0
  %2754 = vmatpush.msra.mxu0 %v2745
  %2755 = vmatpush.msra.mxu0 %v2744
  %2756 = vmatpush.msra.mxu0 %v2743
  %2757 = vmatpush.msra.mxu0 %v2742
  %2758 = vmatpush.msra.mxu0 %v2741
  %2759 = vmatpush.msra.mxu0 %v2740
  %2760 = vmatpush.msra.mxu0 %v2739
  %2761 = vmatpush.msra.mxu0 %v2738
  %2762 = vmatmul.f32.gmra.mxu0 %v344
  %v2763 = vpop.f32.mrf.mxu0
  %v2764 = vadd.f32 0.0, %v2763
  %2765 = vmatmul.f32.gmra.mxu0 %v347
  %v2766 = vpop.f32.mrf.mxu0
  %v2767 = vadd.f32 0.0, %v2766
  %2768 = vmatmul.f32.gmra.mxu0 %v350
  %v2769 = vpop.f32.mrf.mxu0
  %v2770 = vadd.f32 0.0, %v2769
  %2771 = vmatmul.f32.gmra.mxu0 %v353
  %v2772 = vpop.f32.mrf.mxu0
  %v2773 = vadd.f32 0.0, %v2772
  %2774 = vmatmul.f32.gmra.mxu0 %v356
  %v2775 = vpop.f32.mrf.mxu0
  %v2776 = vadd.f32 0.0, %v2775
  %2777 = vmatmul.f32.gmra.mxu0 %v359
  %v2778 = vpop.f32.mrf.mxu0
  %v2779 = vadd.f32 0.0, %v2778
  %2780 = vmatmul.f32.gmra.mxu0 %v362
  %v2781 = vpop.f32.mrf.mxu0
  %v2782 = vadd.f32 0.0, %v2781
  %2783 = vmatmul.f32.gmra.mxu0 %v365
  %v2784 = vpop.f32.mrf.mxu0
  %v2785 = vadd.f32 0.0, %v2784
  %2786 = vdwg.mxu0
  %v2787 = vsel %vm342, %v2764, 0.0
  %2788 = vadd.xlane.f32.xlu0 %v2787
  %v2789 = vpop.xlane.xlu0 %2788
  %v2790 = vsel %vm342, %v2767, 0.0
  %2791 = vadd.xlane.f32.xlu0 %v2790
  %v2792 = vpop.xlane.xlu0 %2791
  %v2793 = vsel %vm342, %v2770, 0.0
  %2794 = vadd.xlane.f32.xlu0 %v2793
  %v2795 = vpop.xlane.xlu0 %2794
  %v2796 = vsel %vm342, %v2773, 0.0
  %2797 = vadd.xlane.f32.xlu0 %v2796
  %v2798 = vpop.xlane.xlu0 %2797
  %v2799 = vsel %vm342, %v2776, 0.0
  %2800 = vadd.xlane.f32.xlu0 %v2799
  %v2801 = vpop.xlane.xlu0 %2800
  %v2802 = vsel %vm342, %v2779, 0.0
  %2803 = vadd.xlane.f32.xlu0 %v2802
  %v2804 = vpop.xlane.xlu0 %2803
  %v2805 = vsel %vm342, %v2782, 0.0
  %2806 = vadd.xlane.f32.xlu0 %v2805
  %v2807 = vpop.xlane.xlu0 %2806
  %v2808 = vsel %vm342, %v2785, 0.0
  %2809 = vadd.xlane.f32.xlu0 %v2808
  %v2810 = vpop.xlane.xlu0 %2809
  %v2811 = vmul.f32 %v2789, 0.001953125
  %v2812 = vmul.f32 %v2792, 0.001953125
  %v2813 = vmul.f32 %v2795, 0.001953125
  %v2814 = vmul.f32 %v2798, 0.001953125
  %v2815 = vmul.f32 %v2801, 0.001953125
  %v2816 = vmul.f32 %v2804, 0.001953125
  %v2817 = vmul.f32 %v2807, 0.001953125
  %v2818 = vmul.f32 %v2810, 0.001953125
  %v2819 = vadd.f32 %v2811, 1e-05
  %v2820 = vadd.f32 %v2812, 1e-05
  %v2821 = vadd.f32 %v2813, 1e-05
  %v2822 = vadd.f32 %v2814, 1e-05
  %v2823 = vadd.f32 %v2815, 1e-05
  %v2824 = vadd.f32 %v2816, 1e-05
  %v2825 = vadd.f32 %v2817, 1e-05
  %v2826 = vadd.f32 %v2818, 1e-05
  %v2827 = vrsqrt.pop %v2819
  %v2828 = vmul.f32 %v2827, %v2819
  %v2829 = vmul.f32 %v2828, %v2827
  %v2830 = vmul.f32 0.5, %v2829
  %v2831 = vsub.f32 1.5, %v2830
  %v2832 = vmul.f32 %v2827, %v2831
  %vm2833 = vweird.f32 %v2819
  %vm2834 = vweird.f32 %v2827
  %vm2835 = vmor %vm2833, %vm2834
  %v2836 = vsel %vm2835, %v2827, %v2832
  %v2837 = vrsqrt.pop %v2820
  %v2838 = vmul.f32 %v2837, %v2820
  %v2839 = vmul.f32 %v2838, %v2837
  %v2840 = vmul.f32 0.5, %v2839
  %v2841 = vsub.f32 1.5, %v2840
  %v2842 = vmul.f32 %v2837, %v2841
  %vm2843 = vweird.f32 %v2820
  %vm2844 = vweird.f32 %v2837
  %vm2845 = vmor %vm2843, %vm2844
  %v2846 = vsel %vm2845, %v2837, %v2842
  %v2847 = vrsqrt.pop %v2821
  %v2848 = vmul.f32 %v2847, %v2821
  %v2849 = vmul.f32 %v2848, %v2847
  %v2850 = vmul.f32 0.5, %v2849
  %v2851 = vsub.f32 1.5, %v2850
  %v2852 = vmul.f32 %v2847, %v2851
  %vm2853 = vweird.f32 %v2821
  %vm2854 = vweird.f32 %v2847
  %vm2855 = vmor %vm2853, %vm2854
  %v2856 = vsel %vm2855, %v2847, %v2852
  %v2857 = vrsqrt.pop %v2822
  %v2858 = vmul.f32 %v2857, %v2822
  %v2859 = vmul.f32 %v2858, %v2857
  %v2860 = vmul.f32 0.5, %v2859
  %v2861 = vsub.f32 1.5, %v2860
  %v2862 = vmul.f32 %v2857, %v2861
  %vm2863 = vweird.f32 %v2822
  %vm2864 = vweird.f32 %v2857
  %vm2865 = vmor %vm2863, %vm2864
  %v2866 = vsel %vm2865, %v2857, %v2862
  %v2867 = vrsqrt.pop %v2823
  %v2868 = vmul.f32 %v2867, %v2823
  %v2869 = vmul.f32 %v2868, %v2867
  %v2870 = vmul.f32 0.5, %v2869
  %v2871 = vsub.f32 1.5, %v2870
  %v2872 = vmul.f32 %v2867, %v2871
  %vm2873 = vweird.f32 %v2823
  %vm2874 = vweird.f32 %v2867
  %vm2875 = vmor %vm2873, %vm2874
  %v2876 = vsel %vm2875, %v2867, %v2872
  %v2877 = vrsqrt.pop %v2824
  %v2878 = vmul.f32 %v2877, %v2824
  %v2879 = vmul.f32 %v2878, %v2877
  %v2880 = vmul.f32 0.5, %v2879
  %v2881 = vsub.f32 1.5, %v2880
  %v2882 = vmul.f32 %v2877, %v2881
  %vm2883 = vweird.f32 %v2824
  %vm2884 = vweird.f32 %v2877
  %vm2885 = vmor %vm2883, %vm2884
  %v2886 = vsel %vm2885, %v2877, %v2882
  %v2887 = vrsqrt.pop %v2825
  %v2888 = vmul.f32 %v2887, %v2825
  %v2889 = vmul.f32 %v2888, %v2887
  %v2890 = vmul.f32 0.5, %v2889
  %v2891 = vsub.f32 1.5, %v2890
  %v2892 = vmul.f32 %v2887, %v2891
  %vm2893 = vweird.f32 %v2825
  %vm2894 = vweird.f32 %v2887
  %vm2895 = vmor %vm2893, %vm2894
  %v2896 = vsel %vm2895, %v2887, %v2892
  %v2897 = vrsqrt.pop %v2826
  %v2898 = vmul.f32 %v2897, %v2826
  %v2899 = vmul.f32 %v2898, %v2897
  %v2900 = vmul.f32 0.5, %v2899
  %v2901 = vsub.f32 1.5, %v2900
  %v2902 = vmul.f32 %v2897, %v2901
  %vm2903 = vweird.f32 %v2826
  %vm2904 = vweird.f32 %v2897
  %vm2905 = vmor %vm2903, %vm2904
  %v2906 = vsel %vm2905, %v2897, %v2902
  %v2907 = vmul.f32 %v2730, %v2836
  %v2908 = vmul.f32 %v2731, %v2846
  %v2909 = vmul.f32 %v2732, %v2856
  %v2910 = vmul.f32 %v2733, %v2866
  %v2911 = vmul.f32 %v2734, %v2876
  %v2912 = vmul.f32 %v2735, %v2886
  %v2913 = vmul.f32 %v2736, %v2896
  %v2914 = vmul.f32 %v2737, %v2906
  %v2915 = vmul.f32 %v2907, %v628
  %v2916 = vmul.f32 %v2908, %v633
  %v2917 = vmul.f32 %v2909, %v638
  %v2918 = vmul.f32 %v2910, %v643
  %v2919 = vmul.f32 %v2911, %v648
  %v2920 = vmul.f32 %v2912, %v653
  %v2921 = vmul.f32 %v2913, %v658
  %v2922 = vmul.f32 %v2914, %v663
  %v2923 = vadd.f32 %v2915, %v676
  %v2924 = vadd.f32 %v2916, %v681
  %v2925 = vadd.f32 %v2917, %v686
  %v2926 = vadd.f32 %v2918, %v691
  %v2927 = vadd.f32 %v2919, %v696
  %v2928 = vadd.f32 %v2920, %v701
  %v2929 = vadd.f32 %v2921, %v706
  %v2930 = vadd.f32 %v2922, %v711
  %v2931 = vsub.f32 0.0, %v2923
  %v2932 = vsub.f32 0.0, %v2924
  %v2933 = vsub.f32 0.0, %v2925
  %v2934 = vsub.f32 0.0, %v2926
  %v2935 = vsub.f32 0.0, %v2927
  %v2936 = vsub.f32 0.0, %v2928
  %v2937 = vsub.f32 0.0, %v2929
  %v2938 = vsub.f32 0.0, %v2930
  %v2939 = vmul.f32 %v2931, 1.442695
  %v2940 = vpow.pop %v2939
  %v2941 = vmul.f32 %v2932, 1.442695
  %v2942 = vpow.pop %v2941
  %v2943 = vmul.f32 %v2933, 1.442695
  %v2944 = vpow.pop %v2943
  %v2945 = vmul.f32 %v2934, 1.442695
  %v2946 = vpow.pop %v2945
  %v2947 = vmul.f32 %v2935, 1.442695
  %v2948 = vpow.pop %v2947
  %v2949 = vmul.f32 %v2936, 1.442695
  %v2950 = vpow.pop %v2949
  %v2951 = vmul.f32 %v2937, 1.442695
  %v2952 = vpow.pop %v2951
  %v2953 = vmul.f32 %v2938, 1.442695
  %v2954 = vpow.pop %v2953
  %v2955 = vadd.f32 %v2940, 1.0
  %v2956 = vadd.f32 %v2942, 1.0
  %v2957 = vadd.f32 %v2944, 1.0
  %v2958 = vadd.f32 %v2946, 1.0
  %v2959 = vadd.f32 %v2948, 1.0
  %v2960 = vadd.f32 %v2950, 1.0
  %v2961 = vadd.f32 %v2952, 1.0
  %v2962 = vadd.f32 %v2954, 1.0
  %v2963 = vrcp.pop %v2955
  %v2964 = vmul.f32 %v2955, %v2963
  %v2965 = vsub.f32 1.0, %v2964
  %v2966 = vmul.f32 %v2963, %v2965
  %v2967 = vadd.f32 %v2963, %v2966
  %vm2968 = vweird.f32 %v2955
  %vm2969 = vweird.f32 %v2963
  %vm2970 = vmor %vm2968, %vm2969
  %v2971 = vsel %vm2970, %v2963, %v2967
  %v2972 = vand.u32 2147483647, %v2955
  %vm2973 = vcmp.eq.f32.partialorder %v2972, 8.507059e+37
  %v2974 = vand.u32 %v2955, 2147483648
  %v2975 = vor.u32 1.1754944e-38, %v2974
  %v2976 = vsel %vm2973, %v2975, %v2971
  %v2977 = vmul.f32 1.0, %v2976
  %v2978 = vrcp.pop %v2956
  %v2979 = vmul.f32 %v2956, %v2978
  %v2980 = vsub.f32 1.0, %v2979
  %v2981 = vmul.f32 %v2978, %v2980
  %v2982 = vadd.f32 %v2978, %v2981
  %vm2983 = vweird.f32 %v2956
  %vm2984 = vweird.f32 %v2978
  %vm2985 = vmor %vm2983, %vm2984
  %v2986 = vsel %vm2985, %v2978, %v2982
  %v2987 = vand.u32 2147483647, %v2956
  %vm2988 = vcmp.eq.f32.partialorder %v2987, 8.507059e+37
  %v2989 = vand.u32 %v2956, 2147483648
  %v2990 = vor.u32 1.1754944e-38, %v2989
  %v2991 = vsel %vm2988, %v2990, %v2986
  %v2992 = vmul.f32 1.0, %v2991
  %v2993 = vrcp.pop %v2957
  %v2994 = vmul.f32 %v2957, %v2993
  %v2995 = vsub.f32 1.0, %v2994
  %v2996 = vmul.f32 %v2993, %v2995
  %v2997 = vadd.f32 %v2993, %v2996
  %vm2998 = vweird.f32 %v2957
  %vm2999 = vweird.f32 %v2993
  %vm3000 = vmor %vm2998, %vm2999
  %v3001 = vsel %vm3000, %v2993, %v2997
  %v3002 = vand.u32 2147483647, %v2957
  %vm3003 = vcmp.eq.f32.partialorder %v3002, 8.507059e+37
  %v3004 = vand.u32 %v2957, 2147483648
  %v3005 = vor.u32 1.1754944e-38, %v3004
  %v3006 = vsel %vm3003, %v3005, %v3001
  %v3007 = vmul.f32 1.0, %v3006
  %v3008 = vrcp.pop %v2958
  %v3009 = vmul.f32 %v2958, %v3008
  %v3010 = vsub.f32 1.0, %v3009
  %v3011 = vmul.f32 %v3008, %v3010
  %v3012 = vadd.f32 %v3008, %v3011
  %vm3013 = vweird.f32 %v2958
  %vm3014 = vweird.f32 %v3008
  %vm3015 = vmor %vm3013, %vm3014
  %v3016 = vsel %vm3015, %v3008, %v3012
  %v3017 = vand.u32 2147483647, %v2958
  %vm3018 = vcmp.eq.f32.partialorder %v3017, 8.507059e+37
  %v3019 = vand.u32 %v2958, 2147483648
  %v3020 = vor.u32 1.1754944e-38, %v3019
  %v3021 = vsel %vm3018, %v3020, %v3016
  %v3022 = vmul.f32 1.0, %v3021
  %v3023 = vrcp.pop %v2959
  %v3024 = vmul.f32 %v2959, %v3023
  %v3025 = vsub.f32 1.0, %v3024
  %v3026 = vmul.f32 %v3023, %v3025
  %v3027 = vadd.f32 %v3023, %v3026
  %vm3028 = vweird.f32 %v2959
  %vm3029 = vweird.f32 %v3023
  %vm3030 = vmor %vm3028, %vm3029
  %v3031 = vsel %vm3030, %v3023, %v3027
  %v3032 = vand.u32 2147483647, %v2959
  %vm3033 = vcmp.eq.f32.partialorder %v3032, 8.507059e+37
  %v3034 = vand.u32 %v2959, 2147483648
  %v3035 = vor.u32 1.1754944e-38, %v3034
  %v3036 = vsel %vm3033, %v3035, %v3031
  %v3037 = vmul.f32 1.0, %v3036
  %v3038 = vrcp.pop %v2960
  %v3039 = vmul.f32 %v2960, %v3038
  %v3040 = vsub.f32 1.0, %v3039
  %v3041 = vmul.f32 %v3038, %v3040
  %v3042 = vadd.f32 %v3038, %v3041
  %vm3043 = vweird.f32 %v2960
  %vm3044 = vweird.f32 %v3038
  %vm3045 = vmor %vm3043, %vm3044
  %v3046 = vsel %vm3045, %v3038, %v3042
  %v3047 = vand.u32 2147483647, %v2960
  %vm3048 = vcmp.eq.f32.partialorder %v3047, 8.507059e+37
  %v3049 = vand.u32 %v2960, 2147483648
  %v3050 = vor.u32 1.1754944e-38, %v3049
  %v3051 = vsel %vm3048, %v3050, %v3046
  %v3052 = vmul.f32 1.0, %v3051
  %v3053 = vrcp.pop %v2961
  %v3054 = vmul.f32 %v2961, %v3053
  %v3055 = vsub.f32 1.0, %v3054
  %v3056 = vmul.f32 %v3053, %v3055
  %v3057 = vadd.f32 %v3053, %v3056
  %vm3058 = vweird.f32 %v2961
  %vm3059 = vweird.f32 %v3053
  %vm3060 = vmor %vm3058, %vm3059
  %v3061 = vsel %vm3060, %v3053, %v3057
  %v3062 = vand.u32 2147483647, %v2961
  %vm3063 = vcmp.eq.f32.partialorder %v3062, 8.507059e+37
  %v3064 = vand.u32 %v2961, 2147483648
  %v3065 = vor.u32 1.1754944e-38, %v3064
  %v3066 = vsel %vm3063, %v3065, %v3061
  %v3067 = vmul.f32 1.0, %v3066
  %v3068 = vrcp.pop %v2962
  %v3069 = vmul.f32 %v2962, %v3068
  %v3070 = vsub.f32 1.0, %v3069
  %v3071 = vmul.f32 %v3068, %v3070
  %v3072 = vadd.f32 %v3068, %v3071
  %vm3073 = vweird.f32 %v2962
  %vm3074 = vweird.f32 %v3068
  %vm3075 = vmor %vm3073, %vm3074
  %v3076 = vsel %vm3075, %v3068, %v3072
  %v3077 = vand.u32 2147483647, %v2962
  %vm3078 = vcmp.eq.f32.partialorder %v3077, 8.507059e+37
  %v3079 = vand.u32 %v2962, 2147483648
  %v3080 = vor.u32 1.1754944e-38, %v3079
  %v3081 = vsel %vm3078, %v3080, %v3076
  %v3082 = vmul.f32 1.0, %v3081
  %v3083 = vmul.f32 %v2923, %v2977
  %v3084 = vmul.f32 %v2924, %v2992
  %v3085 = vmul.f32 %v2925, %v3007
  %v3086 = vmul.f32 %v2926, %v3022
  %v3087 = vmul.f32 %v2927, %v3037
  %v3088 = vmul.f32 %v2928, %v3052
  %v3089 = vmul.f32 %v2929, %v3067
  %v3090 = vmul.f32 %v2930, %v3082
  %3091 = vmatpush.msra.mxu0 0.0
  %3092 = vmatpush.msra.mxu0 0.0
  %3093 = vmatpush.msra.mxu0 0.0
  %3094 = vmatpush.msra.mxu0 0.0
  %3095 = vmatpush.msra.mxu0 0.0
  %3096 = vmatpush.msra.mxu0 0.0
  %3097 = vmatpush.msra.mxu0 0.0
  %3098 = vmatpush.msra.mxu0 0.0
  %3099 = vmatpush.msra.mxu0 %v3090
  %3100 = vmatpush.msra.mxu0 %v3089
  %3101 = vmatpush.msra.mxu0 %v3088
  %3102 = vmatpush.msra.mxu0 %v3087
  %3103 = vmatpush.msra.mxu0 %v3086
  %3104 = vmatpush.msra.mxu0 %v3085
  %3105 = vmatpush.msra.mxu0 %v3084
  %3106 = vmatpush.msra.mxu0 %v3083
  %3107 = vmatmul.f32.gmra.mxu0 %v882
  %v3108 = vpop.f32.mrf.mxu0
  %v3109 = vadd.f32 0.0, %v3108
  %3110 = vmatmul.f32.gmra.mxu0 %v885
  %v3111 = vpop.f32.mrf.mxu0
  %v3112 = vadd.f32 0.0, %v3111
  %3113 = vmatmul.f32.gmra.mxu0 %v888
  %v3114 = vpop.f32.mrf.mxu0
  %v3115 = vadd.f32 0.0, %v3114
  %3116 = vmatmul.f32.gmra.mxu0 %v891
  %v3117 = vpop.f32.mrf.mxu0
  %v3118 = vadd.f32 0.0, %v3117
  %3119 = vmatmul.f32.gmra.mxu0 %v894
  %v3120 = vpop.f32.mrf.mxu0
  %v3121 = vadd.f32 0.0, %v3120
  %3122 = vmatmul.f32.gmra.mxu0 %v897
  %v3123 = vpop.f32.mrf.mxu0
  %v3124 = vadd.f32 0.0, %v3123
  %3125 = vmatmul.f32.gmra.mxu0 %v900
  %v3126 = vpop.f32.mrf.mxu0
  %v3127 = vadd.f32 0.0, %v3126
  %3128 = vmatmul.f32.gmra.mxu0 %v903
  %v3129 = vpop.f32.mrf.mxu0
  %v3130 = vadd.f32 0.0, %v3129
  %3131 = vmatmul.f32.gmra.mxu0 %v906
  %v3132 = vpop.f32.mrf.mxu0
  %v3133 = vadd.f32 0.0, %v3132
  %3134 = vmatmul.f32.gmra.mxu0 %v909
  %v3135 = vpop.f32.mrf.mxu0
  %v3136 = vadd.f32 0.0, %v3135
  %3137 = vmatmul.f32.gmra.mxu0 %v912
  %v3138 = vpop.f32.mrf.mxu0
  %v3139 = vadd.f32 0.0, %v3138
  %3140 = vmatmul.f32.gmra.mxu0 %v915
  %v3141 = vpop.f32.mrf.mxu0
  %v3142 = vadd.f32 0.0, %v3141
  %3143 = vmatmul.f32.gmra.mxu0 %v918
  %v3144 = vpop.f32.mrf.mxu0
  %v3145 = vadd.f32 0.0, %v3144
  %3146 = vmatmul.f32.gmra.mxu0 %v921
  %v3147 = vpop.f32.mrf.mxu0
  %v3148 = vadd.f32 0.0, %v3147
  %3149 = vmatmul.f32.gmra.mxu0 %v924
  %v3150 = vpop.f32.mrf.mxu0
  %v3151 = vadd.f32 0.0, %v3150
  %3152 = vmatmul.f32.gmra.mxu0 %v927
  %v3153 = vpop.f32.mrf.mxu0
  %v3154 = vadd.f32 0.0, %v3153
  %3155 = vmatmul.f32.gmra.mxu0 %v930
  %v3156 = vpop.f32.mrf.mxu0
  %v3157 = vadd.f32 0.0, %v3156
  %3158 = vmatmul.f32.gmra.mxu0 %v933
  %v3159 = vpop.f32.mrf.mxu0
  %v3160 = vadd.f32 0.0, %v3159
  %3161 = vmatmul.f32.gmra.mxu0 %v936
  %v3162 = vpop.f32.mrf.mxu0
  %v3163 = vadd.f32 0.0, %v3162
  %3164 = vmatmul.f32.gmra.mxu0 %v939
  %v3165 = vpop.f32.mrf.mxu0
  %v3166 = vadd.f32 0.0, %v3165
  %3167 = vmatmul.f32.gmra.mxu0 %v942
  %v3168 = vpop.f32.mrf.mxu0
  %v3169 = vadd.f32 0.0, %v3168
  %3170 = vmatmul.f32.gmra.mxu0 %v945
  %v3171 = vpop.f32.mrf.mxu0
  %v3172 = vadd.f32 0.0, %v3171
  %3173 = vmatmul.f32.gmra.mxu0 %v948
  %v3174 = vpop.f32.mrf.mxu0
  %v3175 = vadd.f32 0.0, %v3174
  %3176 = vmatmul.f32.gmra.mxu0 %v951
  %v3177 = vpop.f32.mrf.mxu0
  %v3178 = vadd.f32 0.0, %v3177
  %3179 = vmatmul.f32.gmra.mxu0 %v954
  %v3180 = vpop.f32.mrf.mxu0
  %v3181 = vadd.f32 0.0, %v3180
  %3182 = vmatmul.f32.gmra.mxu0 %v957
  %v3183 = vpop.f32.mrf.mxu0
  %v3184 = vadd.f32 0.0, %v3183
  %3185 = vmatmul.f32.gmra.mxu0 %v960
  %v3186 = vpop.f32.mrf.mxu0
  %v3187 = vadd.f32 0.0, %v3186
  %3188 = vmatmul.f32.gmra.mxu0 %v963
  %v3189 = vpop.f32.mrf.mxu0
  %v3190 = vadd.f32 0.0, %v3189
  %3191 = vmatmul.f32.gmra.mxu0 %v966
  %v3192 = vpop.f32.mrf.mxu0
  %v3193 = vadd.f32 0.0, %v3192
  %3194 = vmatmul.f32.gmra.mxu0 %v969
  %v3195 = vpop.f32.mrf.mxu0
  %v3196 = vadd.f32 0.0, %v3195
  %3197 = vmatmul.f32.gmra.mxu0 %v972
  %v3198 = vpop.f32.mrf.mxu0
  %v3199 = vadd.f32 0.0, %v3198
  %3200 = vmatmul.f32.gmra.mxu0 %v975
  %v3201 = vpop.f32.mrf.mxu0
  %v3202 = vadd.f32 0.0, %v3201
  %3203 = vmatmul.f32.gmra.mxu0 %v978
  %v3204 = vpop.f32.mrf.mxu0
  %v3205 = vadd.f32 0.0, %v3204
  %3206 = vmatmul.f32.gmra.mxu0 %v981
  %v3207 = vpop.f32.mrf.mxu0
  %v3208 = vadd.f32 0.0, %v3207
  %3209 = vmatmul.f32.gmra.mxu0 %v984
  %v3210 = vpop.f32.mrf.mxu0
  %v3211 = vadd.f32 0.0, %v3210
  %3212 = vmatmul.f32.gmra.mxu0 %v987
  %v3213 = vpop.f32.mrf.mxu0
  %v3214 = vadd.f32 0.0, %v3213
  %3215 = vdwg.mxu0
  %v3216 = vld [vmem:[%s16] sm:$0xff]
  %v3217 = vld [vmem:[%s16 + $0x8] sm:$0xff]
  %v3218 = vld [vmem:[%s16 + $0x10] sm:$0xff]
  %v3219 = vld [vmem:[%s16 + $0x18] sm:$0xff]
  %v3220 = vld [vmem:[%s16 + $0x20] sm:$0xff]
  %v3221 = vld [vmem:[%s16 + $0x28] sm:$0xff]
  %v3222 = vld [vmem:[%s16 + $0x30] sm:$0xff]
  %v3223 = vld [vmem:[%s16 + $0x38] sm:$0xff]
  %v3224 = vld [vmem:[%s1122] sm:$0xff]
  %v3225 = vld [vmem:[%s1122 + $0x8] sm:$0xff]
  %v3226 = vld [vmem:[%s1122 + $0x10] sm:$0xff]
  %v3227 = vld [vmem:[%s1122 + $0x18] sm:$0xff]
  %v3228 = vld [vmem:[%s1122 + $0x20] sm:$0xff]
  %v3229 = vld [vmem:[%s1122 + $0x28] sm:$0xff]
  %v3230 = vld [vmem:[%s1122 + $0x30] sm:$0xff]
  %v3231 = vld [vmem:[%s1122 + $0x38] sm:$0xff]
  %v3233 = vsel %vm342, %v3121, 0
  %v3236 = vsel %vm342, %v3124, 0
  %v3239 = vsel %vm342, %v3127, 0
  %v3242 = vsel %vm342, %v3130, 0
  %3244 = vmatpush.msra.mxu0 0.0
  %3245 = vmatpush.msra.mxu0 0.0
  %3246 = vmatpush.msra.mxu0 0.0
  %3247 = vmatpush.msra.mxu0 0.0
  %3248 = vmatpush.msra.mxu0 0.0
  %3249 = vmatpush.msra.mxu0 0.0
  %3250 = vmatpush.msra.mxu0 0.0
  %3251 = vmatpush.msra.mxu0 0.0
  %3252 = vmatpush.msra.mxu0 %v3231
  %3253 = vmatpush.msra.mxu0 %v3230
  %3254 = vmatpush.msra.mxu0 %v3229
  %3255 = vmatpush.msra.mxu0 %v3228
  %3256 = vmatpush.msra.mxu0 %v3227
  %3257 = vmatpush.msra.mxu0 %v3226
  %3258 = vmatpush.msra.mxu0 %v3225
  %3259 = vmatpush.msra.mxu0 %v3224
  %3260 = vmatmul.f32.gmra.mxu0 %v3233
  %v3261 = vpop.f32.mrf.mxu0
  %v3262 = vadd.f32 0.0, %v3261
  %3263 = vmatmul.f32.gmra.mxu0 %v3236
  %v3264 = vpop.f32.mrf.mxu0
  %v3265 = vadd.f32 0.0, %v3264
  %3266 = vmatmul.f32.gmra.mxu0 %v3239
  %v3267 = vpop.f32.mrf.mxu0
  %v3268 = vadd.f32 0.0, %v3267
  %3269 = vmatmul.f32.gmra.mxu0 %v3242
  %v3270 = vpop.f32.mrf.mxu0
  %v3271 = vadd.f32 0.0, %v3270
  %3272 = vdwg.mxu0
  %v3274 = vsel %vm342, %v3109, 0
  %v3277 = vsel %vm342, %v3112, 0
  %v3280 = vsel %vm342, %v3115, 0
  %v3283 = vsel %vm342, %v3118, 0
  %3285 = vmatpush.msra.mxu0 0.0
  %3286 = vmatpush.msra.mxu0 0.0
  %3287 = vmatpush.msra.mxu0 0.0
  %3288 = vmatpush.msra.mxu0 0.0
  %3289 = vmatpush.msra.mxu0 0.0
  %3290 = vmatpush.msra.mxu0 0.0
  %3291 = vmatpush.msra.mxu0 0.0
  %3292 = vmatpush.msra.mxu0 0.0
  %3293 = vmatpush.msra.mxu0 %v3223
  %3294 = vmatpush.msra.mxu0 %v3222
  %3295 = vmatpush.msra.mxu0 %v3221
  %3296 = vmatpush.msra.mxu0 %v3220
  %3297 = vmatpush.msra.mxu0 %v3219
  %3298 = vmatpush.msra.mxu0 %v3218
  %3299 = vmatpush.msra.mxu0 %v3217
  %3300 = vmatpush.msra.mxu0 %v3216
  %3301 = vmatmul.f32.gmra.mxu0 %v3274
  %v3302 = vpop.f32.mrf.mxu0
  %v3303 = vadd.f32 %v3262, %v3302
  %3304 = vmatmul.f32.gmra.mxu0 %v3277
  %v3305 = vpop.f32.mrf.mxu0
  %v3306 = vadd.f32 %v3265, %v3305
  %3307 = vmatmul.f32.gmra.mxu0 %v3280
  %v3308 = vpop.f32.mrf.mxu0
  %v3309 = vadd.f32 %v3268, %v3308
  %3310 = vmatmul.f32.gmra.mxu0 %v3283
  %v3311 = vpop.f32.mrf.mxu0
  %v3312 = vadd.f32 %v3271, %v3311
  %3313 = vdwg.mxu0
  %v3314 = vld [vmem:[%s1213] sm:$0xff]
  %v3315 = vld [vmem:[%s1213 + $0x8] sm:$0xff]
  %v3316 = vld [vmem:[%s1213 + $0x10] sm:$0xff]
  %v3317 = vld [vmem:[%s1213 + $0x18] sm:$0xff]
  %v3318 = vld [vmem:[%s1213 + $0x20] sm:$0xff]
  %v3319 = vld [vmem:[%s1213 + $0x28] sm:$0xff]
  %v3320 = vld [vmem:[%s1213 + $0x30] sm:$0xff]
  %v3321 = vld [vmem:[%s1213 + $0x38] sm:$0xff]
  %v3323 = vsel %vm342, %v3133, 0
  %v3326 = vsel %vm342, %v3136, 0
  %v3329 = vsel %vm342, %v3139, 0
  %v3332 = vsel %vm342, %v3142, 0
  %3334 = vmatpush.msra.mxu0 0.0
  %3335 = vmatpush.msra.mxu0 0.0
  %3336 = vmatpush.msra.mxu0 0.0
  %3337 = vmatpush.msra.mxu0 0.0
  %3338 = vmatpush.msra.mxu0 0.0
  %3339 = vmatpush.msra.mxu0 0.0
  %3340 = vmatpush.msra.mxu0 0.0
  %3341 = vmatpush.msra.mxu0 0.0
  %3342 = vmatpush.msra.mxu0 %v3321
  %3343 = vmatpush.msra.mxu0 %v3320
  %3344 = vmatpush.msra.mxu0 %v3319
  %3345 = vmatpush.msra.mxu0 %v3318
  %3346 = vmatpush.msra.mxu0 %v3317
  %3347 = vmatpush.msra.mxu0 %v3316
  %3348 = vmatpush.msra.mxu0 %v3315
  %3349 = vmatpush.msra.mxu0 %v3314
  %3350 = vmatmul.f32.gmra.mxu0 %v3323
  %v3351 = vpop.f32.mrf.mxu0
  %v3352 = vadd.f32 0.0, %v3351
  %3353 = vmatmul.f32.gmra.mxu0 %v3326
  %v3354 = vpop.f32.mrf.mxu0
  %v3355 = vadd.f32 0.0, %v3354
  %3356 = vmatmul.f32.gmra.mxu0 %v3329
  %v3357 = vpop.f32.mrf.mxu0
  %v3358 = vadd.f32 0.0, %v3357
  %3359 = vmatmul.f32.gmra.mxu0 %v3332
  %v3360 = vpop.f32.mrf.mxu0
  %v3361 = vadd.f32 0.0, %v3360
  %3362 = vdwg.mxu0
  %v3363 = vadd.f32 %v3303, %v3352
  %v3364 = vadd.f32 %v3306, %v3355
  %v3365 = vadd.f32 %v3309, %v3358
  %v3366 = vadd.f32 %v3312, %v3361
  %v3367 = vld [vmem:[%s1267] sm:$0xff]
  %v3368 = vld [vmem:[%s1267 + $0x8] sm:$0xff]
  %v3369 = vld [vmem:[%s1267 + $0x10] sm:$0xff]
  %v3370 = vld [vmem:[%s1267 + $0x18] sm:$0xff]
  %v3371 = vld [vmem:[%s1267 + $0x20] sm:$0xff]
  %v3372 = vld [vmem:[%s1267 + $0x28] sm:$0xff]
  %v3373 = vld [vmem:[%s1267 + $0x30] sm:$0xff]
  %v3374 = vld [vmem:[%s1267 + $0x38] sm:$0xff]
  %v3376 = vsel %vm342, %v3145, 0
  %v3379 = vsel %vm342, %v3148, 0
  %v3382 = vsel %vm342, %v3151, 0
  %v3385 = vsel %vm342, %v3154, 0
  %3387 = vmatpush.msra.mxu0 0.0
  %3388 = vmatpush.msra.mxu0 0.0
  %3389 = vmatpush.msra.mxu0 0.0
  %3390 = vmatpush.msra.mxu0 0.0
  %3391 = vmatpush.msra.mxu0 0.0
  %3392 = vmatpush.msra.mxu0 0.0
  %3393 = vmatpush.msra.mxu0 0.0
  %3394 = vmatpush.msra.mxu0 0.0
  %3395 = vmatpush.msra.mxu0 %v3374
  %3396 = vmatpush.msra.mxu0 %v3373
  %3397 = vmatpush.msra.mxu0 %v3372
  %3398 = vmatpush.msra.mxu0 %v3371
  %3399 = vmatpush.msra.mxu0 %v3370
  %3400 = vmatpush.msra.mxu0 %v3369
  %3401 = vmatpush.msra.mxu0 %v3368
  %3402 = vmatpush.msra.mxu0 %v3367
  %3403 = vmatmul.f32.gmra.mxu0 %v3376
  %v3404 = vpop.f32.mrf.mxu0
  %v3405 = vadd.f32 0.0, %v3404
  %3406 = vmatmul.f32.gmra.mxu0 %v3379
  %v3407 = vpop.f32.mrf.mxu0
  %v3408 = vadd.f32 0.0, %v3407
  %3409 = vmatmul.f32.gmra.mxu0 %v3382
  %v3410 = vpop.f32.mrf.mxu0
  %v3411 = vadd.f32 0.0, %v3410
  %3412 = vmatmul.f32.gmra.mxu0 %v3385
  %v3413 = vpop.f32.mrf.mxu0
  %v3414 = vadd.f32 0.0, %v3413
  %3415 = vdwg.mxu0
  %v3416 = vadd.f32 %v3363, %v3405
  %v3417 = vadd.f32 %v3364, %v3408
  %v3418 = vadd.f32 %v3365, %v3411
  %v3419 = vadd.f32 %v3366, %v3414
  %v3420 = vld [vmem:[%s1321] sm:$0xff]
  %v3421 = vld [vmem:[%s1321 + $0x8] sm:$0xff]
  %v3422 = vld [vmem:[%s1321 + $0x10] sm:$0xff]
  %v3423 = vld [vmem:[%s1321 + $0x18] sm:$0xff]
  %v3424 = vld [vmem:[%s1321 + $0x20] sm:$0xff]
  %v3425 = vld [vmem:[%s1321 + $0x28] sm:$0xff]
  %v3426 = vld [vmem:[%s1321 + $0x30] sm:$0xff]
  %v3427 = vld [vmem:[%s1321 + $0x38] sm:$0xff]
  %v3429 = vsel %vm342, %v3157, 0
  %v3432 = vsel %vm342, %v3160, 0
  %v3435 = vsel %vm342, %v3163, 0
  %v3438 = vsel %vm342, %v3166, 0
  %3440 = vmatpush.msra.mxu0 0.0
  %3441 = vmatpush.msra.mxu0 0.0
  %3442 = vmatpush.msra.mxu0 0.0
  %3443 = vmatpush.msra.mxu0 0.0
  %3444 = vmatpush.msra.mxu0 0.0
  %3445 = vmatpush.msra.mxu0 0.0
  %3446 = vmatpush.msra.mxu0 0.0
  %3447 = vmatpush.msra.mxu0 0.0
  %3448 = vmatpush.msra.mxu0 %v3427
  %3449 = vmatpush.msra.mxu0 %v3426
  %3450 = vmatpush.msra.mxu0 %v3425
  %3451 = vmatpush.msra.mxu0 %v3424
  %3452 = vmatpush.msra.mxu0 %v3423
  %3453 = vmatpush.msra.mxu0 %v3422
  %3454 = vmatpush.msra.mxu0 %v3421
  %3455 = vmatpush.msra.mxu0 %v3420
  %3456 = vmatmul.f32.gmra.mxu0 %v3429
  %v3457 = vpop.f32.mrf.mxu0
  %v3458 = vadd.f32 0.0, %v3457
  %3459 = vmatmul.f32.gmra.mxu0 %v3432
  %v3460 = vpop.f32.mrf.mxu0
  %v3461 = vadd.f32 0.0, %v3460
  %3462 = vmatmul.f32.gmra.mxu0 %v3435
  %v3463 = vpop.f32.mrf.mxu0
  %v3464 = vadd.f32 0.0, %v3463
  %3465 = vmatmul.f32.gmra.mxu0 %v3438
  %v3466 = vpop.f32.mrf.mxu0
  %v3467 = vadd.f32 0.0, %v3466
  %3468 = vdwg.mxu0
  %v3469 = vadd.f32 %v3416, %v3458
  %v3470 = vadd.f32 %v3417, %v3461
  %v3471 = vadd.f32 %v3418, %v3464
  %v3472 = vadd.f32 %v3419, %v3467
  %v3473 = vld [vmem:[%s1375] sm:$0xff]
  %v3474 = vld [vmem:[%s1375 + $0x8] sm:$0xff]
  %v3475 = vld [vmem:[%s1375 + $0x10] sm:$0xff]
  %v3476 = vld [vmem:[%s1375 + $0x18] sm:$0xff]
  %v3477 = vld [vmem:[%s1375 + $0x20] sm:$0xff]
  %v3478 = vld [vmem:[%s1375 + $0x28] sm:$0xff]
  %v3479 = vld [vmem:[%s1375 + $0x30] sm:$0xff]
  %v3480 = vld [vmem:[%s1375 + $0x38] sm:$0xff]
  %v3482 = vsel %vm342, %v3169, 0
  %v3485 = vsel %vm342, %v3172, 0
  %v3488 = vsel %vm342, %v3175, 0
  %v3491 = vsel %vm342, %v3178, 0
  %3493 = vmatpush.msra.mxu0 0.0
  %3494 = vmatpush.msra.mxu0 0.0
  %3495 = vmatpush.msra.mxu0 0.0
  %3496 = vmatpush.msra.mxu0 0.0
  %3497 = vmatpush.msra.mxu0 0.0
  %3498 = vmatpush.msra.mxu0 0.0
  %3499 = vmatpush.msra.mxu0 0.0
  %3500 = vmatpush.msra.mxu0 0.0
  %3501 = vmatpush.msra.mxu0 %v3480
  %3502 = vmatpush.msra.mxu0 %v3479
  %3503 = vmatpush.msra.mxu0 %v3478
  %3504 = vmatpush.msra.mxu0 %v3477
  %3505 = vmatpush.msra.mxu0 %v3476
  %3506 = vmatpush.msra.mxu0 %v3475
  %3507 = vmatpush.msra.mxu0 %v3474
  %3508 = vmatpush.msra.mxu0 %v3473
  %3509 = vmatmul.f32.gmra.mxu0 %v3482
  %v3510 = vpop.f32.mrf.mxu0
  %v3511 = vadd.f32 0.0, %v3510
  %3512 = vmatmul.f32.gmra.mxu0 %v3485
  %v3513 = vpop.f32.mrf.mxu0
  %v3514 = vadd.f32 0.0, %v3513
  %3515 = vmatmul.f32.gmra.mxu0 %v3488
  %v3516 = vpop.f32.mrf.mxu0
  %v3517 = vadd.f32 0.0, %v3516
  %3518 = vmatmul.f32.gmra.mxu0 %v3491
  %v3519 = vpop.f32.mrf.mxu0
  %v3520 = vadd.f32 0.0, %v3519
  %3521 = vdwg.mxu0
  %v3522 = vadd.f32 %v3469, %v3511
  %v3523 = vadd.f32 %v3470, %v3514
  %v3524 = vadd.f32 %v3471, %v3517
  %v3525 = vadd.f32 %v3472, %v3520
  %v3526 = vld [vmem:[%s1429] sm:$0xff]
  %v3527 = vld [vmem:[%s1429 + $0x8] sm:$0xff]
  %v3528 = vld [vmem:[%s1429 + $0x10] sm:$0xff]
  %v3529 = vld [vmem:[%s1429 + $0x18] sm:$0xff]
  %v3530 = vld [vmem:[%s1429 + $0x20] sm:$0xff]
  %v3531 = vld [vmem:[%s1429 + $0x28] sm:$0xff]
  %v3532 = vld [vmem:[%s1429 + $0x30] sm:$0xff]
  %v3533 = vld [vmem:[%s1429 + $0x38] sm:$0xff]
  %v3535 = vsel %vm342, %v3181, 0
  %v3538 = vsel %vm342, %v3184, 0
  %v3541 = vsel %vm342, %v3187, 0
  %v3544 = vsel %vm342, %v3190, 0
  %3546 = vmatpush.msra.mxu0 0.0
  %3547 = vmatpush.msra.mxu0 0.0
  %3548 = vmatpush.msra.mxu0 0.0
  %3549 = vmatpush.msra.mxu0 0.0
  %3550 = vmatpush.msra.mxu0 0.0
  %3551 = vmatpush.msra.mxu0 0.0
  %3552 = vmatpush.msra.mxu0 0.0
  %3553 = vmatpush.msra.mxu0 0.0
  %3554 = vmatpush.msra.mxu0 %v3533
  %3555 = vmatpush.msra.mxu0 %v3532
  %3556 = vmatpush.msra.mxu0 %v3531
  %3557 = vmatpush.msra.mxu0 %v3530
  %3558 = vmatpush.msra.mxu0 %v3529
  %3559 = vmatpush.msra.mxu0 %v3528
  %3560 = vmatpush.msra.mxu0 %v3527
  %3561 = vmatpush.msra.mxu0 %v3526
  %3562 = vmatmul.f32.gmra.mxu0 %v3535
  %v3563 = vpop.f32.mrf.mxu0
  %v3564 = vadd.f32 0.0, %v3563
  %3565 = vmatmul.f32.gmra.mxu0 %v3538
  %v3566 = vpop.f32.mrf.mxu0
  %v3567 = vadd.f32 0.0, %v3566
  %3568 = vmatmul.f32.gmra.mxu0 %v3541
  %v3569 = vpop.f32.mrf.mxu0
  %v3570 = vadd.f32 0.0, %v3569
  %3571 = vmatmul.f32.gmra.mxu0 %v3544
  %v3572 = vpop.f32.mrf.mxu0
  %v3573 = vadd.f32 0.0, %v3572
  %3574 = vdwg.mxu0
  %v3575 = vadd.f32 %v3522, %v3564
  %v3576 = vadd.f32 %v3523, %v3567
  %v3577 = vadd.f32 %v3524, %v3570
  %v3578 = vadd.f32 %v3525, %v3573
  %v3579 = vld [vmem:[%s1483] sm:$0xff]
  %v3580 = vld [vmem:[%s1483 + $0x8] sm:$0xff]
  %v3581 = vld [vmem:[%s1483 + $0x10] sm:$0xff]
  %v3582 = vld [vmem:[%s1483 + $0x18] sm:$0xff]
  %v3583 = vld [vmem:[%s1483 + $0x20] sm:$0xff]
  %v3584 = vld [vmem:[%s1483 + $0x28] sm:$0xff]
  %v3585 = vld [vmem:[%s1483 + $0x30] sm:$0xff]
  %v3586 = vld [vmem:[%s1483 + $0x38] sm:$0xff]
  %v3588 = vsel %vm342, %v3193, 0
  %v3591 = vsel %vm342, %v3196, 0
  %v3594 = vsel %vm342, %v3199, 0
  %v3597 = vsel %vm342, %v3202, 0
  %3599 = vmatpush.msra.mxu0 0.0
  %3600 = vmatpush.msra.mxu0 0.0
  %3601 = vmatpush.msra.mxu0 0.0
  %3602 = vmatpush.msra.mxu0 0.0
  %3603 = vmatpush.msra.mxu0 0.0
  %3604 = vmatpush.msra.mxu0 0.0
  %3605 = vmatpush.msra.mxu0 0.0
  %3606 = vmatpush.msra.mxu0 0.0
  %3607 = vmatpush.msra.mxu0 %v3586
  %3608 = vmatpush.msra.mxu0 %v3585
  %3609 = vmatpush.msra.mxu0 %v3584
  %3610 = vmatpush.msra.mxu0 %v3583
  %3611 = vmatpush.msra.mxu0 %v3582
  %3612 = vmatpush.msra.mxu0 %v3581
  %3613 = vmatpush.msra.mxu0 %v3580
  %3614 = vmatpush.msra.mxu0 %v3579
  %3615 = vmatmul.f32.gmra.mxu0 %v3588
  %v3616 = vpop.f32.mrf.mxu0
  %v3617 = vadd.f32 0.0, %v3616
  %3618 = vmatmul.f32.gmra.mxu0 %v3591
  %v3619 = vpop.f32.mrf.mxu0
  %v3620 = vadd.f32 0.0, %v3619
  %3621 = vmatmul.f32.gmra.mxu0 %v3594
  %v3622 = vpop.f32.mrf.mxu0
  %v3623 = vadd.f32 0.0, %v3622
  %3624 = vmatmul.f32.gmra.mxu0 %v3597
  %v3625 = vpop.f32.mrf.mxu0
  %v3626 = vadd.f32 0.0, %v3625
  %3627 = vdwg.mxu0
  %v3628 = vadd.f32 %v3575, %v3617
  %v3629 = vadd.f32 %v3576, %v3620
  %v3630 = vadd.f32 %v3577, %v3623
  %v3631 = vadd.f32 %v3578, %v3626
  %v3632 = vld [vmem:[%s1537] sm:$0xff]
  %v3633 = vld [vmem:[%s1537 + $0x8] sm:$0xff]
  %v3634 = vld [vmem:[%s1537 + $0x10] sm:$0xff]
  %v3635 = vld [vmem:[%s1537 + $0x18] sm:$0xff]
  %v3636 = vld [vmem:[%s1537 + $0x20] sm:$0xff]
  %v3637 = vld [vmem:[%s1537 + $0x28] sm:$0xff]
  %v3638 = vld [vmem:[%s1537 + $0x30] sm:$0xff]
  %v3639 = vld [vmem:[%s1537 + $0x38] sm:$0xff]
  %v3641 = vsel %vm342, %v3205, 0
  %v3644 = vsel %vm342, %v3208, 0
  %v3647 = vsel %vm342, %v3211, 0
  %v3650 = vsel %vm342, %v3214, 0
  %3652 = vmatpush.msra.mxu0 0.0
  %3653 = vmatpush.msra.mxu0 0.0
  %3654 = vmatpush.msra.mxu0 0.0
  %3655 = vmatpush.msra.mxu0 0.0
  %3656 = vmatpush.msra.mxu0 0.0
  %3657 = vmatpush.msra.mxu0 0.0
  %3658 = vmatpush.msra.mxu0 0.0
  %3659 = vmatpush.msra.mxu0 0.0
  %3660 = vmatpush.msra.mxu0 %v3639
  %3661 = vmatpush.msra.mxu0 %v3638
  %3662 = vmatpush.msra.mxu0 %v3637
  %3663 = vmatpush.msra.mxu0 %v3636
  %3664 = vmatpush.msra.mxu0 %v3635
  %3665 = vmatpush.msra.mxu0 %v3634
  %3666 = vmatpush.msra.mxu0 %v3633
  %3667 = vmatpush.msra.mxu0 %v3632
  %3668 = vmatmul.f32.gmra.mxu0 %v3641
  %v3669 = vpop.f32.mrf.mxu0
  %v3670 = vadd.f32 0.0, %v3669
  %3671 = vmatmul.f32.gmra.mxu0 %v3644
  %v3672 = vpop.f32.mrf.mxu0
  %v3673 = vadd.f32 0.0, %v3672
  %3674 = vmatmul.f32.gmra.mxu0 %v3647
  %v3675 = vpop.f32.mrf.mxu0
  %v3676 = vadd.f32 0.0, %v3675
  %3677 = vmatmul.f32.gmra.mxu0 %v3650
  %v3678 = vpop.f32.mrf.mxu0
  %v3679 = vadd.f32 0.0, %v3678
  %3680 = vdwg.mxu0
  %v3681 = vadd.f32 %v3628, %v3670
  %v3682 = vadd.f32 %v3629, %v3673
  %v3683 = vadd.f32 %v3630, %v3676
  %v3684 = vadd.f32 %v3631, %v3679
  %v3685 = vadd.f32 %v3681, %v1594
  %v3686 = vadd.f32 %v3682, %v1599
  %v3687 = vadd.f32 %v3683, %v1604
  %v3688 = vadd.f32 %v3684, %v1609
  %3689 = vset.pattern.permute.xlu0 1
  %3690 = vperm.xlu0 %3689, %v199
  %v3691 = vpop.permute.xlu0 %3690
  %3693 = vset.pattern.permute.xlu0 1
  %3694 = vperm.xlu0 %3693, %v202
  %v3695 = vpop.permute.xlu0 %3694
  %3697 = vset.pattern.permute.xlu0 1
  %3698 = vperm.xlu0 %3697, %v205
  %v3699 = vpop.permute.xlu0 %3698
  %3701 = vset.pattern.permute.xlu0 1
  %3702 = vperm.xlu0 %3701, %v208
  %v3703 = vpop.permute.xlu0 %3702
  %v3705 = vadd.f32 %v3685, %v3691
  %v3706 = vadd.f32 %v3686, %v3695
  %v3707 = vadd.f32 %v3687, %v3699
  %v3708 = vadd.f32 %v3688, %v3703
  %3709 = vmatpush.msra.mxu0 0.0
  %3710 = vmatpush.msra.mxu0 0.0
  %3711 = vmatpush.msra.mxu0 0.0
  %3712 = vmatpush.msra.mxu0 0.0
  %3713 = vmatpush.msra.mxu0 0.0
  %3714 = vmatpush.msra.mxu0 0.0
  %3715 = vmatpush.msra.mxu0 0.0
  %3716 = vmatpush.msra.mxu0 0.0
  %3717 = vmatpush.msra.mxu0 0.0
  %3718 = vmatpush.msra.mxu0 0.0
  %3719 = vmatpush.msra.mxu0 0.0
  %3720 = vmatpush.msra.mxu0 0.0
  %3721 = vmatpush.msra.mxu0 %v3708
  %3722 = vmatpush.msra.mxu0 %v3707
  %3723 = vmatpush.msra.mxu0 %v3706
  %3724 = vmatpush.msra.mxu0 %v3705
  %3725 = vmatmul.f32.gmra.mxu0 %v1640
  %v3726 = vpop.f32.mrf.mxu0
  %v3727 = vadd.f32 0.0, %v3726
  %3728 = vmatmul.f32.gmra.mxu0 %v1643
  %v3729 = vpop.f32.mrf.mxu0
  %v3730 = vadd.f32 0.0, %v3729
  %3731 = vmatmul.f32.gmra.mxu0 %v1646
  %v3732 = vpop.f32.mrf.mxu0
  %v3733 = vadd.f32 0.0, %v3732
  %3734 = vmatmul.f32.gmra.mxu0 %v1649
  %v3735 = vpop.f32.mrf.mxu0
  %v3736 = vadd.f32 0.0, %v3735
  %3737 = vdwg.mxu0
  %v3738 = vsel %vm342, %v3727, 0.0
  %3739 = vadd.xlane.f32.xlu0 %v3738
  %v3740 = vpop.xlane.xlu0 %3739
  %v3741 = vsel %vm342, %v3730, 0.0
  %3742 = vadd.xlane.f32.xlu0 %v3741
  %v3743 = vpop.xlane.xlu0 %3742
  %v3744 = vsel %vm342, %v3733, 0.0
  %3745 = vadd.xlane.f32.xlu0 %v3744
  %v3746 = vpop.xlane.xlu0 %3745
  %v3747 = vsel %vm342, %v3736, 0.0
  %3748 = vadd.xlane.f32.xlu0 %v3747
  %v3749 = vpop.xlane.xlu0 %3748
  %v3750 = vmul.f32 %v3740, 0.00390625
  %v3751 = vmul.f32 %v3743, 0.00390625
  %v3752 = vmul.f32 %v3746, 0.00390625
  %v3753 = vmul.f32 %v3749, 0.00390625
  %v3754 = vsub.f32 %v3705, %v3750
  %v3755 = vsub.f32 %v3706, %v3751
  %v3756 = vsub.f32 %v3707, %v3752
  %v3757 = vsub.f32 %v3708, %v3753
  %v3758 = vmul.f32 %v3754, %v3754
  %v3759 = vmul.f32 %v3755, %v3755
  %v3760 = vmul.f32 %v3756, %v3756
  %v3761 = vmul.f32 %v3757, %v3757
  %3762 = vmatpush.msra.mxu0 0.0
  %3763 = vmatpush.msra.mxu0 0.0
  %3764 = vmatpush.msra.mxu0 0.0
  %3765 = vmatpush.msra.mxu0 0.0
  %3766 = vmatpush.msra.mxu0 0.0
  %3767 = vmatpush.msra.mxu0 0.0
  %3768 = vmatpush.msra.mxu0 0.0
  %3769 = vmatpush.msra.mxu0 0.0
  %3770 = vmatpush.msra.mxu0 0.0
  %3771 = vmatpush.msra.mxu0 0.0
  %3772 = vmatpush.msra.mxu0 0.0
  %3773 = vmatpush.msra.mxu0 0.0
  %3774 = vmatpush.msra.mxu0 %v3761
  %3775 = vmatpush.msra.mxu0 %v3760
  %3776 = vmatpush.msra.mxu0 %v3759
  %3777 = vmatpush.msra.mxu0 %v3758
  %3778 = vmatmul.f32.gmra.mxu0 %v1640
  %v3779 = vpop.f32.mrf.mxu0
  %v3780 = vadd.f32 0.0, %v3779
  %3781 = vmatmul.f32.gmra.mxu0 %v1643
  %v3782 = vpop.f32.mrf.mxu0
  %v3783 = vadd.f32 0.0, %v3782
  %3784 = vmatmul.f32.gmra.mxu0 %v1646
  %v3785 = vpop.f32.mrf.mxu0
  %v3786 = vadd.f32 0.0, %v3785
  %3787 = vmatmul.f32.gmra.mxu0 %v1649
  %v3788 = vpop.f32.mrf.mxu0
  %v3789 = vadd.f32 0.0, %v3788
  %3790 = vdwg.mxu0
  %v3791 = vsel %vm342, %v3780, 0.0
  %3792 = vadd.xlane.f32.xlu0 %v3791
  %v3793 = vpop.xlane.xlu0 %3792
  %v3794 = vsel %vm342, %v3783, 0.0
  %3795 = vadd.xlane.f32.xlu0 %v3794
  %v3796 = vpop.xlane.xlu0 %3795
  %v3797 = vsel %vm342, %v3786, 0.0
  %3798 = vadd.xlane.f32.xlu0 %v3797
  %v3799 = vpop.xlane.xlu0 %3798
  %v3800 = vsel %vm342, %v3789, 0.0
  %3801 = vadd.xlane.f32.xlu0 %v3800
  %v3802 = vpop.xlane.xlu0 %3801
  %v3803 = vmul.f32 %v3793, 0.00390625
  %v3804 = vmul.f32 %v3796, 0.00390625
  %v3805 = vmul.f32 %v3799, 0.00390625
  %v3806 = vmul.f32 %v3802, 0.00390625
  %v3807 = vadd.f32 %v3803, 1e-05
  %v3808 = vadd.f32 %v3804, 1e-05
  %v3809 = vadd.f32 %v3805, 1e-05
  %v3810 = vadd.f32 %v3806, 1e-05
  %v3811 = vrsqrt.pop %v3807
  %v3812 = vmul.f32 %v3811, %v3807
  %v3813 = vmul.f32 %v3812, %v3811
  %v3814 = vmul.f32 0.5, %v3813
  %v3815 = vsub.f32 1.5, %v3814
  %v3816 = vmul.f32 %v3811, %v3815
  %vm3817 = vweird.f32 %v3807
  %vm3818 = vweird.f32 %v3811
  %vm3819 = vmor %vm3817, %vm3818
  %v3820 = vsel %vm3819, %v3811, %v3816
  %v3821 = vrsqrt.pop %v3808
  %v3822 = vmul.f32 %v3821, %v3808
  %v3823 = vmul.f32 %v3822, %v3821
  %v3824 = vmul.f32 0.5, %v3823
  %v3825 = vsub.f32 1.5, %v3824
  %v3826 = vmul.f32 %v3821, %v3825
  %vm3827 = vweird.f32 %v3808
  %vm3828 = vweird.f32 %v3821
  %vm3829 = vmor %vm3827, %vm3828
  %v3830 = vsel %vm3829, %v3821, %v3826
  %v3831 = vrsqrt.pop %v3809
  %v3832 = vmul.f32 %v3831, %v3809
  %v3833 = vmul.f32 %v3832, %v3831
  %v3834 = vmul.f32 0.5, %v3833
  %v3835 = vsub.f32 1.5, %v3834
  %v3836 = vmul.f32 %v3831, %v3835
  %vm3837 = vweird.f32 %v3809
  %vm3838 = vweird.f32 %v3831
  %vm3839 = vmor %vm3837, %vm3838
  %v3840 = vsel %vm3839, %v3831, %v3836
  %v3841 = vrsqrt.pop %v3810
  %v3842 = vmul.f32 %v3841, %v3810
  %v3843 = vmul.f32 %v3842, %v3841
  %v3844 = vmul.f32 0.5, %v3843
  %v3845 = vsub.f32 1.5, %v3844
  %v3846 = vmul.f32 %v3841, %v3845
  %vm3847 = vweird.f32 %v3810
  %vm3848 = vweird.f32 %v3841
  %vm3849 = vmor %vm3847, %vm3848
  %v3850 = vsel %vm3849, %v3841, %v3846
  %v3851 = vmul.f32 %v3754, %v3820
  %v3852 = vmul.f32 %v3755, %v3830
  %v3853 = vmul.f32 %v3756, %v3840
  %v3854 = vmul.f32 %v3757, %v3850
  %v3855 = vmul.f32 %v3851, %v1800
  %v3856 = vmul.f32 %v3852, %v1805
  %v3857 = vmul.f32 %v3853, %v1810
  %v3858 = vmul.f32 %v3854, %v1815
  %v3859 = vadd.f32 %v3855, %v1824
  %v3860 = vadd.f32 %v3856, %v1829
  %v3861 = vadd.f32 %v3857, %v1834
  %v3862 = vadd.f32 %v3858, %v1839
  %v3863 = vsub.f32 0.0, %v3859
  %v3864 = vsub.f32 0.0, %v3860
  %v3865 = vsub.f32 0.0, %v3861
  %v3866 = vsub.f32 0.0, %v3862
  %v3867 = vmul.f32 %v3863, 1.442695
  %v3868 = vpow.pop %v3867
  %v3869 = vmul.f32 %v3864, 1.442695
  %v3870 = vpow.pop %v3869
  %v3871 = vmul.f32 %v3865, 1.442695
  %v3872 = vpow.pop %v3871
  %v3873 = vmul.f32 %v3866, 1.442695
  %v3874 = vpow.pop %v3873
  %v3875 = vadd.f32 %v3868, 1.0
  %v3876 = vadd.f32 %v3870, 1.0
  %v3877 = vadd.f32 %v3872, 1.0
  %v3878 = vadd.f32 %v3874, 1.0
  %v3879 = vrcp.pop %v3875
  %v3880 = vmul.f32 %v3875, %v3879
  %v3881 = vsub.f32 1.0, %v3880
  %v3882 = vmul.f32 %v3879, %v3881
  %v3883 = vadd.f32 %v3879, %v3882
  %vm3884 = vweird.f32 %v3875
  %vm3885 = vweird.f32 %v3879
  %vm3886 = vmor %vm3884, %vm3885
  %v3887 = vsel %vm3886, %v3879, %v3883
  %v3888 = vand.u32 2147483647, %v3875
  %vm3889 = vcmp.eq.f32.partialorder %v3888, 8.507059e+37
  %v3890 = vand.u32 %v3875, 2147483648
  %v3891 = vor.u32 1.1754944e-38, %v3890
  %v3892 = vsel %vm3889, %v3891, %v3887
  %v3893 = vmul.f32 1.0, %v3892
  %v3894 = vrcp.pop %v3876
  %v3895 = vmul.f32 %v3876, %v3894
  %v3896 = vsub.f32 1.0, %v3895
  %v3897 = vmul.f32 %v3894, %v3896
  %v3898 = vadd.f32 %v3894, %v3897
  %vm3899 = vweird.f32 %v3876
  %vm3900 = vweird.f32 %v3894
  %vm3901 = vmor %vm3899, %vm3900
  %v3902 = vsel %vm3901, %v3894, %v3898
  %v3903 = vand.u32 2147483647, %v3876
  %vm3904 = vcmp.eq.f32.partialorder %v3903, 8.507059e+37
  %v3905 = vand.u32 %v3876, 2147483648
  %v3906 = vor.u32 1.1754944e-38, %v3905
  %v3907 = vsel %vm3904, %v3906, %v3902
  %v3908 = vmul.f32 1.0, %v3907
  %v3909 = vrcp.pop %v3877
  %v3910 = vmul.f32 %v3877, %v3909
  %v3911 = vsub.f32 1.0, %v3910
  %v3912 = vmul.f32 %v3909, %v3911
  %v3913 = vadd.f32 %v3909, %v3912
  %vm3914 = vweird.f32 %v3877
  %vm3915 = vweird.f32 %v3909
  %vm3916 = vmor %vm3914, %vm3915
  %v3917 = vsel %vm3916, %v3909, %v3913
  %v3918 = vand.u32 2147483647, %v3877
  %vm3919 = vcmp.eq.f32.partialorder %v3918, 8.507059e+37
  %v3920 = vand.u32 %v3877, 2147483648
  %v3921 = vor.u32 1.1754944e-38, %v3920
  %v3922 = vsel %vm3919, %v3921, %v3917
  %v3923 = vmul.f32 1.0, %v3922
  %v3924 = vrcp.pop %v3878
  %v3925 = vmul.f32 %v3878, %v3924
  %v3926 = vsub.f32 1.0, %v3925
  %v3927 = vmul.f32 %v3924, %v3926
  %v3928 = vadd.f32 %v3924, %v3927
  %vm3929 = vweird.f32 %v3878
  %vm3930 = vweird.f32 %v3924
  %vm3931 = vmor %vm3929, %vm3930
  %v3932 = vsel %vm3931, %v3924, %v3928
  %v3933 = vand.u32 2147483647, %v3878
  %vm3934 = vcmp.eq.f32.partialorder %v3933, 8.507059e+37
  %v3935 = vand.u32 %v3878, 2147483648
  %v3936 = vor.u32 1.1754944e-38, %v3935
  %v3937 = vsel %vm3934, %v3936, %v3932
  %v3938 = vmul.f32 1.0, %v3937
  %v3939 = vmul.f32 %v3859, %v3893
  %v3940 = vmul.f32 %v3860, %v3908
  %v3941 = vmul.f32 %v3861, %v3923
  %v3942 = vmul.f32 %v3862, %v3938
  %3943 = vmatpush.msra.mxu0 0.0
  %3944 = vmatpush.msra.mxu0 0.0
  %3945 = vmatpush.msra.mxu0 0.0
  %3946 = vmatpush.msra.mxu0 0.0
  %3947 = vmatpush.msra.mxu0 0.0
  %3948 = vmatpush.msra.mxu0 0.0
  %3949 = vmatpush.msra.mxu0 0.0
  %3950 = vmatpush.msra.mxu0 0.0
  %3951 = vmatpush.msra.mxu0 0.0
  %3952 = vmatpush.msra.mxu0 0.0
  %3953 = vmatpush.msra.mxu0 0.0
  %3954 = vmatpush.msra.mxu0 0.0
  %3955 = vmatpush.msra.mxu0 %v3942
  %3956 = vmatpush.msra.mxu0 %v3941
  %3957 = vmatpush.msra.mxu0 %v3940
  %3958 = vmatpush.msra.mxu0 %v3939
  %3959 = vmatmul.f32.gmra.mxu0 %v1926
  %v3960 = vpop.f32.mrf.mxu0
  %v3961 = vadd.f32 0.0, %v3960
  %3962 = vmatmul.f32.gmra.mxu0 %v1929
  %v3963 = vpop.f32.mrf.mxu0
  %v3964 = vadd.f32 0.0, %v3963
  %3965 = vmatmul.f32.gmra.mxu0 %v1932
  %v3966 = vpop.f32.mrf.mxu0
  %v3967 = vadd.f32 0.0, %v3966
  %3968 = vmatmul.f32.gmra.mxu0 %v1935
  %v3969 = vpop.f32.mrf.mxu0
  %v3970 = vadd.f32 0.0, %v3969
  %3971 = vmatmul.f32.gmra.mxu0 %v1938
  %v3972 = vpop.f32.mrf.mxu0
  %v3973 = vadd.f32 0.0, %v3972
  %3974 = vmatmul.f32.gmra.mxu0 %v1941
  %v3975 = vpop.f32.mrf.mxu0
  %v3976 = vadd.f32 0.0, %v3975
  %3977 = vmatmul.f32.gmra.mxu0 %v1944
  %v3978 = vpop.f32.mrf.mxu0
  %v3979 = vadd.f32 0.0, %v3978
  %3980 = vmatmul.f32.gmra.mxu0 %v1947
  %v3981 = vpop.f32.mrf.mxu0
  %v3982 = vadd.f32 0.0, %v3981
  %3983 = vmatmul.f32.gmra.mxu0 %v1950
  %v3984 = vpop.f32.mrf.mxu0
  %v3985 = vadd.f32 0.0, %v3984
  %3986 = vmatmul.f32.gmra.mxu0 %v1953
  %v3987 = vpop.f32.mrf.mxu0
  %v3988 = vadd.f32 0.0, %v3987
  %3989 = vmatmul.f32.gmra.mxu0 %v1956
  %v3990 = vpop.f32.mrf.mxu0
  %v3991 = vadd.f32 0.0, %v3990
  %3992 = vmatmul.f32.gmra.mxu0 %v1959
  %v3993 = vpop.f32.mrf.mxu0
  %v3994 = vadd.f32 0.0, %v3993
  %3995 = vmatmul.f32.gmra.mxu0 %v1962
  %v3996 = vpop.f32.mrf.mxu0
  %v3997 = vadd.f32 0.0, %v3996
  %3998 = vmatmul.f32.gmra.mxu0 %v1965
  %v3999 = vpop.f32.mrf.mxu0
  %v4000 = vadd.f32 0.0, %v3999
  %4001 = vmatmul.f32.gmra.mxu0 %v1968
  %v4002 = vpop.f32.mrf.mxu0
  %v4003 = vadd.f32 0.0, %v4002
  %4004 = vmatmul.f32.gmra.mxu0 %v1971
  %v4005 = vpop.f32.mrf.mxu0
  %v4006 = vadd.f32 0.0, %v4005
  %4007 = vmatmul.f32.gmra.mxu0 %v1974
  %v4008 = vpop.f32.mrf.mxu0
  %v4009 = vadd.f32 0.0, %v4008
  %4010 = vmatmul.f32.gmra.mxu0 %v1977
  %v4011 = vpop.f32.mrf.mxu0
  %v4012 = vadd.f32 0.0, %v4011
  %4013 = vmatmul.f32.gmra.mxu0 %v1980
  %v4014 = vpop.f32.mrf.mxu0
  %v4015 = vadd.f32 0.0, %v4014
  %4016 = vmatmul.f32.gmra.mxu0 %v1983
  %v4017 = vpop.f32.mrf.mxu0
  %v4018 = vadd.f32 0.0, %v4017
  %4019 = vmatmul.f32.gmra.mxu0 %v1986
  %v4020 = vpop.f32.mrf.mxu0
  %v4021 = vadd.f32 0.0, %v4020
  %4022 = vmatmul.f32.gmra.mxu0 %v1989
  %v4023 = vpop.f32.mrf.mxu0
  %v4024 = vadd.f32 0.0, %v4023
  %4025 = vmatmul.f32.gmra.mxu0 %v1992
  %v4026 = vpop.f32.mrf.mxu0
  %v4027 = vadd.f32 0.0, %v4026
  %4028 = vmatmul.f32.gmra.mxu0 %v1995
  %v4029 = vpop.f32.mrf.mxu0
  %v4030 = vadd.f32 0.0, %v4029
  %4031 = vmatmul.f32.gmra.mxu0 %v1998
  %v4032 = vpop.f32.mrf.mxu0
  %v4033 = vadd.f32 0.0, %v4032
  %4034 = vmatmul.f32.gmra.mxu0 %v2001
  %v4035 = vpop.f32.mrf.mxu0
  %v4036 = vadd.f32 0.0, %v4035
  %4037 = vmatmul.f32.gmra.mxu0 %v2004
  %v4038 = vpop.f32.mrf.mxu0
  %v4039 = vadd.f32 0.0, %v4038
  %4040 = vmatmul.f32.gmra.mxu0 %v2007
  %v4041 = vpop.f32.mrf.mxu0
  %v4042 = vadd.f32 0.0, %v4041
  %4043 = vmatmul.f32.gmra.mxu0 %v2010
  %v4044 = vpop.f32.mrf.mxu0
  %v4045 = vadd.f32 0.0, %v4044
  %4046 = vmatmul.f32.gmra.mxu0 %v2013
  %v4047 = vpop.f32.mrf.mxu0
  %v4048 = vadd.f32 0.0, %v4047
  %4049 = vmatmul.f32.gmra.mxu0 %v2016
  %v4050 = vpop.f32.mrf.mxu0
  %v4051 = vadd.f32 0.0, %v4050
  %4052 = vmatmul.f32.gmra.mxu0 %v2019
  %v4053 = vpop.f32.mrf.mxu0
  %v4054 = vadd.f32 0.0, %v4053
  %4055 = vmatmul.f32.gmra.mxu0 %v2022
  %v4056 = vpop.f32.mrf.mxu0
  %v4057 = vadd.f32 0.0, %v4056
  %4058 = vmatmul.f32.gmra.mxu0 %v2025
  %v4059 = vpop.f32.mrf.mxu0
  %v4060 = vadd.f32 0.0, %v4059
  %4061 = vmatmul.f32.gmra.mxu0 %v2028
  %v4062 = vpop.f32.mrf.mxu0
  %v4063 = vadd.f32 0.0, %v4062
  %4064 = vmatmul.f32.gmra.mxu0 %v2031
  %v4065 = vpop.f32.mrf.mxu0
  %v4066 = vadd.f32 0.0, %v4065
  %4067 = vdwg.mxu0
  %v4069 = vsel %vm342, %v3973, 0
  %v4072 = vsel %vm342, %v3976, 0
  %v4075 = vsel %vm342, %v3979, 0
  %v4078 = vsel %vm342, %v3982, 0
  %4080 = vmatpush.msra.mxu0 0.0
  %4081 = vmatpush.msra.mxu0 0.0
  %4082 = vmatpush.msra.mxu0 0.0
  %4083 = vmatpush.msra.mxu0 0.0
  %4084 = vmatpush.msra.mxu0 0.0
  %4085 = vmatpush.msra.mxu0 0.0
  %4086 = vmatpush.msra.mxu0 0.0
  %4087 = vmatpush.msra.mxu0 0.0
  %4088 = vmatpush.msra.mxu0 %v3231
  %4089 = vmatpush.msra.mxu0 %v3230
  %4090 = vmatpush.msra.mxu0 %v3229
  %4091 = vmatpush.msra.mxu0 %v3228
  %4092 = vmatpush.msra.mxu0 %v3227
  %4093 = vmatpush.msra.mxu0 %v3226
  %4094 = vmatpush.msra.mxu0 %v3225
  %4095 = vmatpush.msra.mxu0 %v3224
  %4096 = vmatmul.f32.gmra.mxu0 %v4069
  %v4097 = vpop.f32.mrf.mxu0
  %v4098 = vadd.f32 0.0, %v4097
  %4099 = vmatmul.f32.gmra.mxu0 %v4072
  %v4100 = vpop.f32.mrf.mxu0
  %v4101 = vadd.f32 0.0, %v4100
  %4102 = vmatmul.f32.gmra.mxu0 %v4075
  %v4103 = vpop.f32.mrf.mxu0
  %v4104 = vadd.f32 0.0, %v4103
  %4105 = vmatmul.f32.gmra.mxu0 %v4078
  %v4106 = vpop.f32.mrf.mxu0
  %v4107 = vadd.f32 0.0, %v4106
  %4108 = vdwg.mxu0
  %v4110 = vsel %vm342, %v3961, 0
  %v4113 = vsel %vm342, %v3964, 0
  %v4116 = vsel %vm342, %v3967, 0
  %v4119 = vsel %vm342, %v3970, 0
  %4121 = vmatpush.msra.mxu0 0.0
  %4122 = vmatpush.msra.mxu0 0.0
  %4123 = vmatpush.msra.mxu0 0.0
  %4124 = vmatpush.msra.mxu0 0.0
  %4125 = vmatpush.msra.mxu0 0.0
  %4126 = vmatpush.msra.mxu0 0.0
  %4127 = vmatpush.msra.mxu0 0.0
  %4128 = vmatpush.msra.mxu0 0.0
  %4129 = vmatpush.msra.mxu0 %v3223
  %4130 = vmatpush.msra.mxu0 %v3222
  %4131 = vmatpush.msra.mxu0 %v3221
  %4132 = vmatpush.msra.mxu0 %v3220
  %4133 = vmatpush.msra.mxu0 %v3219
  %4134 = vmatpush.msra.mxu0 %v3218
  %4135 = vmatpush.msra.mxu0 %v3217
  %4136 = vmatpush.msra.mxu0 %v3216
  %4137 = vmatmul.f32.gmra.mxu0 %v4110
  %v4138 = vpop.f32.mrf.mxu0
  %v4139 = vadd.f32 %v4098, %v4138
  %4140 = vmatmul.f32.gmra.mxu0 %v4113
  %v4141 = vpop.f32.mrf.mxu0
  %v4142 = vadd.f32 %v4101, %v4141
  %4143 = vmatmul.f32.gmra.mxu0 %v4116
  %v4144 = vpop.f32.mrf.mxu0
  %v4145 = vadd.f32 %v4104, %v4144
  %4146 = vmatmul.f32.gmra.mxu0 %v4119
  %v4147 = vpop.f32.mrf.mxu0
  %v4148 = vadd.f32 %v4107, %v4147
  %4149 = vdwg.mxu0
  %v4151 = vsel %vm342, %v3985, 0
  %v4154 = vsel %vm342, %v3988, 0
  %v4157 = vsel %vm342, %v3991, 0
  %v4160 = vsel %vm342, %v3994, 0
  %4162 = vmatpush.msra.mxu0 0.0
  %4163 = vmatpush.msra.mxu0 0.0
  %4164 = vmatpush.msra.mxu0 0.0
  %4165 = vmatpush.msra.mxu0 0.0
  %4166 = vmatpush.msra.mxu0 0.0
  %4167 = vmatpush.msra.mxu0 0.0
  %4168 = vmatpush.msra.mxu0 0.0
  %4169 = vmatpush.msra.mxu0 0.0
  %4170 = vmatpush.msra.mxu0 %v3321
  %4171 = vmatpush.msra.mxu0 %v3320
  %4172 = vmatpush.msra.mxu0 %v3319
  %4173 = vmatpush.msra.mxu0 %v3318
  %4174 = vmatpush.msra.mxu0 %v3317
  %4175 = vmatpush.msra.mxu0 %v3316
  %4176 = vmatpush.msra.mxu0 %v3315
  %4177 = vmatpush.msra.mxu0 %v3314
  %4178 = vmatmul.f32.gmra.mxu0 %v4151
  %v4179 = vpop.f32.mrf.mxu0
  %v4180 = vadd.f32 0.0, %v4179
  %4181 = vmatmul.f32.gmra.mxu0 %v4154
  %v4182 = vpop.f32.mrf.mxu0
  %v4183 = vadd.f32 0.0, %v4182
  %4184 = vmatmul.f32.gmra.mxu0 %v4157
  %v4185 = vpop.f32.mrf.mxu0
  %v4186 = vadd.f32 0.0, %v4185
  %4187 = vmatmul.f32.gmra.mxu0 %v4160
  %v4188 = vpop.f32.mrf.mxu0
  %v4189 = vadd.f32 0.0, %v4188
  %4190 = vdwg.mxu0
  %v4191 = vadd.f32 %v4139, %v4180
  %v4192 = vadd.f32 %v4142, %v4183
  %v4193 = vadd.f32 %v4145, %v4186
  %v4194 = vadd.f32 %v4148, %v4189
  %v4196 = vsel %vm342, %v3997, 0
  %v4199 = vsel %vm342, %v4000, 0
  %v4202 = vsel %vm342, %v4003, 0
  %v4205 = vsel %vm342, %v4006, 0
  %4207 = vmatpush.msra.mxu0 0.0
  %4208 = vmatpush.msra.mxu0 0.0
  %4209 = vmatpush.msra.mxu0 0.0
  %4210 = vmatpush.msra.mxu0 0.0
  %4211 = vmatpush.msra.mxu0 0.0
  %4212 = vmatpush.msra.mxu0 0.0
  %4213 = vmatpush.msra.mxu0 0.0
  %4214 = vmatpush.msra.mxu0 0.0
  %4215 = vmatpush.msra.mxu0 %v3374
  %4216 = vmatpush.msra.mxu0 %v3373
  %4217 = vmatpush.msra.mxu0 %v3372
  %4218 = vmatpush.msra.mxu0 %v3371
  %4219 = vmatpush.msra.mxu0 %v3370
  %4220 = vmatpush.msra.mxu0 %v3369
  %4221 = vmatpush.msra.mxu0 %v3368
  %4222 = vmatpush.msra.mxu0 %v3367
  %4223 = vmatmul.f32.gmra.mxu0 %v4196
  %v4224 = vpop.f32.mrf.mxu0
  %v4225 = vadd.f32 0.0, %v4224
  %4226 = vmatmul.f32.gmra.mxu0 %v4199
  %v4227 = vpop.f32.mrf.mxu0
  %v4228 = vadd.f32 0.0, %v4227
  %4229 = vmatmul.f32.gmra.mxu0 %v4202
  %v4230 = vpop.f32.mrf.mxu0
  %v4231 = vadd.f32 0.0, %v4230
  %4232 = vmatmul.f32.gmra.mxu0 %v4205
  %v4233 = vpop.f32.mrf.mxu0
  %v4234 = vadd.f32 0.0, %v4233
  %4235 = vdwg.mxu0
  %v4236 = vadd.f32 %v4191, %v4225
  %v4237 = vadd.f32 %v4192, %v4228
  %v4238 = vadd.f32 %v4193, %v4231
  %v4239 = vadd.f32 %v4194, %v4234
  %v4241 = vsel %vm342, %v4009, 0
  %v4244 = vsel %vm342, %v4012, 0
  %v4247 = vsel %vm342, %v4015, 0
  %v4250 = vsel %vm342, %v4018, 0
  %4252 = vmatpush.msra.mxu0 0.0
  %4253 = vmatpush.msra.mxu0 0.0
  %4254 = vmatpush.msra.mxu0 0.0
  %4255 = vmatpush.msra.mxu0 0.0
  %4256 = vmatpush.msra.mxu0 0.0
  %4257 = vmatpush.msra.mxu0 0.0
  %4258 = vmatpush.msra.mxu0 0.0
  %4259 = vmatpush.msra.mxu0 0.0
  %4260 = vmatpush.msra.mxu0 %v3427
  %4261 = vmatpush.msra.mxu0 %v3426
  %4262 = vmatpush.msra.mxu0 %v3425
  %4263 = vmatpush.msra.mxu0 %v3424
  %4264 = vmatpush.msra.mxu0 %v3423
  %4265 = vmatpush.msra.mxu0 %v3422
  %4266 = vmatpush.msra.mxu0 %v3421
  %4267 = vmatpush.msra.mxu0 %v3420
  %4268 = vmatmul.f32.gmra.mxu0 %v4241
  %v4269 = vpop.f32.mrf.mxu0
  %v4270 = vadd.f32 0.0, %v4269
  %4271 = vmatmul.f32.gmra.mxu0 %v4244
  %v4272 = vpop.f32.mrf.mxu0
  %v4273 = vadd.f32 0.0, %v4272
  %4274 = vmatmul.f32.gmra.mxu0 %v4247
  %v4275 = vpop.f32.mrf.mxu0
  %v4276 = vadd.f32 0.0, %v4275
  %4277 = vmatmul.f32.gmra.mxu0 %v4250
  %v4278 = vpop.f32.mrf.mxu0
  %v4279 = vadd.f32 0.0, %v4278
  %4280 = vdwg.mxu0
  %v4281 = vadd.f32 %v4236, %v4270
  %v4282 = vadd.f32 %v4237, %v4273
  %v4283 = vadd.f32 %v4238, %v4276
  %v4284 = vadd.f32 %v4239, %v4279
  %v4286 = vsel %vm342, %v4021, 0
  %v4289 = vsel %vm342, %v4024, 0
  %v4292 = vsel %vm342, %v4027, 0
  %v4295 = vsel %vm342, %v4030, 0
  %4297 = vmatpush.msra.mxu0 0.0
  %4298 = vmatpush.msra.mxu0 0.0
  %4299 = vmatpush.msra.mxu0 0.0
  %4300 = vmatpush.msra.mxu0 0.0
  %4301 = vmatpush.msra.mxu0 0.0
  %4302 = vmatpush.msra.mxu0 0.0
  %4303 = vmatpush.msra.mxu0 0.0
  %4304 = vmatpush.msra.mxu0 0.0
  %4305 = vmatpush.msra.mxu0 %v3480
  %4306 = vmatpush.msra.mxu0 %v3479
  %4307 = vmatpush.msra.mxu0 %v3478
  %4308 = vmatpush.msra.mxu0 %v3477
  %4309 = vmatpush.msra.mxu0 %v3476
  %4310 = vmatpush.msra.mxu0 %v3475
  %4311 = vmatpush.msra.mxu0 %v3474
  %4312 = vmatpush.msra.mxu0 %v3473
  %4313 = vmatmul.f32.gmra.mxu0 %v4286
  %v4314 = vpop.f32.mrf.mxu0
  %v4315 = vadd.f32 0.0, %v4314
  %4316 = vmatmul.f32.gmra.mxu0 %v4289
  %v4317 = vpop.f32.mrf.mxu0
  %v4318 = vadd.f32 0.0, %v4317
  %4319 = vmatmul.f32.gmra.mxu0 %v4292
  %v4320 = vpop.f32.mrf.mxu0
  %v4321 = vadd.f32 0.0, %v4320
  %4322 = vmatmul.f32.gmra.mxu0 %v4295
  %v4323 = vpop.f32.mrf.mxu0
  %v4324 = vadd.f32 0.0, %v4323
  %4325 = vdwg.mxu0
  %v4326 = vadd.f32 %v4281, %v4315
  %v4327 = vadd.f32 %v4282, %v4318
  %v4328 = vadd.f32 %v4283, %v4321
  %v4329 = vadd.f32 %v4284, %v4324
  %v4331 = vsel %vm342, %v4033, 0
  %v4334 = vsel %vm342, %v4036, 0
  %v4337 = vsel %vm342, %v4039, 0
  %v4340 = vsel %vm342, %v4042, 0
  %4342 = vmatpush.msra.mxu0 0.0
  %4343 = vmatpush.msra.mxu0 0.0
  %4344 = vmatpush.msra.mxu0 0.0
  %4345 = vmatpush.msra.mxu0 0.0
  %4346 = vmatpush.msra.mxu0 0.0
  %4347 = vmatpush.msra.mxu0 0.0
  %4348 = vmatpush.msra.mxu0 0.0
  %4349 = vmatpush.msra.mxu0 0.0
  %4350 = vmatpush.msra.mxu0 %v3533
  %4351 = vmatpush.msra.mxu0 %v3532
  %4352 = vmatpush.msra.mxu0 %v3531
  %4353 = vmatpush.msra.mxu0 %v3530
  %4354 = vmatpush.msra.mxu0 %v3529
  %4355 = vmatpush.msra.mxu0 %v3528
  %4356 = vmatpush.msra.mxu0 %v3527
  %4357 = vmatpush.msra.mxu0 %v3526
  %4358 = vmatmul.f32.gmra.mxu0 %v4331
  %v4359 = vpop.f32.mrf.mxu0
  %v4360 = vadd.f32 0.0, %v4359
  %4361 = vmatmul.f32.gmra.mxu0 %v4334
  %v4362 = vpop.f32.mrf.mxu0
  %v4363 = vadd.f32 0.0, %v4362
  %4364 = vmatmul.f32.gmra.mxu0 %v4337
  %v4365 = vpop.f32.mrf.mxu0
  %v4366 = vadd.f32 0.0, %v4365
  %4367 = vmatmul.f32.gmra.mxu0 %v4340
  %v4368 = vpop.f32.mrf.mxu0
  %v4369 = vadd.f32 0.0, %v4368
  %4370 = vdwg.mxu0
  %v4371 = vadd.f32 %v4326, %v4360
  %v4372 = vadd.f32 %v4327, %v4363
  %v4373 = vadd.f32 %v4328, %v4366
  %v4374 = vadd.f32 %v4329, %v4369
  %v4376 = vsel %vm342, %v4045, 0
  %v4379 = vsel %vm342, %v4048, 0
  %v4382 = vsel %vm342, %v4051, 0
  %v4385 = vsel %vm342, %v4054, 0
  %4387 = vmatpush.msra.mxu0 0.0
  %4388 = vmatpush.msra.mxu0 0.0
  %4389 = vmatpush.msra.mxu0 0.0
  %4390 = vmatpush.msra.mxu0 0.0
  %4391 = vmatpush.msra.mxu0 0.0
  %4392 = vmatpush.msra.mxu0 0.0
  %4393 = vmatpush.msra.mxu0 0.0
  %4394 = vmatpush.msra.mxu0 0.0
  %4395 = vmatpush.msra.mxu0 %v3586
  %4396 = vmatpush.msra.mxu0 %v3585
  %4397 = vmatpush.msra.mxu0 %v3584
  %4398 = vmatpush.msra.mxu0 %v3583
  %4399 = vmatpush.msra.mxu0 %v3582
  %4400 = vmatpush.msra.mxu0 %v3581
  %4401 = vmatpush.msra.mxu0 %v3580
  %4402 = vmatpush.msra.mxu0 %v3579
  %4403 = vmatmul.f32.gmra.mxu0 %v4376
  %v4404 = vpop.f32.mrf.mxu0
  %v4405 = vadd.f32 0.0, %v4404
  %4406 = vmatmul.f32.gmra.mxu0 %v4379
  %v4407 = vpop.f32.mrf.mxu0
  %v4408 = vadd.f32 0.0, %v4407
  %4409 = vmatmul.f32.gmra.mxu0 %v4382
  %v4410 = vpop.f32.mrf.mxu0
  %v4411 = vadd.f32 0.0, %v4410
  %4412 = vmatmul.f32.gmra.mxu0 %v4385
  %v4413 = vpop.f32.mrf.mxu0
  %v4414 = vadd.f32 0.0, %v4413
  %4415 = vdwg.mxu0
  %v4416 = vadd.f32 %v4371, %v4405
  %v4417 = vadd.f32 %v4372, %v4408
  %v4418 = vadd.f32 %v4373, %v4411
  %v4419 = vadd.f32 %v4374, %v4414
  %v4421 = vsel %vm342, %v4057, 0
  %v4424 = vsel %vm342, %v4060, 0
  %v4427 = vsel %vm342, %v4063, 0
  %v4430 = vsel %vm342, %v4066, 0
  %4432 = vmatpush.msra.mxu0 0.0
  %4433 = vmatpush.msra.mxu0 0.0
  %4434 = vmatpush.msra.mxu0 0.0
  %4435 = vmatpush.msra.mxu0 0.0
  %4436 = vmatpush.msra.mxu0 0.0
  %4437 = vmatpush.msra.mxu0 0.0
  %4438 = vmatpush.msra.mxu0 0.0
  %4439 = vmatpush.msra.mxu0 0.0
  %4440 = vmatpush.msra.mxu0 %v3639
  %4441 = vmatpush.msra.mxu0 %v3638
  %4442 = vmatpush.msra.mxu0 %v3637
  %4443 = vmatpush.msra.mxu0 %v3636
  %4444 = vmatpush.msra.mxu0 %v3635
  %4445 = vmatpush.msra.mxu0 %v3634
  %4446 = vmatpush.msra.mxu0 %v3633
  %4447 = vmatpush.msra.mxu0 %v3632
  %4448 = vmatmul.f32.gmra.mxu0 %v4421
  %v4449 = vpop.f32.mrf.mxu0
  %v4450 = vadd.f32 0.0, %v4449
  %4451 = vmatmul.f32.gmra.mxu0 %v4424
  %v4452 = vpop.f32.mrf.mxu0
  %v4453 = vadd.f32 0.0, %v4452
  %4454 = vmatmul.f32.gmra.mxu0 %v4427
  %v4455 = vpop.f32.mrf.mxu0
  %v4456 = vadd.f32 0.0, %v4455
  %4457 = vmatmul.f32.gmra.mxu0 %v4430
  %v4458 = vpop.f32.mrf.mxu0
  %v4459 = vadd.f32 0.0, %v4458
  %4460 = vdwg.mxu0
  %v4461 = vadd.f32 %v4416, %v4450
  %v4462 = vadd.f32 %v4417, %v4453
  %v4463 = vadd.f32 %v4418, %v4456
  %v4464 = vadd.f32 %v4419, %v4459
  %v4465 = vadd.f32 %v4461, %v2558
  %v4466 = vadd.f32 %v4462, %v2563
  %v4467 = vadd.f32 %v4463, %v2568
  %v4468 = vadd.f32 %v4464, %v2573
  %4469 = vmatpush.msra.mxu0 0.0
  %4470 = vmatpush.msra.mxu0 0.0
  %4471 = vmatpush.msra.mxu0 0.0
  %4472 = vmatpush.msra.mxu0 0.0
  %4473 = vmatpush.msra.mxu0 0.0
  %4474 = vmatpush.msra.mxu0 0.0
  %4475 = vmatpush.msra.mxu0 0.0
  %4476 = vmatpush.msra.mxu0 0.0
  %4477 = vmatpush.msra.mxu0 %v2656
  %4478 = vmatpush.msra.mxu0 %v2655
  %4479 = vmatpush.msra.mxu0 %v2654
  %4480 = vmatpush.msra.mxu0 %v2653
  %4481 = vmatpush.msra.mxu0 %v2652
  %4482 = vmatpush.msra.mxu0 %v2651
  %4483 = vmatpush.msra.mxu0 %v2650
  %4484 = vmatpush.msra.mxu0 %v2649
  %4485 = vmatmul.f32.gmra.mxu0 %v2600
  %v4486 = vpop.f32.mrf.mxu0
  %v4487 = vadd.f32 %v2582, %v4486
  %4488 = vmatmul.f32.gmra.mxu0 %v2603
  %v4489 = vpop.f32.mrf.mxu0
  %v4490 = vadd.f32 %v2587, %v4489
  %4491 = vmatmul.f32.gmra.mxu0 %v2606
  %v4492 = vpop.f32.mrf.mxu0
  %v4493 = vadd.f32 %v2592, %v4492
  %4494 = vmatmul.f32.gmra.mxu0 %v2609
  %v4495 = vpop.f32.mrf.mxu0
  %v4496 = vadd.f32 %v2597, %v4495
  %4497 = vdwg.mxu0
  %v4498 = vadd.f32 %v4465, %v4487
  %v4499 = vadd.f32 %v4466, %v4490
  %v4500 = vadd.f32 %v4467, %v4493
  %v4501 = vadd.f32 %v4468, %v4496
  %s4502 = scalar_lea.vmem %s17, 32
  %4503 = vst.msk [vmem:[%s4502] sm:$0xff] %vm342, %v4498
  %4504 = vst.msk [vmem:[%s4502 + $0x8] sm:$0xff] %vm342, %v4499
  %4505 = vst.msk [vmem:[%s4502 + $0x10] sm:$0xff] %vm342, %v4500
  %4506 = vst.msk [vmem:[%s4502 + $0x18] sm:$0xff] %vm342, %v4501
  // Predicated region
  $region70: #{upsample_block_fwd.10} parent=0 // pred_check
    _
  $region71: #{upsample_block_fwd.10} parent=0 // pred_check_branch
    %4508 = sbr.rel (0) target = $region73
  $region72: #{upsample_block_fwd.10} parent=0 // pred_region
    _
  $region73: #{upsample_block_fwd.10} parent=0 // pred_fallthru
    _
  // Predicated region
  $region74: #{upsample_block_fwd.10} parent=0 // pred_check
    _
  $region75: #{upsample_block_fwd.10} parent=0 // pred_check_branch
    %4510 = sbr.rel (0) target = $region77
  $region76: #{upsample_block_fwd.10} parent=0 // pred_region
    _
  $region77: #{upsample_block_fwd.10} parent=0 // pred_fallthru
    _

</llo_original>
